<compile_context>
chip_gen: v5e
topology: v5e:2x2
jax: 0.10.0
libtpu: 0.0.40
codegen_flags: <defaults>
</compile_context>

<pallas_src>
import functools

import numpy as np

import jax
import jax.numpy as jnp
from jax.experimental import pallas as pl
from jax.experimental.pallas import tpu as pltpu


def _round_up(x, m):
    return (x + m - 1) // m * m


# ----------------------------------------------------------------------------
# Pool selector matrices (0/1, built once at trace/prep time)
# ----------------------------------------------------------------------------
def _jpool_pair_matrix(wsp, c):
    """(W*C, W*C): left half gathers even-j columns, right half odd-j columns."""
    wc, half = wsp * c, (wsp // 2) * c
    s = np.zeros((wc, 2 * half), np.float32)
    for j in range(wsp):
        col = (j % 2) * half + (j // 2) * c
        s[j * c:(j + 1) * c, col:col + c] = np.eye(c, dtype=np.float32)
    return s


def _ipool_pair_matrix(b_imgs, hsp, halo):
    """Row-pair selector: top half gathers even rows, bottom half odd rows,
    per image, into (hsp//2 + 2*halo)-row blocks whose halo rows are zero."""
    hp = hsp // 2 + 2 * halo
    r = np.zeros((2 * b_imgs * hp, b_imgs * hsp), np.float32)
    for k in range(2):
        for b in range(b_imgs):
            for io in range(hsp // 2):
                r[k * b_imgs * hp + b * hp + halo + io, b * hsp + 2 * io + k] = 1.0
    return r


def _ipool_final_matrix(b_imgs, hsp):
    """Final row-pair selector; pooled rows come out ordered io*B + b."""
    ho = hsp // 2
    r = np.zeros((2 * b_imgs * ho, b_imgs * hsp), np.float32)
    for k in range(2):
        for io in range(ho):
            for b in range(b_imgs):
                r[k * b_imgs * ho + io * b_imgs + b, b * hsp + 2 * io + k] = 1.0
    return r


# ----------------------------------------------------------------------------
# The fused kernel
# ----------------------------------------------------------------------------
def _shoe_cnn_kernel(x_ref, w1_ref, b1_ref, w2_ref, b2_ref, w3_ref, b3_ref,
                     sj_ref, rh1_ref, rh2_ref, rh3_ref,
                     f1w_ref, f1b_ref, f2w_ref, f2b_ref, f3w_ref, f3b_ref,
                     o_ref, x2_ref, x3_ref, *, B, H, W):
    f32 = jnp.float32
    bf16 = jnp.bfloat16
    WC = W * 32            # conv output lane width (identical for all 3 layers)
    half = WC // 2         # pooled / next-layer input lane width

    def conv(in_ref, w_ref, b_ref, k, h, kdim):
        # One MXU matmul per conv layer: the k row-shifted tap slices are
        # concatenated along the (128-aligned) lane axis so the whole k*W*Cin
        # contraction accumulates inside the MXU (no per-tap f32 RMW).
        taps = [in_ref[:, di:di + h, :].reshape(B * h, kdim) for di in range(k)]
        lhs = jnp.concatenate(taps, axis=-1)                        # (B*h, k*kdim)
        acc = jnp.dot(lhs, w_ref[...], preferred_element_type=f32)  # (B*h, WC)
        return jnp.maximum(acc + b_ref[...], 0.0).astype(bf16)

    def pool(y, sj, rh_ref, rows_out):
        # 2x2/2 max-pool, all lane-dense:
        #   j-pairs: matmul against the even/odd column selector, f32 max.
        #   i-pairs: matmul against the even/odd row selector (which also
        #            inserts the next layer's zero halo rows), f32 max.
        z = jnp.dot(y, sj, preferred_element_type=f32)               # (rows, WC)
        mj = jnp.maximum(z[:, :half], z[:, half:]).astype(bf16)      # (rows, half)
        z = jnp.dot(rh_ref[...], mj, preferred_element_type=f32)     # (2*out, half)
        return jnp.maximum(z[:rows_out], z[rows_out:]).astype(bf16)

    # conv1 (5x5, pad 2, 3->32) + ReLU + pool  ->  x2 scratch (with i-halo)
    y = conv(x_ref, w1_ref, b1_ref, 5, H, W * 8)
    x2_ref[...] = pool(y, sj_ref[0], rh1_ref,
                       B * (H // 2 + 2)).reshape(B, H // 2 + 2, half)

    # conv2 (3x3, pad 1, 32->64) + ReLU + pool  ->  x3 scratch (with i-halo)
    y = conv(x2_ref, w2_ref, b2_ref, 3, H // 2, half)
    x3_ref[...] = pool(y, sj_ref[1], rh2_ref,
                       B * (H // 4 + 2)).reshape(B, H // 4 + 2, half)

    # conv3 (3x3, pad 1, 64->128) + ReLU + final pool (rows ordered io*B + b)
    y = conv(x3_ref, w3_ref, b3_ref, 3, H // 4, half)
    ho = H // 8
    p = pool(y, sj_ref[2], rh3_ref, B * ho)                          # (B*ho, half)

    # fc1 (NCHW-flatten permutation folded into its rows) -> ReLU
    pcat = jnp.concatenate([p[io * B:(io + 1) * B] for io in range(ho)],
                           axis=-1)                                  # (B, ho*half)
    h1 = jnp.dot(pcat, f1w_ref[...], preferred_element_type=f32) + f1b_ref[...]
    h1 = jnp.maximum(h1, 0.0).astype(bf16)                           # (B, 128)
    # fc2 -> ReLU (output zero-padded 16 -> 128 lanes)
    h2 = jnp.dot(h1, f2w_ref[...], preferred_element_type=f32) + f2b_ref[...]
    h2 = jnp.maximum(h2, 0.0).astype(bf16)                           # (B, 128)
    # fc3 (real output in lane 0)
    o_ref[...] = jnp.dot(h2, f3w_ref[...], preferred_element_type=f32) + f3b_ref[...]


# ----------------------------------------------------------------------------
# Forward wrapper
# ----------------------------------------------------------------------------
def shoe_cnn_forward(x_nchw, kp):
    """x_nchw: (N, 3, H, W) -> (N, 1) float32 with Shoe_CNN semantics."""
    n, c, h, w = x_nchw.shape
    assert c == 3 and h % 8 == 0 and w % 8 == 0
    assert kp["w1"].shape == (5 * w * 8, w * 32), "params prepared for another size"

    B = n if n < 8 else 8                 # images per grid step
    npad = _round_up(n, B)
    wc, half = w * 32, w * 16

    # Layout plumbing: NHWC, i-halo rows (+-2), channels 3 -> 8, lanes = j*8+c.
    x = jnp.transpose(x_nchw, (0, 2, 3, 1)).astype(jnp.float32)
    x = jnp.pad(x, ((0, npad - n), (2, 2), (0, 0), (0, 8 - c)))
    x = x.reshape(npad, h + 4, w * 8).astype(jnp.bfloat16)

    # i-direction pool selectors (depend only on the static batch tile B).
    rh1 = jnp.asarray(_ipool_pair_matrix(B, h, 1), jnp.bfloat16)
    rh2 = jnp.asarray(_ipool_pair_matrix(B, h // 2, 1), jnp.bfloat16)
    rh3 = jnp.asarray(_ipool_final_matrix(B, h // 4), jnp.bfloat16)

    consts = [kp["w1"], kp["b1"], kp["w2"], kp["b2"], kp["w3"], kp["b3"],
              kp["sj"], rh1, rh2, rh3,
              kp["fc1_w"], kp["fc1_b"], kp["fc2_w"], kp["fc2_b"],
              kp["fc3_w"], kp["fc3_b"]]

    def _const_spec(a):
        return pl.BlockSpec(a.shape, lambda i, nd=a.ndim: (0,) * nd)

    # Advisory cost hint for XLA's scheduler (per-matmul flop sum, rough bytes).
    m1, m2, m3 = B * h, B * h // 2, B * h // 4
    flops = 2 * (npad // B) * (
        m1 * (5 * w * 8) * wc + m1 * wc * wc + 2 * B * (h // 2 + 2) * m1 * half
        + m2 * (3 * half) * wc + m2 * wc * wc + 2 * B * (h // 4 + 2) * m2 * half
        + m3 * (3 * half) * wc + m3 * wc * wc + 2 * B * (h // 8) * m3 * half
        + B * (h // 8) * half * 128 + 2 * B * 128 * 128)
    bytes_accessed = int(x.size * 2
                         + sum(int(a.size) * a.dtype.itemsize for a in consts)
                         + npad * 128 * 4)

    kernel = functools.partial(_shoe_cnn_kernel, B=B, H=h, W=w)
    out = pl.pallas_call(
        kernel,
        out_shape=jax.ShapeDtypeStruct((npad, 128), jnp.float32),
        grid=(npad // B,),
        in_specs=[pl.BlockSpec((B, h + 4, w * 8), lambda i: (i, 0, 0))]
                + [_const_spec(a) for a in consts],
        out_specs=pl.BlockSpec((B, 128), lambda i: (i, 0)),
        scratch_shapes=[
            pltpu.VMEM((B, h // 2 + 2, half), jnp.bfloat16),   # conv2 input (+halo)
            pltpu.VMEM((B, h // 4 + 2, half), jnp.bfloat16),   # conv3 input (+halo)
        ],
        compiler_params=pltpu.CompilerParams(
            dimension_semantics=("parallel",),
            vmem_limit_bytes=32 * 1024 * 1024,
        ),
        cost_estimate=pl.CostEstimate(flops=int(flops), transcendentals=0,
                                      bytes_accessed=bytes_accessed),
    )(x, *consts)
    return out[:n, :1]


# ----------------------------------------------------------------------------
# Parameters: PyTorch-convention weights + one-time kernel-ready preparation
# ----------------------------------------------------------------------------
def init_params(key, in_hw=16):
    """Deterministic synthetic weights matching Shoe_CNN's shapes (PyTorch conv
    layout (Cout, Cin, k, k); FC weights stored as (in, out) so fwd is x @ W).
    flat_dim matches what LazyLinear would infer for an in_hw x in_hw input."""
    assert in_hw % 8 == 0
    ks = jax.random.split(key, 12)
    s = 0.05
    hw = in_hw // 8
    flat_dim = 128 * hw * hw
    return {
        "conv1_w": jax.random.normal(ks[0], (32, 3, 5, 5), jnp.float32) * s,
        "conv1_b": jax.random.normal(ks[1], (32,), jnp.float32) * s,
        "conv2_w": jax.random.normal(ks[2], (64, 32, 3, 3), jnp.float32) * s,
        "conv2_b": jax.random.normal(ks[3], (64,), jnp.float32) * s,
        "conv3_w": jax.random.normal(ks[4], (128, 64, 3, 3), jnp.float32) * s,
        "conv3_b": jax.random.normal(ks[5], (128,), jnp.float32) * s,
        "fc1_w": jax.random.normal(ks[6], (flat_dim, 128), jnp.float32) * s,
        "fc1_b": jax.random.normal(ks[7], (128,), jnp.float32) * s,
        "fc2_w": jax.random.normal(ks[8], (128, 16), jnp.float32) * s,
        "fc2_b": jax.random.normal(ks[9], (16,), jnp.float32) * s,
        "fc3_w": jax.random.normal(ks[10], (16, 1), jnp.float32) * s,
        "fc3_b": jax.random.normal(ks[11], (1,), jnp.float32) * s,
    }


def prepare_params(params, in_h, in_w):
    """One-time prep: fold the conv taps + 'same' j-padding into per-layer MXU
    weight matrices (lanes = j*Cin + c), build the j-pool selectors, pad the FC
    stack to 128 lanes and fold PyTorch's NCHW flatten into fc1's rows."""
    assert in_h % 8 == 0 and in_w % 8 == 0, "three 2x2 pools need dims % 8 == 0"
    assert params["conv3_w"].shape[0] == 128, "fc1 fold assumes conv3 Cout == 128"

    def conv_big(w, b, wsp, cin_pad, pad):
        w = np.asarray(w, np.float32)            # (cout, cin, k, k) PyTorch layout
        cout, cin, k, _ = w.shape
        big = np.zeros((k, wsp * cin_pad, wsp * cout), np.float32)
        for di in range(k):
            for jo in range(wsp):
                for dj in range(k):
                    jin = jo + dj - pad
                    if 0 <= jin < wsp:
                        big[di, jin * cin_pad:jin * cin_pad + cin,
                            jo * cout:(jo + 1) * cout] = w[:, :, di, dj].T
        bias = np.tile(np.asarray(b, np.float32), wsp).reshape(1, wsp * cout)
        return (jnp.asarray(big.reshape(k * wsp * cin_pad, wsp * cout), jnp.bfloat16),
                jnp.asarray(bias, jnp.float32))

    w1, b1 = conv_big(params["conv1_w"], params["conv1_b"], in_w, 8, 2)
    w2, b2 = conv_big(params["conv2_w"], params["conv2_b"], in_w // 2, 32, 1)
    w3, b3 = conv_big(params["conv3_w"], params["conv3_b"], in_w // 4, 64, 1)

    sj = np.stack([_jpool_pair_matrix(in_w, 32),
                   _jpool_pair_matrix(in_w // 2, 64),
                   _jpool_pair_matrix(in_w // 4, 128)])

    ho, wo = in_h // 8, in_w // 8
    f1 = np.asarray(params["fc1_w"], np.float32)
    assert f1.shape[0] == 128 * ho * wo, "fc1 expects LazyLinear-inferred flat dim"
    # Fold PyTorch's NCHW flatten: row order (c, io, jo) -> (io, jo, c).
    f1 = f1.reshape(128, ho, wo, f1.shape[1]).transpose(1, 2, 0, 3)
    f1 = f1.reshape(ho * wo * 128, -1)

    def fc_pad(w, b):
        w = np.asarray(w, np.float32)
        b = np.asarray(b, np.float32)
        kin, kout = w.shape
        kin_p, kout_p = _round_up(kin, 128), _round_up(kout, 128)
        wp = np.zeros((kin_p, kout_p), np.float32)
        wp[:kin, :kout] = w
        bp = np.zeros((1, kout_p), np.float32)
        bp[0, :kout] = b
        return jnp.asarray(wp, jnp.bfloat16), jnp.asarray(bp, jnp.float32)

    fc1_w, fc1_b = fc_pad(f1, params["fc1_b"])
    fc2_w, fc2_b = fc_pad(params["fc2_w"], params["fc2_b"])
    fc3_w, fc3_b = fc_pad(params["fc3_w"], params["fc3_b"])

    return {"w1": w1, "b1": b1, "w2": w2, "b2": b2, "w3": w3, "b3": b3,
            "sj": jnp.asarray(sj, jnp.bfloat16),
            "fc1_w": fc1_w, "fc1_b": fc1_b, "fc2_w": fc2_w, "fc2_b": fc2_b,
            "fc3_w": fc3_w, "fc3_b": fc3_b}


# ----------------------------------------------------------------------------
# Pure-JAX float32 reference mirroring the PyTorch module exactly
# ----------------------------------------------------------------------------
def reference_forward(x_nchw, params):
    x = jnp.transpose(x_nchw, (0, 2, 3, 1)).astype(jnp.float32)

    def conv_relu(x, w, b, p):
        y = jax.lax.conv_general_dilated(
            x, jnp.transpose(w, (2, 3, 1, 0)), window_strides=(1, 1),
            padding=[(p, p), (p, p)],
            dimension_numbers=("NHWC", "HWIO", "NHWC"))
        return jnp.maximum(y + b, 0.0)

    def pool(x):
        return jax.lax.reduce_window(x, -jnp.inf, jax.lax.max,
                                     (1, 2, 2, 1), (1, 2, 2, 1), "VALID")

    x = pool(conv_relu(x, params["conv1_w"], params["conv1_b"], 2))
    x = pool(conv_relu(x, params["conv2_w"], params["conv2_b"], 1))
    x = pool(conv_relu(x, params["conv3_w"], params["conv3_b"], 1))
    n, h, w, c = x.shape
    flat = jnp.transpose(x, (0, 3, 1, 2)).reshape(n, c * h * w)  # NCHW flatten
    h1 = jnp.maximum(flat @ params["fc1_w"] + params["fc1_b"], 0.0)
    h2 = jnp.maximum(h1 @ params["fc2_w"] + params["fc2_b"], 0.0)
    return h2 @ params["fc3_w"] + params["fc3_b"]


# ----------------------------------------------------------------------------
# Main
# ----------------------------------------------------------------------------
if __name__ == "__main__":
    key = jax.random.PRNGKey(0)
    k_x, k_p = jax.random.split(key)

    N, C, H, W = 2, 3, 16, 16
    x = jax.random.normal(k_x, (N, C, H, W), jnp.float32)
    params = init_params(k_p, in_hw=H)
    kparams = prepare_params(params, H, W)   # one-time packing / padding / bf16

    fwd = jax.jit(shoe_cnn_forward)
    out = jax.block_until_ready(fwd(x, kparams))

    assert out.shape == (N, 1), out.shape
    assert bool(jnp.all(jnp.isfinite(out)))

    # Self-check against the f32 reference (bf16 MXU inputs -> loose tolerance).
    ref = jax.block_until_ready(reference_forward(x, params))
    err = float(jnp.max(jnp.abs(out - ref)))
    assert err < 5e-2, f"max |pallas - reference| = {err}"

    print("KERNEL_OK")
</pallas_src>

<mosaic_0001>
module attributes {stable_mosaic.version = 11 : i64} {
  func.func @_shoe_cnn_kernel(%arg0: i32, %arg1: memref<2x20x128xbf16, #tpu.memory_space<vmem>>, %arg2: memref<640x512xbf16, #tpu.memory_space<vmem>>, %arg3: memref<1x512xf32, #tpu.memory_space<vmem>>, %arg4: memref<768x512xbf16, #tpu.memory_space<vmem>>, %arg5: memref<1x512xf32, #tpu.memory_space<vmem>>, %arg6: memref<768x512xbf16, #tpu.memory_space<vmem>>, %arg7: memref<1x512xf32, #tpu.memory_space<vmem>>, %arg8: memref<3x512x512xbf16, #tpu.memory_space<vmem>>, %arg9: memref<40x32xbf16, #tpu.memory_space<vmem>>, %arg10: memref<24x16xbf16, #tpu.memory_space<vmem>>, %arg11: memref<8x8xbf16, #tpu.memory_space<vmem>>, %arg12: memref<512x128xbf16, #tpu.memory_space<vmem>>, %arg13: memref<1x128xf32, #tpu.memory_space<vmem>>, %arg14: memref<128x128xbf16, #tpu.memory_space<vmem>>, %arg15: memref<1x128xf32, #tpu.memory_space<vmem>>, %arg16: memref<128x128xbf16, #tpu.memory_space<vmem>>, %arg17: memref<1x128xf32, #tpu.memory_space<vmem>>, %arg18: memref<2x128xf32, #tpu.memory_space<vmem>>, %arg19: memref<2x10x256xbf16, #tpu.memory_space<vmem>>, %arg20: memref<2x6x256xbf16, #tpu.memory_space<vmem>>) attributes {dimension_semantics = [#tpu.dimension_semantics<parallel>], iteration_bounds = array<i64: 1>, scalar_prefetch = 0 : i64, scratch_operands = 2 : i64, tpu.core_type = #tpu.core_type<tc>, window_params = [{transform_indices = @transform_0, window_bounds = array<i64: 2, 20, 128>}, {pipeline_mode = #tpu.pipeline_mode<synchronous>, transform_indices = @transform_1, window_bounds = array<i64: 640, 512>}, {pipeline_mode = #tpu.pipeline_mode<synchronous>, transform_indices = @transform_2, window_bounds = array<i64: 1, 512>}, {pipeline_mode = #tpu.pipeline_mode<synchronous>, transform_indices = @transform_3, window_bounds = array<i64: 768, 512>}, {pipeline_mode = #tpu.pipeline_mode<synchronous>, transform_indices = @transform_4, window_bounds = array<i64: 1, 512>}, {pipeline_mode = #tpu.pipeline_mode<synchronous>, transform_indices = @transform_5, window_bounds = array<i64: 768, 512>}, {pipeline_mode = #tpu.pipeline_mode<synchronous>, transform_indices = @transform_6, window_bounds = array<i64: 1, 512>}, {pipeline_mode = #tpu.pipeline_mode<synchronous>, transform_indices = @transform_7, window_bounds = array<i64: 3, 512, 512>}, {pipeline_mode = #tpu.pipeline_mode<synchronous>, transform_indices = @transform_8, window_bounds = array<i64: 40, 32>}, {pipeline_mode = #tpu.pipeline_mode<synchronous>, transform_indices = @transform_9, window_bounds = array<i64: 24, 16>}, {pipeline_mode = #tpu.pipeline_mode<synchronous>, transform_indices = @transform_10, window_bounds = array<i64: 8, 8>}, {pipeline_mode = #tpu.pipeline_mode<synchronous>, transform_indices = @transform_11, window_bounds = array<i64: 512, 128>}, {pipeline_mode = #tpu.pipeline_mode<synchronous>, transform_indices = @transform_12, window_bounds = array<i64: 1, 128>}, {pipeline_mode = #tpu.pipeline_mode<synchronous>, transform_indices = @transform_13, window_bounds = array<i64: 128, 128>}, {pipeline_mode = #tpu.pipeline_mode<synchronous>, transform_indices = @transform_14, window_bounds = array<i64: 1, 128>}, {pipeline_mode = #tpu.pipeline_mode<synchronous>, transform_indices = @transform_15, window_bounds = array<i64: 128, 128>}, {pipeline_mode = #tpu.pipeline_mode<synchronous>, transform_indices = @transform_16, window_bounds = array<i64: 1, 128>}, {transform_indices = @transform_17, window_bounds = array<i64: 2, 128>}]} {
    %c0 = arith.constant 0 : index
    %c0_0 = arith.constant 0 : index
    %c0_1 = arith.constant 0 : index
    %0 = vector.load %arg1[%c0, %c0_0, %c0_1] : memref<2x20x128xbf16, #tpu.memory_space<vmem>>, vector<2x16x128xbf16>
    %1 = vector.shape_cast %0 : vector<2x16x128xbf16> to vector<32x128xbf16>
    %c0_2 = arith.constant 0 : index
    %c1 = arith.constant 1 : index
    %c0_3 = arith.constant 0 : index
    %2 = vector.load %arg1[%c0_2, %c1, %c0_3] : memref<2x20x128xbf16, #tpu.memory_space<vmem>>, vector<2x16x128xbf16>
    %3 = vector.shape_cast %2 : vector<2x16x128xbf16> to vector<32x128xbf16>
    %c0_4 = arith.constant 0 : index
    %c2 = arith.constant 2 : index
    %c0_5 = arith.constant 0 : index
    %4 = vector.load %arg1[%c0_4, %c2, %c0_5] : memref<2x20x128xbf16, #tpu.memory_space<vmem>>, vector<2x16x128xbf16>
    %5 = vector.shape_cast %4 : vector<2x16x128xbf16> to vector<32x128xbf16>
    %c0_6 = arith.constant 0 : index
    %c3 = arith.constant 3 : index
    %c0_7 = arith.constant 0 : index
    %6 = vector.load %arg1[%c0_6, %c3, %c0_7] : memref<2x20x128xbf16, #tpu.memory_space<vmem>>, vector<2x16x128xbf16>
    %7 = vector.shape_cast %6 : vector<2x16x128xbf16> to vector<32x128xbf16>
    %c0_8 = arith.constant 0 : index
    %c4 = arith.constant 4 : index
    %c0_9 = arith.constant 0 : index
    %8 = vector.load %arg1[%c0_8, %c4, %c0_9] : memref<2x20x128xbf16, #tpu.memory_space<vmem>>, vector<2x16x128xbf16>
    %9 = vector.shape_cast %8 : vector<2x16x128xbf16> to vector<32x128xbf16>
    %10 = tpu.concatenate %1, %3, %5, %7, %9 in 1 : vector<32x128xbf16>, vector<32x128xbf16>, vector<32x128xbf16>, vector<32x128xbf16>, vector<32x128xbf16> -> vector<32x640xbf16>
    %c0_10 = arith.constant 0 : index
    %c0_11 = arith.constant 0 : index
    %11 = vector.load %arg2[%c0_10, %c0_11] : memref<640x512xbf16, #tpu.memory_space<vmem>>, vector<640x512xbf16>
    %cst = arith.constant dense<0.000000e+00> : vector<32x512xf32>
    %12 = tpu.matmul %10, %11, %cst {dimension_numbers = #tpu.dot_dimension_numbers<[1], [0], [0], [1], [0, 0, 1, 1], [], []>} : vector<32x640xbf16>, vector<640x512xbf16>, vector<32x512xf32> -> vector<32x512xf32>
    %c0_12 = arith.constant 0 : index
    %c0_13 = arith.constant 0 : index
    %13 = vector.load %arg3[%c0_12, %c0_13] : memref<1x512xf32, #tpu.memory_space<vmem>>, vector<1x512xf32>
    %14 = vector.broadcast %13 : vector<1x512xf32> to vector<32x512xf32>
    %15 = arith.addf %12, %14 : vector<32x512xf32>
    %cst_14 = arith.constant 0.000000e+00 : f32
    %16 = vector.broadcast %cst_14 : f32 to vector<32x512xf32>
    %17 = arith.maximumf %15, %16 : vector<32x512xf32>
    %18 = arith.truncf %17 : vector<32x512xf32> to vector<32x512xbf16>
    %c0_15 = arith.constant 0 : index
    %c0_16 = arith.constant 0 : index
    %c0_17 = arith.constant 0 : index
    %19 = vector.load %arg8[%c0_15, %c0_16, %c0_17] : memref<3x512x512xbf16, #tpu.memory_space<vmem>>, vector<1x512x512xbf16>
    %20 = vector.shape_cast %19 : vector<1x512x512xbf16> to vector<512x512xbf16>
    %cst_18 = arith.constant dense<0.000000e+00> : vector<32x512xf32>
    %21 = tpu.matmul %18, %20, %cst_18 {dimension_numbers = #tpu.dot_dimension_numbers<[1], [0], [0], [1], [0, 0, 1, 1], [], []>} : vector<32x512xbf16>, vector<512x512xbf16>, vector<32x512xf32> -> vector<32x512xf32>
    %22 = vector.extract_strided_slice %21 {offsets = [0, 0], sizes = [32, 256], strides = [1, 1]} : vector<32x512xf32> to vector<32x256xf32>
    %23 = vector.extract_strided_slice %21 {offsets = [0, 256], sizes = [32, 256], strides = [1, 1]} : vector<32x512xf32> to vector<32x256xf32>
    %24 = arith.maximumf %22, %23 : vector<32x256xf32>
    %25 = arith.truncf %24 : vector<32x256xf32> to vector<32x256xbf16>
    %c0_19 = arith.constant 0 : index
    %c0_20 = arith.constant 0 : index
    %26 = vector.load %arg9[%c0_19, %c0_20] : memref<40x32xbf16, #tpu.memory_space<vmem>>, vector<40x32xbf16>
    %cst_21 = arith.constant dense<0.000000e+00> : vector<40x256xf32>
    %27 = tpu.matmul %26, %25, %cst_21 {dimension_numbers = #tpu.dot_dimension_numbers<[1], [0], [0], [1], [0, 0, 1, 1], [], []>} : vector<40x32xbf16>, vector<32x256xbf16>, vector<40x256xf32> -> vector<40x256xf32>
    %28 = vector.extract_strided_slice %27 {offsets = [0, 0], sizes = [20, 256], strides = [1, 1]} : vector<40x256xf32> to vector<20x256xf32>
    %29 = vector.extract_strided_slice %27 {offsets = [20, 0], sizes = [20, 256], strides = [1, 1]} : vector<40x256xf32> to vector<20x256xf32>
    %30 = arith.maximumf %28, %29 : vector<20x256xf32>
    %31 = arith.truncf %30 : vector<20x256xf32> to vector<20x256xbf16>
    %32 = vector.shape_cast %31 : vector<20x256xbf16> to vector<2x10x256xbf16>
    %c0_22 = arith.constant 0 : index
    %c0_23 = arith.constant 0 : index
    %c0_24 = arith.constant 0 : index
    %33 = vector.load %arg19[%c0_22, %c0_23, %c0_24] : memref<2x10x256xbf16, #tpu.memory_space<vmem>>, vector<2x10x256xbf16>
    tpu.vector_store %arg19[%c0_22, %c0_23, %c0_24], %32 {strides = array<i32>} : memref<2x10x256xbf16, #tpu.memory_space<vmem>>, vector<2x10x256xbf16>,
    %c0_25 = arith.constant 0 : index
    %c0_26 = arith.constant 0 : index
    %c0_27 = arith.constant 0 : index
    %34 = vector.load %arg19[%c0_25, %c0_26, %c0_27] : memref<2x10x256xbf16, #tpu.memory_space<vmem>>, vector<2x8x256xbf16>
    %35 = vector.shape_cast %34 : vector<2x8x256xbf16> to vector<16x256xbf16>
    %c0_28 = arith.constant 0 : index
    %c1_29 = arith.constant 1 : index
    %c0_30 = arith.constant 0 : index
    %36 = vector.load %arg19[%c0_28, %c1_29, %c0_30] : memref<2x10x256xbf16, #tpu.memory_space<vmem>>, vector<2x8x256xbf16>
    %37 = vector.shape_cast %36 : vector<2x8x256xbf16> to vector<16x256xbf16>
    %c0_31 = arith.constant 0 : index
    %c2_32 = arith.constant 2 : index
    %c0_33 = arith.constant 0 : index
    %38 = vector.load %arg19[%c0_31, %c2_32, %c0_33] : memref<2x10x256xbf16, #tpu.memory_space<vmem>>, vector<2x8x256xbf16>
    %39 = vector.shape_cast %38 : vector<2x8x256xbf16> to vector<16x256xbf16>
    %40 = tpu.concatenate %35, %37, %39 in 1 : vector<16x256xbf16>, vector<16x256xbf16>, vector<16x256xbf16> -> vector<16x768xbf16>
    %c0_34 = arith.constant 0 : index
    %c0_35 = arith.constant 0 : index
    %41 = vector.load %arg4[%c0_34, %c0_35] : memref<768x512xbf16, #tpu.memory_space<vmem>>, vector<768x512xbf16>
    %cst_36 = arith.constant dense<0.000000e+00> : vector<16x512xf32>
    %42 = tpu.matmul %40, %41, %cst_36 {dimension_numbers = #tpu.dot_dimension_numbers<[1], [0], [0], [1], [0, 0, 1, 1], [], []>} : vector<16x768xbf16>, vector<768x512xbf16>, vector<16x512xf32> -> vector<16x512xf32>
    %c0_37 = arith.constant 0 : index
    %c0_38 = arith.constant 0 : index
    %43 = vector.load %arg5[%c0_37, %c0_38] : memref<1x512xf32, #tpu.memory_space<vmem>>, vector<1x512xf32>
    %44 = vector.broadcast %43 : vector<1x512xf32> to vector<16x512xf32>
    %45 = arith.addf %42, %44 : vector<16x512xf32>
    %cst_39 = arith.constant 0.000000e+00 : f32
    %46 = vector.broadcast %cst_39 : f32 to vector<16x512xf32>
    %47 = arith.maximumf %45, %46 : vector<16x512xf32>
    %48 = arith.truncf %47 : vector<16x512xf32> to vector<16x512xbf16>
    %c1_40 = arith.constant 1 : index
    %c0_41 = arith.constant 0 : index
    %c0_42 = arith.constant 0 : index
    %49 = vector.load %arg8[%c1_40, %c0_41, %c0_42] : memref<3x512x512xbf16, #tpu.memory_space<vmem>>, vector<1x512x512xbf16>
    %50 = vector.shape_cast %49 : vector<1x512x512xbf16> to vector<512x512xbf16>
    %cst_43 = arith.constant dense<0.000000e+00> : vector<16x512xf32>
    %51 = tpu.matmul %48, %50, %cst_43 {dimension_numbers = #tpu.dot_dimension_numbers<[1], [0], [0], [1], [0, 0, 1, 1], [], []>} : vector<16x512xbf16>, vector<512x512xbf16>, vector<16x512xf32> -> vector<16x512xf32>
    %52 = vector.extract_strided_slice %51 {offsets = [0, 0], sizes = [16, 256], strides = [1, 1]} : vector<16x512xf32> to vector<16x256xf32>
    %53 = vector.extract_strided_slice %51 {offsets = [0, 256], sizes = [16, 256], strides = [1, 1]} : vector<16x512xf32> to vector<16x256xf32>
    %54 = arith.maximumf %52, %53 : vector<16x256xf32>
    %55 = arith.truncf %54 : vector<16x256xf32> to vector<16x256xbf16>
    %c0_44 = arith.constant 0 : index
    %c0_45 = arith.constant 0 : index
    %56 = vector.load %arg10[%c0_44, %c0_45] : memref<24x16xbf16, #tpu.memory_space<vmem>>, vector<24x16xbf16>
    %cst_46 = arith.constant dense<0.000000e+00> : vector<24x256xf32>
    %57 = tpu.matmul %56, %55, %cst_46 {dimension_numbers = #tpu.dot_dimension_numbers<[1], [0], [0], [1], [0, 0, 1, 1], [], []>} : vector<24x16xbf16>, vector<16x256xbf16>, vector<24x256xf32> -> vector<24x256xf32>
    %58 = vector.extract_strided_slice %57 {offsets = [0, 0], sizes = [12, 256], strides = [1, 1]} : vector<24x256xf32> to vector<12x256xf32>
    %59 = vector.extract_strided_slice %57 {offsets = [12, 0], sizes = [12, 256], strides = [1, 1]} : vector<24x256xf32> to vector<12x256xf32>
    %60 = arith.maximumf %58, %59 : vector<12x256xf32>
    %61 = arith.truncf %60 : vector<12x256xf32> to vector<12x256xbf16>
    %62 = vector.shape_cast %61 : vector<12x256xbf16> to vector<2x6x256xbf16>
    %c0_47 = arith.constant 0 : index
    %c0_48 = arith.constant 0 : index
    %c0_49 = arith.constant 0 : index
    %63 = vector.load %arg20[%c0_47, %c0_48, %c0_49] : memref<2x6x256xbf16, #tpu.memory_space<vmem>>, vector<2x6x256xbf16>
    tpu.vector_store %arg20[%c0_47, %c0_48, %c0_49], %62 {strides = array<i32>} : memref<2x6x256xbf16, #tpu.memory_space<vmem>>, vector<2x6x256xbf16>,
    %c0_50 = arith.constant 0 : index
    %c0_51 = arith.constant 0 : index
    %c0_52 = arith.constant 0 : index
    %64 = vector.load %arg20[%c0_50, %c0_51, %c0_52] : memref<2x6x256xbf16, #tpu.memory_space<vmem>>, vector<2x4x256xbf16>
    %65 = vector.shape_cast %64 : vector<2x4x256xbf16> to vector<8x256xbf16>
    %c0_53 = arith.constant 0 : index
    %c1_54 = arith.constant 1 : index
    %c0_55 = arith.constant 0 : index
    %66 = vector.load %arg20[%c0_53, %c1_54, %c0_55] : memref<2x6x256xbf16, #tpu.memory_space<vmem>>, vector<2x4x256xbf16>
    %67 = vector.shape_cast %66 : vector<2x4x256xbf16> to vector<8x256xbf16>
    %c0_56 = arith.constant 0 : index
    %c2_57 = arith.constant 2 : index
    %c0_58 = arith.constant 0 : index
    %68 = vector.load %arg20[%c0_56, %c2_57, %c0_58] : memref<2x6x256xbf16, #tpu.memory_space<vmem>>, vector<2x4x256xbf16>
    %69 = vector.shape_cast %68 : vector<2x4x256xbf16> to vector<8x256xbf16>
    %70 = tpu.concatenate %65, %67, %69 in 1 : vector<8x256xbf16>, vector<8x256xbf16>, vector<8x256xbf16> -> vector<8x768xbf16>
    %c0_59 = arith.constant 0 : index
    %c0_60 = arith.constant 0 : index
    %71 = vector.load %arg6[%c0_59, %c0_60] : memref<768x512xbf16, #tpu.memory_space<vmem>>, vector<768x512xbf16>
    %cst_61 = arith.constant dense<0.000000e+00> : vector<8x512xf32>
    %72 = tpu.matmul %70, %71, %cst_61 {dimension_numbers = #tpu.dot_dimension_numbers<[1], [0], [0], [1], [0, 0, 1, 1], [], []>} : vector<8x768xbf16>, vector<768x512xbf16>, vector<8x512xf32> -> vector<8x512xf32>
    %c0_62 = arith.constant 0 : index
    %c0_63 = arith.constant 0 : index
    %73 = vector.load %arg7[%c0_62, %c0_63] : memref<1x512xf32, #tpu.memory_space<vmem>>, vector<1x512xf32>
    %74 = vector.broadcast %73 : vector<1x512xf32> to vector<8x512xf32>
    %75 = arith.addf %72, %74 : vector<8x512xf32>
    %cst_64 = arith.constant 0.000000e+00 : f32
    %76 = vector.broadcast %cst_64 : f32 to vector<8x512xf32>
    %77 = arith.maximumf %75, %76 : vector<8x512xf32>
    %78 = arith.truncf %77 : vector<8x512xf32> to vector<8x512xbf16>
    %c2_65 = arith.constant 2 : index
    %c0_66 = arith.constant 0 : index
    %c0_67 = arith.constant 0 : index
    %79 = vector.load %arg8[%c2_65, %c0_66, %c0_67] : memref<3x512x512xbf16, #tpu.memory_space<vmem>>, vector<1x512x512xbf16>
    %80 = vector.shape_cast %79 : vector<1x512x512xbf16> to vector<512x512xbf16>
    %cst_68 = arith.constant dense<0.000000e+00> : vector<8x512xf32>
    %81 = tpu.matmul %78, %80, %cst_68 {dimension_numbers = #tpu.dot_dimension_numbers<[1], [0], [0], [1], [0, 0, 1, 1], [], []>} : vector<8x512xbf16>, vector<512x512xbf16>, vector<8x512xf32> -> vector<8x512xf32>
    %82 = vector.extract_strided_slice %81 {offsets = [0, 0], sizes = [8, 256], strides = [1, 1]} : vector<8x512xf32> to vector<8x256xf32>
    %83 = vector.extract_strided_slice %81 {offsets = [0, 256], sizes = [8, 256], strides = [1, 1]} : vector<8x512xf32> to vector<8x256xf32>
    %84 = arith.maximumf %82, %83 : vector<8x256xf32>
    %85 = arith.truncf %84 : vector<8x256xf32> to vector<8x256xbf16>
    %c0_69 = arith.constant 0 : index
    %c0_70 = arith.constant 0 : index
    %86 = vector.load %arg11[%c0_69, %c0_70] : memref<8x8xbf16, #tpu.memory_space<vmem>>, vector<8x8xbf16>
    %cst_71 = arith.constant dense<0.000000e+00> : vector<8x256xf32>
    %87 = tpu.matmul %86, %85, %cst_71 {dimension_numbers = #tpu.dot_dimension_numbers<[1], [0], [0], [1], [0, 0, 1, 1], [], []>} : vector<8x8xbf16>, vector<8x256xbf16>, vector<8x256xf32> -> vector<8x256xf32>
    %88 = vector.extract_strided_slice %87 {offsets = [0, 0], sizes = [4, 256], strides = [1, 1]} : vector<8x256xf32> to vector<4x256xf32>
    %89 = vector.extract_strided_slice %87 {offsets = [4, 0], sizes = [4, 256], strides = [1, 1]} : vector<8x256xf32> to vector<4x256xf32>
    %90 = arith.maximumf %88, %89 : vector<4x256xf32>
    %91 = arith.truncf %90 : vector<4x256xf32> to vector<4x256xbf16>
    %92 = vector.extract_strided_slice %91 {offsets = [0, 0], sizes = [2, 256], strides = [1, 1]} : vector<4x256xbf16> to vector<2x256xbf16>
    %93 = vector.extract_strided_slice %91 {offsets = [2, 0], sizes = [2, 256], strides = [1, 1]} : vector<4x256xbf16> to vector<2x256xbf16>
    %94 = tpu.concatenate %92, %93 in 1 : vector<2x256xbf16>, vector<2x256xbf16> -> vector<2x512xbf16>
    %c0_72 = arith.constant 0 : index
    %c0_73 = arith.constant 0 : index
    %95 = vector.load %arg12[%c0_72, %c0_73] : memref<512x128xbf16, #tpu.memory_space<vmem>>, vector<512x128xbf16>
    %cst_74 = arith.constant dense<0.000000e+00> : vector<2x128xf32>
    %96 = tpu.matmul %94, %95, %cst_74 {dimension_numbers = #tpu.dot_dimension_numbers<[1], [0], [0], [1], [0, 0, 1, 1], [], []>} : vector<2x512xbf16>, vector<512x128xbf16>, vector<2x128xf32> -> vector<2x128xf32>
    %c0_75 = arith.constant 0 : index
    %c0_76 = arith.constant 0 : index
    %97 = vector.load %arg13[%c0_75, %c0_76] : memref<1x128xf32, #tpu.memory_space<vmem>>, vector<1x128xf32>
    %98 = vector.broadcast %97 : vector<1x128xf32> to vector<2x128xf32>
    %99 = arith.addf %96, %98 : vector<2x128xf32>
    %cst_77 = arith.constant 0.000000e+00 : f32
    %100 = vector.broadcast %cst_77 : f32 to vector<2x128xf32>
    %101 = arith.maximumf %99, %100 : vector<2x128xf32>
    %102 = arith.truncf %101 : vector<2x128xf32> to vector<2x128xbf16>
    %c0_78 = arith.constant 0 : index
    %c0_79 = arith.constant 0 : index
    %103 = vector.load %arg14[%c0_78, %c0_79] : memref<128x128xbf16, #tpu.memory_space<vmem>>, vector<128x128xbf16>
    %cst_80 = arith.constant dense<0.000000e+00> : vector<2x128xf32>
    %104 = tpu.matmul %102, %103, %cst_80 {dimension_numbers = #tpu.dot_dimension_numbers<[1], [0], [0], [1], [0, 0, 1, 1], [], []>} : vector<2x128xbf16>, vector<128x128xbf16>, vector<2x128xf32> -> vector<2x128xf32>
    %c0_81 = arith.constant 0 : index
    %c0_82 = arith.constant 0 : index
    %105 = vector.load %arg15[%c0_81, %c0_82] : memref<1x128xf32, #tpu.memory_space<vmem>>, vector<1x128xf32>
    %106 = vector.broadcast %105 : vector<1x128xf32> to vector<2x128xf32>
    %107 = arith.addf %104, %106 : vector<2x128xf32>
    %cst_83 = arith.constant 0.000000e+00 : f32
    %108 = vector.broadcast %cst_83 : f32 to vector<2x128xf32>
    %109 = arith.maximumf %107, %108 : vector<2x128xf32>
    %110 = arith.truncf %109 : vector<2x128xf32> to vector<2x128xbf16>
    %c0_84 = arith.constant 0 : index
    %c0_85 = arith.constant 0 : index
    %111 = vector.load %arg16[%c0_84, %c0_85] : memref<128x128xbf16, #tpu.memory_space<vmem>>, vector<128x128xbf16>
    %cst_86 = arith.constant dense<0.000000e+00> : vector<2x128xf32>
    %112 = tpu.matmul %110, %111, %cst_86 {dimension_numbers = #tpu.dot_dimension_numbers<[1], [0], [0], [1], [0, 0, 1, 1], [], []>} : vector<2x128xbf16>, vector<128x128xbf16>, vector<2x128xf32> -> vector<2x128xf32>
    %c0_87 = arith.constant 0 : index
    %c0_88 = arith.constant 0 : index
    %113 = vector.load %arg17[%c0_87, %c0_88] : memref<1x128xf32, #tpu.memory_space<vmem>>, vector<1x128xf32>
    %114 = vector.broadcast %113 : vector<1x128xf32> to vector<2x128xf32>
    %115 = arith.addf %112, %114 : vector<2x128xf32>
    %c0_89 = arith.constant 0 : index
    %c0_90 = arith.constant 0 : index
    %116 = vector.load %arg18[%c0_89, %c0_90] : memref<2x128xf32, #tpu.memory_space<vmem>>, vector<2x128xf32>
    tpu.vector_store %arg18[%c0_89, %c0_90], %115 {strides = array<i32>} : memref<2x128xf32, #tpu.memory_space<vmem>>, vector<2x128xf32>,
    return
  }
  func.func @transform_0(%arg0: i32) -> (i32, i32, i32) {
    %c0_i32 = arith.constant 0 : i32
    %c0_i32_0 = arith.constant 0 : i32
    %c0_i32_1 = arith.constant 0 : i32
    return %arg0, %c0_i32, %c0_i32_0 : i32, i32, i32
  }
  func.func @transform_1(%arg0: i32) -> (i32, i32) {
    %c0_i32 = arith.constant 0 : i32
    %c0_i32_0 = arith.constant 0 : i32
    %c0_i32_1 = arith.constant 0 : i32
    return %c0_i32, %c0_i32_0 : i32, i32
  }
  func.func @transform_2(%arg0: i32) -> (i32, i32) {
    %c0_i32 = arith.constant 0 : i32
    %c0_i32_0 = arith.constant 0 : i32
    %c0_i32_1 = arith.constant 0 : i32
    return %c0_i32, %c0_i32_0 : i32, i32
  }
  func.func @transform_3(%arg0: i32) -> (i32, i32) {
    %c0_i32 = arith.constant 0 : i32
    %c0_i32_0 = arith.constant 0 : i32
    %c0_i32_1 = arith.constant 0 : i32
    return %c0_i32, %c0_i32_0 : i32, i32
  }
  func.func @transform_4(%arg0: i32) -> (i32, i32) {
    %c0_i32 = arith.constant 0 : i32
    %c0_i32_0 = arith.constant 0 : i32
    %c0_i32_1 = arith.constant 0 : i32
    return %c0_i32, %c0_i32_0 : i32, i32
  }
  func.func @transform_5(%arg0: i32) -> (i32, i32) {
    %c0_i32 = arith.constant 0 : i32
    %c0_i32_0 = arith.constant 0 : i32
    %c0_i32_1 = arith.constant 0 : i32
    return %c0_i32, %c0_i32_0 : i32, i32
  }
  func.func @transform_6(%arg0: i32) -> (i32, i32) {
    %c0_i32 = arith.constant 0 : i32
    %c0_i32_0 = arith.constant 0 : i32
    %c0_i32_1 = arith.constant 0 : i32
    return %c0_i32, %c0_i32_0 : i32, i32
  }
  func.func @transform_7(%arg0: i32) -> (i32, i32, i32) {
    %c0_i32 = arith.constant 0 : i32
    %c0_i32_0 = arith.constant 0 : i32
    %c0_i32_1 = arith.constant 0 : i32
    %c0_i32_2 = arith.constant 0 : i32
    return %c0_i32, %c0_i32_0, %c0_i32_1 : i32, i32, i32
  }
  func.func @transform_8(%arg0: i32) -> (i32, i32) {
    %c0_i32 = arith.constant 0 : i32
    %c0_i32_0 = arith.constant 0 : i32
    %c0_i32_1 = arith.constant 0 : i32
    return %c0_i32, %c0_i32_0 : i32, i32
  }
  func.func @transform_9(%arg0: i32) -> (i32, i32) {
    %c0_i32 = arith.constant 0 : i32
    %c0_i32_0 = arith.constant 0 : i32
    %c0_i32_1 = arith.constant 0 : i32
    return %c0_i32, %c0_i32_0 : i32, i32
  }
  func.func @transform_10(%arg0: i32) -> (i32, i32) {
    %c0_i32 = arith.constant 0 : i32
    %c0_i32_0 = arith.constant 0 : i32
    %c0_i32_1 = arith.constant 0 : i32
    return %c0_i32, %c0_i32_0 : i32, i32
  }
  func.func @transform_11(%arg0: i32) -> (i32, i32) {
    %c0_i32 = arith.constant 0 : i32
    %c0_i32_0 = arith.constant 0 : i32
    %c0_i32_1 = arith.constant 0 : i32
    return %c0_i32, %c0_i32_0 : i32, i32
  }
  func.func @transform_12(%arg0: i32) -> (i32, i32) {
    %c0_i32 = arith.constant 0 : i32
    %c0_i32_0 = arith.constant 0 : i32
    %c0_i32_1 = arith.constant 0 : i32
    return %c0_i32, %c0_i32_0 : i32, i32
  }
  func.func @transform_13(%arg0: i32) -> (i32, i32) {
    %c0_i32 = arith.constant 0 : i32
    %c0_i32_0 = arith.constant 0 : i32
    %c0_i32_1 = arith.constant 0 : i32
    return %c0_i32, %c0_i32_0 : i32, i32
  }
  func.func @transform_14(%arg0: i32) -> (i32, i32) {
    %c0_i32 = arith.constant 0 : i32
    %c0_i32_0 = arith.constant 0 : i32
    %c0_i32_1 = arith.constant 0 : i32
    return %c0_i32, %c0_i32_0 : i32, i32
  }
  func.func @transform_15(%arg0: i32) -> (i32, i32) {
    %c0_i32 = arith.constant 0 : i32
    %c0_i32_0 = arith.constant 0 : i32
    %c0_i32_1 = arith.constant 0 : i32
    return %c0_i32, %c0_i32_0 : i32, i32
  }
  func.func @transform_16(%arg0: i32) -> (i32, i32) {
    %c0_i32 = arith.constant 0 : i32
    %c0_i32_0 = arith.constant 0 : i32
    %c0_i32_1 = arith.constant 0 : i32
    return %c0_i32, %c0_i32_0 : i32, i32
  }
  func.func @transform_17(%arg0: i32) -> (i32, i32) {
    %c0_i32 = arith.constant 0 : i32
    %c0_i32_0 = arith.constant 0 : i32
    return %arg0, %c0_i32 : i32, i32
  }
}

</mosaic_0001>

<llo_original>
// kernel: shoe_cnn_forward.1
$region0: #{shoe_cnn_forward.1}
  #allocation0 [shape = 'u32[]', space=smem, size = 0x4, offset = 0x4, fixed_abs, tag = 'smem constant byte address 0x4 - core index']
  #allocation1 [shape = 'u32[72,128]{1,0:T(1,128)}', space=vmem, size = 0x9000, scoped, tag = 'internal scratch']
  #allocation2 [shape = 'bf16[2,10,256]{2,1,0:T(8,128)(2,1)}', space=vmem, size = 0x4000, scoped, tag = 'scratch operand']
  #allocation3 [shape = 'bf16[2,6,256]{2,1,0:T(8,128)(2,1)}', space=vmem, size = 0x2000, scoped, tag = 'scratch operand']
  %s0 = inlined_call_operand.vmem [shape: bf16[2,20,128], index: 0, kind: input, shape index: {}]
  %s1 = inlined_call_operand.hbm [shape: bf16[640,512], index: 1, kind: input, shape index: {}]
  %s2 = inlined_call_operand.hbm [shape: f32[1,512], index: 2, kind: input, shape index: {}]
  %s3 = inlined_call_operand.hbm [shape: bf16[768,512], index: 3, kind: input, shape index: {}]
  %s4 = inlined_call_operand.hbm [shape: f32[1,512], index: 4, kind: input, shape index: {}]
  %s5 = inlined_call_operand.hbm [shape: bf16[768,512], index: 5, kind: input, shape index: {}]
  %s6 = inlined_call_operand.hbm [shape: f32[1,512], index: 6, kind: input, shape index: {}]
  %s7 = inlined_call_operand.hbm [shape: bf16[3,512,512], index: 7, kind: input, shape index: {}]
  %s8 = inlined_call_operand.hbm [shape: bf16[40,32], index: 8, kind: input, shape index: {}]
  %s9 = inlined_call_operand.hbm [shape: bf16[24,16], index: 9, kind: input, shape index: {}]
  %s10 = inlined_call_operand.hbm [shape: bf16[8,8], index: 10, kind: input, shape index: {}]
  %s11 = inlined_call_operand.hbm [shape: bf16[512,128], index: 11, kind: input, shape index: {}]
  %s12 = inlined_call_operand.hbm [shape: f32[1,128], index: 12, kind: input, shape index: {}]
  %s13 = inlined_call_operand.hbm [shape: bf16[128,128], index: 13, kind: input, shape index: {}]
  %s14 = inlined_call_operand.hbm [shape: f32[1,128], index: 14, kind: input, shape index: {}]
  %s15 = inlined_call_operand.hbm [shape: bf16[128,128], index: 15, kind: input, shape index: {}]
  %s16 = inlined_call_operand.hbm [shape: f32[1,128], index: 16, kind: input, shape index: {}]
  %s17 = inlined_call_operand.vmem [shape: f32[2,128], index: 17, kind: output, shape index: {}]
  %s18 = sld [smem:[#allocation0]]
  $region142: #{shoe_cnn_forward.1} parent=0
    _
  %s20 = ssub.s32 1, %s18
  %s21 = scalar_select 0, %s20, %s18
  $region1: #{shoe_cnn_forward.1} parent=0
    #allocation4 [shape = 'u8[655360]{0}', space=vmem, size = 0xa0000, scoped, tag = 'input window, operand 1, single buffered']
    #allocation5 [shape = 's32[1]{0}', space=sflag, size = 0x4, scoped, tag = 'scoped memory for shoe_cnn_forward.1']
    #allocation6 [shape = 'u8[2048]{0}', space=vmem, size = 0x800, scoped, tag = 'input window, operand 2, single buffered']
    #allocation7 [shape = 's32[1]{0}', space=sflag, size = 0x4, scoped, tag = 'scoped memory for shoe_cnn_forward.1']
    #allocation8 [shape = 'u8[786432]{0}', space=vmem, size = 0xc0000, scoped, tag = 'input window, operand 3, single buffered']
    #allocation9 [shape = 'u8[2048]{0}', space=vmem, size = 0x800, scoped, tag = 'input window, operand 4, single buffered']
    #allocation10 [shape = 's32[1]{0}', space=sflag, size = 0x4, scoped, tag = 'scoped memory for shoe_cnn_forward.1']
    #allocation11 [shape = 'u8[786432]{0}', space=vmem, size = 0xc0000, scoped, tag = 'input window, operand 5, single buffered']
    #allocation12 [shape = 'u8[2048]{0}', space=vmem, size = 0x800, scoped, tag = 'input window, operand 6, single buffered']
    #allocation13 [shape = 's32[1]{0}', space=sflag, size = 0x4, scoped, tag = 'scoped memory for shoe_cnn_forward.1']
    #allocation14 [shape = 'u8[1572864]{0}', space=vmem, size = 0x180000, scoped, tag = 'input window, operand 7, single buffered']
    #allocation15 [shape = 'u8[10240]{0}', space=vmem, size = 0x2800, scoped, tag = 'input window, operand 8, single buffered']
    #allocation16 [shape = 's32[1]{0}', space=sflag, size = 0x4, scoped, tag = 'scoped memory for shoe_cnn_forward.1']
    #allocation17 [shape = 'u8[6144]{0}', space=vmem, size = 0x1800, scoped, tag = 'input window, operand 9, single buffered']
    #allocation18 [shape = 'u8[2048]{0}', space=vmem, size = 0x800, scoped, tag = 'input window, operand 10, single buffered']
    #allocation19 [shape = 's32[1]{0}', space=sflag, size = 0x4, scoped, tag = 'scoped memory for shoe_cnn_forward.1']
    #allocation20 [shape = 'u8[131072]{0}', space=vmem, size = 0x20000, scoped, tag = 'input window, operand 11, single buffered']
    #allocation21 [shape = 'u8[512]{0}', space=vmem, size = 0x400, scoped, tag = 'input window, operand 12, single buffered']
    #allocation22 [shape = 's32[1]{0}', space=sflag, size = 0x4, scoped, tag = 'scoped memory for shoe_cnn_forward.1']
    #allocation23 [shape = 'u8[32768]{0}', space=vmem, size = 0x8000, scoped, tag = 'input window, operand 13, single buffered']
    #allocation24 [shape = 'u8[512]{0}', space=vmem, size = 0x400, scoped, tag = 'input window, operand 14, single buffered']
    #allocation25 [shape = 's32[1]{0}', space=sflag, size = 0x4, scoped, tag = 'scoped memory for shoe_cnn_forward.1']
    #allocation26 [shape = 'u8[32768]{0}', space=vmem, size = 0x8000, scoped, tag = 'input window, operand 15, single buffered']
    #allocation27 [shape = 'u8[512]{0}', space=vmem, size = 0x400, scoped, tag = 'input window, operand 16, single buffered']
    #allocation28 [shape = 's32[1]{0}', space=sflag, size = 0x4, scoped, tag = 'scoped memory for shoe_cnn_forward.1']
    %22 = vsyncpa [#allocation5], 0
    %23 = vsyncpa [#allocation7], 0
    %24 = vsyncpa [#allocation10], 0
    %25 = vsyncpa [#allocation13], 0
    %26 = vsyncpa [#allocation16], 0
    %27 = vsyncpa [#allocation19], 0
    %28 = vsyncpa [#allocation22], 0
    %29 = vsyncpa [#allocation25], 0
    %30 = vsyncpa [#allocation28], 0
    // Predicated region
    $region2: #{shoe_cnn_forward.1} parent=1 // pred_check
      _
    $region3: #{shoe_cnn_forward.1} parent=1 // pred_check_branch
      %32 = sbr.rel (0) target = $region5
    $region4: #{shoe_cnn_forward.1} parent=1 // pred_region
      _
    $region5: #{shoe_cnn_forward.1} parent=1 // pred_fallthru
      _
    // Predicated region
    $region6: #{shoe_cnn_forward.1} parent=1 // pred_check
      _
    $region7: #{shoe_cnn_forward.1} parent=1 // pred_check_branch
      %34 = sbr.rel (0) target = $region9
    $region8: #{shoe_cnn_forward.1} parent=1 // pred_region
      %36 = vsyncadd [#allocation5], 0
      %s37 = sshll.u32 %s1, 4
      %s38 = int_to_ptr.hbm [resolvable:$true] %s37
      %s39 = sshll.u32 [#allocation4], 4
      %s40 = int_to_ptr.vmem [resolvable:$true] %s39
      %45 = dma.hbm_to_vmem [thread:$0]  %s38, 20480, %s40, [#allocation5], 256, 256, 16
    $region9: #{shoe_cnn_forward.1} parent=1 // pred_fallthru
      _
    // Predicated region
    $region10: #{shoe_cnn_forward.1} parent=1 // pred_check
      _
    $region11: #{shoe_cnn_forward.1} parent=1 // pred_check_branch
      %47 = sbr.rel (0) target = $region13
    $region12: #{shoe_cnn_forward.1} parent=1 // pred_region
      %49 = vsyncadd [#allocation7], 0
      %s51 = sshll.u32 %s2, 4
      %s52 = int_to_ptr.hbm [resolvable:$true] %s51
      %s53 = sshll.u32 [#allocation6], 4
      %s54 = int_to_ptr.vmem [resolvable:$true] %s53
      %56 = dma.hbm_to_vmem [thread:$0]  %s52, 64, %s54, [#allocation7]
    $region13: #{shoe_cnn_forward.1} parent=1 // pred_fallthru
      _
    // Predicated region
    $region14: #{shoe_cnn_forward.1} parent=1 // pred_check
      _
    $region15: #{shoe_cnn_forward.1} parent=1 // pred_check_branch
      %58 = sbr.rel (0) target = $region17
    $region16: #{shoe_cnn_forward.1} parent=1 // pred_region
      %60 = vsyncadd [#allocation7], 0
      %s61 = sshll.u32 %s3, 4
      %s62 = int_to_ptr.hbm [resolvable:$true] %s61
      %s63 = sshll.u32 [#allocation8], 4
      %s64 = int_to_ptr.vmem [resolvable:$true] %s63
      %69 = dma.hbm_to_vmem [thread:$0]  %s62, 24576, %s64, [#allocation7], 256, 256, 16
    $region17: #{shoe_cnn_forward.1} parent=1 // pred_fallthru
      _
    // Predicated region
    $region18: #{shoe_cnn_forward.1} parent=1 // pred_check
      _
    $region19: #{shoe_cnn_forward.1} parent=1 // pred_check_branch
      %71 = sbr.rel (0) target = $region21
    $region20: #{shoe_cnn_forward.1} parent=1 // pred_region
      %73 = vsyncadd [#allocation10], 0
      %s75 = sshll.u32 %s4, 4
      %s76 = int_to_ptr.hbm [resolvable:$true] %s75
      %s77 = sshll.u32 [#allocation9], 4
      %s78 = int_to_ptr.vmem [resolvable:$true] %s77
      %80 = dma.hbm_to_vmem [thread:$0]  %s76, 64, %s78, [#allocation10]
    $region21: #{shoe_cnn_forward.1} parent=1 // pred_fallthru
      _
    // Predicated region
    $region22: #{shoe_cnn_forward.1} parent=1 // pred_check
      _
    $region23: #{shoe_cnn_forward.1} parent=1 // pred_check_branch
      %82 = sbr.rel (0) target = $region25
    $region24: #{shoe_cnn_forward.1} parent=1 // pred_region
      %84 = vsyncadd [#allocation10], 0
      %s85 = sshll.u32 %s5, 4
      %s86 = int_to_ptr.hbm [resolvable:$true] %s85
      %s87 = sshll.u32 [#allocation11], 4
      %s88 = int_to_ptr.vmem [resolvable:$true] %s87
      %93 = dma.hbm_to_vmem [thread:$0]  %s86, 24576, %s88, [#allocation10], 256, 256, 16
    $region25: #{shoe_cnn_forward.1} parent=1 // pred_fallthru
      _
    // Predicated region
    $region26: #{shoe_cnn_forward.1} parent=1 // pred_check
      _
    $region27: #{shoe_cnn_forward.1} parent=1 // pred_check_branch
      %95 = sbr.rel (0) target = $region29
    $region28: #{shoe_cnn_forward.1} parent=1 // pred_region
      %97 = vsyncadd [#allocation13], 0
      %s99 = sshll.u32 %s6, 4
      %s100 = int_to_ptr.hbm [resolvable:$true] %s99
      %s101 = sshll.u32 [#allocation12], 4
      %s102 = int_to_ptr.vmem [resolvable:$true] %s101
      %104 = dma.hbm_to_vmem [thread:$0]  %s100, 64, %s102, [#allocation13]
    $region29: #{shoe_cnn_forward.1} parent=1 // pred_fallthru
      _
    // Predicated region
    $region30: #{shoe_cnn_forward.1} parent=1 // pred_check
      _
    $region31: #{shoe_cnn_forward.1} parent=1 // pred_check_branch
      %106 = sbr.rel (0) target = $region33
    $region32: #{shoe_cnn_forward.1} parent=1 // pred_region
      %108 = vsyncadd [#allocation13], 0
      %s109 = sshll.u32 %s7, 4
      %s110 = int_to_ptr.hbm [resolvable:$true] %s109
      %s111 = sshll.u32 [#allocation14], 4
      %s112 = int_to_ptr.vmem [resolvable:$true] %s111
      %117 = dma.hbm_to_vmem [thread:$0]  %s110, 49152, %s112, [#allocation13], 256, 256, 16
    $region33: #{shoe_cnn_forward.1} parent=1 // pred_fallthru
      _
    // Predicated region
    $region34: #{shoe_cnn_forward.1} parent=1 // pred_check
      _
    $region35: #{shoe_cnn_forward.1} parent=1 // pred_check_branch
      %119 = sbr.rel (0) target = $region37
    $region36: #{shoe_cnn_forward.1} parent=1 // pred_region
      %121 = vsyncadd [#allocation16], 0
      %s122 = sshll.u32 %s8, 4
      %s123 = int_to_ptr.hbm [resolvable:$true] %s122
      %s124 = sshll.u32 [#allocation15], 4
      %s125 = int_to_ptr.vmem [resolvable:$true] %s124
      %130 = dma.hbm_to_vmem [thread:$0]  %s123, 320, %s125, [#allocation16], 64, 64, 4
    $region37: #{shoe_cnn_forward.1} parent=1 // pred_fallthru
      _
    // Predicated region
    $region38: #{shoe_cnn_forward.1} parent=1 // pred_check
      _
    $region39: #{shoe_cnn_forward.1} parent=1 // pred_check_branch
      %132 = sbr.rel (0) target = $region41
    $region40: #{shoe_cnn_forward.1} parent=1 // pred_region
      %134 = vsyncadd [#allocation16], 0
      %s135 = sshll.u32 %s9, 4
      %s136 = int_to_ptr.hbm [resolvable:$true] %s135
      %s137 = sshll.u32 [#allocation17], 4
      %s138 = int_to_ptr.vmem [resolvable:$true] %s137
      %143 = dma.hbm_to_vmem [thread:$0]  %s136, 192, %s138, [#allocation16], 64, 64, 4
    $region41: #{shoe_cnn_forward.1} parent=1 // pred_fallthru
      _
    // Predicated region
    $region42: #{shoe_cnn_forward.1} parent=1 // pred_check
      _
    $region43: #{shoe_cnn_forward.1} parent=1 // pred_check_branch
      %145 = sbr.rel (0) target = $region45
    $region44: #{shoe_cnn_forward.1} parent=1 // pred_region
      %147 = vsyncadd [#allocation19], 0
      %s149 = sshll.u32 %s10, 4
      %s150 = int_to_ptr.hbm [resolvable:$true] %s149
      %s151 = sshll.u32 [#allocation18], 4
      %s152 = int_to_ptr.vmem [resolvable:$true] %s151
      %154 = dma.hbm_to_vmem [thread:$0]  %s150, 64, %s152, [#allocation19]
    $region45: #{shoe_cnn_forward.1} parent=1 // pred_fallthru
      _
    // Predicated region
    $region46: #{shoe_cnn_forward.1} parent=1 // pred_check
      _
    $region47: #{shoe_cnn_forward.1} parent=1 // pred_check_branch
      %156 = sbr.rel (0) target = $region49
    $region48: #{shoe_cnn_forward.1} parent=1 // pred_region
      %158 = vsyncadd [#allocation19], 0
      %s159 = sshll.u32 %s11, 4
      %s160 = int_to_ptr.hbm [resolvable:$true] %s159
      %s161 = sshll.u32 [#allocation20], 4
      %s162 = int_to_ptr.vmem [resolvable:$true] %s161
      %167 = dma.hbm_to_vmem [thread:$0]  %s160, 4096, %s162, [#allocation19], 64, 64, 4
    $region49: #{shoe_cnn_forward.1} parent=1 // pred_fallthru
      _
    // Predicated region
    $region50: #{shoe_cnn_forward.1} parent=1 // pred_check
      _
    $region51: #{shoe_cnn_forward.1} parent=1 // pred_check_branch
      %169 = sbr.rel (0) target = $region53
    $region52: #{shoe_cnn_forward.1} parent=1 // pred_region
      %171 = vsyncadd [#allocation22], 0
      %s173 = sshll.u32 %s12, 4
      %s174 = int_to_ptr.hbm [resolvable:$true] %s173
      %s175 = sshll.u32 [#allocation21], 4
      %s176 = int_to_ptr.vmem [resolvable:$true] %s175
      %178 = dma.hbm_to_vmem [thread:$0]  %s174, 16, %s176, [#allocation22]
    $region53: #{shoe_cnn_forward.1} parent=1 // pred_fallthru
      _
    // Predicated region
    $region54: #{shoe_cnn_forward.1} parent=1 // pred_check
      _
    $region55: #{shoe_cnn_forward.1} parent=1 // pred_check_branch
      %180 = sbr.rel (0) target = $region57
    $region56: #{shoe_cnn_forward.1} parent=1 // pred_region
      %182 = vsyncadd [#allocation22], 0
      %s183 = sshll.u32 %s13, 4
      %s184 = int_to_ptr.hbm [resolvable:$true] %s183
      %s185 = sshll.u32 [#allocation23], 4
      %s186 = int_to_ptr.vmem [resolvable:$true] %s185
      %191 = dma.hbm_to_vmem [thread:$0]  %s184, 1024, %s186, [#allocation22], 64, 64, 4
    $region57: #{shoe_cnn_forward.1} parent=1 // pred_fallthru
      _
    // Predicated region
    $region58: #{shoe_cnn_forward.1} parent=1 // pred_check
      _
    $region59: #{shoe_cnn_forward.1} parent=1 // pred_check_branch
      %193 = sbr.rel (0) target = $region61
    $region60: #{shoe_cnn_forward.1} parent=1 // pred_region
      %195 = vsyncadd [#allocation25], 0
      %s197 = sshll.u32 %s14, 4
      %s198 = int_to_ptr.hbm [resolvable:$true] %s197
      %s199 = sshll.u32 [#allocation24], 4
      %s200 = int_to_ptr.vmem [resolvable:$true] %s199
      %202 = dma.hbm_to_vmem [thread:$0]  %s198, 16, %s200, [#allocation25]
    $region61: #{shoe_cnn_forward.1} parent=1 // pred_fallthru
      _
    // Predicated region
    $region62: #{shoe_cnn_forward.1} parent=1 // pred_check
      _
    $region63: #{shoe_cnn_forward.1} parent=1 // pred_check_branch
      %204 = sbr.rel (0) target = $region65
    $region64: #{shoe_cnn_forward.1} parent=1 // pred_region
      %206 = vsyncadd [#allocation25], 0
      %s207 = sshll.u32 %s15, 4
      %s208 = int_to_ptr.hbm [resolvable:$true] %s207
      %s209 = sshll.u32 [#allocation26], 4
      %s210 = int_to_ptr.vmem [resolvable:$true] %s209
      %215 = dma.hbm_to_vmem [thread:$0]  %s208, 1024, %s210, [#allocation25], 64, 64, 4
    $region65: #{shoe_cnn_forward.1} parent=1 // pred_fallthru
      _
    // Predicated region
    $region66: #{shoe_cnn_forward.1} parent=1 // pred_check
      _
    $region67: #{shoe_cnn_forward.1} parent=1 // pred_check_branch
      %217 = sbr.rel (0) target = $region69
    $region68: #{shoe_cnn_forward.1} parent=1 // pred_region
      %219 = vsyncadd [#allocation28], 0
      %s221 = sshll.u32 %s16, 4
      %s222 = int_to_ptr.hbm [resolvable:$true] %s221
      %s223 = sshll.u32 [#allocation27], 4
      %s224 = int_to_ptr.vmem [resolvable:$true] %s223
      %226 = dma.hbm_to_vmem [thread:$0]  %s222, 16, %s224, [#allocation28]
    $region69: #{shoe_cnn_forward.1} parent=1 // pred_fallthru
      _
    // Predicated region
    $region70: #{shoe_cnn_forward.1} parent=1 // pred_check
      _
    $region71: #{shoe_cnn_forward.1} parent=1 // pred_check_branch
      %228 = sbr.rel (0) target = $region73
    $region72: #{shoe_cnn_forward.1} parent=1 // pred_region
      %230 = dma.done [#allocation5], 20480
    $region73: #{shoe_cnn_forward.1} parent=1 // pred_fallthru
      _
    // Predicated region
    $region74: #{shoe_cnn_forward.1} parent=1 // pred_check
      _
    $region75: #{shoe_cnn_forward.1} parent=1 // pred_check_branch
      %232 = sbr.rel (0) target = $region77
    $region76: #{shoe_cnn_forward.1} parent=1 // pred_region
      %234 = dma.done [#allocation7], 64
    $region77: #{shoe_cnn_forward.1} parent=1 // pred_fallthru
      _
    // Predicated region
    $region78: #{shoe_cnn_forward.1} parent=1 // pred_check
      _
    $region79: #{shoe_cnn_forward.1} parent=1 // pred_check_branch
      %236 = sbr.rel (0) target = $region81
    $region80: #{shoe_cnn_forward.1} parent=1 // pred_region
      %238 = dma.done [#allocation7], 24576
    $region81: #{shoe_cnn_forward.1} parent=1 // pred_fallthru
      _
    // Predicated region
    $region82: #{shoe_cnn_forward.1} parent=1 // pred_check
      _
    $region83: #{shoe_cnn_forward.1} parent=1 // pred_check_branch
      %240 = sbr.rel (0) target = $region85
    $region84: #{shoe_cnn_forward.1} parent=1 // pred_region
      %242 = dma.done [#allocation10], 64
    $region85: #{shoe_cnn_forward.1} parent=1 // pred_fallthru
      _
    // Predicated region
    $region86: #{shoe_cnn_forward.1} parent=1 // pred_check
      _
    $region87: #{shoe_cnn_forward.1} parent=1 // pred_check_branch
      %244 = sbr.rel (0) target = $region89
    $region88: #{shoe_cnn_forward.1} parent=1 // pred_region
      %246 = dma.done [#allocation10], 24576
    $region89: #{shoe_cnn_forward.1} parent=1 // pred_fallthru
      _
    // Predicated region
    $region90: #{shoe_cnn_forward.1} parent=1 // pred_check
      _
    $region91: #{shoe_cnn_forward.1} parent=1 // pred_check_branch
      %248 = sbr.rel (0) target = $region93
    $region92: #{shoe_cnn_forward.1} parent=1 // pred_region
      %250 = dma.done [#allocation13], 64
    $region93: #{shoe_cnn_forward.1} parent=1 // pred_fallthru
      _
    // Predicated region
    $region94: #{shoe_cnn_forward.1} parent=1 // pred_check
      _
    $region95: #{shoe_cnn_forward.1} parent=1 // pred_check_branch
      %252 = sbr.rel (0) target = $region97
    $region96: #{shoe_cnn_forward.1} parent=1 // pred_region
      %254 = dma.done [#allocation13], 49152
    $region97: #{shoe_cnn_forward.1} parent=1 // pred_fallthru
      _
    // Predicated region
    $region98: #{shoe_cnn_forward.1} parent=1 // pred_check
      _
    $region99: #{shoe_cnn_forward.1} parent=1 // pred_check_branch
      %256 = sbr.rel (0) target = $region101
    $region100: #{shoe_cnn_forward.1} parent=1 // pred_region
      %258 = dma.done [#allocation16], 320
    $region101: #{shoe_cnn_forward.1} parent=1 // pred_fallthru
      _
    // Predicated region
    $region102: #{shoe_cnn_forward.1} parent=1 // pred_check
      _
    $region103: #{shoe_cnn_forward.1} parent=1 // pred_check_branch
      %260 = sbr.rel (0) target = $region105
    $region104: #{shoe_cnn_forward.1} parent=1 // pred_region
      %262 = dma.done [#allocation16], 192
    $region105: #{shoe_cnn_forward.1} parent=1 // pred_fallthru
      _
    // Predicated region
    $region106: #{shoe_cnn_forward.1} parent=1 // pred_check
      _
    $region107: #{shoe_cnn_forward.1} parent=1 // pred_check_branch
      %264 = sbr.rel (0) target = $region109
    $region108: #{shoe_cnn_forward.1} parent=1 // pred_region
      %266 = dma.done [#allocation19], 64
    $region109: #{shoe_cnn_forward.1} parent=1 // pred_fallthru
      _
    // Predicated region
    $region110: #{shoe_cnn_forward.1} parent=1 // pred_check
      _
    $region111: #{shoe_cnn_forward.1} parent=1 // pred_check_branch
      %268 = sbr.rel (0) target = $region113
    $region112: #{shoe_cnn_forward.1} parent=1 // pred_region
      %270 = dma.done [#allocation19], 4096
    $region113: #{shoe_cnn_forward.1} parent=1 // pred_fallthru
      _
    // Predicated region
    $region114: #{shoe_cnn_forward.1} parent=1 // pred_check
      _
    $region115: #{shoe_cnn_forward.1} parent=1 // pred_check_branch
      %272 = sbr.rel (0) target = $region117
    $region116: #{shoe_cnn_forward.1} parent=1 // pred_region
      %274 = dma.done [#allocation22], 16
    $region117: #{shoe_cnn_forward.1} parent=1 // pred_fallthru
      _
    // Predicated region
    $region118: #{shoe_cnn_forward.1} parent=1 // pred_check
      _
    $region119: #{shoe_cnn_forward.1} parent=1 // pred_check_branch
      %276 = sbr.rel (0) target = $region121
    $region120: #{shoe_cnn_forward.1} parent=1 // pred_region
      %278 = dma.done [#allocation22], 1024
    $region121: #{shoe_cnn_forward.1} parent=1 // pred_fallthru
      _
    // Predicated region
    $region122: #{shoe_cnn_forward.1} parent=1 // pred_check
      _
    $region123: #{shoe_cnn_forward.1} parent=1 // pred_check_branch
      %280 = sbr.rel (0) target = $region125
    $region124: #{shoe_cnn_forward.1} parent=1 // pred_region
      %282 = dma.done [#allocation25], 16
    $region125: #{shoe_cnn_forward.1} parent=1 // pred_fallthru
      _
    // Predicated region
    $region126: #{shoe_cnn_forward.1} parent=1 // pred_check
      _
    $region127: #{shoe_cnn_forward.1} parent=1 // pred_check_branch
      %284 = sbr.rel (0) target = $region129
    $region128: #{shoe_cnn_forward.1} parent=1 // pred_region
      %286 = dma.done [#allocation25], 1024
    $region129: #{shoe_cnn_forward.1} parent=1 // pred_fallthru
      _
    // Predicated region
    $region130: #{shoe_cnn_forward.1} parent=1 // pred_check
      _
    $region131: #{shoe_cnn_forward.1} parent=1 // pred_check_branch
      %288 = sbr.rel (0) target = $region133
    $region132: #{shoe_cnn_forward.1} parent=1 // pred_region
      %290 = dma.done [#allocation28], 16
    $region133: #{shoe_cnn_forward.1} parent=1 // pred_fallthru
      _
    %v292 = vld [vmem:[%s0] sm:$0xf]
    %v293 = vld [vmem:[%s0 + $0x4] sm:$0xf]
    %v294 = vld [vmem:[%s0 + $0xc] sm:$0xf]
    %v295 = vld [vmem:[%s0 + $0x10] sm:$0xf]
    %v296 = vld [vmem:[%s0 + $0x8] sm:$0x1]
    %v297 = vld [vmem:[%s0 + $0x14] sm:$0x1]
    %vm298 = vsmask.f32 3328
    %vm299 = vsmask.f32 7440
    %vm300 = vmor %vm298, %vm299
    %v302 = vshrl.u32 %v292, 16
    %v304 = vrot.slane %v302, 4
    %v305 = vshll.u32 %v292, 16
    %v307 = vrot.slane %v305, 5
    %v308 = vor.u32 %v304, %v307
    %v309 = vrot.slane %v308, 4
    %v311 = vshll.u32 %v293, 16
    %v313 = vrot.slane %v311, 5
    %v314 = vsel %vm300, %v309, %v313
    %v315 = vshrl.u32 %v293, 16
    %v317 = vrot.slane %v315, 4
    %v318 = vor.u32 %v317, %v313
    %v319 = vrot.slane %v318, 4
    %v321 = vshll.u32 %v296, 16
    %v323 = vrot.slane %v321, 5
    %v324 = vsel %vm300, %v319, %v323
    %v326 = vshrl.u32 %v294, 16
    %v328 = vrot.slane %v326, 4
    %v329 = vshll.u32 %v294, 16
    %v331 = vrot.slane %v329, 5
    %v332 = vor.u32 %v328, %v331
    %v333 = vrot.slane %v332, 4
    %v335 = vshll.u32 %v295, 16
    %v337 = vrot.slane %v335, 5
    %v338 = vsel %vm300, %v333, %v337
    %v339 = vshrl.u32 %v295, 16
    %v341 = vrot.slane %v339, 4
    %v342 = vor.u32 %v341, %v337
    %v343 = vrot.slane %v342, 4
    %v345 = vshll.u32 %v297, 16
    %v347 = vrot.slane %v345, 5
    %v348 = vsel %vm300, %v343, %v347
    %v349 = vld [vmem:[%s0] sm:$0xe]
    %v350 = vld [vmem:[%s0 + $0xc] sm:$0xe]
    %vm357 = vcmask 1042432
    %vm358 = vcmask 1046532
    %vm359 = vmor %vm357, %vm358
    %v360 = vrot.slane %v349, 5
    %v361 = vrot.slane %v360, 4
    %v362 = vrot.slane %v293, 5
    %v363 = vsel %vm359, %v361, %v362
    %v364 = vrot.slane %v362, 4
    %v365 = vrot.slane %v296, 5
    %v366 = vsel %vm359, %v364, %v365
    %v367 = vrot.slane %v350, 5
    %v368 = vrot.slane %v367, 4
    %v369 = vrot.slane %v295, 5
    %v370 = vsel %vm359, %v368, %v369
    %v371 = vrot.slane %v369, 4
    %v372 = vrot.slane %v297, 5
    %v373 = vsel %vm359, %v371, %v372
    %v374 = vld [vmem:[%s0 + $0x8] sm:$0x3]
    %v375 = vld [vmem:[%s0 + $0x14] sm:$0x3]
    %vm376 = vsmask.f32 2304
    %vm377 = vsmask.f32 6416
    %vm378 = vmor %vm376, %vm377
    %v380 = vshrl.u32 %v349, 16
    %v382 = vrot.slane %v380, 5
    %v383 = vshll.u32 %v349, 16
    %v385 = vrot.slane %v383, 6
    %v386 = vor.u32 %v382, %v385
    %v387 = vrot.slane %v386, 4
    %v388 = vrot.slane %v315, 5
    %v389 = vrot.slane %v311, 6
    %v390 = vor.u32 %v388, %v389
    %v391 = vsel %vm378, %v387, %v390
    %v392 = vrot.slane %v390, 4
    %v394 = vshrl.u32 %v374, 16
    %v396 = vrot.slane %v394, 5
    %v397 = vshll.u32 %v374, 16
    %v399 = vrot.slane %v397, 6
    %v400 = vor.u32 %v396, %v399
    %v401 = vsel %vm378, %v392, %v400
    %v403 = vshrl.u32 %v350, 16
    %v405 = vrot.slane %v403, 5
    %v406 = vshll.u32 %v350, 16
    %v408 = vrot.slane %v406, 6
    %v409 = vor.u32 %v405, %v408
    %v410 = vrot.slane %v409, 4
    %v411 = vrot.slane %v339, 5
    %v412 = vrot.slane %v335, 6
    %v413 = vor.u32 %v411, %v412
    %v414 = vsel %vm378, %v410, %v413
    %v415 = vrot.slane %v413, 4
    %v417 = vshrl.u32 %v375, 16
    %v419 = vrot.slane %v417, 5
    %v420 = vshll.u32 %v375, 16
    %v422 = vrot.slane %v420, 6
    %v423 = vor.u32 %v419, %v422
    %v424 = vsel %vm378, %v415, %v423
    %v425 = vld [vmem:[%s0] sm:$0xc]
    %v426 = vld [vmem:[%s0 + $0xc] sm:$0xc]
    %vm431 = vcmask 1041408
    %vm432 = vcmask 1045508
    %vm433 = vmor %vm431, %vm432
    %v434 = vrot.slane %v425, 6
    %v435 = vrot.slane %v434, 4
    %v436 = vrot.slane %v293, 6
    %v437 = vsel %vm433, %v435, %v436
    %v438 = vrot.slane %v436, 4
    %v439 = vrot.slane %v374, 6
    %v440 = vsel %vm433, %v438, %v439
    %v441 = vrot.slane %v426, 6
    %v442 = vrot.slane %v441, 4
    %v443 = vrot.slane %v295, 6
    %v444 = vsel %vm433, %v442, %v443
    %v445 = vrot.slane %v443, 4
    %v446 = vrot.slane %v375, 6
    %v447 = vsel %vm433, %v445, %v446
    %v450 = vunpack.c.l.b16 %v292
    %v451 = vunpack.c.l.b16 %v293
    %v452 = vunpack.c.l.b16 %v294
    %v453 = vunpack.c.l.b16 %v295
    %v454 = vpack.c.b16 %v451, %v450
    %v455 = vpack.c.b16 %v453, %v452
    %v458 = vunpack.c.l.b16 %v314
    %v459 = vunpack.c.l.b16 %v324
    %v460 = vunpack.c.l.b16 %v338
    %v461 = vunpack.c.l.b16 %v348
    %v462 = vpack.c.b16 %v459, %v458
    %v463 = vpack.c.b16 %v461, %v460
    %v466 = vunpack.c.l.b16 %v363
    %v467 = vunpack.c.l.b16 %v366
    %v468 = vunpack.c.l.b16 %v370
    %v469 = vunpack.c.l.b16 %v373
    %v470 = vpack.c.b16 %v467, %v466
    %v471 = vpack.c.b16 %v469, %v468
    %v474 = vunpack.c.l.b16 %v391
    %v475 = vunpack.c.l.b16 %v401
    %v476 = vunpack.c.l.b16 %v414
    %v477 = vunpack.c.l.b16 %v424
    %v478 = vpack.c.b16 %v475, %v474
    %v479 = vpack.c.b16 %v477, %v476
    %v482 = vunpack.c.l.b16 %v437
    %v483 = vunpack.c.l.b16 %v440
    %v484 = vunpack.c.l.b16 %v444
    %v485 = vunpack.c.l.b16 %v447
    %v486 = vpack.c.b16 %v483, %v482
    %v487 = vpack.c.b16 %v485, %v484
    %v490 = vld [vmem:[#allocation4] sm:$0xff]
    %v491 = vld [vmem:[#allocation4 + $0x8] sm:$0xff]
    %v492 = vld [vmem:[#allocation4 + $0x10] sm:$0xff]
    %v493 = vld [vmem:[#allocation4 + $0x18] sm:$0xff]
    %v494 = vld [vmem:[#allocation4 + $0x20] sm:$0xff]
    %v495 = vld [vmem:[#allocation4 + $0x28] sm:$0xff]
    %v496 = vld [vmem:[#allocation4 + $0x30] sm:$0xff]
    %v497 = vld [vmem:[#allocation4 + $0x38] sm:$0xff]
    %v498 = vld [vmem:[#allocation4 + $0x40] sm:$0xff]
    %v499 = vld [vmem:[#allocation4 + $0x48] sm:$0xff]
    %v500 = vld [vmem:[#allocation4 + $0x50] sm:$0xff]
    %v501 = vld [vmem:[#allocation4 + $0x58] sm:$0xff]
    %v502 = vld [vmem:[#allocation4 + $0x60] sm:$0xff]
    %v503 = vld [vmem:[#allocation4 + $0x68] sm:$0xff]
    %v504 = vld [vmem:[#allocation4 + $0x70] sm:$0xff]
    %v505 = vld [vmem:[#allocation4 + $0x78] sm:$0xff]
    %v506 = vld [vmem:[#allocation4 + $0x80] sm:$0xff]
    %v507 = vld [vmem:[#allocation4 + $0x88] sm:$0xff]
    %v508 = vld [vmem:[#allocation4 + $0x90] sm:$0xff]
    %v509 = vld [vmem:[#allocation4 + $0x98] sm:$0xff]
    %v510 = vld [vmem:[#allocation4 + $0xa0] sm:$0xff]
    %v511 = vld [vmem:[#allocation4 + $0xa8] sm:$0xff]
    %v512 = vld [vmem:[#allocation4 + $0xb0] sm:$0xff]
    %v513 = vld [vmem:[#allocation4 + $0xb8] sm:$0xff]
    %v514 = vld [vmem:[#allocation4 + $0xc0] sm:$0xff]
    %v515 = vld [vmem:[#allocation4 + $0xc8] sm:$0xff]
    %v516 = vld [vmem:[#allocation4 + $0xd0] sm:$0xff]
    %v517 = vld [vmem:[#allocation4 + $0xd8] sm:$0xff]
    %v518 = vld [vmem:[#allocation4 + $0xe0] sm:$0xff]
    %v519 = vld [vmem:[#allocation4 + $0xe8] sm:$0xff]
    %v520 = vld [vmem:[#allocation4 + $0xf0] sm:$0xff]
    %v521 = vld [vmem:[#allocation4 + $0xf8] sm:$0xff]
    %v522 = vld [vmem:[#allocation4 + $0x100] sm:$0xff]
    %v523 = vld [vmem:[#allocation4 + $0x108] sm:$0xff]
    %v524 = vld [vmem:[#allocation4 + $0x110] sm:$0xff]
    %v525 = vld [vmem:[#allocation4 + $0x118] sm:$0xff]
    %v526 = vld [vmem:[#allocation4 + $0x120] sm:$0xff]
    %v527 = vld [vmem:[#allocation4 + $0x128] sm:$0xff]
    %v528 = vld [vmem:[#allocation4 + $0x130] sm:$0xff]
    %v529 = vld [vmem:[#allocation4 + $0x138] sm:$0xff]
    %v530 = vld [vmem:[#allocation4 + $0x140] sm:$0xff]
    %v531 = vld [vmem:[#allocation4 + $0x148] sm:$0xff]
    %v532 = vld [vmem:[#allocation4 + $0x150] sm:$0xff]
    %v533 = vld [vmem:[#allocation4 + $0x158] sm:$0xff]
    %v534 = vld [vmem:[#allocation4 + $0x160] sm:$0xff]
    %v535 = vld [vmem:[#allocation4 + $0x168] sm:$0xff]
    %v536 = vld [vmem:[#allocation4 + $0x170] sm:$0xff]
    %v537 = vld [vmem:[#allocation4 + $0x178] sm:$0xff]
    %v538 = vld [vmem:[#allocation4 + $0x180] sm:$0xff]
    %v539 = vld [vmem:[#allocation4 + $0x188] sm:$0xff]
    %v540 = vld [vmem:[#allocation4 + $0x190] sm:$0xff]
    %v541 = vld [vmem:[#allocation4 + $0x198] sm:$0xff]
    %v542 = vld [vmem:[#allocation4 + $0x1a0] sm:$0xff]
    %v543 = vld [vmem:[#allocation4 + $0x1a8] sm:$0xff]
    %v544 = vld [vmem:[#allocation4 + $0x1b0] sm:$0xff]
    %v545 = vld [vmem:[#allocation4 + $0x1b8] sm:$0xff]
    %v546 = vld [vmem:[#allocation4 + $0x1c0] sm:$0xff]
    %v547 = vld [vmem:[#allocation4 + $0x1c8] sm:$0xff]
    %v548 = vld [vmem:[#allocation4 + $0x1d0] sm:$0xff]
    %v549 = vld [vmem:[#allocation4 + $0x1d8] sm:$0xff]
    %v550 = vld [vmem:[#allocation4 + $0x1e0] sm:$0xff]
    %v551 = vld [vmem:[#allocation4 + $0x1e8] sm:$0xff]
    %v552 = vld [vmem:[#allocation4 + $0x1f0] sm:$0xff]
    %v553 = vld [vmem:[#allocation4 + $0x1f8] sm:$0xff]
    %v554 = vld [vmem:[#allocation4 + $0x200] sm:$0xff]
    %v555 = vld [vmem:[#allocation4 + $0x208] sm:$0xff]
    %v556 = vld [vmem:[#allocation4 + $0x210] sm:$0xff]
    %v557 = vld [vmem:[#allocation4 + $0x218] sm:$0xff]
    %v558 = vld [vmem:[#allocation4 + $0x220] sm:$0xff]
    %v559 = vld [vmem:[#allocation4 + $0x228] sm:$0xff]
    %v560 = vld [vmem:[#allocation4 + $0x230] sm:$0xff]
    %v561 = vld [vmem:[#allocation4 + $0x238] sm:$0xff]
    %v562 = vld [vmem:[#allocation4 + $0x240] sm:$0xff]
    %v563 = vld [vmem:[#allocation4 + $0x248] sm:$0xff]
    %v564 = vld [vmem:[#allocation4 + $0x250] sm:$0xff]
    %v565 = vld [vmem:[#allocation4 + $0x258] sm:$0xff]
    %v566 = vld [vmem:[#allocation4 + $0x260] sm:$0xff]
    %v567 = vld [vmem:[#allocation4 + $0x268] sm:$0xff]
    %v568 = vld [vmem:[#allocation4 + $0x270] sm:$0xff]
    %v569 = vld [vmem:[#allocation4 + $0x278] sm:$0xff]
    %v570 = vld [vmem:[#allocation4 + $0x280] sm:$0xff]
    %v571 = vld [vmem:[#allocation4 + $0x288] sm:$0xff]
    %v572 = vld [vmem:[#allocation4 + $0x290] sm:$0xff]
    %v573 = vld [vmem:[#allocation4 + $0x298] sm:$0xff]
    %v574 = vld [vmem:[#allocation4 + $0x2a0] sm:$0xff]
    %v575 = vld [vmem:[#allocation4 + $0x2a8] sm:$0xff]
    %v576 = vld [vmem:[#allocation4 + $0x2b0] sm:$0xff]
    %v577 = vld [vmem:[#allocation4 + $0x2b8] sm:$0xff]
    %v578 = vld [vmem:[#allocation4 + $0x2c0] sm:$0xff]
    %v579 = vld [vmem:[#allocation4 + $0x2c8] sm:$0xff]
    %v580 = vld [vmem:[#allocation4 + $0x2d0] sm:$0xff]
    %v581 = vld [vmem:[#allocation4 + $0x2d8] sm:$0xff]
    %v582 = vld [vmem:[#allocation4 + $0x2e0] sm:$0xff]
    %v583 = vld [vmem:[#allocation4 + $0x2e8] sm:$0xff]
    %v584 = vld [vmem:[#allocation4 + $0x2f0] sm:$0xff]
    %v585 = vld [vmem:[#allocation4 + $0x2f8] sm:$0xff]
    %v586 = vld [vmem:[#allocation4 + $0x300] sm:$0xff]
    %v587 = vld [vmem:[#allocation4 + $0x308] sm:$0xff]
    %v588 = vld [vmem:[#allocation4 + $0x310] sm:$0xff]
    %v589 = vld [vmem:[#allocation4 + $0x318] sm:$0xff]
    %v590 = vld [vmem:[#allocation4 + $0x320] sm:$0xff]
    %v591 = vld [vmem:[#allocation4 + $0x328] sm:$0xff]
    %v592 = vld [vmem:[#allocation4 + $0x330] sm:$0xff]
    %v593 = vld [vmem:[#allocation4 + $0x338] sm:$0xff]
    %v594 = vld [vmem:[#allocation4 + $0x340] sm:$0xff]
    %v595 = vld [vmem:[#allocation4 + $0x348] sm:$0xff]
    %v596 = vld [vmem:[#allocation4 + $0x350] sm:$0xff]
    %v597 = vld [vmem:[#allocation4 + $0x358] sm:$0xff]
    %v598 = vld [vmem:[#allocation4 + $0x360] sm:$0xff]
    %v599 = vld [vmem:[#allocation4 + $0x368] sm:$0xff]
    %v600 = vld [vmem:[#allocation4 + $0x370] sm:$0xff]
    %v601 = vld [vmem:[#allocation4 + $0x378] sm:$0xff]
    %v602 = vld [vmem:[#allocation4 + $0x380] sm:$0xff]
    %v603 = vld [vmem:[#allocation4 + $0x388] sm:$0xff]
    %v604 = vld [vmem:[#allocation4 + $0x390] sm:$0xff]
    %v605 = vld [vmem:[#allocation4 + $0x398] sm:$0xff]
    %v606 = vld [vmem:[#allocation4 + $0x3a0] sm:$0xff]
    %v607 = vld [vmem:[#allocation4 + $0x3a8] sm:$0xff]
    %v608 = vld [vmem:[#allocation4 + $0x3b0] sm:$0xff]
    %v609 = vld [vmem:[#allocation4 + $0x3b8] sm:$0xff]
    %v610 = vld [vmem:[#allocation4 + $0x3c0] sm:$0xff]
    %v611 = vld [vmem:[#allocation4 + $0x3c8] sm:$0xff]
    %v612 = vld [vmem:[#allocation4 + $0x3d0] sm:$0xff]
    %v613 = vld [vmem:[#allocation4 + $0x3d8] sm:$0xff]
    %v614 = vld [vmem:[#allocation4 + $0x3e0] sm:$0xff]
    %v615 = vld [vmem:[#allocation4 + $0x3e8] sm:$0xff]
    %v616 = vld [vmem:[#allocation4 + $0x3f0] sm:$0xff]
    %v617 = vld [vmem:[#allocation4 + $0x3f8] sm:$0xff]
    %v618 = vld [vmem:[#allocation4 + $0x400] sm:$0xff]
    %v619 = vld [vmem:[#allocation4 + $0x408] sm:$0xff]
    %v620 = vld [vmem:[#allocation4 + $0x410] sm:$0xff]
    %v621 = vld [vmem:[#allocation4 + $0x418] sm:$0xff]
    %v622 = vld [vmem:[#allocation4 + $0x420] sm:$0xff]
    %v623 = vld [vmem:[#allocation4 + $0x428] sm:$0xff]
    %v624 = vld [vmem:[#allocation4 + $0x430] sm:$0xff]
    %v625 = vld [vmem:[#allocation4 + $0x438] sm:$0xff]
    %v626 = vld [vmem:[#allocation4 + $0x440] sm:$0xff]
    %v627 = vld [vmem:[#allocation4 + $0x448] sm:$0xff]
    %v628 = vld [vmem:[#allocation4 + $0x450] sm:$0xff]
    %v629 = vld [vmem:[#allocation4 + $0x458] sm:$0xff]
    %v630 = vld [vmem:[#allocation4 + $0x460] sm:$0xff]
    %v631 = vld [vmem:[#allocation4 + $0x468] sm:$0xff]
    %v632 = vld [vmem:[#allocation4 + $0x470] sm:$0xff]
    %v633 = vld [vmem:[#allocation4 + $0x478] sm:$0xff]
    %v634 = vld [vmem:[#allocation4 + $0x480] sm:$0xff]
    %v635 = vld [vmem:[#allocation4 + $0x488] sm:$0xff]
    %v636 = vld [vmem:[#allocation4 + $0x490] sm:$0xff]
    %v637 = vld [vmem:[#allocation4 + $0x498] sm:$0xff]
    %v638 = vld [vmem:[#allocation4 + $0x4a0] sm:$0xff]
    %v639 = vld [vmem:[#allocation4 + $0x4a8] sm:$0xff]
    %v640 = vld [vmem:[#allocation4 + $0x4b0] sm:$0xff]
    %v641 = vld [vmem:[#allocation4 + $0x4b8] sm:$0xff]
    %v642 = vld [vmem:[#allocation4 + $0x4c0] sm:$0xff]
    %v643 = vld [vmem:[#allocation4 + $0x4c8] sm:$0xff]
    %v644 = vld [vmem:[#allocation4 + $0x4d0] sm:$0xff]
    %v645 = vld [vmem:[#allocation4 + $0x4d8] sm:$0xff]
    %v646 = vld [vmem:[#allocation4 + $0x4e0] sm:$0xff]
    %v647 = vld [vmem:[#allocation4 + $0x4e8] sm:$0xff]
    %v648 = vld [vmem:[#allocation4 + $0x4f0] sm:$0xff]
    %v649 = vld [vmem:[#allocation4 + $0x4f8] sm:$0xff]
    %v650 = vld [vmem:[#allocation6] sm:$0xf]
    %v652 = vperm.slane %v650, 0
    %v653 = vperm.slane %v650, 1
    %v654 = vperm.slane %v650, 2
    %v655 = vperm.slane %v650, 3
    %v820 = vunpack.c.l.b16 %v490
    %v821 = vunpack.c.h.b16 %v490
    %v822 = vunpack.c.l.b16 %v491
    %v823 = vunpack.c.h.b16 %v491
    %v824 = vunpack.c.l.b16 %v492
    %v825 = vunpack.c.h.b16 %v492
    %v826 = vunpack.c.l.b16 %v493
    %v827 = vunpack.c.h.b16 %v493
    %v828 = vunpack.c.l.b16 %v494
    %v829 = vunpack.c.h.b16 %v494
    %v830 = vunpack.c.l.b16 %v495
    %v831 = vunpack.c.h.b16 %v495
    %v832 = vunpack.c.l.b16 %v496
    %v833 = vunpack.c.h.b16 %v496
    %v834 = vunpack.c.l.b16 %v497
    %v835 = vunpack.c.h.b16 %v497
    %v836 = vunpack.c.l.b16 %v498
    %v837 = vunpack.c.h.b16 %v498
    %v838 = vunpack.c.l.b16 %v499
    %v839 = vunpack.c.h.b16 %v499
    %v840 = vunpack.c.l.b16 %v500
    %v841 = vunpack.c.h.b16 %v500
    %v842 = vunpack.c.l.b16 %v501
    %v843 = vunpack.c.h.b16 %v501
    %v844 = vunpack.c.l.b16 %v502
    %v845 = vunpack.c.h.b16 %v502
    %v846 = vunpack.c.l.b16 %v503
    %v847 = vunpack.c.h.b16 %v503
    %v848 = vunpack.c.l.b16 %v504
    %v849 = vunpack.c.h.b16 %v504
    %v850 = vunpack.c.l.b16 %v505
    %v851 = vunpack.c.h.b16 %v505
    %v852 = vunpack.c.l.b16 %v506
    %v853 = vunpack.c.h.b16 %v506
    %v854 = vunpack.c.l.b16 %v507
    %v855 = vunpack.c.h.b16 %v507
    %v856 = vunpack.c.l.b16 %v508
    %v857 = vunpack.c.h.b16 %v508
    %v858 = vunpack.c.l.b16 %v509
    %v859 = vunpack.c.h.b16 %v509
    %v860 = vunpack.c.l.b16 %v510
    %v861 = vunpack.c.h.b16 %v510
    %v862 = vunpack.c.l.b16 %v511
    %v863 = vunpack.c.h.b16 %v511
    %v864 = vunpack.c.l.b16 %v512
    %v865 = vunpack.c.h.b16 %v512
    %v866 = vunpack.c.l.b16 %v513
    %v867 = vunpack.c.h.b16 %v513
    %v868 = vunpack.c.l.b16 %v514
    %v869 = vunpack.c.h.b16 %v514
    %v870 = vunpack.c.l.b16 %v515
    %v871 = vunpack.c.h.b16 %v515
    %v872 = vunpack.c.l.b16 %v516
    %v873 = vunpack.c.h.b16 %v516
    %v874 = vunpack.c.l.b16 %v517
    %v875 = vunpack.c.h.b16 %v517
    %v876 = vunpack.c.l.b16 %v518
    %v877 = vunpack.c.h.b16 %v518
    %v878 = vunpack.c.l.b16 %v519
    %v879 = vunpack.c.h.b16 %v519
    %v880 = vunpack.c.l.b16 %v520
    %v881 = vunpack.c.h.b16 %v520
    %v882 = vunpack.c.l.b16 %v521
    %v883 = vunpack.c.h.b16 %v521
    %v884 = vunpack.c.l.b16 %v522
    %v885 = vunpack.c.h.b16 %v522
    %v886 = vunpack.c.l.b16 %v523
    %v887 = vunpack.c.h.b16 %v523
    %v888 = vunpack.c.l.b16 %v524
    %v889 = vunpack.c.h.b16 %v524
    %v890 = vunpack.c.l.b16 %v525
    %v891 = vunpack.c.h.b16 %v525
    %v892 = vunpack.c.l.b16 %v526
    %v893 = vunpack.c.h.b16 %v526
    %v894 = vunpack.c.l.b16 %v527
    %v895 = vunpack.c.h.b16 %v527
    %v896 = vunpack.c.l.b16 %v528
    %v897 = vunpack.c.h.b16 %v528
    %v898 = vunpack.c.l.b16 %v529
    %v899 = vunpack.c.h.b16 %v529
    %v900 = vunpack.c.l.b16 %v530
    %v901 = vunpack.c.h.b16 %v530
    %v902 = vunpack.c.l.b16 %v531
    %v903 = vunpack.c.h.b16 %v531
    %v904 = vunpack.c.l.b16 %v532
    %v905 = vunpack.c.h.b16 %v532
    %v906 = vunpack.c.l.b16 %v533
    %v907 = vunpack.c.h.b16 %v533
    %v908 = vunpack.c.l.b16 %v534
    %v909 = vunpack.c.h.b16 %v534
    %v910 = vunpack.c.l.b16 %v535
    %v911 = vunpack.c.h.b16 %v535
    %v912 = vunpack.c.l.b16 %v536
    %v913 = vunpack.c.h.b16 %v536
    %v914 = vunpack.c.l.b16 %v537
    %v915 = vunpack.c.h.b16 %v537
    %v916 = vunpack.c.l.b16 %v538
    %v917 = vunpack.c.h.b16 %v538
    %v918 = vunpack.c.l.b16 %v539
    %v919 = vunpack.c.h.b16 %v539
    %v920 = vunpack.c.l.b16 %v540
    %v921 = vunpack.c.h.b16 %v540
    %v922 = vunpack.c.l.b16 %v541
    %v923 = vunpack.c.h.b16 %v541
    %v924 = vunpack.c.l.b16 %v542
    %v925 = vunpack.c.h.b16 %v542
    %v926 = vunpack.c.l.b16 %v543
    %v927 = vunpack.c.h.b16 %v543
    %v928 = vunpack.c.l.b16 %v544
    %v929 = vunpack.c.h.b16 %v544
    %v930 = vunpack.c.l.b16 %v545
    %v931 = vunpack.c.h.b16 %v545
    %v932 = vunpack.c.l.b16 %v546
    %v933 = vunpack.c.h.b16 %v546
    %v934 = vunpack.c.l.b16 %v547
    %v935 = vunpack.c.h.b16 %v547
    %v936 = vunpack.c.l.b16 %v548
    %v937 = vunpack.c.h.b16 %v548
    %v938 = vunpack.c.l.b16 %v549
    %v939 = vunpack.c.h.b16 %v549
    %v940 = vunpack.c.l.b16 %v550
    %v941 = vunpack.c.h.b16 %v550
    %v942 = vunpack.c.l.b16 %v551
    %v943 = vunpack.c.h.b16 %v551
    %v944 = vunpack.c.l.b16 %v552
    %v945 = vunpack.c.h.b16 %v552
    %v946 = vunpack.c.l.b16 %v553
    %v947 = vunpack.c.h.b16 %v553
    %v948 = vunpack.c.l.b16 %v554
    %v949 = vunpack.c.h.b16 %v554
    %v950 = vunpack.c.l.b16 %v555
    %v951 = vunpack.c.h.b16 %v555
    %v952 = vunpack.c.l.b16 %v556
    %v953 = vunpack.c.h.b16 %v556
    %v954 = vunpack.c.l.b16 %v557
    %v955 = vunpack.c.h.b16 %v557
    %v956 = vunpack.c.l.b16 %v558
    %v957 = vunpack.c.h.b16 %v558
    %v958 = vunpack.c.l.b16 %v559
    %v959 = vunpack.c.h.b16 %v559
    %v960 = vunpack.c.l.b16 %v560
    %v961 = vunpack.c.h.b16 %v560
    %v962 = vunpack.c.l.b16 %v561
    %v963 = vunpack.c.h.b16 %v561
    %v964 = vunpack.c.l.b16 %v562
    %v965 = vunpack.c.h.b16 %v562
    %v966 = vunpack.c.l.b16 %v563
    %v967 = vunpack.c.h.b16 %v563
    %v968 = vunpack.c.l.b16 %v564
    %v969 = vunpack.c.h.b16 %v564
    %v970 = vunpack.c.l.b16 %v565
    %v971 = vunpack.c.h.b16 %v565
    %v972 = vunpack.c.l.b16 %v566
    %v973 = vunpack.c.h.b16 %v566
    %v974 = vunpack.c.l.b16 %v567
    %v975 = vunpack.c.h.b16 %v567
    %v976 = vunpack.c.l.b16 %v568
    %v977 = vunpack.c.h.b16 %v568
    %v978 = vunpack.c.l.b16 %v569
    %v979 = vunpack.c.h.b16 %v569
    %v980 = vunpack.c.l.b16 %v570
    %v981 = vunpack.c.h.b16 %v570
    %v982 = vunpack.c.l.b16 %v571
    %v983 = vunpack.c.h.b16 %v571
    %v984 = vunpack.c.l.b16 %v572
    %v985 = vunpack.c.h.b16 %v572
    %v986 = vunpack.c.l.b16 %v573
    %v987 = vunpack.c.h.b16 %v573
    %v988 = vunpack.c.l.b16 %v574
    %v989 = vunpack.c.h.b16 %v574
    %v990 = vunpack.c.l.b16 %v575
    %v991 = vunpack.c.h.b16 %v575
    %v992 = vunpack.c.l.b16 %v576
    %v993 = vunpack.c.h.b16 %v576
    %v994 = vunpack.c.l.b16 %v577
    %v995 = vunpack.c.h.b16 %v577
    %v996 = vunpack.c.l.b16 %v578
    %v997 = vunpack.c.h.b16 %v578
    %v998 = vunpack.c.l.b16 %v579
    %v999 = vunpack.c.h.b16 %v579
    %v1000 = vunpack.c.l.b16 %v580
    %v1001 = vunpack.c.h.b16 %v580
    %v1002 = vunpack.c.l.b16 %v581
    %v1003 = vunpack.c.h.b16 %v581
    %v1004 = vunpack.c.l.b16 %v582
    %v1005 = vunpack.c.h.b16 %v582
    %v1006 = vunpack.c.l.b16 %v583
    %v1007 = vunpack.c.h.b16 %v583
    %v1008 = vunpack.c.l.b16 %v584
    %v1009 = vunpack.c.h.b16 %v584
    %v1010 = vunpack.c.l.b16 %v585
    %v1011 = vunpack.c.h.b16 %v585
    %v1012 = vunpack.c.l.b16 %v586
    %v1013 = vunpack.c.h.b16 %v586
    %v1014 = vunpack.c.l.b16 %v587
    %v1015 = vunpack.c.h.b16 %v587
    %v1016 = vunpack.c.l.b16 %v588
    %v1017 = vunpack.c.h.b16 %v588
    %v1018 = vunpack.c.l.b16 %v589
    %v1019 = vunpack.c.h.b16 %v589
    %v1020 = vunpack.c.l.b16 %v590
    %v1021 = vunpack.c.h.b16 %v590
    %v1022 = vunpack.c.l.b16 %v591
    %v1023 = vunpack.c.h.b16 %v591
    %v1024 = vunpack.c.l.b16 %v592
    %v1025 = vunpack.c.h.b16 %v592
    %v1026 = vunpack.c.l.b16 %v593
    %v1027 = vunpack.c.h.b16 %v593
    %v1028 = vunpack.c.l.b16 %v594
    %v1029 = vunpack.c.h.b16 %v594
    %v1030 = vunpack.c.l.b16 %v595
    %v1031 = vunpack.c.h.b16 %v595
    %v1032 = vunpack.c.l.b16 %v596
    %v1033 = vunpack.c.h.b16 %v596
    %v1034 = vunpack.c.l.b16 %v597
    %v1035 = vunpack.c.h.b16 %v597
    %v1036 = vunpack.c.l.b16 %v598
    %v1037 = vunpack.c.h.b16 %v598
    %v1038 = vunpack.c.l.b16 %v599
    %v1039 = vunpack.c.h.b16 %v599
    %v1040 = vunpack.c.l.b16 %v600
    %v1041 = vunpack.c.h.b16 %v600
    %v1042 = vunpack.c.l.b16 %v601
    %v1043 = vunpack.c.h.b16 %v601
    %v1044 = vunpack.c.l.b16 %v602
    %v1045 = vunpack.c.h.b16 %v602
    %v1046 = vunpack.c.l.b16 %v603
    %v1047 = vunpack.c.h.b16 %v603
    %v1048 = vunpack.c.l.b16 %v604
    %v1049 = vunpack.c.h.b16 %v604
    %v1050 = vunpack.c.l.b16 %v605
    %v1051 = vunpack.c.h.b16 %v605
    %v1052 = vunpack.c.l.b16 %v606
    %v1053 = vunpack.c.h.b16 %v606
    %v1054 = vunpack.c.l.b16 %v607
    %v1055 = vunpack.c.h.b16 %v607
    %v1056 = vunpack.c.l.b16 %v608
    %v1057 = vunpack.c.h.b16 %v608
    %v1058 = vunpack.c.l.b16 %v609
    %v1059 = vunpack.c.h.b16 %v609
    %v1060 = vunpack.c.l.b16 %v610
    %v1061 = vunpack.c.h.b16 %v610
    %v1062 = vunpack.c.l.b16 %v611
    %v1063 = vunpack.c.h.b16 %v611
    %v1064 = vunpack.c.l.b16 %v612
    %v1065 = vunpack.c.h.b16 %v612
    %v1066 = vunpack.c.l.b16 %v613
    %v1067 = vunpack.c.h.b16 %v613
    %v1068 = vunpack.c.l.b16 %v614
    %v1069 = vunpack.c.h.b16 %v614
    %v1070 = vunpack.c.l.b16 %v615
    %v1071 = vunpack.c.h.b16 %v615
    %v1072 = vunpack.c.l.b16 %v616
    %v1073 = vunpack.c.h.b16 %v616
    %v1074 = vunpack.c.l.b16 %v617
    %v1075 = vunpack.c.h.b16 %v617
    %v1076 = vunpack.c.l.b16 %v618
    %v1077 = vunpack.c.h.b16 %v618
    %v1078 = vunpack.c.l.b16 %v619
    %v1079 = vunpack.c.h.b16 %v619
    %v1080 = vunpack.c.l.b16 %v620
    %v1081 = vunpack.c.h.b16 %v620
    %v1082 = vunpack.c.l.b16 %v621
    %v1083 = vunpack.c.h.b16 %v621
    %v1084 = vunpack.c.l.b16 %v622
    %v1085 = vunpack.c.h.b16 %v622
    %v1086 = vunpack.c.l.b16 %v623
    %v1087 = vunpack.c.h.b16 %v623
    %v1088 = vunpack.c.l.b16 %v624
    %v1089 = vunpack.c.h.b16 %v624
    %v1090 = vunpack.c.l.b16 %v625
    %v1091 = vunpack.c.h.b16 %v625
    %v1092 = vunpack.c.l.b16 %v626
    %v1093 = vunpack.c.h.b16 %v626
    %v1094 = vunpack.c.l.b16 %v627
    %v1095 = vunpack.c.h.b16 %v627
    %v1096 = vunpack.c.l.b16 %v628
    %v1097 = vunpack.c.h.b16 %v628
    %v1098 = vunpack.c.l.b16 %v629
    %v1099 = vunpack.c.h.b16 %v629
    %v1100 = vunpack.c.l.b16 %v630
    %v1101 = vunpack.c.h.b16 %v630
    %v1102 = vunpack.c.l.b16 %v631
    %v1103 = vunpack.c.h.b16 %v631
    %v1104 = vunpack.c.l.b16 %v632
    %v1105 = vunpack.c.h.b16 %v632
    %v1106 = vunpack.c.l.b16 %v633
    %v1107 = vunpack.c.h.b16 %v633
    %v1108 = vunpack.c.l.b16 %v634
    %v1109 = vunpack.c.h.b16 %v634
    %v1110 = vunpack.c.l.b16 %v635
    %v1111 = vunpack.c.h.b16 %v635
    %v1112 = vunpack.c.l.b16 %v636
    %v1113 = vunpack.c.h.b16 %v636
    %v1114 = vunpack.c.l.b16 %v637
    %v1115 = vunpack.c.h.b16 %v637
    %v1116 = vunpack.c.l.b16 %v638
    %v1117 = vunpack.c.h.b16 %v638
    %v1118 = vunpack.c.l.b16 %v639
    %v1119 = vunpack.c.h.b16 %v639
    %v1120 = vunpack.c.l.b16 %v640
    %v1121 = vunpack.c.h.b16 %v640
    %v1122 = vunpack.c.l.b16 %v641
    %v1123 = vunpack.c.h.b16 %v641
    %v1124 = vunpack.c.l.b16 %v642
    %v1125 = vunpack.c.h.b16 %v642
    %v1126 = vunpack.c.l.b16 %v643
    %v1127 = vunpack.c.h.b16 %v643
    %v1128 = vunpack.c.l.b16 %v644
    %v1129 = vunpack.c.h.b16 %v644
    %v1130 = vunpack.c.l.b16 %v645
    %v1131 = vunpack.c.h.b16 %v645
    %v1132 = vunpack.c.l.b16 %v646
    %v1133 = vunpack.c.h.b16 %v646
    %v1134 = vunpack.c.l.b16 %v647
    %v1135 = vunpack.c.h.b16 %v647
    %v1136 = vunpack.c.l.b16 %v648
    %v1137 = vunpack.c.h.b16 %v648
    %v1138 = vunpack.c.l.b16 %v649
    %v1139 = vunpack.c.h.b16 %v649
    %v1140 = vpack.c.b16 %v824, %v820
    %v1141 = vpack.c.b16 %v825, %v821
    %v1142 = vpack.c.b16 %v826, %v822
    %v1143 = vpack.c.b16 %v827, %v823
    %v1144 = vpack.c.b16 %v832, %v828
    %v1145 = vpack.c.b16 %v833, %v829
    %v1146 = vpack.c.b16 %v834, %v830
    %v1147 = vpack.c.b16 %v835, %v831
    %v1148 = vpack.c.b16 %v840, %v836
    %v1149 = vpack.c.b16 %v841, %v837
    %v1150 = vpack.c.b16 %v842, %v838
    %v1151 = vpack.c.b16 %v843, %v839
    %v1152 = vpack.c.b16 %v848, %v844
    %v1153 = vpack.c.b16 %v849, %v845
    %v1154 = vpack.c.b16 %v850, %v846
    %v1155 = vpack.c.b16 %v851, %v847
    %v1156 = vpack.c.b16 %v856, %v852
    %v1157 = vpack.c.b16 %v857, %v853
    %v1158 = vpack.c.b16 %v858, %v854
    %v1159 = vpack.c.b16 %v859, %v855
    %v1160 = vpack.c.b16 %v864, %v860
    %v1161 = vpack.c.b16 %v865, %v861
    %v1162 = vpack.c.b16 %v866, %v862
    %v1163 = vpack.c.b16 %v867, %v863
    %v1164 = vpack.c.b16 %v872, %v868
    %v1165 = vpack.c.b16 %v873, %v869
    %v1166 = vpack.c.b16 %v874, %v870
    %v1167 = vpack.c.b16 %v875, %v871
    %v1168 = vpack.c.b16 %v880, %v876
    %v1169 = vpack.c.b16 %v881, %v877
    %v1170 = vpack.c.b16 %v882, %v878
    %v1171 = vpack.c.b16 %v883, %v879
    %v1172 = vpack.c.b16 %v888, %v884
    %v1173 = vpack.c.b16 %v889, %v885
    %v1174 = vpack.c.b16 %v890, %v886
    %v1175 = vpack.c.b16 %v891, %v887
    %v1176 = vpack.c.b16 %v896, %v892
    %v1177 = vpack.c.b16 %v897, %v893
    %v1178 = vpack.c.b16 %v898, %v894
    %v1179 = vpack.c.b16 %v899, %v895
    %v1180 = vpack.c.b16 %v904, %v900
    %v1181 = vpack.c.b16 %v905, %v901
    %v1182 = vpack.c.b16 %v906, %v902
    %v1183 = vpack.c.b16 %v907, %v903
    %v1184 = vpack.c.b16 %v912, %v908
    %v1185 = vpack.c.b16 %v913, %v909
    %v1186 = vpack.c.b16 %v914, %v910
    %v1187 = vpack.c.b16 %v915, %v911
    %v1188 = vpack.c.b16 %v920, %v916
    %v1189 = vpack.c.b16 %v921, %v917
    %v1190 = vpack.c.b16 %v922, %v918
    %v1191 = vpack.c.b16 %v923, %v919
    %v1192 = vpack.c.b16 %v928, %v924
    %v1193 = vpack.c.b16 %v929, %v925
    %v1194 = vpack.c.b16 %v930, %v926
    %v1195 = vpack.c.b16 %v931, %v927
    %v1196 = vpack.c.b16 %v936, %v932
    %v1197 = vpack.c.b16 %v937, %v933
    %v1198 = vpack.c.b16 %v938, %v934
    %v1199 = vpack.c.b16 %v939, %v935
    %v1200 = vpack.c.b16 %v944, %v940
    %v1201 = vpack.c.b16 %v945, %v941
    %v1202 = vpack.c.b16 %v946, %v942
    %v1203 = vpack.c.b16 %v947, %v943
    %v1204 = vpack.c.b16 %v952, %v948
    %v1205 = vpack.c.b16 %v953, %v949
    %v1206 = vpack.c.b16 %v954, %v950
    %v1207 = vpack.c.b16 %v955, %v951
    %v1208 = vpack.c.b16 %v960, %v956
    %v1209 = vpack.c.b16 %v961, %v957
    %v1210 = vpack.c.b16 %v962, %v958
    %v1211 = vpack.c.b16 %v963, %v959
    %v1212 = vpack.c.b16 %v968, %v964
    %v1213 = vpack.c.b16 %v969, %v965
    %v1214 = vpack.c.b16 %v970, %v966
    %v1215 = vpack.c.b16 %v971, %v967
    %v1216 = vpack.c.b16 %v976, %v972
    %v1217 = vpack.c.b16 %v977, %v973
    %v1218 = vpack.c.b16 %v978, %v974
    %v1219 = vpack.c.b16 %v979, %v975
    %v1220 = vpack.c.b16 %v984, %v980
    %v1221 = vpack.c.b16 %v985, %v981
    %v1222 = vpack.c.b16 %v986, %v982
    %v1223 = vpack.c.b16 %v987, %v983
    %v1224 = vpack.c.b16 %v992, %v988
    %v1225 = vpack.c.b16 %v993, %v989
    %v1226 = vpack.c.b16 %v994, %v990
    %v1227 = vpack.c.b16 %v995, %v991
    %v1228 = vpack.c.b16 %v1000, %v996
    %v1229 = vpack.c.b16 %v1001, %v997
    %v1230 = vpack.c.b16 %v1002, %v998
    %v1231 = vpack.c.b16 %v1003, %v999
    %v1232 = vpack.c.b16 %v1008, %v1004
    %v1233 = vpack.c.b16 %v1009, %v1005
    %v1234 = vpack.c.b16 %v1010, %v1006
    %v1235 = vpack.c.b16 %v1011, %v1007
    %v1236 = vpack.c.b16 %v1016, %v1012
    %v1237 = vpack.c.b16 %v1017, %v1013
    %v1238 = vpack.c.b16 %v1018, %v1014
    %v1239 = vpack.c.b16 %v1019, %v1015
    %v1240 = vpack.c.b16 %v1024, %v1020
    %v1241 = vpack.c.b16 %v1025, %v1021
    %v1242 = vpack.c.b16 %v1026, %v1022
    %v1243 = vpack.c.b16 %v1027, %v1023
    %v1244 = vpack.c.b16 %v1032, %v1028
    %v1245 = vpack.c.b16 %v1033, %v1029
    %v1246 = vpack.c.b16 %v1034, %v1030
    %v1247 = vpack.c.b16 %v1035, %v1031
    %v1248 = vpack.c.b16 %v1040, %v1036
    %v1249 = vpack.c.b16 %v1041, %v1037
    %v1250 = vpack.c.b16 %v1042, %v1038
    %v1251 = vpack.c.b16 %v1043, %v1039
    %v1252 = vpack.c.b16 %v1048, %v1044
    %v1253 = vpack.c.b16 %v1049, %v1045
    %v1254 = vpack.c.b16 %v1050, %v1046
    %v1255 = vpack.c.b16 %v1051, %v1047
    %v1256 = vpack.c.b16 %v1056, %v1052
    %v1257 = vpack.c.b16 %v1057, %v1053
    %v1258 = vpack.c.b16 %v1058, %v1054
    %v1259 = vpack.c.b16 %v1059, %v1055
    %v1260 = vpack.c.b16 %v1064, %v1060
    %v1261 = vpack.c.b16 %v1065, %v1061
    %v1262 = vpack.c.b16 %v1066, %v1062
    %v1263 = vpack.c.b16 %v1067, %v1063
    %v1264 = vpack.c.b16 %v1072, %v1068
    %v1265 = vpack.c.b16 %v1073, %v1069
    %v1266 = vpack.c.b16 %v1074, %v1070
    %v1267 = vpack.c.b16 %v1075, %v1071
    %v1268 = vpack.c.b16 %v1080, %v1076
    %v1269 = vpack.c.b16 %v1081, %v1077
    %v1270 = vpack.c.b16 %v1082, %v1078
    %v1271 = vpack.c.b16 %v1083, %v1079
    %v1272 = vpack.c.b16 %v1088, %v1084
    %v1273 = vpack.c.b16 %v1089, %v1085
    %v1274 = vpack.c.b16 %v1090, %v1086
    %v1275 = vpack.c.b16 %v1091, %v1087
    %v1276 = vpack.c.b16 %v1096, %v1092
    %v1277 = vpack.c.b16 %v1097, %v1093
    %v1278 = vpack.c.b16 %v1098, %v1094
    %v1279 = vpack.c.b16 %v1099, %v1095
    %v1280 = vpack.c.b16 %v1104, %v1100
    %v1281 = vpack.c.b16 %v1105, %v1101
    %v1282 = vpack.c.b16 %v1106, %v1102
    %v1283 = vpack.c.b16 %v1107, %v1103
    %v1284 = vpack.c.b16 %v1112, %v1108
    %v1285 = vpack.c.b16 %v1113, %v1109
    %v1286 = vpack.c.b16 %v1114, %v1110
    %v1287 = vpack.c.b16 %v1115, %v1111
    %v1288 = vpack.c.b16 %v1120, %v1116
    %v1289 = vpack.c.b16 %v1121, %v1117
    %v1290 = vpack.c.b16 %v1122, %v1118
    %v1291 = vpack.c.b16 %v1123, %v1119
    %v1292 = vpack.c.b16 %v1128, %v1124
    %v1293 = vpack.c.b16 %v1129, %v1125
    %v1294 = vpack.c.b16 %v1130, %v1126
    %v1295 = vpack.c.b16 %v1131, %v1127
    %v1296 = vpack.c.b16 %v1136, %v1132
    %v1297 = vpack.c.b16 %v1137, %v1133
    %v1298 = vpack.c.b16 %v1138, %v1134
    %v1299 = vpack.c.b16 %v1139, %v1135
    %1460 = vmatpush.bf16.msra.mxu0 %v1168
    %1461 = vmatpush.bf16.msra.mxu0 %v1164
    %1462 = vmatpush.bf16.msra.mxu0 %v1160
    %1463 = vmatpush.bf16.msra.mxu0 %v1156
    %1464 = vmatpush.bf16.msra.mxu0 %v1152
    %1465 = vmatpush.bf16.msra.mxu0 %v1148
    %1466 = vmatpush.bf16.msra.mxu0 %v1144
    %1467 = vmatpush.bf16.msra.mxu0 %v1140
    %1468 = vmatmul.bf16.gmra.mxu0 %v454
    %v1469 = vpop.f32.mrf.mxu0
    %v1470 = vadd.f32 %v652, %v1469
    %v1471 = vpop.f32.mrf.mxu0
    %v1472 = vadd.f32 %v652, %v1471
    %1473 = vmatmul.bf16.gmra.mxu0 %v455
    %v1474 = vpop.f32.mrf.mxu0
    %v1475 = vadd.f32 %v652, %v1474
    %v1476 = vpop.f32.mrf.mxu0
    %v1477 = vadd.f32 %v652, %v1476
    %1478 = vdwg.mxu0
    %1479 = vmatpush.bf16.msra.mxu0 %v1200
    %1480 = vmatpush.bf16.msra.mxu0 %v1196
    %1481 = vmatpush.bf16.msra.mxu0 %v1192
    %1482 = vmatpush.bf16.msra.mxu0 %v1188
    %1483 = vmatpush.bf16.msra.mxu0 %v1184
    %1484 = vmatpush.bf16.msra.mxu0 %v1180
    %1485 = vmatpush.bf16.msra.mxu0 %v1176
    %1486 = vmatpush.bf16.msra.mxu0 %v1172
    %1487 = vmatmul.bf16.gmra.mxu0 %v462
    %v1488 = vpop.f32.mrf.mxu0
    %v1489 = vadd.f32 %v1470, %v1488
    %v1490 = vpop.f32.mrf.mxu0
    %v1491 = vadd.f32 %v1472, %v1490
    %1492 = vmatmul.bf16.gmra.mxu0 %v463
    %v1493 = vpop.f32.mrf.mxu0
    %v1494 = vadd.f32 %v1475, %v1493
    %v1495 = vpop.f32.mrf.mxu0
    %v1496 = vadd.f32 %v1477, %v1495
    %1497 = vdwg.mxu0
    %1498 = vmatpush.bf16.msra.mxu0 %v1232
    %1499 = vmatpush.bf16.msra.mxu0 %v1228
    %1500 = vmatpush.bf16.msra.mxu0 %v1224
    %1501 = vmatpush.bf16.msra.mxu0 %v1220
    %1502 = vmatpush.bf16.msra.mxu0 %v1216
    %1503 = vmatpush.bf16.msra.mxu0 %v1212
    %1504 = vmatpush.bf16.msra.mxu0 %v1208
    %1505 = vmatpush.bf16.msra.mxu0 %v1204
    %1506 = vmatmul.bf16.gmra.mxu0 %v470
    %v1507 = vpop.f32.mrf.mxu0
    %v1508 = vadd.f32 %v1489, %v1507
    %v1509 = vpop.f32.mrf.mxu0
    %v1510 = vadd.f32 %v1491, %v1509
    %1511 = vmatmul.bf16.gmra.mxu0 %v471
    %v1512 = vpop.f32.mrf.mxu0
    %v1513 = vadd.f32 %v1494, %v1512
    %v1514 = vpop.f32.mrf.mxu0
    %v1515 = vadd.f32 %v1496, %v1514
    %1516 = vdwg.mxu0
    %1517 = vmatpush.bf16.msra.mxu0 %v1264
    %1518 = vmatpush.bf16.msra.mxu0 %v1260
    %1519 = vmatpush.bf16.msra.mxu0 %v1256
    %1520 = vmatpush.bf16.msra.mxu0 %v1252
    %1521 = vmatpush.bf16.msra.mxu0 %v1248
    %1522 = vmatpush.bf16.msra.mxu0 %v1244
    %1523 = vmatpush.bf16.msra.mxu0 %v1240
    %1524 = vmatpush.bf16.msra.mxu0 %v1236
    %1525 = vmatmul.bf16.gmra.mxu0 %v478
    %v1526 = vpop.f32.mrf.mxu0
    %v1527 = vadd.f32 %v1508, %v1526
    %v1528 = vpop.f32.mrf.mxu0
    %v1529 = vadd.f32 %v1510, %v1528
    %1530 = vmatmul.bf16.gmra.mxu0 %v479
    %v1531 = vpop.f32.mrf.mxu0
    %v1532 = vadd.f32 %v1513, %v1531
    %v1533 = vpop.f32.mrf.mxu0
    %v1534 = vadd.f32 %v1515, %v1533
    %1535 = vdwg.mxu0
    %1536 = vmatpush.bf16.msra.mxu0 %v1296
    %1537 = vmatpush.bf16.msra.mxu0 %v1292
    %1538 = vmatpush.bf16.msra.mxu0 %v1288
    %1539 = vmatpush.bf16.msra.mxu0 %v1284
    %1540 = vmatpush.bf16.msra.mxu0 %v1280
    %1541 = vmatpush.bf16.msra.mxu0 %v1276
    %1542 = vmatpush.bf16.msra.mxu0 %v1272
    %1543 = vmatpush.bf16.msra.mxu0 %v1268
    %1544 = vmatmul.bf16.gmra.mxu0 %v486
    %v1545 = vpop.f32.mrf.mxu0
    %v1546 = vadd.f32 %v1527, %v1545
    %v1547 = vpop.f32.mrf.mxu0
    %v1548 = vadd.f32 %v1529, %v1547
    %1549 = vmatmul.bf16.gmra.mxu0 %v487
    %v1550 = vpop.f32.mrf.mxu0
    %v1551 = vadd.f32 %v1532, %v1550
    %v1552 = vpop.f32.mrf.mxu0
    %v1553 = vadd.f32 %v1534, %v1552
    %1554 = vdwg.mxu0
    %1555 = vmatpush.bf16.msra.mxu0 %v1169
    %1556 = vmatpush.bf16.msra.mxu0 %v1165
    %1557 = vmatpush.bf16.msra.mxu0 %v1161
    %1558 = vmatpush.bf16.msra.mxu0 %v1157
    %1559 = vmatpush.bf16.msra.mxu0 %v1153
    %1560 = vmatpush.bf16.msra.mxu0 %v1149
    %1561 = vmatpush.bf16.msra.mxu0 %v1145
    %1562 = vmatpush.bf16.msra.mxu0 %v1141
    %1563 = vmatmul.bf16.gmra.mxu0 %v454
    %v1564 = vpop.f32.mrf.mxu0
    %v1565 = vadd.f32 %v653, %v1564
    %v1566 = vpop.f32.mrf.mxu0
    %v1567 = vadd.f32 %v653, %v1566
    %1568 = vmatmul.bf16.gmra.mxu0 %v455
    %v1569 = vpop.f32.mrf.mxu0
    %v1570 = vadd.f32 %v653, %v1569
    %v1571 = vpop.f32.mrf.mxu0
    %v1572 = vadd.f32 %v653, %v1571
    %1573 = vdwg.mxu0
    %1574 = vmatpush.bf16.msra.mxu0 %v1201
    %1575 = vmatpush.bf16.msra.mxu0 %v1197
    %1576 = vmatpush.bf16.msra.mxu0 %v1193
    %1577 = vmatpush.bf16.msra.mxu0 %v1189
    %1578 = vmatpush.bf16.msra.mxu0 %v1185
    %1579 = vmatpush.bf16.msra.mxu0 %v1181
    %1580 = vmatpush.bf16.msra.mxu0 %v1177
    %1581 = vmatpush.bf16.msra.mxu0 %v1173
    %1582 = vmatmul.bf16.gmra.mxu0 %v462
    %v1583 = vpop.f32.mrf.mxu0
    %v1584 = vadd.f32 %v1565, %v1583
    %v1585 = vpop.f32.mrf.mxu0
    %v1586 = vadd.f32 %v1567, %v1585
    %1587 = vmatmul.bf16.gmra.mxu0 %v463
    %v1588 = vpop.f32.mrf.mxu0
    %v1589 = vadd.f32 %v1570, %v1588
    %v1590 = vpop.f32.mrf.mxu0
    %v1591 = vadd.f32 %v1572, %v1590
    %1592 = vdwg.mxu0
    %1593 = vmatpush.bf16.msra.mxu0 %v1233
    %1594 = vmatpush.bf16.msra.mxu0 %v1229
    %1595 = vmatpush.bf16.msra.mxu0 %v1225
    %1596 = vmatpush.bf16.msra.mxu0 %v1221
    %1597 = vmatpush.bf16.msra.mxu0 %v1217
    %1598 = vmatpush.bf16.msra.mxu0 %v1213
    %1599 = vmatpush.bf16.msra.mxu0 %v1209
    %1600 = vmatpush.bf16.msra.mxu0 %v1205
    %1601 = vmatmul.bf16.gmra.mxu0 %v470
    %v1602 = vpop.f32.mrf.mxu0
    %v1603 = vadd.f32 %v1584, %v1602
    %v1604 = vpop.f32.mrf.mxu0
    %v1605 = vadd.f32 %v1586, %v1604
    %1606 = vmatmul.bf16.gmra.mxu0 %v471
    %v1607 = vpop.f32.mrf.mxu0
    %v1608 = vadd.f32 %v1589, %v1607
    %v1609 = vpop.f32.mrf.mxu0
    %v1610 = vadd.f32 %v1591, %v1609
    %1611 = vdwg.mxu0
    %1612 = vmatpush.bf16.msra.mxu0 %v1265
    %1613 = vmatpush.bf16.msra.mxu0 %v1261
    %1614 = vmatpush.bf16.msra.mxu0 %v1257
    %1615 = vmatpush.bf16.msra.mxu0 %v1253
    %1616 = vmatpush.bf16.msra.mxu0 %v1249
    %1617 = vmatpush.bf16.msra.mxu0 %v1245
    %1618 = vmatpush.bf16.msra.mxu0 %v1241
    %1619 = vmatpush.bf16.msra.mxu0 %v1237
    %1620 = vmatmul.bf16.gmra.mxu0 %v478
    %v1621 = vpop.f32.mrf.mxu0
    %v1622 = vadd.f32 %v1603, %v1621
    %v1623 = vpop.f32.mrf.mxu0
    %v1624 = vadd.f32 %v1605, %v1623
    %1625 = vmatmul.bf16.gmra.mxu0 %v479
    %v1626 = vpop.f32.mrf.mxu0
    %v1627 = vadd.f32 %v1608, %v1626
    %v1628 = vpop.f32.mrf.mxu0
    %v1629 = vadd.f32 %v1610, %v1628
    %1630 = vdwg.mxu0
    %1631 = vmatpush.bf16.msra.mxu0 %v1297
    %1632 = vmatpush.bf16.msra.mxu0 %v1293
    %1633 = vmatpush.bf16.msra.mxu0 %v1289
    %1634 = vmatpush.bf16.msra.mxu0 %v1285
    %1635 = vmatpush.bf16.msra.mxu0 %v1281
    %1636 = vmatpush.bf16.msra.mxu0 %v1277
    %1637 = vmatpush.bf16.msra.mxu0 %v1273
    %1638 = vmatpush.bf16.msra.mxu0 %v1269
    %1639 = vmatmul.bf16.gmra.mxu0 %v486
    %v1640 = vpop.f32.mrf.mxu0
    %v1641 = vadd.f32 %v1622, %v1640
    %v1642 = vpop.f32.mrf.mxu0
    %v1643 = vadd.f32 %v1624, %v1642
    %1644 = vmatmul.bf16.gmra.mxu0 %v487
    %v1645 = vpop.f32.mrf.mxu0
    %v1646 = vadd.f32 %v1627, %v1645
    %v1647 = vpop.f32.mrf.mxu0
    %v1648 = vadd.f32 %v1629, %v1647
    %1649 = vdwg.mxu0
    %1650 = vmatpush.bf16.msra.mxu0 %v1170
    %1651 = vmatpush.bf16.msra.mxu0 %v1166
    %1652 = vmatpush.bf16.msra.mxu0 %v1162
    %1653 = vmatpush.bf16.msra.mxu0 %v1158
    %1654 = vmatpush.bf16.msra.mxu0 %v1154
    %1655 = vmatpush.bf16.msra.mxu0 %v1150
    %1656 = vmatpush.bf16.msra.mxu0 %v1146
    %1657 = vmatpush.bf16.msra.mxu0 %v1142
    %1658 = vmatmul.bf16.gmra.mxu0 %v454
    %v1659 = vpop.f32.mrf.mxu0
    %v1660 = vadd.f32 %v654, %v1659
    %v1661 = vpop.f32.mrf.mxu0
    %v1662 = vadd.f32 %v654, %v1661
    %1663 = vmatmul.bf16.gmra.mxu0 %v455
    %v1664 = vpop.f32.mrf.mxu0
    %v1665 = vadd.f32 %v654, %v1664
    %v1666 = vpop.f32.mrf.mxu0
    %v1667 = vadd.f32 %v654, %v1666
    %1668 = vdwg.mxu0
    %1669 = vmatpush.bf16.msra.mxu0 %v1202
    %1670 = vmatpush.bf16.msra.mxu0 %v1198
    %1671 = vmatpush.bf16.msra.mxu0 %v1194
    %1672 = vmatpush.bf16.msra.mxu0 %v1190
    %1673 = vmatpush.bf16.msra.mxu0 %v1186
    %1674 = vmatpush.bf16.msra.mxu0 %v1182
    %1675 = vmatpush.bf16.msra.mxu0 %v1178
    %1676 = vmatpush.bf16.msra.mxu0 %v1174
    %1677 = vmatmul.bf16.gmra.mxu0 %v462
    %v1678 = vpop.f32.mrf.mxu0
    %v1679 = vadd.f32 %v1660, %v1678
    %v1680 = vpop.f32.mrf.mxu0
    %v1681 = vadd.f32 %v1662, %v1680
    %1682 = vmatmul.bf16.gmra.mxu0 %v463
    %v1683 = vpop.f32.mrf.mxu0
    %v1684 = vadd.f32 %v1665, %v1683
    %v1685 = vpop.f32.mrf.mxu0
    %v1686 = vadd.f32 %v1667, %v1685
    %1687 = vdwg.mxu0
    %1688 = vmatpush.bf16.msra.mxu0 %v1234
    %1689 = vmatpush.bf16.msra.mxu0 %v1230
    %1690 = vmatpush.bf16.msra.mxu0 %v1226
    %1691 = vmatpush.bf16.msra.mxu0 %v1222
    %1692 = vmatpush.bf16.msra.mxu0 %v1218
    %1693 = vmatpush.bf16.msra.mxu0 %v1214
    %1694 = vmatpush.bf16.msra.mxu0 %v1210
    %1695 = vmatpush.bf16.msra.mxu0 %v1206
    %1696 = vmatmul.bf16.gmra.mxu0 %v470
    %v1697 = vpop.f32.mrf.mxu0
    %v1698 = vadd.f32 %v1679, %v1697
    %v1699 = vpop.f32.mrf.mxu0
    %v1700 = vadd.f32 %v1681, %v1699
    %1701 = vmatmul.bf16.gmra.mxu0 %v471
    %v1702 = vpop.f32.mrf.mxu0
    %v1703 = vadd.f32 %v1684, %v1702
    %v1704 = vpop.f32.mrf.mxu0
    %v1705 = vadd.f32 %v1686, %v1704
    %1706 = vdwg.mxu0
    %1707 = vmatpush.bf16.msra.mxu0 %v1266
    %1708 = vmatpush.bf16.msra.mxu0 %v1262
    %1709 = vmatpush.bf16.msra.mxu0 %v1258
    %1710 = vmatpush.bf16.msra.mxu0 %v1254
    %1711 = vmatpush.bf16.msra.mxu0 %v1250
    %1712 = vmatpush.bf16.msra.mxu0 %v1246
    %1713 = vmatpush.bf16.msra.mxu0 %v1242
    %1714 = vmatpush.bf16.msra.mxu0 %v1238
    %1715 = vmatmul.bf16.gmra.mxu0 %v478
    %v1716 = vpop.f32.mrf.mxu0
    %v1717 = vadd.f32 %v1698, %v1716
    %v1718 = vpop.f32.mrf.mxu0
    %v1719 = vadd.f32 %v1700, %v1718
    %1720 = vmatmul.bf16.gmra.mxu0 %v479
    %v1721 = vpop.f32.mrf.mxu0
    %v1722 = vadd.f32 %v1703, %v1721
    %v1723 = vpop.f32.mrf.mxu0
    %v1724 = vadd.f32 %v1705, %v1723
    %1725 = vdwg.mxu0
    %1726 = vmatpush.bf16.msra.mxu0 %v1298
    %1727 = vmatpush.bf16.msra.mxu0 %v1294
    %1728 = vmatpush.bf16.msra.mxu0 %v1290
    %1729 = vmatpush.bf16.msra.mxu0 %v1286
    %1730 = vmatpush.bf16.msra.mxu0 %v1282
    %1731 = vmatpush.bf16.msra.mxu0 %v1278
    %1732 = vmatpush.bf16.msra.mxu0 %v1274
    %1733 = vmatpush.bf16.msra.mxu0 %v1270
    %1734 = vmatmul.bf16.gmra.mxu0 %v486
    %v1735 = vpop.f32.mrf.mxu0
    %v1736 = vadd.f32 %v1717, %v1735
    %v1737 = vpop.f32.mrf.mxu0
    %v1738 = vadd.f32 %v1719, %v1737
    %1739 = vmatmul.bf16.gmra.mxu0 %v487
    %v1740 = vpop.f32.mrf.mxu0
    %v1741 = vadd.f32 %v1722, %v1740
    %v1742 = vpop.f32.mrf.mxu0
    %v1743 = vadd.f32 %v1724, %v1742
    %1744 = vdwg.mxu0
    %1745 = vmatpush.bf16.msra.mxu0 %v1171
    %1746 = vmatpush.bf16.msra.mxu0 %v1167
    %1747 = vmatpush.bf16.msra.mxu0 %v1163
    %1748 = vmatpush.bf16.msra.mxu0 %v1159
    %1749 = vmatpush.bf16.msra.mxu0 %v1155
    %1750 = vmatpush.bf16.msra.mxu0 %v1151
    %1751 = vmatpush.bf16.msra.mxu0 %v1147
    %1752 = vmatpush.bf16.msra.mxu0 %v1143
    %1753 = vmatmul.bf16.gmra.mxu0 %v454
    %v1754 = vpop.f32.mrf.mxu0
    %v1755 = vadd.f32 %v655, %v1754
    %v1756 = vpop.f32.mrf.mxu0
    %v1757 = vadd.f32 %v655, %v1756
    %1758 = vmatmul.bf16.gmra.mxu0 %v455
    %v1759 = vpop.f32.mrf.mxu0
    %v1760 = vadd.f32 %v655, %v1759
    %v1761 = vpop.f32.mrf.mxu0
    %v1762 = vadd.f32 %v655, %v1761
    %1763 = vdwg.mxu0
    %1764 = vmatpush.bf16.msra.mxu0 %v1203
    %1765 = vmatpush.bf16.msra.mxu0 %v1199
    %1766 = vmatpush.bf16.msra.mxu0 %v1195
    %1767 = vmatpush.bf16.msra.mxu0 %v1191
    %1768 = vmatpush.bf16.msra.mxu0 %v1187
    %1769 = vmatpush.bf16.msra.mxu0 %v1183
    %1770 = vmatpush.bf16.msra.mxu0 %v1179
    %1771 = vmatpush.bf16.msra.mxu0 %v1175
    %1772 = vmatmul.bf16.gmra.mxu0 %v462
    %v1773 = vpop.f32.mrf.mxu0
    %v1774 = vadd.f32 %v1755, %v1773
    %v1775 = vpop.f32.mrf.mxu0
    %v1776 = vadd.f32 %v1757, %v1775
    %1777 = vmatmul.bf16.gmra.mxu0 %v463
    %v1778 = vpop.f32.mrf.mxu0
    %v1779 = vadd.f32 %v1760, %v1778
    %v1780 = vpop.f32.mrf.mxu0
    %v1781 = vadd.f32 %v1762, %v1780
    %1782 = vdwg.mxu0
    %1783 = vmatpush.bf16.msra.mxu0 %v1235
    %1784 = vmatpush.bf16.msra.mxu0 %v1231
    %1785 = vmatpush.bf16.msra.mxu0 %v1227
    %1786 = vmatpush.bf16.msra.mxu0 %v1223
    %1787 = vmatpush.bf16.msra.mxu0 %v1219
    %1788 = vmatpush.bf16.msra.mxu0 %v1215
    %1789 = vmatpush.bf16.msra.mxu0 %v1211
    %1790 = vmatpush.bf16.msra.mxu0 %v1207
    %1791 = vmatmul.bf16.gmra.mxu0 %v470
    %v1792 = vpop.f32.mrf.mxu0
    %v1793 = vadd.f32 %v1774, %v1792
    %v1794 = vpop.f32.mrf.mxu0
    %v1795 = vadd.f32 %v1776, %v1794
    %1796 = vmatmul.bf16.gmra.mxu0 %v471
    %v1797 = vpop.f32.mrf.mxu0
    %v1798 = vadd.f32 %v1779, %v1797
    %v1799 = vpop.f32.mrf.mxu0
    %v1800 = vadd.f32 %v1781, %v1799
    %1801 = vdwg.mxu0
    %1802 = vmatpush.bf16.msra.mxu0 %v1267
    %1803 = vmatpush.bf16.msra.mxu0 %v1263
    %1804 = vmatpush.bf16.msra.mxu0 %v1259
    %1805 = vmatpush.bf16.msra.mxu0 %v1255
    %1806 = vmatpush.bf16.msra.mxu0 %v1251
    %1807 = vmatpush.bf16.msra.mxu0 %v1247
    %1808 = vmatpush.bf16.msra.mxu0 %v1243
    %1809 = vmatpush.bf16.msra.mxu0 %v1239
    %1810 = vmatmul.bf16.gmra.mxu0 %v478
    %v1811 = vpop.f32.mrf.mxu0
    %v1812 = vadd.f32 %v1793, %v1811
    %v1813 = vpop.f32.mrf.mxu0
    %v1814 = vadd.f32 %v1795, %v1813
    %1815 = vmatmul.bf16.gmra.mxu0 %v479
    %v1816 = vpop.f32.mrf.mxu0
    %v1817 = vadd.f32 %v1798, %v1816
    %v1818 = vpop.f32.mrf.mxu0
    %v1819 = vadd.f32 %v1800, %v1818
    %1820 = vdwg.mxu0
    %1821 = vmatpush.bf16.msra.mxu0 %v1299
    %1822 = vmatpush.bf16.msra.mxu0 %v1295
    %1823 = vmatpush.bf16.msra.mxu0 %v1291
    %1824 = vmatpush.bf16.msra.mxu0 %v1287
    %1825 = vmatpush.bf16.msra.mxu0 %v1283
    %1826 = vmatpush.bf16.msra.mxu0 %v1279
    %1827 = vmatpush.bf16.msra.mxu0 %v1275
    %1828 = vmatpush.bf16.msra.mxu0 %v1271
    %1829 = vmatmul.bf16.gmra.mxu0 %v486
    %v1830 = vpop.f32.mrf.mxu0
    %v1831 = vadd.f32 %v1812, %v1830
    %v1832 = vpop.f32.mrf.mxu0
    %v1833 = vadd.f32 %v1814, %v1832
    %1834 = vmatmul.bf16.gmra.mxu0 %v487
    %v1835 = vpop.f32.mrf.mxu0
    %v1836 = vadd.f32 %v1817, %v1835
    %v1837 = vpop.f32.mrf.mxu0
    %v1838 = vadd.f32 %v1819, %v1837
    %1839 = vdwg.mxu0
    %v1840 = vmax.f32 %v1546, 0.0
    %v1841 = vmax.f32 %v1641, 0.0
    %v1842 = vmax.f32 %v1736, 0.0
    %v1843 = vmax.f32 %v1831, 0.0
    %v1844 = vmax.f32 %v1548, 0.0
    %v1845 = vmax.f32 %v1643, 0.0
    %v1846 = vmax.f32 %v1738, 0.0
    %v1847 = vmax.f32 %v1833, 0.0
    %v1848 = vmax.f32 %v1551, 0.0
    %v1849 = vmax.f32 %v1646, 0.0
    %v1850 = vmax.f32 %v1741, 0.0
    %v1851 = vmax.f32 %v1836, 0.0
    %v1852 = vmax.f32 %v1553, 0.0
    %v1853 = vmax.f32 %v1648, 0.0
    %v1854 = vmax.f32 %v1743, 0.0
    %v1855 = vmax.f32 %v1838, 0.0
    %v1856 = vpack.c.bf16 %v1844, %v1840
    %v1857 = vpack.c.bf16 %v1845, %v1841
    %v1858 = vpack.c.bf16 %v1846, %v1842
    %v1859 = vpack.c.bf16 %v1847, %v1843
    %v1860 = vpack.c.bf16 %v1852, %v1848
    %v1861 = vpack.c.bf16 %v1853, %v1849
    %v1862 = vpack.c.bf16 %v1854, %v1850
    %v1863 = vpack.c.bf16 %v1855, %v1851
    %v1864 = vld [vmem:[#allocation14] sm:$0xff]
    %v1865 = vld [vmem:[#allocation14 + $0x8] sm:$0xff]
    %v1866 = vld [vmem:[#allocation14 + $0x10] sm:$0xff]
    %v1867 = vld [vmem:[#allocation14 + $0x18] sm:$0xff]
    %v1868 = vld [vmem:[#allocation14 + $0x20] sm:$0xff]
    %v1869 = vld [vmem:[#allocation14 + $0x28] sm:$0xff]
    %v1870 = vld [vmem:[#allocation14 + $0x30] sm:$0xff]
    %v1871 = vld [vmem:[#allocation14 + $0x38] sm:$0xff]
    %v1872 = vld [vmem:[#allocation14 + $0x40] sm:$0xff]
    %v1873 = vld [vmem:[#allocation14 + $0x48] sm:$0xff]
    %v1874 = vld [vmem:[#allocation14 + $0x50] sm:$0xff]
    %v1875 = vld [vmem:[#allocation14 + $0x58] sm:$0xff]
    %v1876 = vld [vmem:[#allocation14 + $0x60] sm:$0xff]
    %v1877 = vld [vmem:[#allocation14 + $0x68] sm:$0xff]
    %v1878 = vld [vmem:[#allocation14 + $0x70] sm:$0xff]
    %v1879 = vld [vmem:[#allocation14 + $0x78] sm:$0xff]
    %v1880 = vld [vmem:[#allocation14 + $0x80] sm:$0xff]
    %v1881 = vld [vmem:[#allocation14 + $0x88] sm:$0xff]
    %v1882 = vld [vmem:[#allocation14 + $0x90] sm:$0xff]
    %v1883 = vld [vmem:[#allocation14 + $0x98] sm:$0xff]
    %v1884 = vld [vmem:[#allocation14 + $0xa0] sm:$0xff]
    %v1885 = vld [vmem:[#allocation14 + $0xa8] sm:$0xff]
    %v1886 = vld [vmem:[#allocation14 + $0xb0] sm:$0xff]
    %v1887 = vld [vmem:[#allocation14 + $0xb8] sm:$0xff]
    %v1888 = vld [vmem:[#allocation14 + $0xc0] sm:$0xff]
    %v1889 = vld [vmem:[#allocation14 + $0xc8] sm:$0xff]
    %v1890 = vld [vmem:[#allocation14 + $0xd0] sm:$0xff]
    %v1891 = vld [vmem:[#allocation14 + $0xd8] sm:$0xff]
    %v1892 = vld [vmem:[#allocation14 + $0xe0] sm:$0xff]
    %v1893 = vld [vmem:[#allocation14 + $0xe8] sm:$0xff]
    %v1894 = vld [vmem:[#allocation14 + $0xf0] sm:$0xff]
    %v1895 = vld [vmem:[#allocation14 + $0xf8] sm:$0xff]
    %v1896 = vld [vmem:[#allocation14 + $0x100] sm:$0xff]
    %v1897 = vld [vmem:[#allocation14 + $0x108] sm:$0xff]
    %v1898 = vld [vmem:[#allocation14 + $0x110] sm:$0xff]
    %v1899 = vld [vmem:[#allocation14 + $0x118] sm:$0xff]
    %v1900 = vld [vmem:[#allocation14 + $0x120] sm:$0xff]
    %v1901 = vld [vmem:[#allocation14 + $0x128] sm:$0xff]
    %v1902 = vld [vmem:[#allocation14 + $0x130] sm:$0xff]
    %v1903 = vld [vmem:[#allocation14 + $0x138] sm:$0xff]
    %v1904 = vld [vmem:[#allocation14 + $0x140] sm:$0xff]
    %v1905 = vld [vmem:[#allocation14 + $0x148] sm:$0xff]
    %v1906 = vld [vmem:[#allocation14 + $0x150] sm:$0xff]
    %v1907 = vld [vmem:[#allocation14 + $0x158] sm:$0xff]
    %v1908 = vld [vmem:[#allocation14 + $0x160] sm:$0xff]
    %v1909 = vld [vmem:[#allocation14 + $0x168] sm:$0xff]
    %v1910 = vld [vmem:[#allocation14 + $0x170] sm:$0xff]
    %v1911 = vld [vmem:[#allocation14 + $0x178] sm:$0xff]
    %v1912 = vld [vmem:[#allocation14 + $0x180] sm:$0xff]
    %v1913 = vld [vmem:[#allocation14 + $0x188] sm:$0xff]
    %v1914 = vld [vmem:[#allocation14 + $0x190] sm:$0xff]
    %v1915 = vld [vmem:[#allocation14 + $0x198] sm:$0xff]
    %v1916 = vld [vmem:[#allocation14 + $0x1a0] sm:$0xff]
    %v1917 = vld [vmem:[#allocation14 + $0x1a8] sm:$0xff]
    %v1918 = vld [vmem:[#allocation14 + $0x1b0] sm:$0xff]
    %v1919 = vld [vmem:[#allocation14 + $0x1b8] sm:$0xff]
    %v1920 = vld [vmem:[#allocation14 + $0x1c0] sm:$0xff]
    %v1921 = vld [vmem:[#allocation14 + $0x1c8] sm:$0xff]
    %v1922 = vld [vmem:[#allocation14 + $0x1d0] sm:$0xff]
    %v1923 = vld [vmem:[#allocation14 + $0x1d8] sm:$0xff]
    %v1924 = vld [vmem:[#allocation14 + $0x1e0] sm:$0xff]
    %v1925 = vld [vmem:[#allocation14 + $0x1e8] sm:$0xff]
    %v1926 = vld [vmem:[#allocation14 + $0x1f0] sm:$0xff]
    %v1927 = vld [vmem:[#allocation14 + $0x1f8] sm:$0xff]
    %v1928 = vld [vmem:[#allocation14 + $0x200] sm:$0xff]
    %v1929 = vld [vmem:[#allocation14 + $0x208] sm:$0xff]
    %v1930 = vld [vmem:[#allocation14 + $0x210] sm:$0xff]
    %v1931 = vld [vmem:[#allocation14 + $0x218] sm:$0xff]
    %v1932 = vld [vmem:[#allocation14 + $0x220] sm:$0xff]
    %v1933 = vld [vmem:[#allocation14 + $0x228] sm:$0xff]
    %v1934 = vld [vmem:[#allocation14 + $0x230] sm:$0xff]
    %v1935 = vld [vmem:[#allocation14 + $0x238] sm:$0xff]
    %v1936 = vld [vmem:[#allocation14 + $0x240] sm:$0xff]
    %v1937 = vld [vmem:[#allocation14 + $0x248] sm:$0xff]
    %v1938 = vld [vmem:[#allocation14 + $0x250] sm:$0xff]
    %v1939 = vld [vmem:[#allocation14 + $0x258] sm:$0xff]
    %v1940 = vld [vmem:[#allocation14 + $0x260] sm:$0xff]
    %v1941 = vld [vmem:[#allocation14 + $0x268] sm:$0xff]
    %v1942 = vld [vmem:[#allocation14 + $0x270] sm:$0xff]
    %v1943 = vld [vmem:[#allocation14 + $0x278] sm:$0xff]
    %v1944 = vld [vmem:[#allocation14 + $0x280] sm:$0xff]
    %v1945 = vld [vmem:[#allocation14 + $0x288] sm:$0xff]
    %v1946 = vld [vmem:[#allocation14 + $0x290] sm:$0xff]
    %v1947 = vld [vmem:[#allocation14 + $0x298] sm:$0xff]
    %v1948 = vld [vmem:[#allocation14 + $0x2a0] sm:$0xff]
    %v1949 = vld [vmem:[#allocation14 + $0x2a8] sm:$0xff]
    %v1950 = vld [vmem:[#allocation14 + $0x2b0] sm:$0xff]
    %v1951 = vld [vmem:[#allocation14 + $0x2b8] sm:$0xff]
    %v1952 = vld [vmem:[#allocation14 + $0x2c0] sm:$0xff]
    %v1953 = vld [vmem:[#allocation14 + $0x2c8] sm:$0xff]
    %v1954 = vld [vmem:[#allocation14 + $0x2d0] sm:$0xff]
    %v1955 = vld [vmem:[#allocation14 + $0x2d8] sm:$0xff]
    %v1956 = vld [vmem:[#allocation14 + $0x2e0] sm:$0xff]
    %v1957 = vld [vmem:[#allocation14 + $0x2e8] sm:$0xff]
    %v1958 = vld [vmem:[#allocation14 + $0x2f0] sm:$0xff]
    %v1959 = vld [vmem:[#allocation14 + $0x2f8] sm:$0xff]
    %v1960 = vld [vmem:[#allocation14 + $0x300] sm:$0xff]
    %v1961 = vld [vmem:[#allocation14 + $0x308] sm:$0xff]
    %v1962 = vld [vmem:[#allocation14 + $0x310] sm:$0xff]
    %v1963 = vld [vmem:[#allocation14 + $0x318] sm:$0xff]
    %v1964 = vld [vmem:[#allocation14 + $0x320] sm:$0xff]
    %v1965 = vld [vmem:[#allocation14 + $0x328] sm:$0xff]
    %v1966 = vld [vmem:[#allocation14 + $0x330] sm:$0xff]
    %v1967 = vld [vmem:[#allocation14 + $0x338] sm:$0xff]
    %v1968 = vld [vmem:[#allocation14 + $0x340] sm:$0xff]
    %v1969 = vld [vmem:[#allocation14 + $0x348] sm:$0xff]
    %v1970 = vld [vmem:[#allocation14 + $0x350] sm:$0xff]
    %v1971 = vld [vmem:[#allocation14 + $0x358] sm:$0xff]
    %v1972 = vld [vmem:[#allocation14 + $0x360] sm:$0xff]
    %v1973 = vld [vmem:[#allocation14 + $0x368] sm:$0xff]
    %v1974 = vld [vmem:[#allocation14 + $0x370] sm:$0xff]
    %v1975 = vld [vmem:[#allocation14 + $0x378] sm:$0xff]
    %v1976 = vld [vmem:[#allocation14 + $0x380] sm:$0xff]
    %v1977 = vld [vmem:[#allocation14 + $0x388] sm:$0xff]
    %v1978 = vld [vmem:[#allocation14 + $0x390] sm:$0xff]
    %v1979 = vld [vmem:[#allocation14 + $0x398] sm:$0xff]
    %v1980 = vld [vmem:[#allocation14 + $0x3a0] sm:$0xff]
    %v1981 = vld [vmem:[#allocation14 + $0x3a8] sm:$0xff]
    %v1982 = vld [vmem:[#allocation14 + $0x3b0] sm:$0xff]
    %v1983 = vld [vmem:[#allocation14 + $0x3b8] sm:$0xff]
    %v1984 = vld [vmem:[#allocation14 + $0x3c0] sm:$0xff]
    %v1985 = vld [vmem:[#allocation14 + $0x3c8] sm:$0xff]
    %v1986 = vld [vmem:[#allocation14 + $0x3d0] sm:$0xff]
    %v1987 = vld [vmem:[#allocation14 + $0x3d8] sm:$0xff]
    %v1988 = vld [vmem:[#allocation14 + $0x3e0] sm:$0xff]
    %v1989 = vld [vmem:[#allocation14 + $0x3e8] sm:$0xff]
    %v1990 = vld [vmem:[#allocation14 + $0x3f0] sm:$0xff]
    %v1991 = vld [vmem:[#allocation14 + $0x3f8] sm:$0xff]
    %v2120 = vunpack.c.l.b16 %v1864
    %v2121 = vunpack.c.h.b16 %v1864
    %v2122 = vunpack.c.l.b16 %v1865
    %v2123 = vunpack.c.h.b16 %v1865
    %v2124 = vunpack.c.l.b16 %v1866
    %v2125 = vunpack.c.h.b16 %v1866
    %v2126 = vunpack.c.l.b16 %v1867
    %v2127 = vunpack.c.h.b16 %v1867
    %v2128 = vunpack.c.l.b16 %v1868
    %v2129 = vunpack.c.h.b16 %v1868
    %v2130 = vunpack.c.l.b16 %v1869
    %v2131 = vunpack.c.h.b16 %v1869
    %v2132 = vunpack.c.l.b16 %v1870
    %v2133 = vunpack.c.h.b16 %v1870
    %v2134 = vunpack.c.l.b16 %v1871
    %v2135 = vunpack.c.h.b16 %v1871
    %v2136 = vunpack.c.l.b16 %v1872
    %v2137 = vunpack.c.h.b16 %v1872
    %v2138 = vunpack.c.l.b16 %v1873
    %v2139 = vunpack.c.h.b16 %v1873
    %v2140 = vunpack.c.l.b16 %v1874
    %v2141 = vunpack.c.h.b16 %v1874
    %v2142 = vunpack.c.l.b16 %v1875
    %v2143 = vunpack.c.h.b16 %v1875
    %v2144 = vunpack.c.l.b16 %v1876
    %v2145 = vunpack.c.h.b16 %v1876
    %v2146 = vunpack.c.l.b16 %v1877
    %v2147 = vunpack.c.h.b16 %v1877
    %v2148 = vunpack.c.l.b16 %v1878
    %v2149 = vunpack.c.h.b16 %v1878
    %v2150 = vunpack.c.l.b16 %v1879
    %v2151 = vunpack.c.h.b16 %v1879
    %v2152 = vunpack.c.l.b16 %v1880
    %v2153 = vunpack.c.h.b16 %v1880
    %v2154 = vunpack.c.l.b16 %v1881
    %v2155 = vunpack.c.h.b16 %v1881
    %v2156 = vunpack.c.l.b16 %v1882
    %v2157 = vunpack.c.h.b16 %v1882
    %v2158 = vunpack.c.l.b16 %v1883
    %v2159 = vunpack.c.h.b16 %v1883
    %v2160 = vunpack.c.l.b16 %v1884
    %v2161 = vunpack.c.h.b16 %v1884
    %v2162 = vunpack.c.l.b16 %v1885
    %v2163 = vunpack.c.h.b16 %v1885
    %v2164 = vunpack.c.l.b16 %v1886
    %v2165 = vunpack.c.h.b16 %v1886
    %v2166 = vunpack.c.l.b16 %v1887
    %v2167 = vunpack.c.h.b16 %v1887
    %v2168 = vunpack.c.l.b16 %v1888
    %v2169 = vunpack.c.h.b16 %v1888
    %v2170 = vunpack.c.l.b16 %v1889
    %v2171 = vunpack.c.h.b16 %v1889
    %v2172 = vunpack.c.l.b16 %v1890
    %v2173 = vunpack.c.h.b16 %v1890
    %v2174 = vunpack.c.l.b16 %v1891
    %v2175 = vunpack.c.h.b16 %v1891
    %v2176 = vunpack.c.l.b16 %v1892
    %v2177 = vunpack.c.h.b16 %v1892
    %v2178 = vunpack.c.l.b16 %v1893
    %v2179 = vunpack.c.h.b16 %v1893
    %v2180 = vunpack.c.l.b16 %v1894
    %v2181 = vunpack.c.h.b16 %v1894
    %v2182 = vunpack.c.l.b16 %v1895
    %v2183 = vunpack.c.h.b16 %v1895
    %v2184 = vunpack.c.l.b16 %v1896
    %v2185 = vunpack.c.h.b16 %v1896
    %v2186 = vunpack.c.l.b16 %v1897
    %v2187 = vunpack.c.h.b16 %v1897
    %v2188 = vunpack.c.l.b16 %v1898
    %v2189 = vunpack.c.h.b16 %v1898
    %v2190 = vunpack.c.l.b16 %v1899
    %v2191 = vunpack.c.h.b16 %v1899
    %v2192 = vunpack.c.l.b16 %v1900
    %v2193 = vunpack.c.h.b16 %v1900
    %v2194 = vunpack.c.l.b16 %v1901
    %v2195 = vunpack.c.h.b16 %v1901
    %v2196 = vunpack.c.l.b16 %v1902
    %v2197 = vunpack.c.h.b16 %v1902
    %v2198 = vunpack.c.l.b16 %v1903
    %v2199 = vunpack.c.h.b16 %v1903
    %v2200 = vunpack.c.l.b16 %v1904
    %v2201 = vunpack.c.h.b16 %v1904
    %v2202 = vunpack.c.l.b16 %v1905
    %v2203 = vunpack.c.h.b16 %v1905
    %v2204 = vunpack.c.l.b16 %v1906
    %v2205 = vunpack.c.h.b16 %v1906
    %v2206 = vunpack.c.l.b16 %v1907
    %v2207 = vunpack.c.h.b16 %v1907
    %v2208 = vunpack.c.l.b16 %v1908
    %v2209 = vunpack.c.h.b16 %v1908
    %v2210 = vunpack.c.l.b16 %v1909
    %v2211 = vunpack.c.h.b16 %v1909
    %v2212 = vunpack.c.l.b16 %v1910
    %v2213 = vunpack.c.h.b16 %v1910
    %v2214 = vunpack.c.l.b16 %v1911
    %v2215 = vunpack.c.h.b16 %v1911
    %v2216 = vunpack.c.l.b16 %v1912
    %v2217 = vunpack.c.h.b16 %v1912
    %v2218 = vunpack.c.l.b16 %v1913
    %v2219 = vunpack.c.h.b16 %v1913
    %v2220 = vunpack.c.l.b16 %v1914
    %v2221 = vunpack.c.h.b16 %v1914
    %v2222 = vunpack.c.l.b16 %v1915
    %v2223 = vunpack.c.h.b16 %v1915
    %v2224 = vunpack.c.l.b16 %v1916
    %v2225 = vunpack.c.h.b16 %v1916
    %v2226 = vunpack.c.l.b16 %v1917
    %v2227 = vunpack.c.h.b16 %v1917
    %v2228 = vunpack.c.l.b16 %v1918
    %v2229 = vunpack.c.h.b16 %v1918
    %v2230 = vunpack.c.l.b16 %v1919
    %v2231 = vunpack.c.h.b16 %v1919
    %v2232 = vunpack.c.l.b16 %v1920
    %v2233 = vunpack.c.h.b16 %v1920
    %v2234 = vunpack.c.l.b16 %v1921
    %v2235 = vunpack.c.h.b16 %v1921
    %v2236 = vunpack.c.l.b16 %v1922
    %v2237 = vunpack.c.h.b16 %v1922
    %v2238 = vunpack.c.l.b16 %v1923
    %v2239 = vunpack.c.h.b16 %v1923
    %v2240 = vunpack.c.l.b16 %v1924
    %v2241 = vunpack.c.h.b16 %v1924
    %v2242 = vunpack.c.l.b16 %v1925
    %v2243 = vunpack.c.h.b16 %v1925
    %v2244 = vunpack.c.l.b16 %v1926
    %v2245 = vunpack.c.h.b16 %v1926
    %v2246 = vunpack.c.l.b16 %v1927
    %v2247 = vunpack.c.h.b16 %v1927
    %v2248 = vunpack.c.l.b16 %v1928
    %v2249 = vunpack.c.h.b16 %v1928
    %v2250 = vunpack.c.l.b16 %v1929
    %v2251 = vunpack.c.h.b16 %v1929
    %v2252 = vunpack.c.l.b16 %v1930
    %v2253 = vunpack.c.h.b16 %v1930
    %v2254 = vunpack.c.l.b16 %v1931
    %v2255 = vunpack.c.h.b16 %v1931
    %v2256 = vunpack.c.l.b16 %v1932
    %v2257 = vunpack.c.h.b16 %v1932
    %v2258 = vunpack.c.l.b16 %v1933
    %v2259 = vunpack.c.h.b16 %v1933
    %v2260 = vunpack.c.l.b16 %v1934
    %v2261 = vunpack.c.h.b16 %v1934
    %v2262 = vunpack.c.l.b16 %v1935
    %v2263 = vunpack.c.h.b16 %v1935
    %v2264 = vunpack.c.l.b16 %v1936
    %v2265 = vunpack.c.h.b16 %v1936
    %v2266 = vunpack.c.l.b16 %v1937
    %v2267 = vunpack.c.h.b16 %v1937
    %v2268 = vunpack.c.l.b16 %v1938
    %v2269 = vunpack.c.h.b16 %v1938
    %v2270 = vunpack.c.l.b16 %v1939
    %v2271 = vunpack.c.h.b16 %v1939
    %v2272 = vunpack.c.l.b16 %v1940
    %v2273 = vunpack.c.h.b16 %v1940
    %v2274 = vunpack.c.l.b16 %v1941
    %v2275 = vunpack.c.h.b16 %v1941
    %v2276 = vunpack.c.l.b16 %v1942
    %v2277 = vunpack.c.h.b16 %v1942
    %v2278 = vunpack.c.l.b16 %v1943
    %v2279 = vunpack.c.h.b16 %v1943
    %v2280 = vunpack.c.l.b16 %v1944
    %v2281 = vunpack.c.h.b16 %v1944
    %v2282 = vunpack.c.l.b16 %v1945
    %v2283 = vunpack.c.h.b16 %v1945
    %v2284 = vunpack.c.l.b16 %v1946
    %v2285 = vunpack.c.h.b16 %v1946
    %v2286 = vunpack.c.l.b16 %v1947
    %v2287 = vunpack.c.h.b16 %v1947
    %v2288 = vunpack.c.l.b16 %v1948
    %v2289 = vunpack.c.h.b16 %v1948
    %v2290 = vunpack.c.l.b16 %v1949
    %v2291 = vunpack.c.h.b16 %v1949
    %v2292 = vunpack.c.l.b16 %v1950
    %v2293 = vunpack.c.h.b16 %v1950
    %v2294 = vunpack.c.l.b16 %v1951
    %v2295 = vunpack.c.h.b16 %v1951
    %v2296 = vunpack.c.l.b16 %v1952
    %v2297 = vunpack.c.h.b16 %v1952
    %v2298 = vunpack.c.l.b16 %v1953
    %v2299 = vunpack.c.h.b16 %v1953
    %v2300 = vunpack.c.l.b16 %v1954
    %v2301 = vunpack.c.h.b16 %v1954
    %v2302 = vunpack.c.l.b16 %v1955
    %v2303 = vunpack.c.h.b16 %v1955
    %v2304 = vunpack.c.l.b16 %v1956
    %v2305 = vunpack.c.h.b16 %v1956
    %v2306 = vunpack.c.l.b16 %v1957
    %v2307 = vunpack.c.h.b16 %v1957
    %v2308 = vunpack.c.l.b16 %v1958
    %v2309 = vunpack.c.h.b16 %v1958
    %v2310 = vunpack.c.l.b16 %v1959
    %v2311 = vunpack.c.h.b16 %v1959
    %v2312 = vunpack.c.l.b16 %v1960
    %v2313 = vunpack.c.h.b16 %v1960
    %v2314 = vunpack.c.l.b16 %v1961
    %v2315 = vunpack.c.h.b16 %v1961
    %v2316 = vunpack.c.l.b16 %v1962
    %v2317 = vunpack.c.h.b16 %v1962
    %v2318 = vunpack.c.l.b16 %v1963
    %v2319 = vunpack.c.h.b16 %v1963
    %v2320 = vunpack.c.l.b16 %v1964
    %v2321 = vunpack.c.h.b16 %v1964
    %v2322 = vunpack.c.l.b16 %v1965
    %v2323 = vunpack.c.h.b16 %v1965
    %v2324 = vunpack.c.l.b16 %v1966
    %v2325 = vunpack.c.h.b16 %v1966
    %v2326 = vunpack.c.l.b16 %v1967
    %v2327 = vunpack.c.h.b16 %v1967
    %v2328 = vunpack.c.l.b16 %v1968
    %v2329 = vunpack.c.h.b16 %v1968
    %v2330 = vunpack.c.l.b16 %v1969
    %v2331 = vunpack.c.h.b16 %v1969
    %v2332 = vunpack.c.l.b16 %v1970
    %v2333 = vunpack.c.h.b16 %v1970
    %v2334 = vunpack.c.l.b16 %v1971
    %v2335 = vunpack.c.h.b16 %v1971
    %v2336 = vunpack.c.l.b16 %v1972
    %v2337 = vunpack.c.h.b16 %v1972
    %v2338 = vunpack.c.l.b16 %v1973
    %v2339 = vunpack.c.h.b16 %v1973
    %v2340 = vunpack.c.l.b16 %v1974
    %v2341 = vunpack.c.h.b16 %v1974
    %v2342 = vunpack.c.l.b16 %v1975
    %v2343 = vunpack.c.h.b16 %v1975
    %v2344 = vunpack.c.l.b16 %v1976
    %v2345 = vunpack.c.h.b16 %v1976
    %v2346 = vunpack.c.l.b16 %v1977
    %v2347 = vunpack.c.h.b16 %v1977
    %v2348 = vunpack.c.l.b16 %v1978
    %v2349 = vunpack.c.h.b16 %v1978
    %v2350 = vunpack.c.l.b16 %v1979
    %v2351 = vunpack.c.h.b16 %v1979
    %v2352 = vunpack.c.l.b16 %v1980
    %v2353 = vunpack.c.h.b16 %v1980
    %v2354 = vunpack.c.l.b16 %v1981
    %v2355 = vunpack.c.h.b16 %v1981
    %v2356 = vunpack.c.l.b16 %v1982
    %v2357 = vunpack.c.h.b16 %v1982
    %v2358 = vunpack.c.l.b16 %v1983
    %v2359 = vunpack.c.h.b16 %v1983
    %v2360 = vunpack.c.l.b16 %v1984
    %v2361 = vunpack.c.h.b16 %v1984
    %v2362 = vunpack.c.l.b16 %v1985
    %v2363 = vunpack.c.h.b16 %v1985
    %v2364 = vunpack.c.l.b16 %v1986
    %v2365 = vunpack.c.h.b16 %v1986
    %v2366 = vunpack.c.l.b16 %v1987
    %v2367 = vunpack.c.h.b16 %v1987
    %v2368 = vunpack.c.l.b16 %v1988
    %v2369 = vunpack.c.h.b16 %v1988
    %v2370 = vunpack.c.l.b16 %v1989
    %v2371 = vunpack.c.h.b16 %v1989
    %v2372 = vunpack.c.l.b16 %v1990
    %v2373 = vunpack.c.h.b16 %v1990
    %v2374 = vunpack.c.l.b16 %v1991
    %v2375 = vunpack.c.h.b16 %v1991
    %v2376 = vpack.c.b16 %v2124, %v2120
    %v2377 = vpack.c.b16 %v2125, %v2121
    %v2378 = vpack.c.b16 %v2126, %v2122
    %v2379 = vpack.c.b16 %v2127, %v2123
    %v2380 = vpack.c.b16 %v2132, %v2128
    %v2381 = vpack.c.b16 %v2133, %v2129
    %v2382 = vpack.c.b16 %v2134, %v2130
    %v2383 = vpack.c.b16 %v2135, %v2131
    %v2384 = vpack.c.b16 %v2140, %v2136
    %v2385 = vpack.c.b16 %v2141, %v2137
    %v2386 = vpack.c.b16 %v2142, %v2138
    %v2387 = vpack.c.b16 %v2143, %v2139
    %v2388 = vpack.c.b16 %v2148, %v2144
    %v2389 = vpack.c.b16 %v2149, %v2145
    %v2390 = vpack.c.b16 %v2150, %v2146
    %v2391 = vpack.c.b16 %v2151, %v2147
    %v2392 = vpack.c.b16 %v2156, %v2152
    %v2393 = vpack.c.b16 %v2157, %v2153
    %v2394 = vpack.c.b16 %v2158, %v2154
    %v2395 = vpack.c.b16 %v2159, %v2155
    %v2396 = vpack.c.b16 %v2164, %v2160
    %v2397 = vpack.c.b16 %v2165, %v2161
    %v2398 = vpack.c.b16 %v2166, %v2162
    %v2399 = vpack.c.b16 %v2167, %v2163
    %v2400 = vpack.c.b16 %v2172, %v2168
    %v2401 = vpack.c.b16 %v2173, %v2169
    %v2402 = vpack.c.b16 %v2174, %v2170
    %v2403 = vpack.c.b16 %v2175, %v2171
    %v2404 = vpack.c.b16 %v2180, %v2176
    %v2405 = vpack.c.b16 %v2181, %v2177
    %v2406 = vpack.c.b16 %v2182, %v2178
    %v2407 = vpack.c.b16 %v2183, %v2179
    %v2408 = vpack.c.b16 %v2188, %v2184
    %v2409 = vpack.c.b16 %v2189, %v2185
    %v2410 = vpack.c.b16 %v2190, %v2186
    %v2411 = vpack.c.b16 %v2191, %v2187
    %v2412 = vpack.c.b16 %v2196, %v2192
    %v2413 = vpack.c.b16 %v2197, %v2193
    %v2414 = vpack.c.b16 %v2198, %v2194
    %v2415 = vpack.c.b16 %v2199, %v2195
    %v2416 = vpack.c.b16 %v2204, %v2200
    %v2417 = vpack.c.b16 %v2205, %v2201
    %v2418 = vpack.c.b16 %v2206, %v2202
    %v2419 = vpack.c.b16 %v2207, %v2203
    %v2420 = vpack.c.b16 %v2212, %v2208
    %v2421 = vpack.c.b16 %v2213, %v2209
    %v2422 = vpack.c.b16 %v2214, %v2210
    %v2423 = vpack.c.b16 %v2215, %v2211
    %v2424 = vpack.c.b16 %v2220, %v2216
    %v2425 = vpack.c.b16 %v2221, %v2217
    %v2426 = vpack.c.b16 %v2222, %v2218
    %v2427 = vpack.c.b16 %v2223, %v2219
    %v2428 = vpack.c.b16 %v2228, %v2224
    %v2429 = vpack.c.b16 %v2229, %v2225
    %v2430 = vpack.c.b16 %v2230, %v2226
    %v2431 = vpack.c.b16 %v2231, %v2227
    %v2432 = vpack.c.b16 %v2236, %v2232
    %v2433 = vpack.c.b16 %v2237, %v2233
    %v2434 = vpack.c.b16 %v2238, %v2234
    %v2435 = vpack.c.b16 %v2239, %v2235
    %v2436 = vpack.c.b16 %v2244, %v2240
    %v2437 = vpack.c.b16 %v2245, %v2241
    %v2438 = vpack.c.b16 %v2246, %v2242
    %v2439 = vpack.c.b16 %v2247, %v2243
    %v2440 = vpack.c.b16 %v2252, %v2248
    %v2441 = vpack.c.b16 %v2253, %v2249
    %v2442 = vpack.c.b16 %v2254, %v2250
    %v2443 = vpack.c.b16 %v2255, %v2251
    %v2444 = vpack.c.b16 %v2260, %v2256
    %v2445 = vpack.c.b16 %v2261, %v2257
    %v2446 = vpack.c.b16 %v2262, %v2258
    %v2447 = vpack.c.b16 %v2263, %v2259
    %v2448 = vpack.c.b16 %v2268, %v2264
    %v2449 = vpack.c.b16 %v2269, %v2265
    %v2450 = vpack.c.b16 %v2270, %v2266
    %v2451 = vpack.c.b16 %v2271, %v2267
    %v2452 = vpack.c.b16 %v2276, %v2272
    %v2453 = vpack.c.b16 %v2277, %v2273
    %v2454 = vpack.c.b16 %v2278, %v2274
    %v2455 = vpack.c.b16 %v2279, %v2275
    %v2456 = vpack.c.b16 %v2284, %v2280
    %v2457 = vpack.c.b16 %v2285, %v2281
    %v2458 = vpack.c.b16 %v2286, %v2282
    %v2459 = vpack.c.b16 %v2287, %v2283
    %v2460 = vpack.c.b16 %v2292, %v2288
    %v2461 = vpack.c.b16 %v2293, %v2289
    %v2462 = vpack.c.b16 %v2294, %v2290
    %v2463 = vpack.c.b16 %v2295, %v2291
    %v2464 = vpack.c.b16 %v2300, %v2296
    %v2465 = vpack.c.b16 %v2301, %v2297
    %v2466 = vpack.c.b16 %v2302, %v2298
    %v2467 = vpack.c.b16 %v2303, %v2299
    %v2468 = vpack.c.b16 %v2308, %v2304
    %v2469 = vpack.c.b16 %v2309, %v2305
    %v2470 = vpack.c.b16 %v2310, %v2306
    %v2471 = vpack.c.b16 %v2311, %v2307
    %v2472 = vpack.c.b16 %v2316, %v2312
    %v2473 = vpack.c.b16 %v2317, %v2313
    %v2474 = vpack.c.b16 %v2318, %v2314
    %v2475 = vpack.c.b16 %v2319, %v2315
    %v2476 = vpack.c.b16 %v2324, %v2320
    %v2477 = vpack.c.b16 %v2325, %v2321
    %v2478 = vpack.c.b16 %v2326, %v2322
    %v2479 = vpack.c.b16 %v2327, %v2323
    %v2480 = vpack.c.b16 %v2332, %v2328
    %v2481 = vpack.c.b16 %v2333, %v2329
    %v2482 = vpack.c.b16 %v2334, %v2330
    %v2483 = vpack.c.b16 %v2335, %v2331
    %v2484 = vpack.c.b16 %v2340, %v2336
    %v2485 = vpack.c.b16 %v2341, %v2337
    %v2486 = vpack.c.b16 %v2342, %v2338
    %v2487 = vpack.c.b16 %v2343, %v2339
    %v2488 = vpack.c.b16 %v2348, %v2344
    %v2489 = vpack.c.b16 %v2349, %v2345
    %v2490 = vpack.c.b16 %v2350, %v2346
    %v2491 = vpack.c.b16 %v2351, %v2347
    %v2492 = vpack.c.b16 %v2356, %v2352
    %v2493 = vpack.c.b16 %v2357, %v2353
    %v2494 = vpack.c.b16 %v2358, %v2354
    %v2495 = vpack.c.b16 %v2359, %v2355
    %v2496 = vpack.c.b16 %v2364, %v2360
    %v2497 = vpack.c.b16 %v2365, %v2361
    %v2498 = vpack.c.b16 %v2366, %v2362
    %v2499 = vpack.c.b16 %v2367, %v2363
    %v2500 = vpack.c.b16 %v2372, %v2368
    %v2501 = vpack.c.b16 %v2373, %v2369
    %v2502 = vpack.c.b16 %v2374, %v2370
    %v2503 = vpack.c.b16 %v2375, %v2371
    %2632 = vmatpush.bf16.msra.mxu0 %v2404
    %2633 = vmatpush.bf16.msra.mxu0 %v2400
    %2634 = vmatpush.bf16.msra.mxu0 %v2396
    %2635 = vmatpush.bf16.msra.mxu0 %v2392
    %2636 = vmatpush.bf16.msra.mxu0 %v2388
    %2637 = vmatpush.bf16.msra.mxu0 %v2384
    %2638 = vmatpush.bf16.msra.mxu0 %v2380
    %2639 = vmatpush.bf16.msra.mxu0 %v2376
    %2640 = vmatmul.bf16.gmra.mxu0 %v1856
    %v2641 = vpop.f32.mrf.mxu0
    %v2642 = vadd.f32 0.0, %v2641
    %v2643 = vpop.f32.mrf.mxu0
    %v2644 = vadd.f32 0.0, %v2643
    %2645 = vmatmul.bf16.gmra.mxu0 %v1860
    %v2646 = vpop.f32.mrf.mxu0
    %v2647 = vadd.f32 0.0, %v2646
    %v2648 = vpop.f32.mrf.mxu0
    %v2649 = vadd.f32 0.0, %v2648
    %2650 = vdwg.mxu0
    %2651 = vmatpush.bf16.msra.mxu0 %v2436
    %2652 = vmatpush.bf16.msra.mxu0 %v2432
    %2653 = vmatpush.bf16.msra.mxu0 %v2428
    %2654 = vmatpush.bf16.msra.mxu0 %v2424
    %2655 = vmatpush.bf16.msra.mxu0 %v2420
    %2656 = vmatpush.bf16.msra.mxu0 %v2416
    %2657 = vmatpush.bf16.msra.mxu0 %v2412
    %2658 = vmatpush.bf16.msra.mxu0 %v2408
    %2659 = vmatmul.bf16.gmra.mxu0 %v1857
    %v2660 = vpop.f32.mrf.mxu0
    %v2661 = vadd.f32 %v2642, %v2660
    %v2662 = vpop.f32.mrf.mxu0
    %v2663 = vadd.f32 %v2644, %v2662
    %2664 = vmatmul.bf16.gmra.mxu0 %v1861
    %v2665 = vpop.f32.mrf.mxu0
    %v2666 = vadd.f32 %v2647, %v2665
    %v2667 = vpop.f32.mrf.mxu0
    %v2668 = vadd.f32 %v2649, %v2667
    %2669 = vdwg.mxu0
    %2670 = vmatpush.bf16.msra.mxu0 %v2468
    %2671 = vmatpush.bf16.msra.mxu0 %v2464
    %2672 = vmatpush.bf16.msra.mxu0 %v2460
    %2673 = vmatpush.bf16.msra.mxu0 %v2456
    %2674 = vmatpush.bf16.msra.mxu0 %v2452
    %2675 = vmatpush.bf16.msra.mxu0 %v2448
    %2676 = vmatpush.bf16.msra.mxu0 %v2444
    %2677 = vmatpush.bf16.msra.mxu0 %v2440
    %2678 = vmatmul.bf16.gmra.mxu0 %v1858
    %v2679 = vpop.f32.mrf.mxu0
    %v2680 = vadd.f32 %v2661, %v2679
    %v2681 = vpop.f32.mrf.mxu0
    %v2682 = vadd.f32 %v2663, %v2681
    %2683 = vmatmul.bf16.gmra.mxu0 %v1862
    %v2684 = vpop.f32.mrf.mxu0
    %v2685 = vadd.f32 %v2666, %v2684
    %v2686 = vpop.f32.mrf.mxu0
    %v2687 = vadd.f32 %v2668, %v2686
    %2688 = vdwg.mxu0
    %2689 = vmatpush.bf16.msra.mxu0 %v2500
    %2690 = vmatpush.bf16.msra.mxu0 %v2496
    %2691 = vmatpush.bf16.msra.mxu0 %v2492
    %2692 = vmatpush.bf16.msra.mxu0 %v2488
    %2693 = vmatpush.bf16.msra.mxu0 %v2484
    %2694 = vmatpush.bf16.msra.mxu0 %v2480
    %2695 = vmatpush.bf16.msra.mxu0 %v2476
    %2696 = vmatpush.bf16.msra.mxu0 %v2472
    %2697 = vmatmul.bf16.gmra.mxu0 %v1859
    %v2698 = vpop.f32.mrf.mxu0
    %v2699 = vadd.f32 %v2680, %v2698
    %v2700 = vpop.f32.mrf.mxu0
    %v2701 = vadd.f32 %v2682, %v2700
    %2702 = vmatmul.bf16.gmra.mxu0 %v1863
    %v2703 = vpop.f32.mrf.mxu0
    %v2704 = vadd.f32 %v2685, %v2703
    %v2705 = vpop.f32.mrf.mxu0
    %v2706 = vadd.f32 %v2687, %v2705
    %2707 = vdwg.mxu0
    %2708 = vmatpush.bf16.msra.mxu0 %v2405
    %2709 = vmatpush.bf16.msra.mxu0 %v2401
    %2710 = vmatpush.bf16.msra.mxu0 %v2397
    %2711 = vmatpush.bf16.msra.mxu0 %v2393
    %2712 = vmatpush.bf16.msra.mxu0 %v2389
    %2713 = vmatpush.bf16.msra.mxu0 %v2385
    %2714 = vmatpush.bf16.msra.mxu0 %v2381
    %2715 = vmatpush.bf16.msra.mxu0 %v2377
    %2716 = vmatmul.bf16.gmra.mxu0 %v1856
    %v2717 = vpop.f32.mrf.mxu0
    %v2718 = vadd.f32 0.0, %v2717
    %v2719 = vpop.f32.mrf.mxu0
    %v2720 = vadd.f32 0.0, %v2719
    %2721 = vmatmul.bf16.gmra.mxu0 %v1860
    %v2722 = vpop.f32.mrf.mxu0
    %v2723 = vadd.f32 0.0, %v2722
    %v2724 = vpop.f32.mrf.mxu0
    %v2725 = vadd.f32 0.0, %v2724
    %2726 = vdwg.mxu0
    %2727 = vmatpush.bf16.msra.mxu0 %v2437
    %2728 = vmatpush.bf16.msra.mxu0 %v2433
    %2729 = vmatpush.bf16.msra.mxu0 %v2429
    %2730 = vmatpush.bf16.msra.mxu0 %v2425
    %2731 = vmatpush.bf16.msra.mxu0 %v2421
    %2732 = vmatpush.bf16.msra.mxu0 %v2417
    %2733 = vmatpush.bf16.msra.mxu0 %v2413
    %2734 = vmatpush.bf16.msra.mxu0 %v2409
    %2735 = vmatmul.bf16.gmra.mxu0 %v1857
    %v2736 = vpop.f32.mrf.mxu0
    %v2737 = vadd.f32 %v2718, %v2736
    %v2738 = vpop.f32.mrf.mxu0
    %v2739 = vadd.f32 %v2720, %v2738
    %2740 = vmatmul.bf16.gmra.mxu0 %v1861
    %v2741 = vpop.f32.mrf.mxu0
    %v2742 = vadd.f32 %v2723, %v2741
    %v2743 = vpop.f32.mrf.mxu0
    %v2744 = vadd.f32 %v2725, %v2743
    %2745 = vdwg.mxu0
    %2746 = vmatpush.bf16.msra.mxu0 %v2469
    %2747 = vmatpush.bf16.msra.mxu0 %v2465
    %2748 = vmatpush.bf16.msra.mxu0 %v2461
    %2749 = vmatpush.bf16.msra.mxu0 %v2457
    %2750 = vmatpush.bf16.msra.mxu0 %v2453
    %2751 = vmatpush.bf16.msra.mxu0 %v2449
    %2752 = vmatpush.bf16.msra.mxu0 %v2445
    %2753 = vmatpush.bf16.msra.mxu0 %v2441
    %2754 = vmatmul.bf16.gmra.mxu0 %v1858
    %v2755 = vpop.f32.mrf.mxu0
    %v2756 = vadd.f32 %v2737, %v2755
    %v2757 = vpop.f32.mrf.mxu0
    %v2758 = vadd.f32 %v2739, %v2757
    %2759 = vmatmul.bf16.gmra.mxu0 %v1862
    %v2760 = vpop.f32.mrf.mxu0
    %v2761 = vadd.f32 %v2742, %v2760
    %v2762 = vpop.f32.mrf.mxu0
    %v2763 = vadd.f32 %v2744, %v2762
    %2764 = vdwg.mxu0
    %2765 = vmatpush.bf16.msra.mxu0 %v2501
    %2766 = vmatpush.bf16.msra.mxu0 %v2497
    %2767 = vmatpush.bf16.msra.mxu0 %v2493
    %2768 = vmatpush.bf16.msra.mxu0 %v2489
    %2769 = vmatpush.bf16.msra.mxu0 %v2485
    %2770 = vmatpush.bf16.msra.mxu0 %v2481
    %2771 = vmatpush.bf16.msra.mxu0 %v2477
    %2772 = vmatpush.bf16.msra.mxu0 %v2473
    %2773 = vmatmul.bf16.gmra.mxu0 %v1859
    %v2774 = vpop.f32.mrf.mxu0
    %v2775 = vadd.f32 %v2756, %v2774
    %v2776 = vpop.f32.mrf.mxu0
    %v2777 = vadd.f32 %v2758, %v2776
    %2778 = vmatmul.bf16.gmra.mxu0 %v1863
    %v2779 = vpop.f32.mrf.mxu0
    %v2780 = vadd.f32 %v2761, %v2779
    %v2781 = vpop.f32.mrf.mxu0
    %v2782 = vadd.f32 %v2763, %v2781
    %2783 = vdwg.mxu0
    %2784 = vmatpush.bf16.msra.mxu0 %v2406
    %2785 = vmatpush.bf16.msra.mxu0 %v2402
    %2786 = vmatpush.bf16.msra.mxu0 %v2398
    %2787 = vmatpush.bf16.msra.mxu0 %v2394
    %2788 = vmatpush.bf16.msra.mxu0 %v2390
    %2789 = vmatpush.bf16.msra.mxu0 %v2386
    %2790 = vmatpush.bf16.msra.mxu0 %v2382
    %2791 = vmatpush.bf16.msra.mxu0 %v2378
    %2792 = vmatmul.bf16.gmra.mxu0 %v1856
    %v2793 = vpop.f32.mrf.mxu0
    %v2794 = vadd.f32 0.0, %v2793
    %v2795 = vpop.f32.mrf.mxu0
    %v2796 = vadd.f32 0.0, %v2795
    %2797 = vmatmul.bf16.gmra.mxu0 %v1860
    %v2798 = vpop.f32.mrf.mxu0
    %v2799 = vadd.f32 0.0, %v2798
    %v2800 = vpop.f32.mrf.mxu0
    %v2801 = vadd.f32 0.0, %v2800
    %2802 = vdwg.mxu0
    %2803 = vmatpush.bf16.msra.mxu0 %v2438
    %2804 = vmatpush.bf16.msra.mxu0 %v2434
    %2805 = vmatpush.bf16.msra.mxu0 %v2430
    %2806 = vmatpush.bf16.msra.mxu0 %v2426
    %2807 = vmatpush.bf16.msra.mxu0 %v2422
    %2808 = vmatpush.bf16.msra.mxu0 %v2418
    %2809 = vmatpush.bf16.msra.mxu0 %v2414
    %2810 = vmatpush.bf16.msra.mxu0 %v2410
    %2811 = vmatmul.bf16.gmra.mxu0 %v1857
    %v2812 = vpop.f32.mrf.mxu0
    %v2813 = vadd.f32 %v2794, %v2812
    %v2814 = vpop.f32.mrf.mxu0
    %v2815 = vadd.f32 %v2796, %v2814
    %2816 = vmatmul.bf16.gmra.mxu0 %v1861
    %v2817 = vpop.f32.mrf.mxu0
    %v2818 = vadd.f32 %v2799, %v2817
    %v2819 = vpop.f32.mrf.mxu0
    %v2820 = vadd.f32 %v2801, %v2819
    %2821 = vdwg.mxu0
    %2822 = vmatpush.bf16.msra.mxu0 %v2470
    %2823 = vmatpush.bf16.msra.mxu0 %v2466
    %2824 = vmatpush.bf16.msra.mxu0 %v2462
    %2825 = vmatpush.bf16.msra.mxu0 %v2458
    %2826 = vmatpush.bf16.msra.mxu0 %v2454
    %2827 = vmatpush.bf16.msra.mxu0 %v2450
    %2828 = vmatpush.bf16.msra.mxu0 %v2446
    %2829 = vmatpush.bf16.msra.mxu0 %v2442
    %2830 = vmatmul.bf16.gmra.mxu0 %v1858
    %v2831 = vpop.f32.mrf.mxu0
    %v2832 = vadd.f32 %v2813, %v2831
    %v2833 = vpop.f32.mrf.mxu0
    %v2834 = vadd.f32 %v2815, %v2833
    %2835 = vmatmul.bf16.gmra.mxu0 %v1862
    %v2836 = vpop.f32.mrf.mxu0
    %v2837 = vadd.f32 %v2818, %v2836
    %v2838 = vpop.f32.mrf.mxu0
    %v2839 = vadd.f32 %v2820, %v2838
    %2840 = vdwg.mxu0
    %2841 = vmatpush.bf16.msra.mxu0 %v2502
    %2842 = vmatpush.bf16.msra.mxu0 %v2498
    %2843 = vmatpush.bf16.msra.mxu0 %v2494
    %2844 = vmatpush.bf16.msra.mxu0 %v2490
    %2845 = vmatpush.bf16.msra.mxu0 %v2486
    %2846 = vmatpush.bf16.msra.mxu0 %v2482
    %2847 = vmatpush.bf16.msra.mxu0 %v2478
    %2848 = vmatpush.bf16.msra.mxu0 %v2474
    %2849 = vmatmul.bf16.gmra.mxu0 %v1859
    %v2850 = vpop.f32.mrf.mxu0
    %v2851 = vadd.f32 %v2832, %v2850
    %v2852 = vpop.f32.mrf.mxu0
    %v2853 = vadd.f32 %v2834, %v2852
    %2854 = vmatmul.bf16.gmra.mxu0 %v1863
    %v2855 = vpop.f32.mrf.mxu0
    %v2856 = vadd.f32 %v2837, %v2855
    %v2857 = vpop.f32.mrf.mxu0
    %v2858 = vadd.f32 %v2839, %v2857
    %2859 = vdwg.mxu0
    %2860 = vmatpush.bf16.msra.mxu0 %v2407
    %2861 = vmatpush.bf16.msra.mxu0 %v2403
    %2862 = vmatpush.bf16.msra.mxu0 %v2399
    %2863 = vmatpush.bf16.msra.mxu0 %v2395
    %2864 = vmatpush.bf16.msra.mxu0 %v2391
    %2865 = vmatpush.bf16.msra.mxu0 %v2387
    %2866 = vmatpush.bf16.msra.mxu0 %v2383
    %2867 = vmatpush.bf16.msra.mxu0 %v2379
    %2868 = vmatmul.bf16.gmra.mxu0 %v1856
    %v2869 = vpop.f32.mrf.mxu0
    %v2870 = vadd.f32 0.0, %v2869
    %v2871 = vpop.f32.mrf.mxu0
    %v2872 = vadd.f32 0.0, %v2871
    %2873 = vmatmul.bf16.gmra.mxu0 %v1860
    %v2874 = vpop.f32.mrf.mxu0
    %v2875 = vadd.f32 0.0, %v2874
    %v2876 = vpop.f32.mrf.mxu0
    %v2877 = vadd.f32 0.0, %v2876
    %2878 = vdwg.mxu0
    %2879 = vmatpush.bf16.msra.mxu0 %v2439
    %2880 = vmatpush.bf16.msra.mxu0 %v2435
    %2881 = vmatpush.bf16.msra.mxu0 %v2431
    %2882 = vmatpush.bf16.msra.mxu0 %v2427
    %2883 = vmatpush.bf16.msra.mxu0 %v2423
    %2884 = vmatpush.bf16.msra.mxu0 %v2419
    %2885 = vmatpush.bf16.msra.mxu0 %v2415
    %2886 = vmatpush.bf16.msra.mxu0 %v2411
    %2887 = vmatmul.bf16.gmra.mxu0 %v1857
    %v2888 = vpop.f32.mrf.mxu0
    %v2889 = vadd.f32 %v2870, %v2888
    %v2890 = vpop.f32.mrf.mxu0
    %v2891 = vadd.f32 %v2872, %v2890
    %2892 = vmatmul.bf16.gmra.mxu0 %v1861
    %v2893 = vpop.f32.mrf.mxu0
    %v2894 = vadd.f32 %v2875, %v2893
    %v2895 = vpop.f32.mrf.mxu0
    %v2896 = vadd.f32 %v2877, %v2895
    %2897 = vdwg.mxu0
    %2898 = vmatpush.bf16.msra.mxu0 %v2471
    %2899 = vmatpush.bf16.msra.mxu0 %v2467
    %2900 = vmatpush.bf16.msra.mxu0 %v2463
    %2901 = vmatpush.bf16.msra.mxu0 %v2459
    %2902 = vmatpush.bf16.msra.mxu0 %v2455
    %2903 = vmatpush.bf16.msra.mxu0 %v2451
    %2904 = vmatpush.bf16.msra.mxu0 %v2447
    %2905 = vmatpush.bf16.msra.mxu0 %v2443
    %2906 = vmatmul.bf16.gmra.mxu0 %v1858
    %v2907 = vpop.f32.mrf.mxu0
    %v2908 = vadd.f32 %v2889, %v2907
    %v2909 = vpop.f32.mrf.mxu0
    %v2910 = vadd.f32 %v2891, %v2909
    %2911 = vmatmul.bf16.gmra.mxu0 %v1862
    %v2912 = vpop.f32.mrf.mxu0
    %v2913 = vadd.f32 %v2894, %v2912
    %v2914 = vpop.f32.mrf.mxu0
    %v2915 = vadd.f32 %v2896, %v2914
    %2916 = vdwg.mxu0
    %2917 = vmatpush.bf16.msra.mxu0 %v2503
    %2918 = vmatpush.bf16.msra.mxu0 %v2499
    %2919 = vmatpush.bf16.msra.mxu0 %v2495
    %2920 = vmatpush.bf16.msra.mxu0 %v2491
    %2921 = vmatpush.bf16.msra.mxu0 %v2487
    %2922 = vmatpush.bf16.msra.mxu0 %v2483
    %2923 = vmatpush.bf16.msra.mxu0 %v2479
    %2924 = vmatpush.bf16.msra.mxu0 %v2475
    %2925 = vmatmul.bf16.gmra.mxu0 %v1859
    %v2926 = vpop.f32.mrf.mxu0
    %v2927 = vadd.f32 %v2908, %v2926
    %v2928 = vpop.f32.mrf.mxu0
    %v2929 = vadd.f32 %v2910, %v2928
    %2930 = vmatmul.bf16.gmra.mxu0 %v1863
    %v2931 = vpop.f32.mrf.mxu0
    %v2932 = vadd.f32 %v2913, %v2931
    %v2933 = vpop.f32.mrf.mxu0
    %v2934 = vadd.f32 %v2915, %v2933
    %2935 = vdwg.mxu0
    %v2936 = vmax.f32 %v2699, %v2851
    %v2937 = vmax.f32 %v2775, %v2927
    %v2938 = vmax.f32 %v2701, %v2853
    %v2939 = vmax.f32 %v2777, %v2929
    %v2940 = vmax.f32 %v2704, %v2856
    %v2941 = vmax.f32 %v2780, %v2932
    %v2942 = vmax.f32 %v2706, %v2858
    %v2943 = vmax.f32 %v2782, %v2934
    %v2944 = vpack.c.bf16 %v2938, %v2936
    %v2945 = vpack.c.bf16 %v2939, %v2937
    %v2946 = vpack.c.bf16 %v2942, %v2940
    %v2947 = vpack.c.bf16 %v2943, %v2941
    %v2948 = vld [vmem:[#allocation15] sm:$0xf]
    %v2949 = vld [vmem:[#allocation15 + $0x4] sm:$0xf]
    %v2950 = vld [vmem:[#allocation15 + $0x8] sm:$0xf]
    %v2951 = vld [vmem:[#allocation15 + $0xc] sm:$0xf]
    %v2952 = vld [vmem:[#allocation15 + $0x10] sm:$0xf]
    %v2958 = vunpack.c.l.b16 %v2948
    %v2959 = vunpack.c.l.b16 %v2949
    %v2960 = vunpack.c.l.b16 %v2950
    %v2961 = vunpack.c.l.b16 %v2951
    %v2962 = vunpack.c.l.b16 %v2952
    %v2963 = vpack.c.b16 %v2959, %v2958
    %v2964 = vpack.c.b16 %v2961, %v2960
    %v2965 = vpack.c.b16 %v2962, %v2962
    %vm2966 = vcmask 261120
    %v2968 = vsel %vm2966, %v2963, 0
    %v2971 = vsel %vm2966, %v2964, 0
    %v2974 = vsel %vm2966, %v2965, 0
    %2976 = vmatpush.bf16.msra.mxu0 0
    %2977 = vmatpush.bf16.msra.mxu0 0
    %2978 = vmatpush.bf16.msra.mxu0 0
    %2979 = vmatpush.bf16.msra.mxu0 0
    %2980 = vmatpush.bf16.msra.mxu0 0
    %2981 = vmatpush.bf16.msra.mxu0 0
    %2982 = vmatpush.bf16.msra.mxu0 %v2946
    %2983 = vmatpush.bf16.msra.mxu0 %v2944
    %2984 = vmatmul.bf16.gmra.mxu0 %v2968
    %v2985 = vpop.f32.mrf.mxu0
    %v2986 = vadd.f32 0.0, %v2985
    %v2987 = vpop.f32.mrf.mxu0
    %v2988 = vadd.f32 0.0, %v2987
    %2989 = vmatmul.bf16.gmra.mxu0 %v2971
    %v2990 = vpop.f32.mrf.mxu0
    %v2991 = vadd.f32 0.0, %v2990
    %v2992 = vpop.f32.mrf.mxu0
    %v2993 = vadd.f32 0.0, %v2992
    %2994 = vmatmul.bf16.gmra.mxu0 %v2974
    %v2995 = vpop.f32.mrf.mxu0
    %v2996 = vadd.f32 0.0, %v2995
    %v2997 = vpop.f32.mrf.mxu0
    %2998 = vdwg.mxu0
    %2999 = vmatpush.bf16.msra.mxu0 0
    %3000 = vmatpush.bf16.msra.mxu0 0
    %3001 = vmatpush.bf16.msra.mxu0 0
    %3002 = vmatpush.bf16.msra.mxu0 0
    %3003 = vmatpush.bf16.msra.mxu0 0
    %3004 = vmatpush.bf16.msra.mxu0 0
    %3005 = vmatpush.bf16.msra.mxu0 %v2947
    %3006 = vmatpush.bf16.msra.mxu0 %v2945
    %3007 = vmatmul.bf16.gmra.mxu0 %v2968
    %v3008 = vpop.f32.mrf.mxu0
    %v3009 = vadd.f32 0.0, %v3008
    %v3010 = vpop.f32.mrf.mxu0
    %v3011 = vadd.f32 0.0, %v3010
    %3012 = vmatmul.bf16.gmra.mxu0 %v2971
    %v3013 = vpop.f32.mrf.mxu0
    %v3014 = vadd.f32 0.0, %v3013
    %v3015 = vpop.f32.mrf.mxu0
    %v3016 = vadd.f32 0.0, %v3015
    %3017 = vmatmul.bf16.gmra.mxu0 %v2974
    %v3018 = vpop.f32.mrf.mxu0
    %v3019 = vadd.f32 0.0, %v3018
    %v3020 = vpop.f32.mrf.mxu0
    %3021 = vdwg.mxu0
    %vm3028 = vcmask 1043456
    %v3029 = vrot.slane %v2991, 4
    %v3030 = vrot.slane %v2993, 4
    %v3031 = vsel %vm3028, %v3029, %v3030
    %v3032 = vrot.slane %v3014, 4
    %v3033 = vrot.slane %v3016, 4
    %v3034 = vsel %vm3028, %v3032, %v3033
    %v3035 = vrot.slane %v2996, 4
    %v3036 = vsel %vm3028, %v3030, %v3035
    %v3037 = vrot.slane %v3019, 4
    %v3038 = vsel %vm3028, %v3033, %v3037
    %v3045 = vmax.f32 %v2986, %v3031
    %v3046 = vmax.f32 %v3009, %v3034
    %v3047 = vmax.f32 %v2988, %v3036
    %v3048 = vmax.f32 %v3011, %v3038
    %v3049 = vmax.f32 %v2991, %v3035
    %v3050 = vmax.f32 %v3014, %v3037
    %v3051 = vpack.c.bf16 %v3046, %v3045
    %v3052 = vpack.c.bf16 %v3048, %v3047
    %v3053 = vpack.c.bf16 %v3050, %v3049
    %v3057 = vrot.slane %v3051, 3
    %v3058 = vrot.slane %v3052, 3
    %v3059 = vrot.slane %v3053, 3
    %vm3060 = vcmask 1040384
    %v3063 = vsel %vm3060, %v3051, %v3057
    %vm3064 = vcmask 1041409
    %v3065 = vsel %vm3064, %v3051, %v3057
    %v3067 = vrot.slane %v3065, 1
    %vm3068 = vcmask 1042434
    %v3069 = vsel %vm3068, %v3051, %v3057
    %v3071 = vrot.slane %v3069, 2
    %vm3072 = vcmask 1043459
    %v3073 = vsel %vm3072, %v3051, %v3057
    %v3075 = vrot.slane %v3073, 3
    %v3078 = vsel %vm3060, %v3052, %v3058
    %v3079 = vsel %vm3064, %v3052, %v3058
    %v3081 = vrot.slane %v3079, 1
    %v3082 = vsel %vm3068, %v3052, %v3058
    %v3084 = vrot.slane %v3082, 2
    %v3085 = vsel %vm3072, %v3052, %v3058
    %v3087 = vrot.slane %v3085, 3
    %v3090 = vsel %vm3060, %v3053, %v3059
    %v3091 = vsel %vm3064, %v3053, %v3059
    %v3093 = vrot.slane %v3091, 1
    %3094 = vst [vmem:[#allocation1] ss:$4 sm:$0xff] %v3063
    %s3096 = scalar_lea.vmem [#allocation1], 1
    %3097 = vst [vmem:[%s3096] ss:$4 sm:$0xff] %v3067
    %s3099 = scalar_lea.vmem [#allocation1], 2
    %3100 = vst [vmem:[%s3099] ss:$4 sm:$0xff] %v3071
    %s3102 = scalar_lea.vmem [#allocation1], 3
    %3103 = vst [vmem:[%s3102] ss:$4 sm:$0xff] %v3075
    %s3104 = scalar_lea.vmem [#allocation1], 32
    %3105 = vst [vmem:[%s3104] ss:$4 sm:$0xff] %v3078
    %v3106 = vld [vmem:[#allocation1] sm:$0xff]
    %v3107 = vld [vmem:[#allocation1 + $0x20] sm:$0xff]
    %3109 = vst [vmem:[#allocation1] ss:$4 sm:$0xff] %v3081
    %3111 = vst [vmem:[%s3096] ss:$4 sm:$0xff] %v3084
    %3113 = vst [vmem:[%s3099] ss:$4 sm:$0xff] %v3087
    %3114 = vst [vmem:[%s3102] ss:$4 sm:$0xff] %v3090
    %3116 = vst [vmem:[%s3104] ss:$4 sm:$0xff] %v3093
    %v3117 = vld [vmem:[#allocation1] sm:$0xff]
    %v3118 = vld [vmem:[#allocation1 + $0x20] sm:$0xff]
    %3123 = vst [vmem:[#allocation2] sm:$0xff] %v3106
    %3124 = vst [vmem:[#allocation2 + $0x8] sm:$0x11] %v3107
    %3125 = vst [vmem:[#allocation2 + $0x10] sm:$0xff] %v3117
    %3126 = vst [vmem:[#allocation2 + $0x18] sm:$0x11] %v3118
    %v3127 = vld [vmem:[#allocation2] sm:$0xff]
    %v3128 = vld [vmem:[#allocation2 + $0x10] sm:$0xff]
    %v3129 = vld [vmem:[#allocation2 + $0x8] sm:$0x11]
    %v3130 = vld [vmem:[#allocation2 + $0x18] sm:$0x11]
    %v3132 = vshrl.u32 %v3127, 16
    %v3134 = vrot.slane %v3132, 4
    %v3135 = vshll.u32 %v3127, 16
    %v3137 = vrot.slane %v3135, 5
    %v3138 = vor.u32 %v3134, %v3137
    %v3139 = vrot.slane %v3138, 4
    %v3141 = vshll.u32 %v3129, 16
    %v3143 = vrot.slane %v3141, 5
    %v3144 = vsel %vm300, %v3139, %v3143
    %v3146 = vshrl.u32 %v3128, 16
    %v3148 = vrot.slane %v3146, 4
    %v3149 = vshll.u32 %v3128, 16
    %v3151 = vrot.slane %v3149, 5
    %v3152 = vor.u32 %v3148, %v3151
    %v3153 = vrot.slane %v3152, 4
    %v3155 = vshll.u32 %v3130, 16
    %v3157 = vrot.slane %v3155, 5
    %v3158 = vsel %vm300, %v3153, %v3157
    %v3159 = vld [vmem:[#allocation2] sm:$0xee]
    %v3160 = vld [vmem:[#allocation2 + $0x10] sm:$0xee]
    %v3165 = vrot.slane %v3159, 5
    %v3166 = vrot.slane %v3165, 4
    %v3167 = vrot.slane %v3129, 5
    %v3168 = vsel %vm359, %v3166, %v3167
    %v3169 = vrot.slane %v3160, 5
    %v3170 = vrot.slane %v3169, 4
    %v3171 = vrot.slane %v3130, 5
    %v3172 = vsel %vm359, %v3170, %v3171
    %v3175 = vunpack.c.l.b16 %v3127
    %v3176 = vunpack.c.h.b16 %v3127
    %v3177 = vunpack.c.l.b16 %v3128
    %v3178 = vunpack.c.h.b16 %v3128
    %v3179 = vpack.c.b16 %v3177, %v3175
    %v3180 = vpack.c.b16 %v3178, %v3176
    %v3183 = vunpack.c.l.b16 %v3144
    %v3184 = vunpack.c.h.b16 %v3144
    %v3185 = vunpack.c.l.b16 %v3158
    %v3186 = vunpack.c.h.b16 %v3158
    %v3187 = vpack.c.b16 %v3185, %v3183
    %v3188 = vpack.c.b16 %v3186, %v3184
    %v3191 = vunpack.c.l.b16 %v3168
    %v3192 = vunpack.c.h.b16 %v3168
    %v3193 = vunpack.c.l.b16 %v3172
    %v3194 = vunpack.c.h.b16 %v3172
    %v3195 = vpack.c.b16 %v3193, %v3191
    %v3196 = vpack.c.b16 %v3194, %v3192
    %v3199 = vld [vmem:[#allocation8] sm:$0xff]
    %v3200 = vld [vmem:[#allocation8 + $0x8] sm:$0xff]
    %v3201 = vld [vmem:[#allocation8 + $0x10] sm:$0xff]
    %v3202 = vld [vmem:[#allocation8 + $0x18] sm:$0xff]
    %v3203 = vld [vmem:[#allocation8 + $0x20] sm:$0xff]
    %v3204 = vld [vmem:[#allocation8 + $0x28] sm:$0xff]
    %v3205 = vld [vmem:[#allocation8 + $0x30] sm:$0xff]
    %v3206 = vld [vmem:[#allocation8 + $0x38] sm:$0xff]
    %v3207 = vld [vmem:[#allocation8 + $0x40] sm:$0xff]
    %v3208 = vld [vmem:[#allocation8 + $0x48] sm:$0xff]
    %v3209 = vld [vmem:[#allocation8 + $0x50] sm:$0xff]
    %v3210 = vld [vmem:[#allocation8 + $0x58] sm:$0xff]
    %v3211 = vld [vmem:[#allocation8 + $0x60] sm:$0xff]
    %v3212 = vld [vmem:[#allocation8 + $0x68] sm:$0xff]
    %v3213 = vld [vmem:[#allocation8 + $0x70] sm:$0xff]
    %v3214 = vld [vmem:[#allocation8 + $0x78] sm:$0xff]
    %v3215 = vld [vmem:[#allocation8 + $0x80] sm:$0xff]
    %v3216 = vld [vmem:[#allocation8 + $0x88] sm:$0xff]
    %v3217 = vld [vmem:[#allocation8 + $0x90] sm:$0xff]
    %v3218 = vld [vmem:[#allocation8 + $0x98] sm:$0xff]
    %v3219 = vld [vmem:[#allocation8 + $0xa0] sm:$0xff]
    %v3220 = vld [vmem:[#allocation8 + $0xa8] sm:$0xff]
    %v3221 = vld [vmem:[#allocation8 + $0xb0] sm:$0xff]
    %v3222 = vld [vmem:[#allocation8 + $0xb8] sm:$0xff]
    %v3223 = vld [vmem:[#allocation8 + $0xc0] sm:$0xff]
    %v3224 = vld [vmem:[#allocation8 + $0xc8] sm:$0xff]
    %v3225 = vld [vmem:[#allocation8 + $0xd0] sm:$0xff]
    %v3226 = vld [vmem:[#allocation8 + $0xd8] sm:$0xff]
    %v3227 = vld [vmem:[#allocation8 + $0xe0] sm:$0xff]
    %v3228 = vld [vmem:[#allocation8 + $0xe8] sm:$0xff]
    %v3229 = vld [vmem:[#allocation8 + $0xf0] sm:$0xff]
    %v3230 = vld [vmem:[#allocation8 + $0xf8] sm:$0xff]
    %v3231 = vld [vmem:[#allocation8 + $0x100] sm:$0xff]
    %v3232 = vld [vmem:[#allocation8 + $0x108] sm:$0xff]
    %v3233 = vld [vmem:[#allocation8 + $0x110] sm:$0xff]
    %v3234 = vld [vmem:[#allocation8 + $0x118] sm:$0xff]
    %v3235 = vld [vmem:[#allocation8 + $0x120] sm:$0xff]
    %v3236 = vld [vmem:[#allocation8 + $0x128] sm:$0xff]
    %v3237 = vld [vmem:[#allocation8 + $0x130] sm:$0xff]
    %v3238 = vld [vmem:[#allocation8 + $0x138] sm:$0xff]
    %v3239 = vld [vmem:[#allocation8 + $0x140] sm:$0xff]
    %v3240 = vld [vmem:[#allocation8 + $0x148] sm:$0xff]
    %v3241 = vld [vmem:[#allocation8 + $0x150] sm:$0xff]
    %v3242 = vld [vmem:[#allocation8 + $0x158] sm:$0xff]
    %v3243 = vld [vmem:[#allocation8 + $0x160] sm:$0xff]
    %v3244 = vld [vmem:[#allocation8 + $0x168] sm:$0xff]
    %v3245 = vld [vmem:[#allocation8 + $0x170] sm:$0xff]
    %v3246 = vld [vmem:[#allocation8 + $0x178] sm:$0xff]
    %v3247 = vld [vmem:[#allocation8 + $0x180] sm:$0xff]
    %v3248 = vld [vmem:[#allocation8 + $0x188] sm:$0xff]
    %v3249 = vld [vmem:[#allocation8 + $0x190] sm:$0xff]
    %v3250 = vld [vmem:[#allocation8 + $0x198] sm:$0xff]
    %v3251 = vld [vmem:[#allocation8 + $0x1a0] sm:$0xff]
    %v3252 = vld [vmem:[#allocation8 + $0x1a8] sm:$0xff]
    %v3253 = vld [vmem:[#allocation8 + $0x1b0] sm:$0xff]
    %v3254 = vld [vmem:[#allocation8 + $0x1b8] sm:$0xff]
    %v3255 = vld [vmem:[#allocation8 + $0x1c0] sm:$0xff]
    %v3256 = vld [vmem:[#allocation8 + $0x1c8] sm:$0xff]
    %v3257 = vld [vmem:[#allocation8 + $0x1d0] sm:$0xff]
    %v3258 = vld [vmem:[#allocation8 + $0x1d8] sm:$0xff]
    %v3259 = vld [vmem:[#allocation8 + $0x1e0] sm:$0xff]
    %v3260 = vld [vmem:[#allocation8 + $0x1e8] sm:$0xff]
    %v3261 = vld [vmem:[#allocation8 + $0x1f0] sm:$0xff]
    %v3262 = vld [vmem:[#allocation8 + $0x1f8] sm:$0xff]
    %v3263 = vld [vmem:[#allocation8 + $0x200] sm:$0xff]
    %v3264 = vld [vmem:[#allocation8 + $0x208] sm:$0xff]
    %v3265 = vld [vmem:[#allocation8 + $0x210] sm:$0xff]
    %v3266 = vld [vmem:[#allocation8 + $0x218] sm:$0xff]
    %v3267 = vld [vmem:[#allocation8 + $0x220] sm:$0xff]
    %v3268 = vld [vmem:[#allocation8 + $0x228] sm:$0xff]
    %v3269 = vld [vmem:[#allocation8 + $0x230] sm:$0xff]
    %v3270 = vld [vmem:[#allocation8 + $0x238] sm:$0xff]
    %v3271 = vld [vmem:[#allocation8 + $0x240] sm:$0xff]
    %v3272 = vld [vmem:[#allocation8 + $0x248] sm:$0xff]
    %v3273 = vld [vmem:[#allocation8 + $0x250] sm:$0xff]
    %v3274 = vld [vmem:[#allocation8 + $0x258] sm:$0xff]
    %v3275 = vld [vmem:[#allocation8 + $0x260] sm:$0xff]
    %v3276 = vld [vmem:[#allocation8 + $0x268] sm:$0xff]
    %v3277 = vld [vmem:[#allocation8 + $0x270] sm:$0xff]
    %v3278 = vld [vmem:[#allocation8 + $0x278] sm:$0xff]
    %v3279 = vld [vmem:[#allocation8 + $0x280] sm:$0xff]
    %v3280 = vld [vmem:[#allocation8 + $0x288] sm:$0xff]
    %v3281 = vld [vmem:[#allocation8 + $0x290] sm:$0xff]
    %v3282 = vld [vmem:[#allocation8 + $0x298] sm:$0xff]
    %v3283 = vld [vmem:[#allocation8 + $0x2a0] sm:$0xff]
    %v3284 = vld [vmem:[#allocation8 + $0x2a8] sm:$0xff]
    %v3285 = vld [vmem:[#allocation8 + $0x2b0] sm:$0xff]
    %v3286 = vld [vmem:[#allocation8 + $0x2b8] sm:$0xff]
    %v3287 = vld [vmem:[#allocation8 + $0x2c0] sm:$0xff]
    %v3288 = vld [vmem:[#allocation8 + $0x2c8] sm:$0xff]
    %v3289 = vld [vmem:[#allocation8 + $0x2d0] sm:$0xff]
    %v3290 = vld [vmem:[#allocation8 + $0x2d8] sm:$0xff]
    %v3291 = vld [vmem:[#allocation8 + $0x2e0] sm:$0xff]
    %v3292 = vld [vmem:[#allocation8 + $0x2e8] sm:$0xff]
    %v3293 = vld [vmem:[#allocation8 + $0x2f0] sm:$0xff]
    %v3294 = vld [vmem:[#allocation8 + $0x2f8] sm:$0xff]
    %v3295 = vld [vmem:[#allocation8 + $0x300] sm:$0xff]
    %v3296 = vld [vmem:[#allocation8 + $0x308] sm:$0xff]
    %v3297 = vld [vmem:[#allocation8 + $0x310] sm:$0xff]
    %v3298 = vld [vmem:[#allocation8 + $0x318] sm:$0xff]
    %v3299 = vld [vmem:[#allocation8 + $0x320] sm:$0xff]
    %v3300 = vld [vmem:[#allocation8 + $0x328] sm:$0xff]
    %v3301 = vld [vmem:[#allocation8 + $0x330] sm:$0xff]
    %v3302 = vld [vmem:[#allocation8 + $0x338] sm:$0xff]
    %v3303 = vld [vmem:[#allocation8 + $0x340] sm:$0xff]
    %v3304 = vld [vmem:[#allocation8 + $0x348] sm:$0xff]
    %v3305 = vld [vmem:[#allocation8 + $0x350] sm:$0xff]
    %v3306 = vld [vmem:[#allocation8 + $0x358] sm:$0xff]
    %v3307 = vld [vmem:[#allocation8 + $0x360] sm:$0xff]
    %v3308 = vld [vmem:[#allocation8 + $0x368] sm:$0xff]
    %v3309 = vld [vmem:[#allocation8 + $0x370] sm:$0xff]
    %v3310 = vld [vmem:[#allocation8 + $0x378] sm:$0xff]
    %v3311 = vld [vmem:[#allocation8 + $0x380] sm:$0xff]
    %v3312 = vld [vmem:[#allocation8 + $0x388] sm:$0xff]
    %v3313 = vld [vmem:[#allocation8 + $0x390] sm:$0xff]
    %v3314 = vld [vmem:[#allocation8 + $0x398] sm:$0xff]
    %v3315 = vld [vmem:[#allocation8 + $0x3a0] sm:$0xff]
    %v3316 = vld [vmem:[#allocation8 + $0x3a8] sm:$0xff]
    %v3317 = vld [vmem:[#allocation8 + $0x3b0] sm:$0xff]
    %v3318 = vld [vmem:[#allocation8 + $0x3b8] sm:$0xff]
    %v3319 = vld [vmem:[#allocation8 + $0x3c0] sm:$0xff]
    %v3320 = vld [vmem:[#allocation8 + $0x3c8] sm:$0xff]
    %v3321 = vld [vmem:[#allocation8 + $0x3d0] sm:$0xff]
    %v3322 = vld [vmem:[#allocation8 + $0x3d8] sm:$0xff]
    %v3323 = vld [vmem:[#allocation8 + $0x3e0] sm:$0xff]
    %v3324 = vld [vmem:[#allocation8 + $0x3e8] sm:$0xff]
    %v3325 = vld [vmem:[#allocation8 + $0x3f0] sm:$0xff]
    %v3326 = vld [vmem:[#allocation8 + $0x3f8] sm:$0xff]
    %v3327 = vld [vmem:[#allocation8 + $0x400] sm:$0xff]
    %v3328 = vld [vmem:[#allocation8 + $0x408] sm:$0xff]
    %v3329 = vld [vmem:[#allocation8 + $0x410] sm:$0xff]
    %v3330 = vld [vmem:[#allocation8 + $0x418] sm:$0xff]
    %v3331 = vld [vmem:[#allocation8 + $0x420] sm:$0xff]
    %v3332 = vld [vmem:[#allocation8 + $0x428] sm:$0xff]
    %v3333 = vld [vmem:[#allocation8 + $0x430] sm:$0xff]
    %v3334 = vld [vmem:[#allocation8 + $0x438] sm:$0xff]
    %v3335 = vld [vmem:[#allocation8 + $0x440] sm:$0xff]
    %v3336 = vld [vmem:[#allocation8 + $0x448] sm:$0xff]
    %v3337 = vld [vmem:[#allocation8 + $0x450] sm:$0xff]
    %v3338 = vld [vmem:[#allocation8 + $0x458] sm:$0xff]
    %v3339 = vld [vmem:[#allocation8 + $0x460] sm:$0xff]
    %v3340 = vld [vmem:[#allocation8 + $0x468] sm:$0xff]
    %v3341 = vld [vmem:[#allocation8 + $0x470] sm:$0xff]
    %v3342 = vld [vmem:[#allocation8 + $0x478] sm:$0xff]
    %v3343 = vld [vmem:[#allocation8 + $0x480] sm:$0xff]
    %v3344 = vld [vmem:[#allocation8 + $0x488] sm:$0xff]
    %v3345 = vld [vmem:[#allocation8 + $0x490] sm:$0xff]
    %v3346 = vld [vmem:[#allocation8 + $0x498] sm:$0xff]
    %v3347 = vld [vmem:[#allocation8 + $0x4a0] sm:$0xff]
    %v3348 = vld [vmem:[#allocation8 + $0x4a8] sm:$0xff]
    %v3349 = vld [vmem:[#allocation8 + $0x4b0] sm:$0xff]
    %v3350 = vld [vmem:[#allocation8 + $0x4b8] sm:$0xff]
    %v3351 = vld [vmem:[#allocation8 + $0x4c0] sm:$0xff]
    %v3352 = vld [vmem:[#allocation8 + $0x4c8] sm:$0xff]
    %v3353 = vld [vmem:[#allocation8 + $0x4d0] sm:$0xff]
    %v3354 = vld [vmem:[#allocation8 + $0x4d8] sm:$0xff]
    %v3355 = vld [vmem:[#allocation8 + $0x4e0] sm:$0xff]
    %v3356 = vld [vmem:[#allocation8 + $0x4e8] sm:$0xff]
    %v3357 = vld [vmem:[#allocation8 + $0x4f0] sm:$0xff]
    %v3358 = vld [vmem:[#allocation8 + $0x4f8] sm:$0xff]
    %v3359 = vld [vmem:[#allocation8 + $0x500] sm:$0xff]
    %v3360 = vld [vmem:[#allocation8 + $0x508] sm:$0xff]
    %v3361 = vld [vmem:[#allocation8 + $0x510] sm:$0xff]
    %v3362 = vld [vmem:[#allocation8 + $0x518] sm:$0xff]
    %v3363 = vld [vmem:[#allocation8 + $0x520] sm:$0xff]
    %v3364 = vld [vmem:[#allocation8 + $0x528] sm:$0xff]
    %v3365 = vld [vmem:[#allocation8 + $0x530] sm:$0xff]
    %v3366 = vld [vmem:[#allocation8 + $0x538] sm:$0xff]
    %v3367 = vld [vmem:[#allocation8 + $0x540] sm:$0xff]
    %v3368 = vld [vmem:[#allocation8 + $0x548] sm:$0xff]
    %v3369 = vld [vmem:[#allocation8 + $0x550] sm:$0xff]
    %v3370 = vld [vmem:[#allocation8 + $0x558] sm:$0xff]
    %v3371 = vld [vmem:[#allocation8 + $0x560] sm:$0xff]
    %v3372 = vld [vmem:[#allocation8 + $0x568] sm:$0xff]
    %v3373 = vld [vmem:[#allocation8 + $0x570] sm:$0xff]
    %v3374 = vld [vmem:[#allocation8 + $0x578] sm:$0xff]
    %v3375 = vld [vmem:[#allocation8 + $0x580] sm:$0xff]
    %v3376 = vld [vmem:[#allocation8 + $0x588] sm:$0xff]
    %v3377 = vld [vmem:[#allocation8 + $0x590] sm:$0xff]
    %v3378 = vld [vmem:[#allocation8 + $0x598] sm:$0xff]
    %v3379 = vld [vmem:[#allocation8 + $0x5a0] sm:$0xff]
    %v3380 = vld [vmem:[#allocation8 + $0x5a8] sm:$0xff]
    %v3381 = vld [vmem:[#allocation8 + $0x5b0] sm:$0xff]
    %v3382 = vld [vmem:[#allocation8 + $0x5b8] sm:$0xff]
    %v3383 = vld [vmem:[#allocation8 + $0x5c0] sm:$0xff]
    %v3384 = vld [vmem:[#allocation8 + $0x5c8] sm:$0xff]
    %v3385 = vld [vmem:[#allocation8 + $0x5d0] sm:$0xff]
    %v3386 = vld [vmem:[#allocation8 + $0x5d8] sm:$0xff]
    %v3387 = vld [vmem:[#allocation8 + $0x5e0] sm:$0xff]
    %v3388 = vld [vmem:[#allocation8 + $0x5e8] sm:$0xff]
    %v3389 = vld [vmem:[#allocation8 + $0x5f0] sm:$0xff]
    %v3390 = vld [vmem:[#allocation8 + $0x5f8] sm:$0xff]
    %v3391 = vld [vmem:[#allocation9] sm:$0xf]
    %v3393 = vperm.slane %v3391, 0
    %v3394 = vperm.slane %v3391, 1
    %v3395 = vperm.slane %v3391, 2
    %v3396 = vperm.slane %v3391, 3
    %v3593 = vunpack.c.l.b16 %v3199
    %v3594 = vunpack.c.h.b16 %v3199
    %v3595 = vunpack.c.l.b16 %v3200
    %v3596 = vunpack.c.h.b16 %v3200
    %v3597 = vunpack.c.l.b16 %v3201
    %v3598 = vunpack.c.h.b16 %v3201
    %v3599 = vunpack.c.l.b16 %v3202
    %v3600 = vunpack.c.h.b16 %v3202
    %v3601 = vunpack.c.l.b16 %v3203
    %v3602 = vunpack.c.h.b16 %v3203
    %v3603 = vunpack.c.l.b16 %v3204
    %v3604 = vunpack.c.h.b16 %v3204
    %v3605 = vunpack.c.l.b16 %v3205
    %v3606 = vunpack.c.h.b16 %v3205
    %v3607 = vunpack.c.l.b16 %v3206
    %v3608 = vunpack.c.h.b16 %v3206
    %v3609 = vunpack.c.l.b16 %v3207
    %v3610 = vunpack.c.h.b16 %v3207
    %v3611 = vunpack.c.l.b16 %v3208
    %v3612 = vunpack.c.h.b16 %v3208
    %v3613 = vunpack.c.l.b16 %v3209
    %v3614 = vunpack.c.h.b16 %v3209
    %v3615 = vunpack.c.l.b16 %v3210
    %v3616 = vunpack.c.h.b16 %v3210
    %v3617 = vunpack.c.l.b16 %v3211
    %v3618 = vunpack.c.h.b16 %v3211
    %v3619 = vunpack.c.l.b16 %v3212
    %v3620 = vunpack.c.h.b16 %v3212
    %v3621 = vunpack.c.l.b16 %v3213
    %v3622 = vunpack.c.h.b16 %v3213
    %v3623 = vunpack.c.l.b16 %v3214
    %v3624 = vunpack.c.h.b16 %v3214
    %v3625 = vunpack.c.l.b16 %v3215
    %v3626 = vunpack.c.h.b16 %v3215
    %v3627 = vunpack.c.l.b16 %v3216
    %v3628 = vunpack.c.h.b16 %v3216
    %v3629 = vunpack.c.l.b16 %v3217
    %v3630 = vunpack.c.h.b16 %v3217
    %v3631 = vunpack.c.l.b16 %v3218
    %v3632 = vunpack.c.h.b16 %v3218
    %v3633 = vunpack.c.l.b16 %v3219
    %v3634 = vunpack.c.h.b16 %v3219
    %v3635 = vunpack.c.l.b16 %v3220
    %v3636 = vunpack.c.h.b16 %v3220
    %v3637 = vunpack.c.l.b16 %v3221
    %v3638 = vunpack.c.h.b16 %v3221
    %v3639 = vunpack.c.l.b16 %v3222
    %v3640 = vunpack.c.h.b16 %v3222
    %v3641 = vunpack.c.l.b16 %v3223
    %v3642 = vunpack.c.h.b16 %v3223
    %v3643 = vunpack.c.l.b16 %v3224
    %v3644 = vunpack.c.h.b16 %v3224
    %v3645 = vunpack.c.l.b16 %v3225
    %v3646 = vunpack.c.h.b16 %v3225
    %v3647 = vunpack.c.l.b16 %v3226
    %v3648 = vunpack.c.h.b16 %v3226
    %v3649 = vunpack.c.l.b16 %v3227
    %v3650 = vunpack.c.h.b16 %v3227
    %v3651 = vunpack.c.l.b16 %v3228
    %v3652 = vunpack.c.h.b16 %v3228
    %v3653 = vunpack.c.l.b16 %v3229
    %v3654 = vunpack.c.h.b16 %v3229
    %v3655 = vunpack.c.l.b16 %v3230
    %v3656 = vunpack.c.h.b16 %v3230
    %v3657 = vunpack.c.l.b16 %v3231
    %v3658 = vunpack.c.h.b16 %v3231
    %v3659 = vunpack.c.l.b16 %v3232
    %v3660 = vunpack.c.h.b16 %v3232
    %v3661 = vunpack.c.l.b16 %v3233
    %v3662 = vunpack.c.h.b16 %v3233
    %v3663 = vunpack.c.l.b16 %v3234
    %v3664 = vunpack.c.h.b16 %v3234
    %v3665 = vunpack.c.l.b16 %v3235
    %v3666 = vunpack.c.h.b16 %v3235
    %v3667 = vunpack.c.l.b16 %v3236
    %v3668 = vunpack.c.h.b16 %v3236
    %v3669 = vunpack.c.l.b16 %v3237
    %v3670 = vunpack.c.h.b16 %v3237
    %v3671 = vunpack.c.l.b16 %v3238
    %v3672 = vunpack.c.h.b16 %v3238
    %v3673 = vunpack.c.l.b16 %v3239
    %v3674 = vunpack.c.h.b16 %v3239
    %v3675 = vunpack.c.l.b16 %v3240
    %v3676 = vunpack.c.h.b16 %v3240
    %v3677 = vunpack.c.l.b16 %v3241
    %v3678 = vunpack.c.h.b16 %v3241
    %v3679 = vunpack.c.l.b16 %v3242
    %v3680 = vunpack.c.h.b16 %v3242
    %v3681 = vunpack.c.l.b16 %v3243
    %v3682 = vunpack.c.h.b16 %v3243
    %v3683 = vunpack.c.l.b16 %v3244
    %v3684 = vunpack.c.h.b16 %v3244
    %v3685 = vunpack.c.l.b16 %v3245
    %v3686 = vunpack.c.h.b16 %v3245
    %v3687 = vunpack.c.l.b16 %v3246
    %v3688 = vunpack.c.h.b16 %v3246
    %v3689 = vunpack.c.l.b16 %v3247
    %v3690 = vunpack.c.h.b16 %v3247
    %v3691 = vunpack.c.l.b16 %v3248
    %v3692 = vunpack.c.h.b16 %v3248
    %v3693 = vunpack.c.l.b16 %v3249
    %v3694 = vunpack.c.h.b16 %v3249
    %v3695 = vunpack.c.l.b16 %v3250
    %v3696 = vunpack.c.h.b16 %v3250
    %v3697 = vunpack.c.l.b16 %v3251
    %v3698 = vunpack.c.h.b16 %v3251
    %v3699 = vunpack.c.l.b16 %v3252
    %v3700 = vunpack.c.h.b16 %v3252
    %v3701 = vunpack.c.l.b16 %v3253
    %v3702 = vunpack.c.h.b16 %v3253
    %v3703 = vunpack.c.l.b16 %v3254
    %v3704 = vunpack.c.h.b16 %v3254
    %v3705 = vunpack.c.l.b16 %v3255
    %v3706 = vunpack.c.h.b16 %v3255
    %v3707 = vunpack.c.l.b16 %v3256
    %v3708 = vunpack.c.h.b16 %v3256
    %v3709 = vunpack.c.l.b16 %v3257
    %v3710 = vunpack.c.h.b16 %v3257
    %v3711 = vunpack.c.l.b16 %v3258
    %v3712 = vunpack.c.h.b16 %v3258
    %v3713 = vunpack.c.l.b16 %v3259
    %v3714 = vunpack.c.h.b16 %v3259
    %v3715 = vunpack.c.l.b16 %v3260
    %v3716 = vunpack.c.h.b16 %v3260
    %v3717 = vunpack.c.l.b16 %v3261
    %v3718 = vunpack.c.h.b16 %v3261
    %v3719 = vunpack.c.l.b16 %v3262
    %v3720 = vunpack.c.h.b16 %v3262
    %v3721 = vunpack.c.l.b16 %v3263
    %v3722 = vunpack.c.h.b16 %v3263
    %v3723 = vunpack.c.l.b16 %v3264
    %v3724 = vunpack.c.h.b16 %v3264
    %v3725 = vunpack.c.l.b16 %v3265
    %v3726 = vunpack.c.h.b16 %v3265
    %v3727 = vunpack.c.l.b16 %v3266
    %v3728 = vunpack.c.h.b16 %v3266
    %v3729 = vunpack.c.l.b16 %v3267
    %v3730 = vunpack.c.h.b16 %v3267
    %v3731 = vunpack.c.l.b16 %v3268
    %v3732 = vunpack.c.h.b16 %v3268
    %v3733 = vunpack.c.l.b16 %v3269
    %v3734 = vunpack.c.h.b16 %v3269
    %v3735 = vunpack.c.l.b16 %v3270
    %v3736 = vunpack.c.h.b16 %v3270
    %v3737 = vunpack.c.l.b16 %v3271
    %v3738 = vunpack.c.h.b16 %v3271
    %v3739 = vunpack.c.l.b16 %v3272
    %v3740 = vunpack.c.h.b16 %v3272
    %v3741 = vunpack.c.l.b16 %v3273
    %v3742 = vunpack.c.h.b16 %v3273
    %v3743 = vunpack.c.l.b16 %v3274
    %v3744 = vunpack.c.h.b16 %v3274
    %v3745 = vunpack.c.l.b16 %v3275
    %v3746 = vunpack.c.h.b16 %v3275
    %v3747 = vunpack.c.l.b16 %v3276
    %v3748 = vunpack.c.h.b16 %v3276
    %v3749 = vunpack.c.l.b16 %v3277
    %v3750 = vunpack.c.h.b16 %v3277
    %v3751 = vunpack.c.l.b16 %v3278
    %v3752 = vunpack.c.h.b16 %v3278
    %v3753 = vunpack.c.l.b16 %v3279
    %v3754 = vunpack.c.h.b16 %v3279
    %v3755 = vunpack.c.l.b16 %v3280
    %v3756 = vunpack.c.h.b16 %v3280
    %v3757 = vunpack.c.l.b16 %v3281
    %v3758 = vunpack.c.h.b16 %v3281
    %v3759 = vunpack.c.l.b16 %v3282
    %v3760 = vunpack.c.h.b16 %v3282
    %v3761 = vunpack.c.l.b16 %v3283
    %v3762 = vunpack.c.h.b16 %v3283
    %v3763 = vunpack.c.l.b16 %v3284
    %v3764 = vunpack.c.h.b16 %v3284
    %v3765 = vunpack.c.l.b16 %v3285
    %v3766 = vunpack.c.h.b16 %v3285
    %v3767 = vunpack.c.l.b16 %v3286
    %v3768 = vunpack.c.h.b16 %v3286
    %v3769 = vunpack.c.l.b16 %v3287
    %v3770 = vunpack.c.h.b16 %v3287
    %v3771 = vunpack.c.l.b16 %v3288
    %v3772 = vunpack.c.h.b16 %v3288
    %v3773 = vunpack.c.l.b16 %v3289
    %v3774 = vunpack.c.h.b16 %v3289
    %v3775 = vunpack.c.l.b16 %v3290
    %v3776 = vunpack.c.h.b16 %v3290
    %v3777 = vunpack.c.l.b16 %v3291
    %v3778 = vunpack.c.h.b16 %v3291
    %v3779 = vunpack.c.l.b16 %v3292
    %v3780 = vunpack.c.h.b16 %v3292
    %v3781 = vunpack.c.l.b16 %v3293
    %v3782 = vunpack.c.h.b16 %v3293
    %v3783 = vunpack.c.l.b16 %v3294
    %v3784 = vunpack.c.h.b16 %v3294
    %v3785 = vunpack.c.l.b16 %v3295
    %v3786 = vunpack.c.h.b16 %v3295
    %v3787 = vunpack.c.l.b16 %v3296
    %v3788 = vunpack.c.h.b16 %v3296
    %v3789 = vunpack.c.l.b16 %v3297
    %v3790 = vunpack.c.h.b16 %v3297
    %v3791 = vunpack.c.l.b16 %v3298
    %v3792 = vunpack.c.h.b16 %v3298
    %v3793 = vunpack.c.l.b16 %v3299
    %v3794 = vunpack.c.h.b16 %v3299
    %v3795 = vunpack.c.l.b16 %v3300
    %v3796 = vunpack.c.h.b16 %v3300
    %v3797 = vunpack.c.l.b16 %v3301
    %v3798 = vunpack.c.h.b16 %v3301
    %v3799 = vunpack.c.l.b16 %v3302
    %v3800 = vunpack.c.h.b16 %v3302
    %v3801 = vunpack.c.l.b16 %v3303
    %v3802 = vunpack.c.h.b16 %v3303
    %v3803 = vunpack.c.l.b16 %v3304
    %v3804 = vunpack.c.h.b16 %v3304
    %v3805 = vunpack.c.l.b16 %v3305
    %v3806 = vunpack.c.h.b16 %v3305
    %v3807 = vunpack.c.l.b16 %v3306
    %v3808 = vunpack.c.h.b16 %v3306
    %v3809 = vunpack.c.l.b16 %v3307
    %v3810 = vunpack.c.h.b16 %v3307
    %v3811 = vunpack.c.l.b16 %v3308
    %v3812 = vunpack.c.h.b16 %v3308
    %v3813 = vunpack.c.l.b16 %v3309
    %v3814 = vunpack.c.h.b16 %v3309
    %v3815 = vunpack.c.l.b16 %v3310
    %v3816 = vunpack.c.h.b16 %v3310
    %v3817 = vunpack.c.l.b16 %v3311
    %v3818 = vunpack.c.h.b16 %v3311
    %v3819 = vunpack.c.l.b16 %v3312
    %v3820 = vunpack.c.h.b16 %v3312
    %v3821 = vunpack.c.l.b16 %v3313
    %v3822 = vunpack.c.h.b16 %v3313
    %v3823 = vunpack.c.l.b16 %v3314
    %v3824 = vunpack.c.h.b16 %v3314
    %v3825 = vunpack.c.l.b16 %v3315
    %v3826 = vunpack.c.h.b16 %v3315
    %v3827 = vunpack.c.l.b16 %v3316
    %v3828 = vunpack.c.h.b16 %v3316
    %v3829 = vunpack.c.l.b16 %v3317
    %v3830 = vunpack.c.h.b16 %v3317
    %v3831 = vunpack.c.l.b16 %v3318
    %v3832 = vunpack.c.h.b16 %v3318
    %v3833 = vunpack.c.l.b16 %v3319
    %v3834 = vunpack.c.h.b16 %v3319
    %v3835 = vunpack.c.l.b16 %v3320
    %v3836 = vunpack.c.h.b16 %v3320
    %v3837 = vunpack.c.l.b16 %v3321
    %v3838 = vunpack.c.h.b16 %v3321
    %v3839 = vunpack.c.l.b16 %v3322
    %v3840 = vunpack.c.h.b16 %v3322
    %v3841 = vunpack.c.l.b16 %v3323
    %v3842 = vunpack.c.h.b16 %v3323
    %v3843 = vunpack.c.l.b16 %v3324
    %v3844 = vunpack.c.h.b16 %v3324
    %v3845 = vunpack.c.l.b16 %v3325
    %v3846 = vunpack.c.h.b16 %v3325
    %v3847 = vunpack.c.l.b16 %v3326
    %v3848 = vunpack.c.h.b16 %v3326
    %v3849 = vunpack.c.l.b16 %v3327
    %v3850 = vunpack.c.h.b16 %v3327
    %v3851 = vunpack.c.l.b16 %v3328
    %v3852 = vunpack.c.h.b16 %v3328
    %v3853 = vunpack.c.l.b16 %v3329
    %v3854 = vunpack.c.h.b16 %v3329
    %v3855 = vunpack.c.l.b16 %v3330
    %v3856 = vunpack.c.h.b16 %v3330
    %v3857 = vunpack.c.l.b16 %v3331
    %v3858 = vunpack.c.h.b16 %v3331
    %v3859 = vunpack.c.l.b16 %v3332
    %v3860 = vunpack.c.h.b16 %v3332
    %v3861 = vunpack.c.l.b16 %v3333
    %v3862 = vunpack.c.h.b16 %v3333
    %v3863 = vunpack.c.l.b16 %v3334
    %v3864 = vunpack.c.h.b16 %v3334
    %v3865 = vunpack.c.l.b16 %v3335
    %v3866 = vunpack.c.h.b16 %v3335
    %v3867 = vunpack.c.l.b16 %v3336
    %v3868 = vunpack.c.h.b16 %v3336
    %v3869 = vunpack.c.l.b16 %v3337
    %v3870 = vunpack.c.h.b16 %v3337
    %v3871 = vunpack.c.l.b16 %v3338
    %v3872 = vunpack.c.h.b16 %v3338
    %v3873 = vunpack.c.l.b16 %v3339
    %v3874 = vunpack.c.h.b16 %v3339
    %v3875 = vunpack.c.l.b16 %v3340
    %v3876 = vunpack.c.h.b16 %v3340
    %v3877 = vunpack.c.l.b16 %v3341
    %v3878 = vunpack.c.h.b16 %v3341
    %v3879 = vunpack.c.l.b16 %v3342
    %v3880 = vunpack.c.h.b16 %v3342
    %v3881 = vunpack.c.l.b16 %v3343
    %v3882 = vunpack.c.h.b16 %v3343
    %v3883 = vunpack.c.l.b16 %v3344
    %v3884 = vunpack.c.h.b16 %v3344
    %v3885 = vunpack.c.l.b16 %v3345
    %v3886 = vunpack.c.h.b16 %v3345
    %v3887 = vunpack.c.l.b16 %v3346
    %v3888 = vunpack.c.h.b16 %v3346
    %v3889 = vunpack.c.l.b16 %v3347
    %v3890 = vunpack.c.h.b16 %v3347
    %v3891 = vunpack.c.l.b16 %v3348
    %v3892 = vunpack.c.h.b16 %v3348
    %v3893 = vunpack.c.l.b16 %v3349
    %v3894 = vunpack.c.h.b16 %v3349
    %v3895 = vunpack.c.l.b16 %v3350
    %v3896 = vunpack.c.h.b16 %v3350
    %v3897 = vunpack.c.l.b16 %v3351
    %v3898 = vunpack.c.h.b16 %v3351
    %v3899 = vunpack.c.l.b16 %v3352
    %v3900 = vunpack.c.h.b16 %v3352
    %v3901 = vunpack.c.l.b16 %v3353
    %v3902 = vunpack.c.h.b16 %v3353
    %v3903 = vunpack.c.l.b16 %v3354
    %v3904 = vunpack.c.h.b16 %v3354
    %v3905 = vunpack.c.l.b16 %v3355
    %v3906 = vunpack.c.h.b16 %v3355
    %v3907 = vunpack.c.l.b16 %v3356
    %v3908 = vunpack.c.h.b16 %v3356
    %v3909 = vunpack.c.l.b16 %v3357
    %v3910 = vunpack.c.h.b16 %v3357
    %v3911 = vunpack.c.l.b16 %v3358
    %v3912 = vunpack.c.h.b16 %v3358
    %v3913 = vunpack.c.l.b16 %v3359
    %v3914 = vunpack.c.h.b16 %v3359
    %v3915 = vunpack.c.l.b16 %v3360
    %v3916 = vunpack.c.h.b16 %v3360
    %v3917 = vunpack.c.l.b16 %v3361
    %v3918 = vunpack.c.h.b16 %v3361
    %v3919 = vunpack.c.l.b16 %v3362
    %v3920 = vunpack.c.h.b16 %v3362
    %v3921 = vunpack.c.l.b16 %v3363
    %v3922 = vunpack.c.h.b16 %v3363
    %v3923 = vunpack.c.l.b16 %v3364
    %v3924 = vunpack.c.h.b16 %v3364
    %v3925 = vunpack.c.l.b16 %v3365
    %v3926 = vunpack.c.h.b16 %v3365
    %v3927 = vunpack.c.l.b16 %v3366
    %v3928 = vunpack.c.h.b16 %v3366
    %v3929 = vunpack.c.l.b16 %v3367
    %v3930 = vunpack.c.h.b16 %v3367
    %v3931 = vunpack.c.l.b16 %v3368
    %v3932 = vunpack.c.h.b16 %v3368
    %v3933 = vunpack.c.l.b16 %v3369
    %v3934 = vunpack.c.h.b16 %v3369
    %v3935 = vunpack.c.l.b16 %v3370
    %v3936 = vunpack.c.h.b16 %v3370
    %v3937 = vunpack.c.l.b16 %v3371
    %v3938 = vunpack.c.h.b16 %v3371
    %v3939 = vunpack.c.l.b16 %v3372
    %v3940 = vunpack.c.h.b16 %v3372
    %v3941 = vunpack.c.l.b16 %v3373
    %v3942 = vunpack.c.h.b16 %v3373
    %v3943 = vunpack.c.l.b16 %v3374
    %v3944 = vunpack.c.h.b16 %v3374
    %v3945 = vunpack.c.l.b16 %v3375
    %v3946 = vunpack.c.h.b16 %v3375
    %v3947 = vunpack.c.l.b16 %v3376
    %v3948 = vunpack.c.h.b16 %v3376
    %v3949 = vunpack.c.l.b16 %v3377
    %v3950 = vunpack.c.h.b16 %v3377
    %v3951 = vunpack.c.l.b16 %v3378
    %v3952 = vunpack.c.h.b16 %v3378
    %v3953 = vunpack.c.l.b16 %v3379
    %v3954 = vunpack.c.h.b16 %v3379
    %v3955 = vunpack.c.l.b16 %v3380
    %v3956 = vunpack.c.h.b16 %v3380
    %v3957 = vunpack.c.l.b16 %v3381
    %v3958 = vunpack.c.h.b16 %v3381
    %v3959 = vunpack.c.l.b16 %v3382
    %v3960 = vunpack.c.h.b16 %v3382
    %v3961 = vunpack.c.l.b16 %v3383
    %v3962 = vunpack.c.h.b16 %v3383
    %v3963 = vunpack.c.l.b16 %v3384
    %v3964 = vunpack.c.h.b16 %v3384
    %v3965 = vunpack.c.l.b16 %v3385
    %v3966 = vunpack.c.h.b16 %v3385
    %v3967 = vunpack.c.l.b16 %v3386
    %v3968 = vunpack.c.h.b16 %v3386
    %v3969 = vunpack.c.l.b16 %v3387
    %v3970 = vunpack.c.h.b16 %v3387
    %v3971 = vunpack.c.l.b16 %v3388
    %v3972 = vunpack.c.h.b16 %v3388
    %v3973 = vunpack.c.l.b16 %v3389
    %v3974 = vunpack.c.h.b16 %v3389
    %v3975 = vunpack.c.l.b16 %v3390
    %v3976 = vunpack.c.h.b16 %v3390
    %v3977 = vpack.c.b16 %v3597, %v3593
    %v3978 = vpack.c.b16 %v3598, %v3594
    %v3979 = vpack.c.b16 %v3599, %v3595
    %v3980 = vpack.c.b16 %v3600, %v3596
    %v3981 = vpack.c.b16 %v3605, %v3601
    %v3982 = vpack.c.b16 %v3606, %v3602
    %v3983 = vpack.c.b16 %v3607, %v3603
    %v3984 = vpack.c.b16 %v3608, %v3604
    %v3985 = vpack.c.b16 %v3613, %v3609
    %v3986 = vpack.c.b16 %v3614, %v3610
    %v3987 = vpack.c.b16 %v3615, %v3611
    %v3988 = vpack.c.b16 %v3616, %v3612
    %v3989 = vpack.c.b16 %v3621, %v3617
    %v3990 = vpack.c.b16 %v3622, %v3618
    %v3991 = vpack.c.b16 %v3623, %v3619
    %v3992 = vpack.c.b16 %v3624, %v3620
    %v3993 = vpack.c.b16 %v3629, %v3625
    %v3994 = vpack.c.b16 %v3630, %v3626
    %v3995 = vpack.c.b16 %v3631, %v3627
    %v3996 = vpack.c.b16 %v3632, %v3628
    %v3997 = vpack.c.b16 %v3637, %v3633
    %v3998 = vpack.c.b16 %v3638, %v3634
    %v3999 = vpack.c.b16 %v3639, %v3635
    %v4000 = vpack.c.b16 %v3640, %v3636
    %v4001 = vpack.c.b16 %v3645, %v3641
    %v4002 = vpack.c.b16 %v3646, %v3642
    %v4003 = vpack.c.b16 %v3647, %v3643
    %v4004 = vpack.c.b16 %v3648, %v3644
    %v4005 = vpack.c.b16 %v3653, %v3649
    %v4006 = vpack.c.b16 %v3654, %v3650
    %v4007 = vpack.c.b16 %v3655, %v3651
    %v4008 = vpack.c.b16 %v3656, %v3652
    %v4009 = vpack.c.b16 %v3661, %v3657
    %v4010 = vpack.c.b16 %v3662, %v3658
    %v4011 = vpack.c.b16 %v3663, %v3659
    %v4012 = vpack.c.b16 %v3664, %v3660
    %v4013 = vpack.c.b16 %v3669, %v3665
    %v4014 = vpack.c.b16 %v3670, %v3666
    %v4015 = vpack.c.b16 %v3671, %v3667
    %v4016 = vpack.c.b16 %v3672, %v3668
    %v4017 = vpack.c.b16 %v3677, %v3673
    %v4018 = vpack.c.b16 %v3678, %v3674
    %v4019 = vpack.c.b16 %v3679, %v3675
    %v4020 = vpack.c.b16 %v3680, %v3676
    %v4021 = vpack.c.b16 %v3685, %v3681
    %v4022 = vpack.c.b16 %v3686, %v3682
    %v4023 = vpack.c.b16 %v3687, %v3683
    %v4024 = vpack.c.b16 %v3688, %v3684
    %v4025 = vpack.c.b16 %v3693, %v3689
    %v4026 = vpack.c.b16 %v3694, %v3690
    %v4027 = vpack.c.b16 %v3695, %v3691
    %v4028 = vpack.c.b16 %v3696, %v3692
    %v4029 = vpack.c.b16 %v3701, %v3697
    %v4030 = vpack.c.b16 %v3702, %v3698
    %v4031 = vpack.c.b16 %v3703, %v3699
    %v4032 = vpack.c.b16 %v3704, %v3700
    %v4033 = vpack.c.b16 %v3709, %v3705
    %v4034 = vpack.c.b16 %v3710, %v3706
    %v4035 = vpack.c.b16 %v3711, %v3707
    %v4036 = vpack.c.b16 %v3712, %v3708
    %v4037 = vpack.c.b16 %v3717, %v3713
    %v4038 = vpack.c.b16 %v3718, %v3714
    %v4039 = vpack.c.b16 %v3719, %v3715
    %v4040 = vpack.c.b16 %v3720, %v3716
    %v4041 = vpack.c.b16 %v3725, %v3721
    %v4042 = vpack.c.b16 %v3726, %v3722
    %v4043 = vpack.c.b16 %v3727, %v3723
    %v4044 = vpack.c.b16 %v3728, %v3724
    %v4045 = vpack.c.b16 %v3733, %v3729
    %v4046 = vpack.c.b16 %v3734, %v3730
    %v4047 = vpack.c.b16 %v3735, %v3731
    %v4048 = vpack.c.b16 %v3736, %v3732
    %v4049 = vpack.c.b16 %v3741, %v3737
    %v4050 = vpack.c.b16 %v3742, %v3738
    %v4051 = vpack.c.b16 %v3743, %v3739
    %v4052 = vpack.c.b16 %v3744, %v3740
    %v4053 = vpack.c.b16 %v3749, %v3745
    %v4054 = vpack.c.b16 %v3750, %v3746
    %v4055 = vpack.c.b16 %v3751, %v3747
    %v4056 = vpack.c.b16 %v3752, %v3748
    %v4057 = vpack.c.b16 %v3757, %v3753
    %v4058 = vpack.c.b16 %v3758, %v3754
    %v4059 = vpack.c.b16 %v3759, %v3755
    %v4060 = vpack.c.b16 %v3760, %v3756
    %v4061 = vpack.c.b16 %v3765, %v3761
    %v4062 = vpack.c.b16 %v3766, %v3762
    %v4063 = vpack.c.b16 %v3767, %v3763
    %v4064 = vpack.c.b16 %v3768, %v3764
    %v4065 = vpack.c.b16 %v3773, %v3769
    %v4066 = vpack.c.b16 %v3774, %v3770
    %v4067 = vpack.c.b16 %v3775, %v3771
    %v4068 = vpack.c.b16 %v3776, %v3772
    %v4069 = vpack.c.b16 %v3781, %v3777
    %v4070 = vpack.c.b16 %v3782, %v3778
    %v4071 = vpack.c.b16 %v3783, %v3779
    %v4072 = vpack.c.b16 %v3784, %v3780
    %v4073 = vpack.c.b16 %v3789, %v3785
    %v4074 = vpack.c.b16 %v3790, %v3786
    %v4075 = vpack.c.b16 %v3791, %v3787
    %v4076 = vpack.c.b16 %v3792, %v3788
    %v4077 = vpack.c.b16 %v3797, %v3793
    %v4078 = vpack.c.b16 %v3798, %v3794
    %v4079 = vpack.c.b16 %v3799, %v3795
    %v4080 = vpack.c.b16 %v3800, %v3796
    %v4081 = vpack.c.b16 %v3805, %v3801
    %v4082 = vpack.c.b16 %v3806, %v3802
    %v4083 = vpack.c.b16 %v3807, %v3803
    %v4084 = vpack.c.b16 %v3808, %v3804
    %v4085 = vpack.c.b16 %v3813, %v3809
    %v4086 = vpack.c.b16 %v3814, %v3810
    %v4087 = vpack.c.b16 %v3815, %v3811
    %v4088 = vpack.c.b16 %v3816, %v3812
    %v4089 = vpack.c.b16 %v3821, %v3817
    %v4090 = vpack.c.b16 %v3822, %v3818
    %v4091 = vpack.c.b16 %v3823, %v3819
    %v4092 = vpack.c.b16 %v3824, %v3820
    %v4093 = vpack.c.b16 %v3829, %v3825
    %v4094 = vpack.c.b16 %v3830, %v3826
    %v4095 = vpack.c.b16 %v3831, %v3827
    %v4096 = vpack.c.b16 %v3832, %v3828
    %v4097 = vpack.c.b16 %v3837, %v3833
    %v4098 = vpack.c.b16 %v3838, %v3834
    %v4099 = vpack.c.b16 %v3839, %v3835
    %v4100 = vpack.c.b16 %v3840, %v3836
    %v4101 = vpack.c.b16 %v3845, %v3841
    %v4102 = vpack.c.b16 %v3846, %v3842
    %v4103 = vpack.c.b16 %v3847, %v3843
    %v4104 = vpack.c.b16 %v3848, %v3844
    %v4105 = vpack.c.b16 %v3853, %v3849
    %v4106 = vpack.c.b16 %v3854, %v3850
    %v4107 = vpack.c.b16 %v3855, %v3851
    %v4108 = vpack.c.b16 %v3856, %v3852
    %v4109 = vpack.c.b16 %v3861, %v3857
    %v4110 = vpack.c.b16 %v3862, %v3858
    %v4111 = vpack.c.b16 %v3863, %v3859
    %v4112 = vpack.c.b16 %v3864, %v3860
    %v4113 = vpack.c.b16 %v3869, %v3865
    %v4114 = vpack.c.b16 %v3870, %v3866
    %v4115 = vpack.c.b16 %v3871, %v3867
    %v4116 = vpack.c.b16 %v3872, %v3868
    %v4117 = vpack.c.b16 %v3877, %v3873
    %v4118 = vpack.c.b16 %v3878, %v3874
    %v4119 = vpack.c.b16 %v3879, %v3875
    %v4120 = vpack.c.b16 %v3880, %v3876
    %v4121 = vpack.c.b16 %v3885, %v3881
    %v4122 = vpack.c.b16 %v3886, %v3882
    %v4123 = vpack.c.b16 %v3887, %v3883
    %v4124 = vpack.c.b16 %v3888, %v3884
    %v4125 = vpack.c.b16 %v3893, %v3889
    %v4126 = vpack.c.b16 %v3894, %v3890
    %v4127 = vpack.c.b16 %v3895, %v3891
    %v4128 = vpack.c.b16 %v3896, %v3892
    %v4129 = vpack.c.b16 %v3901, %v3897
    %v4130 = vpack.c.b16 %v3902, %v3898
    %v4131 = vpack.c.b16 %v3903, %v3899
    %v4132 = vpack.c.b16 %v3904, %v3900
    %v4133 = vpack.c.b16 %v3909, %v3905
    %v4134 = vpack.c.b16 %v3910, %v3906
    %v4135 = vpack.c.b16 %v3911, %v3907
    %v4136 = vpack.c.b16 %v3912, %v3908
    %v4137 = vpack.c.b16 %v3917, %v3913
    %v4138 = vpack.c.b16 %v3918, %v3914
    %v4139 = vpack.c.b16 %v3919, %v3915
    %v4140 = vpack.c.b16 %v3920, %v3916
    %v4141 = vpack.c.b16 %v3925, %v3921
    %v4142 = vpack.c.b16 %v3926, %v3922
    %v4143 = vpack.c.b16 %v3927, %v3923
    %v4144 = vpack.c.b16 %v3928, %v3924
    %v4145 = vpack.c.b16 %v3933, %v3929
    %v4146 = vpack.c.b16 %v3934, %v3930
    %v4147 = vpack.c.b16 %v3935, %v3931
    %v4148 = vpack.c.b16 %v3936, %v3932
    %v4149 = vpack.c.b16 %v3941, %v3937
    %v4150 = vpack.c.b16 %v3942, %v3938
    %v4151 = vpack.c.b16 %v3943, %v3939
    %v4152 = vpack.c.b16 %v3944, %v3940
    %v4153 = vpack.c.b16 %v3949, %v3945
    %v4154 = vpack.c.b16 %v3950, %v3946
    %v4155 = vpack.c.b16 %v3951, %v3947
    %v4156 = vpack.c.b16 %v3952, %v3948
    %v4157 = vpack.c.b16 %v3957, %v3953
    %v4158 = vpack.c.b16 %v3958, %v3954
    %v4159 = vpack.c.b16 %v3959, %v3955
    %v4160 = vpack.c.b16 %v3960, %v3956
    %v4161 = vpack.c.b16 %v3965, %v3961
    %v4162 = vpack.c.b16 %v3966, %v3962
    %v4163 = vpack.c.b16 %v3967, %v3963
    %v4164 = vpack.c.b16 %v3968, %v3964
    %v4165 = vpack.c.b16 %v3973, %v3969
    %v4166 = vpack.c.b16 %v3974, %v3970
    %v4167 = vpack.c.b16 %v3975, %v3971
    %v4168 = vpack.c.b16 %v3976, %v3972
    %4361 = vmatpush.bf16.msra.mxu0 %v4005
    %4362 = vmatpush.bf16.msra.mxu0 %v4001
    %4363 = vmatpush.bf16.msra.mxu0 %v3997
    %4364 = vmatpush.bf16.msra.mxu0 %v3993
    %4365 = vmatpush.bf16.msra.mxu0 %v3989
    %4366 = vmatpush.bf16.msra.mxu0 %v3985
    %4367 = vmatpush.bf16.msra.mxu0 %v3981
    %4368 = vmatpush.bf16.msra.mxu0 %v3977
    %4369 = vmatmul.bf16.gmra.mxu0 %v3179
    %v4370 = vpop.f32.mrf.mxu0
    %v4371 = vadd.f32 %v3393, %v4370
    %v4372 = vpop.f32.mrf.mxu0
    %v4373 = vadd.f32 %v3393, %v4372
    %4374 = vdwg.mxu0
    %4375 = vmatpush.bf16.msra.mxu0 %v4037
    %4376 = vmatpush.bf16.msra.mxu0 %v4033
    %4377 = vmatpush.bf16.msra.mxu0 %v4029
    %4378 = vmatpush.bf16.msra.mxu0 %v4025
    %4379 = vmatpush.bf16.msra.mxu0 %v4021
    %4380 = vmatpush.bf16.msra.mxu0 %v4017
    %4381 = vmatpush.bf16.msra.mxu0 %v4013
    %4382 = vmatpush.bf16.msra.mxu0 %v4009
    %4383 = vmatmul.bf16.gmra.mxu0 %v3180
    %v4384 = vpop.f32.mrf.mxu0
    %v4385 = vadd.f32 %v4371, %v4384
    %v4386 = vpop.f32.mrf.mxu0
    %v4387 = vadd.f32 %v4373, %v4386
    %4388 = vdwg.mxu0
    %4389 = vmatpush.bf16.msra.mxu0 %v4069
    %4390 = vmatpush.bf16.msra.mxu0 %v4065
    %4391 = vmatpush.bf16.msra.mxu0 %v4061
    %4392 = vmatpush.bf16.msra.mxu0 %v4057
    %4393 = vmatpush.bf16.msra.mxu0 %v4053
    %4394 = vmatpush.bf16.msra.mxu0 %v4049
    %4395 = vmatpush.bf16.msra.mxu0 %v4045
    %4396 = vmatpush.bf16.msra.mxu0 %v4041
    %4397 = vmatmul.bf16.gmra.mxu0 %v3187
    %v4398 = vpop.f32.mrf.mxu0
    %v4399 = vadd.f32 %v4385, %v4398
    %v4400 = vpop.f32.mrf.mxu0
    %v4401 = vadd.f32 %v4387, %v4400
    %4402 = vdwg.mxu0
    %4403 = vmatpush.bf16.msra.mxu0 %v4101
    %4404 = vmatpush.bf16.msra.mxu0 %v4097
    %4405 = vmatpush.bf16.msra.mxu0 %v4093
    %4406 = vmatpush.bf16.msra.mxu0 %v4089
    %4407 = vmatpush.bf16.msra.mxu0 %v4085
    %4408 = vmatpush.bf16.msra.mxu0 %v4081
    %4409 = vmatpush.bf16.msra.mxu0 %v4077
    %4410 = vmatpush.bf16.msra.mxu0 %v4073
    %4411 = vmatmul.bf16.gmra.mxu0 %v3188
    %v4412 = vpop.f32.mrf.mxu0
    %v4413 = vadd.f32 %v4399, %v4412
    %v4414 = vpop.f32.mrf.mxu0
    %v4415 = vadd.f32 %v4401, %v4414
    %4416 = vdwg.mxu0
    %4417 = vmatpush.bf16.msra.mxu0 %v4133
    %4418 = vmatpush.bf16.msra.mxu0 %v4129
    %4419 = vmatpush.bf16.msra.mxu0 %v4125
    %4420 = vmatpush.bf16.msra.mxu0 %v4121
    %4421 = vmatpush.bf16.msra.mxu0 %v4117
    %4422 = vmatpush.bf16.msra.mxu0 %v4113
    %4423 = vmatpush.bf16.msra.mxu0 %v4109
    %4424 = vmatpush.bf16.msra.mxu0 %v4105
    %4425 = vmatmul.bf16.gmra.mxu0 %v3195
    %v4426 = vpop.f32.mrf.mxu0
    %v4427 = vadd.f32 %v4413, %v4426
    %v4428 = vpop.f32.mrf.mxu0
    %v4429 = vadd.f32 %v4415, %v4428
    %4430 = vdwg.mxu0
    %4431 = vmatpush.bf16.msra.mxu0 %v4165
    %4432 = vmatpush.bf16.msra.mxu0 %v4161
    %4433 = vmatpush.bf16.msra.mxu0 %v4157
    %4434 = vmatpush.bf16.msra.mxu0 %v4153
    %4435 = vmatpush.bf16.msra.mxu0 %v4149
    %4436 = vmatpush.bf16.msra.mxu0 %v4145
    %4437 = vmatpush.bf16.msra.mxu0 %v4141
    %4438 = vmatpush.bf16.msra.mxu0 %v4137
    %4439 = vmatmul.bf16.gmra.mxu0 %v3196
    %v4440 = vpop.f32.mrf.mxu0
    %v4441 = vadd.f32 %v4427, %v4440
    %v4442 = vpop.f32.mrf.mxu0
    %v4443 = vadd.f32 %v4429, %v4442
    %4444 = vdwg.mxu0
    %4445 = vmatpush.bf16.msra.mxu0 %v4006
    %4446 = vmatpush.bf16.msra.mxu0 %v4002
    %4447 = vmatpush.bf16.msra.mxu0 %v3998
    %4448 = vmatpush.bf16.msra.mxu0 %v3994
    %4449 = vmatpush.bf16.msra.mxu0 %v3990
    %4450 = vmatpush.bf16.msra.mxu0 %v3986
    %4451 = vmatpush.bf16.msra.mxu0 %v3982
    %4452 = vmatpush.bf16.msra.mxu0 %v3978
    %4453 = vmatmul.bf16.gmra.mxu0 %v3179
    %v4454 = vpop.f32.mrf.mxu0
    %v4455 = vadd.f32 %v3394, %v4454
    %v4456 = vpop.f32.mrf.mxu0
    %v4457 = vadd.f32 %v3394, %v4456
    %4458 = vdwg.mxu0
    %4459 = vmatpush.bf16.msra.mxu0 %v4038
    %4460 = vmatpush.bf16.msra.mxu0 %v4034
    %4461 = vmatpush.bf16.msra.mxu0 %v4030
    %4462 = vmatpush.bf16.msra.mxu0 %v4026
    %4463 = vmatpush.bf16.msra.mxu0 %v4022
    %4464 = vmatpush.bf16.msra.mxu0 %v4018
    %4465 = vmatpush.bf16.msra.mxu0 %v4014
    %4466 = vmatpush.bf16.msra.mxu0 %v4010
    %4467 = vmatmul.bf16.gmra.mxu0 %v3180
    %v4468 = vpop.f32.mrf.mxu0
    %v4469 = vadd.f32 %v4455, %v4468
    %v4470 = vpop.f32.mrf.mxu0
    %v4471 = vadd.f32 %v4457, %v4470
    %4472 = vdwg.mxu0
    %4473 = vmatpush.bf16.msra.mxu0 %v4070
    %4474 = vmatpush.bf16.msra.mxu0 %v4066
    %4475 = vmatpush.bf16.msra.mxu0 %v4062
    %4476 = vmatpush.bf16.msra.mxu0 %v4058
    %4477 = vmatpush.bf16.msra.mxu0 %v4054
    %4478 = vmatpush.bf16.msra.mxu0 %v4050
    %4479 = vmatpush.bf16.msra.mxu0 %v4046
    %4480 = vmatpush.bf16.msra.mxu0 %v4042
    %4481 = vmatmul.bf16.gmra.mxu0 %v3187
    %v4482 = vpop.f32.mrf.mxu0
    %v4483 = vadd.f32 %v4469, %v4482
    %v4484 = vpop.f32.mrf.mxu0
    %v4485 = vadd.f32 %v4471, %v4484
    %4486 = vdwg.mxu0
    %4487 = vmatpush.bf16.msra.mxu0 %v4102
    %4488 = vmatpush.bf16.msra.mxu0 %v4098
    %4489 = vmatpush.bf16.msra.mxu0 %v4094
    %4490 = vmatpush.bf16.msra.mxu0 %v4090
    %4491 = vmatpush.bf16.msra.mxu0 %v4086
    %4492 = vmatpush.bf16.msra.mxu0 %v4082
    %4493 = vmatpush.bf16.msra.mxu0 %v4078
    %4494 = vmatpush.bf16.msra.mxu0 %v4074
    %4495 = vmatmul.bf16.gmra.mxu0 %v3188
    %v4496 = vpop.f32.mrf.mxu0
    %v4497 = vadd.f32 %v4483, %v4496
    %v4498 = vpop.f32.mrf.mxu0
    %v4499 = vadd.f32 %v4485, %v4498
    %4500 = vdwg.mxu0
    %4501 = vmatpush.bf16.msra.mxu0 %v4134
    %4502 = vmatpush.bf16.msra.mxu0 %v4130
    %4503 = vmatpush.bf16.msra.mxu0 %v4126
    %4504 = vmatpush.bf16.msra.mxu0 %v4122
    %4505 = vmatpush.bf16.msra.mxu0 %v4118
    %4506 = vmatpush.bf16.msra.mxu0 %v4114
    %4507 = vmatpush.bf16.msra.mxu0 %v4110
    %4508 = vmatpush.bf16.msra.mxu0 %v4106
    %4509 = vmatmul.bf16.gmra.mxu0 %v3195
    %v4510 = vpop.f32.mrf.mxu0
    %v4511 = vadd.f32 %v4497, %v4510
    %v4512 = vpop.f32.mrf.mxu0
    %v4513 = vadd.f32 %v4499, %v4512
    %4514 = vdwg.mxu0
    %4515 = vmatpush.bf16.msra.mxu0 %v4166
    %4516 = vmatpush.bf16.msra.mxu0 %v4162
    %4517 = vmatpush.bf16.msra.mxu0 %v4158
    %4518 = vmatpush.bf16.msra.mxu0 %v4154
    %4519 = vmatpush.bf16.msra.mxu0 %v4150
    %4520 = vmatpush.bf16.msra.mxu0 %v4146
    %4521 = vmatpush.bf16.msra.mxu0 %v4142
    %4522 = vmatpush.bf16.msra.mxu0 %v4138
    %4523 = vmatmul.bf16.gmra.mxu0 %v3196
    %v4524 = vpop.f32.mrf.mxu0
    %v4525 = vadd.f32 %v4511, %v4524
    %v4526 = vpop.f32.mrf.mxu0
    %v4527 = vadd.f32 %v4513, %v4526
    %4528 = vdwg.mxu0
    %4529 = vmatpush.bf16.msra.mxu0 %v4007
    %4530 = vmatpush.bf16.msra.mxu0 %v4003
    %4531 = vmatpush.bf16.msra.mxu0 %v3999
    %4532 = vmatpush.bf16.msra.mxu0 %v3995
    %4533 = vmatpush.bf16.msra.mxu0 %v3991
    %4534 = vmatpush.bf16.msra.mxu0 %v3987
    %4535 = vmatpush.bf16.msra.mxu0 %v3983
    %4536 = vmatpush.bf16.msra.mxu0 %v3979
    %4537 = vmatmul.bf16.gmra.mxu0 %v3179
    %v4538 = vpop.f32.mrf.mxu0
    %v4539 = vadd.f32 %v3395, %v4538
    %v4540 = vpop.f32.mrf.mxu0
    %v4541 = vadd.f32 %v3395, %v4540
    %4542 = vdwg.mxu0
    %4543 = vmatpush.bf16.msra.mxu0 %v4039
    %4544 = vmatpush.bf16.msra.mxu0 %v4035
    %4545 = vmatpush.bf16.msra.mxu0 %v4031
    %4546 = vmatpush.bf16.msra.mxu0 %v4027
    %4547 = vmatpush.bf16.msra.mxu0 %v4023
    %4548 = vmatpush.bf16.msra.mxu0 %v4019
    %4549 = vmatpush.bf16.msra.mxu0 %v4015
    %4550 = vmatpush.bf16.msra.mxu0 %v4011
    %4551 = vmatmul.bf16.gmra.mxu0 %v3180
    %v4552 = vpop.f32.mrf.mxu0
    %v4553 = vadd.f32 %v4539, %v4552
    %v4554 = vpop.f32.mrf.mxu0
    %v4555 = vadd.f32 %v4541, %v4554
    %4556 = vdwg.mxu0
    %4557 = vmatpush.bf16.msra.mxu0 %v4071
    %4558 = vmatpush.bf16.msra.mxu0 %v4067
    %4559 = vmatpush.bf16.msra.mxu0 %v4063
    %4560 = vmatpush.bf16.msra.mxu0 %v4059
    %4561 = vmatpush.bf16.msra.mxu0 %v4055
    %4562 = vmatpush.bf16.msra.mxu0 %v4051
    %4563 = vmatpush.bf16.msra.mxu0 %v4047
    %4564 = vmatpush.bf16.msra.mxu0 %v4043
    %4565 = vmatmul.bf16.gmra.mxu0 %v3187
    %v4566 = vpop.f32.mrf.mxu0
    %v4567 = vadd.f32 %v4553, %v4566
    %v4568 = vpop.f32.mrf.mxu0
    %v4569 = vadd.f32 %v4555, %v4568
    %4570 = vdwg.mxu0
    %4571 = vmatpush.bf16.msra.mxu0 %v4103
    %4572 = vmatpush.bf16.msra.mxu0 %v4099
    %4573 = vmatpush.bf16.msra.mxu0 %v4095
    %4574 = vmatpush.bf16.msra.mxu0 %v4091
    %4575 = vmatpush.bf16.msra.mxu0 %v4087
    %4576 = vmatpush.bf16.msra.mxu0 %v4083
    %4577 = vmatpush.bf16.msra.mxu0 %v4079
    %4578 = vmatpush.bf16.msra.mxu0 %v4075
    %4579 = vmatmul.bf16.gmra.mxu0 %v3188
    %v4580 = vpop.f32.mrf.mxu0
    %v4581 = vadd.f32 %v4567, %v4580
    %v4582 = vpop.f32.mrf.mxu0
    %v4583 = vadd.f32 %v4569, %v4582
    %4584 = vdwg.mxu0
    %4585 = vmatpush.bf16.msra.mxu0 %v4135
    %4586 = vmatpush.bf16.msra.mxu0 %v4131
    %4587 = vmatpush.bf16.msra.mxu0 %v4127
    %4588 = vmatpush.bf16.msra.mxu0 %v4123
    %4589 = vmatpush.bf16.msra.mxu0 %v4119
    %4590 = vmatpush.bf16.msra.mxu0 %v4115
    %4591 = vmatpush.bf16.msra.mxu0 %v4111
    %4592 = vmatpush.bf16.msra.mxu0 %v4107
    %4593 = vmatmul.bf16.gmra.mxu0 %v3195
    %v4594 = vpop.f32.mrf.mxu0
    %v4595 = vadd.f32 %v4581, %v4594
    %v4596 = vpop.f32.mrf.mxu0
    %v4597 = vadd.f32 %v4583, %v4596
    %4598 = vdwg.mxu0
    %4599 = vmatpush.bf16.msra.mxu0 %v4167
    %4600 = vmatpush.bf16.msra.mxu0 %v4163
    %4601 = vmatpush.bf16.msra.mxu0 %v4159
    %4602 = vmatpush.bf16.msra.mxu0 %v4155
    %4603 = vmatpush.bf16.msra.mxu0 %v4151
    %4604 = vmatpush.bf16.msra.mxu0 %v4147
    %4605 = vmatpush.bf16.msra.mxu0 %v4143
    %4606 = vmatpush.bf16.msra.mxu0 %v4139
    %4607 = vmatmul.bf16.gmra.mxu0 %v3196
    %v4608 = vpop.f32.mrf.mxu0
    %v4609 = vadd.f32 %v4595, %v4608
    %v4610 = vpop.f32.mrf.mxu0
    %v4611 = vadd.f32 %v4597, %v4610
    %4612 = vdwg.mxu0
    %4613 = vmatpush.bf16.msra.mxu0 %v4008
    %4614 = vmatpush.bf16.msra.mxu0 %v4004
    %4615 = vmatpush.bf16.msra.mxu0 %v4000
    %4616 = vmatpush.bf16.msra.mxu0 %v3996
    %4617 = vmatpush.bf16.msra.mxu0 %v3992
    %4618 = vmatpush.bf16.msra.mxu0 %v3988
    %4619 = vmatpush.bf16.msra.mxu0 %v3984
    %4620 = vmatpush.bf16.msra.mxu0 %v3980
    %4621 = vmatmul.bf16.gmra.mxu0 %v3179
    %v4622 = vpop.f32.mrf.mxu0
    %v4623 = vadd.f32 %v3396, %v4622
    %v4624 = vpop.f32.mrf.mxu0
    %v4625 = vadd.f32 %v3396, %v4624
    %4626 = vdwg.mxu0
    %4627 = vmatpush.bf16.msra.mxu0 %v4040
    %4628 = vmatpush.bf16.msra.mxu0 %v4036
    %4629 = vmatpush.bf16.msra.mxu0 %v4032
    %4630 = vmatpush.bf16.msra.mxu0 %v4028
    %4631 = vmatpush.bf16.msra.mxu0 %v4024
    %4632 = vmatpush.bf16.msra.mxu0 %v4020
    %4633 = vmatpush.bf16.msra.mxu0 %v4016
    %4634 = vmatpush.bf16.msra.mxu0 %v4012
    %4635 = vmatmul.bf16.gmra.mxu0 %v3180
    %v4636 = vpop.f32.mrf.mxu0
    %v4637 = vadd.f32 %v4623, %v4636
    %v4638 = vpop.f32.mrf.mxu0
    %v4639 = vadd.f32 %v4625, %v4638
    %4640 = vdwg.mxu0
    %4641 = vmatpush.bf16.msra.mxu0 %v4072
    %4642 = vmatpush.bf16.msra.mxu0 %v4068
    %4643 = vmatpush.bf16.msra.mxu0 %v4064
    %4644 = vmatpush.bf16.msra.mxu0 %v4060
    %4645 = vmatpush.bf16.msra.mxu0 %v4056
    %4646 = vmatpush.bf16.msra.mxu0 %v4052
    %4647 = vmatpush.bf16.msra.mxu0 %v4048
    %4648 = vmatpush.bf16.msra.mxu0 %v4044
    %4649 = vmatmul.bf16.gmra.mxu0 %v3187
    %v4650 = vpop.f32.mrf.mxu0
    %v4651 = vadd.f32 %v4637, %v4650
    %v4652 = vpop.f32.mrf.mxu0
    %v4653 = vadd.f32 %v4639, %v4652
    %4654 = vdwg.mxu0
    %4655 = vmatpush.bf16.msra.mxu0 %v4104
    %4656 = vmatpush.bf16.msra.mxu0 %v4100
    %4657 = vmatpush.bf16.msra.mxu0 %v4096
    %4658 = vmatpush.bf16.msra.mxu0 %v4092
    %4659 = vmatpush.bf16.msra.mxu0 %v4088
    %4660 = vmatpush.bf16.msra.mxu0 %v4084
    %4661 = vmatpush.bf16.msra.mxu0 %v4080
    %4662 = vmatpush.bf16.msra.mxu0 %v4076
    %4663 = vmatmul.bf16.gmra.mxu0 %v3188
    %v4664 = vpop.f32.mrf.mxu0
    %v4665 = vadd.f32 %v4651, %v4664
    %v4666 = vpop.f32.mrf.mxu0
    %v4667 = vadd.f32 %v4653, %v4666
    %4668 = vdwg.mxu0
    %4669 = vmatpush.bf16.msra.mxu0 %v4136
    %4670 = vmatpush.bf16.msra.mxu0 %v4132
    %4671 = vmatpush.bf16.msra.mxu0 %v4128
    %4672 = vmatpush.bf16.msra.mxu0 %v4124
    %4673 = vmatpush.bf16.msra.mxu0 %v4120
    %4674 = vmatpush.bf16.msra.mxu0 %v4116
    %4675 = vmatpush.bf16.msra.mxu0 %v4112
    %4676 = vmatpush.bf16.msra.mxu0 %v4108
    %4677 = vmatmul.bf16.gmra.mxu0 %v3195
    %v4678 = vpop.f32.mrf.mxu0
    %v4679 = vadd.f32 %v4665, %v4678
    %v4680 = vpop.f32.mrf.mxu0
    %v4681 = vadd.f32 %v4667, %v4680
    %4682 = vdwg.mxu0
    %4683 = vmatpush.bf16.msra.mxu0 %v4168
    %4684 = vmatpush.bf16.msra.mxu0 %v4164
    %4685 = vmatpush.bf16.msra.mxu0 %v4160
    %4686 = vmatpush.bf16.msra.mxu0 %v4156
    %4687 = vmatpush.bf16.msra.mxu0 %v4152
    %4688 = vmatpush.bf16.msra.mxu0 %v4148
    %4689 = vmatpush.bf16.msra.mxu0 %v4144
    %4690 = vmatpush.bf16.msra.mxu0 %v4140
    %4691 = vmatmul.bf16.gmra.mxu0 %v3196
    %v4692 = vpop.f32.mrf.mxu0
    %v4693 = vadd.f32 %v4679, %v4692
    %v4694 = vpop.f32.mrf.mxu0
    %v4695 = vadd.f32 %v4681, %v4694
    %4696 = vdwg.mxu0
    %v4697 = vmax.f32 %v4441, 0.0
    %v4698 = vmax.f32 %v4525, 0.0
    %v4699 = vmax.f32 %v4609, 0.0
    %v4700 = vmax.f32 %v4693, 0.0
    %v4701 = vmax.f32 %v4443, 0.0
    %v4702 = vmax.f32 %v4527, 0.0
    %v4703 = vmax.f32 %v4611, 0.0
    %v4704 = vmax.f32 %v4695, 0.0
    %v4705 = vpack.c.bf16 %v4701, %v4697
    %v4706 = vpack.c.bf16 %v4702, %v4698
    %v4707 = vpack.c.bf16 %v4703, %v4699
    %v4708 = vpack.c.bf16 %v4704, %v4700
    %s4709 = scalar_lea.vmem [#allocation14], 1024
    %v4710 = vld [vmem:[%s4709] sm:$0xff]
    %v4711 = vld [vmem:[%s4709 + $0x8] sm:$0xff]
    %v4712 = vld [vmem:[%s4709 + $0x10] sm:$0xff]
    %v4713 = vld [vmem:[%s4709 + $0x18] sm:$0xff]
    %v4714 = vld [vmem:[%s4709 + $0x20] sm:$0xff]
    %v4715 = vld [vmem:[%s4709 + $0x28] sm:$0xff]
    %v4716 = vld [vmem:[%s4709 + $0x30] sm:$0xff]
    %v4717 = vld [vmem:[%s4709 + $0x38] sm:$0xff]
    %v4718 = vld [vmem:[%s4709 + $0x40] sm:$0xff]
    %v4719 = vld [vmem:[%s4709 + $0x48] sm:$0xff]
    %v4720 = vld [vmem:[%s4709 + $0x50] sm:$0xff]
    %v4721 = vld [vmem:[%s4709 + $0x58] sm:$0xff]
    %v4722 = vld [vmem:[%s4709 + $0x60] sm:$0xff]
    %v4723 = vld [vmem:[%s4709 + $0x68] sm:$0xff]
    %v4724 = vld [vmem:[%s4709 + $0x70] sm:$0xff]
    %v4725 = vld [vmem:[%s4709 + $0x78] sm:$0xff]
    %v4726 = vld [vmem:[%s4709 + $0x80] sm:$0xff]
    %v4727 = vld [vmem:[%s4709 + $0x88] sm:$0xff]
    %v4728 = vld [vmem:[%s4709 + $0x90] sm:$0xff]
    %v4729 = vld [vmem:[%s4709 + $0x98] sm:$0xff]
    %v4730 = vld [vmem:[%s4709 + $0xa0] sm:$0xff]
    %v4731 = vld [vmem:[%s4709 + $0xa8] sm:$0xff]
    %v4732 = vld [vmem:[%s4709 + $0xb0] sm:$0xff]
    %v4733 = vld [vmem:[%s4709 + $0xb8] sm:$0xff]
    %v4734 = vld [vmem:[%s4709 + $0xc0] sm:$0xff]
    %v4735 = vld [vmem:[%s4709 + $0xc8] sm:$0xff]
    %v4736 = vld [vmem:[%s4709 + $0xd0] sm:$0xff]
    %v4737 = vld [vmem:[%s4709 + $0xd8] sm:$0xff]
    %v4738 = vld [vmem:[%s4709 + $0xe0] sm:$0xff]
    %v4739 = vld [vmem:[%s4709 + $0xe8] sm:$0xff]
    %v4740 = vld [vmem:[%s4709 + $0xf0] sm:$0xff]
    %v4741 = vld [vmem:[%s4709 + $0xf8] sm:$0xff]
    %v4742 = vld [vmem:[%s4709 + $0x100] sm:$0xff]
    %v4743 = vld [vmem:[%s4709 + $0x108] sm:$0xff]
    %v4744 = vld [vmem:[%s4709 + $0x110] sm:$0xff]
    %v4745 = vld [vmem:[%s4709 + $0x118] sm:$0xff]
    %v4746 = vld [vmem:[%s4709 + $0x120] sm:$0xff]
    %v4747 = vld [vmem:[%s4709 + $0x128] sm:$0xff]
    %v4748 = vld [vmem:[%s4709 + $0x130] sm:$0xff]
    %v4749 = vld [vmem:[%s4709 + $0x138] sm:$0xff]
    %v4750 = vld [vmem:[%s4709 + $0x140] sm:$0xff]
    %v4751 = vld [vmem:[%s4709 + $0x148] sm:$0xff]
    %v4752 = vld [vmem:[%s4709 + $0x150] sm:$0xff]
    %v4753 = vld [vmem:[%s4709 + $0x158] sm:$0xff]
    %v4754 = vld [vmem:[%s4709 + $0x160] sm:$0xff]
    %v4755 = vld [vmem:[%s4709 + $0x168] sm:$0xff]
    %v4756 = vld [vmem:[%s4709 + $0x170] sm:$0xff]
    %v4757 = vld [vmem:[%s4709 + $0x178] sm:$0xff]
    %v4758 = vld [vmem:[%s4709 + $0x180] sm:$0xff]
    %v4759 = vld [vmem:[%s4709 + $0x188] sm:$0xff]
    %v4760 = vld [vmem:[%s4709 + $0x190] sm:$0xff]
    %v4761 = vld [vmem:[%s4709 + $0x198] sm:$0xff]
    %v4762 = vld [vmem:[%s4709 + $0x1a0] sm:$0xff]
    %v4763 = vld [vmem:[%s4709 + $0x1a8] sm:$0xff]
    %v4764 = vld [vmem:[%s4709 + $0x1b0] sm:$0xff]
    %v4765 = vld [vmem:[%s4709 + $0x1b8] sm:$0xff]
    %v4766 = vld [vmem:[%s4709 + $0x1c0] sm:$0xff]
    %v4767 = vld [vmem:[%s4709 + $0x1c8] sm:$0xff]
    %v4768 = vld [vmem:[%s4709 + $0x1d0] sm:$0xff]
    %v4769 = vld [vmem:[%s4709 + $0x1d8] sm:$0xff]
    %v4770 = vld [vmem:[%s4709 + $0x1e0] sm:$0xff]
    %v4771 = vld [vmem:[%s4709 + $0x1e8] sm:$0xff]
    %v4772 = vld [vmem:[%s4709 + $0x1f0] sm:$0xff]
    %v4773 = vld [vmem:[%s4709 + $0x1f8] sm:$0xff]
    %v4774 = vld [vmem:[%s4709 + $0x200] sm:$0xff]
    %v4775 = vld [vmem:[%s4709 + $0x208] sm:$0xff]
    %v4776 = vld [vmem:[%s4709 + $0x210] sm:$0xff]
    %v4777 = vld [vmem:[%s4709 + $0x218] sm:$0xff]
    %v4778 = vld [vmem:[%s4709 + $0x220] sm:$0xff]
    %v4779 = vld [vmem:[%s4709 + $0x228] sm:$0xff]
    %v4780 = vld [vmem:[%s4709 + $0x230] sm:$0xff]
    %v4781 = vld [vmem:[%s4709 + $0x238] sm:$0xff]
    %v4782 = vld [vmem:[%s4709 + $0x240] sm:$0xff]
    %v4783 = vld [vmem:[%s4709 + $0x248] sm:$0xff]
    %v4784 = vld [vmem:[%s4709 + $0x250] sm:$0xff]
    %v4785 = vld [vmem:[%s4709 + $0x258] sm:$0xff]
    %v4786 = vld [vmem:[%s4709 + $0x260] sm:$0xff]
    %v4787 = vld [vmem:[%s4709 + $0x268] sm:$0xff]
    %v4788 = vld [vmem:[%s4709 + $0x270] sm:$0xff]
    %v4789 = vld [vmem:[%s4709 + $0x278] sm:$0xff]
    %v4790 = vld [vmem:[%s4709 + $0x280] sm:$0xff]
    %v4791 = vld [vmem:[%s4709 + $0x288] sm:$0xff]
    %v4792 = vld [vmem:[%s4709 + $0x290] sm:$0xff]
    %v4793 = vld [vmem:[%s4709 + $0x298] sm:$0xff]
    %v4794 = vld [vmem:[%s4709 + $0x2a0] sm:$0xff]
    %v4795 = vld [vmem:[%s4709 + $0x2a8] sm:$0xff]
    %v4796 = vld [vmem:[%s4709 + $0x2b0] sm:$0xff]
    %v4797 = vld [vmem:[%s4709 + $0x2b8] sm:$0xff]
    %v4798 = vld [vmem:[%s4709 + $0x2c0] sm:$0xff]
    %v4799 = vld [vmem:[%s4709 + $0x2c8] sm:$0xff]
    %v4800 = vld [vmem:[%s4709 + $0x2d0] sm:$0xff]
    %v4801 = vld [vmem:[%s4709 + $0x2d8] sm:$0xff]
    %v4802 = vld [vmem:[%s4709 + $0x2e0] sm:$0xff]
    %v4803 = vld [vmem:[%s4709 + $0x2e8] sm:$0xff]
    %v4804 = vld [vmem:[%s4709 + $0x2f0] sm:$0xff]
    %v4805 = vld [vmem:[%s4709 + $0x2f8] sm:$0xff]
    %v4806 = vld [vmem:[%s4709 + $0x300] sm:$0xff]
    %v4807 = vld [vmem:[%s4709 + $0x308] sm:$0xff]
    %v4808 = vld [vmem:[%s4709 + $0x310] sm:$0xff]
    %v4809 = vld [vmem:[%s4709 + $0x318] sm:$0xff]
    %v4810 = vld [vmem:[%s4709 + $0x320] sm:$0xff]
    %v4811 = vld [vmem:[%s4709 + $0x328] sm:$0xff]
    %v4812 = vld [vmem:[%s4709 + $0x330] sm:$0xff]
    %v4813 = vld [vmem:[%s4709 + $0x338] sm:$0xff]
    %v4814 = vld [vmem:[%s4709 + $0x340] sm:$0xff]
    %v4815 = vld [vmem:[%s4709 + $0x348] sm:$0xff]
    %v4816 = vld [vmem:[%s4709 + $0x350] sm:$0xff]
    %v4817 = vld [vmem:[%s4709 + $0x358] sm:$0xff]
    %v4818 = vld [vmem:[%s4709 + $0x360] sm:$0xff]
    %v4819 = vld [vmem:[%s4709 + $0x368] sm:$0xff]
    %v4820 = vld [vmem:[%s4709 + $0x370] sm:$0xff]
    %v4821 = vld [vmem:[%s4709 + $0x378] sm:$0xff]
    %v4822 = vld [vmem:[%s4709 + $0x380] sm:$0xff]
    %v4823 = vld [vmem:[%s4709 + $0x388] sm:$0xff]
    %v4824 = vld [vmem:[%s4709 + $0x390] sm:$0xff]
    %v4825 = vld [vmem:[%s4709 + $0x398] sm:$0xff]
    %v4826 = vld [vmem:[%s4709 + $0x3a0] sm:$0xff]
    %v4827 = vld [vmem:[%s4709 + $0x3a8] sm:$0xff]
    %v4828 = vld [vmem:[%s4709 + $0x3b0] sm:$0xff]
    %v4829 = vld [vmem:[%s4709 + $0x3b8] sm:$0xff]
    %v4830 = vld [vmem:[%s4709 + $0x3c0] sm:$0xff]
    %v4831 = vld [vmem:[%s4709 + $0x3c8] sm:$0xff]
    %v4832 = vld [vmem:[%s4709 + $0x3d0] sm:$0xff]
    %v4833 = vld [vmem:[%s4709 + $0x3d8] sm:$0xff]
    %v4834 = vld [vmem:[%s4709 + $0x3e0] sm:$0xff]
    %v4835 = vld [vmem:[%s4709 + $0x3e8] sm:$0xff]
    %v4836 = vld [vmem:[%s4709 + $0x3f0] sm:$0xff]
    %v4837 = vld [vmem:[%s4709 + $0x3f8] sm:$0xff]
    %v4966 = vunpack.c.l.b16 %v4710
    %v4967 = vunpack.c.h.b16 %v4710
    %v4968 = vunpack.c.l.b16 %v4711
    %v4969 = vunpack.c.h.b16 %v4711
    %v4970 = vunpack.c.l.b16 %v4712
    %v4971 = vunpack.c.h.b16 %v4712
    %v4972 = vunpack.c.l.b16 %v4713
    %v4973 = vunpack.c.h.b16 %v4713
    %v4974 = vunpack.c.l.b16 %v4714
    %v4975 = vunpack.c.h.b16 %v4714
    %v4976 = vunpack.c.l.b16 %v4715
    %v4977 = vunpack.c.h.b16 %v4715
    %v4978 = vunpack.c.l.b16 %v4716
    %v4979 = vunpack.c.h.b16 %v4716
    %v4980 = vunpack.c.l.b16 %v4717
    %v4981 = vunpack.c.h.b16 %v4717
    %v4982 = vunpack.c.l.b16 %v4718
    %v4983 = vunpack.c.h.b16 %v4718
    %v4984 = vunpack.c.l.b16 %v4719
    %v4985 = vunpack.c.h.b16 %v4719
    %v4986 = vunpack.c.l.b16 %v4720
    %v4987 = vunpack.c.h.b16 %v4720
    %v4988 = vunpack.c.l.b16 %v4721
    %v4989 = vunpack.c.h.b16 %v4721
    %v4990 = vunpack.c.l.b16 %v4722
    %v4991 = vunpack.c.h.b16 %v4722
    %v4992 = vunpack.c.l.b16 %v4723
    %v4993 = vunpack.c.h.b16 %v4723
    %v4994 = vunpack.c.l.b16 %v4724
    %v4995 = vunpack.c.h.b16 %v4724
    %v4996 = vunpack.c.l.b16 %v4725
    %v4997 = vunpack.c.h.b16 %v4725
    %v4998 = vunpack.c.l.b16 %v4726
    %v4999 = vunpack.c.h.b16 %v4726
    %v5000 = vunpack.c.l.b16 %v4727
    %v5001 = vunpack.c.h.b16 %v4727
    %v5002 = vunpack.c.l.b16 %v4728
    %v5003 = vunpack.c.h.b16 %v4728
    %v5004 = vunpack.c.l.b16 %v4729
    %v5005 = vunpack.c.h.b16 %v4729
    %v5006 = vunpack.c.l.b16 %v4730
    %v5007 = vunpack.c.h.b16 %v4730
    %v5008 = vunpack.c.l.b16 %v4731
    %v5009 = vunpack.c.h.b16 %v4731
    %v5010 = vunpack.c.l.b16 %v4732
    %v5011 = vunpack.c.h.b16 %v4732
    %v5012 = vunpack.c.l.b16 %v4733
    %v5013 = vunpack.c.h.b16 %v4733
    %v5014 = vunpack.c.l.b16 %v4734
    %v5015 = vunpack.c.h.b16 %v4734
    %v5016 = vunpack.c.l.b16 %v4735
    %v5017 = vunpack.c.h.b16 %v4735
    %v5018 = vunpack.c.l.b16 %v4736
    %v5019 = vunpack.c.h.b16 %v4736
    %v5020 = vunpack.c.l.b16 %v4737
    %v5021 = vunpack.c.h.b16 %v4737
    %v5022 = vunpack.c.l.b16 %v4738
    %v5023 = vunpack.c.h.b16 %v4738
    %v5024 = vunpack.c.l.b16 %v4739
    %v5025 = vunpack.c.h.b16 %v4739
    %v5026 = vunpack.c.l.b16 %v4740
    %v5027 = vunpack.c.h.b16 %v4740
    %v5028 = vunpack.c.l.b16 %v4741
    %v5029 = vunpack.c.h.b16 %v4741
    %v5030 = vunpack.c.l.b16 %v4742
    %v5031 = vunpack.c.h.b16 %v4742
    %v5032 = vunpack.c.l.b16 %v4743
    %v5033 = vunpack.c.h.b16 %v4743
    %v5034 = vunpack.c.l.b16 %v4744
    %v5035 = vunpack.c.h.b16 %v4744
    %v5036 = vunpack.c.l.b16 %v4745
    %v5037 = vunpack.c.h.b16 %v4745
    %v5038 = vunpack.c.l.b16 %v4746
    %v5039 = vunpack.c.h.b16 %v4746
    %v5040 = vunpack.c.l.b16 %v4747
    %v5041 = vunpack.c.h.b16 %v4747
    %v5042 = vunpack.c.l.b16 %v4748
    %v5043 = vunpack.c.h.b16 %v4748
    %v5044 = vunpack.c.l.b16 %v4749
    %v5045 = vunpack.c.h.b16 %v4749
    %v5046 = vunpack.c.l.b16 %v4750
    %v5047 = vunpack.c.h.b16 %v4750
    %v5048 = vunpack.c.l.b16 %v4751
    %v5049 = vunpack.c.h.b16 %v4751
    %v5050 = vunpack.c.l.b16 %v4752
    %v5051 = vunpack.c.h.b16 %v4752
    %v5052 = vunpack.c.l.b16 %v4753
    %v5053 = vunpack.c.h.b16 %v4753
    %v5054 = vunpack.c.l.b16 %v4754
    %v5055 = vunpack.c.h.b16 %v4754
    %v5056 = vunpack.c.l.b16 %v4755
    %v5057 = vunpack.c.h.b16 %v4755
    %v5058 = vunpack.c.l.b16 %v4756
    %v5059 = vunpack.c.h.b16 %v4756
    %v5060 = vunpack.c.l.b16 %v4757
    %v5061 = vunpack.c.h.b16 %v4757
    %v5062 = vunpack.c.l.b16 %v4758
    %v5063 = vunpack.c.h.b16 %v4758
    %v5064 = vunpack.c.l.b16 %v4759
    %v5065 = vunpack.c.h.b16 %v4759
    %v5066 = vunpack.c.l.b16 %v4760
    %v5067 = vunpack.c.h.b16 %v4760
    %v5068 = vunpack.c.l.b16 %v4761
    %v5069 = vunpack.c.h.b16 %v4761
    %v5070 = vunpack.c.l.b16 %v4762
    %v5071 = vunpack.c.h.b16 %v4762
    %v5072 = vunpack.c.l.b16 %v4763
    %v5073 = vunpack.c.h.b16 %v4763
    %v5074 = vunpack.c.l.b16 %v4764
    %v5075 = vunpack.c.h.b16 %v4764
    %v5076 = vunpack.c.l.b16 %v4765
    %v5077 = vunpack.c.h.b16 %v4765
    %v5078 = vunpack.c.l.b16 %v4766
    %v5079 = vunpack.c.h.b16 %v4766
    %v5080 = vunpack.c.l.b16 %v4767
    %v5081 = vunpack.c.h.b16 %v4767
    %v5082 = vunpack.c.l.b16 %v4768
    %v5083 = vunpack.c.h.b16 %v4768
    %v5084 = vunpack.c.l.b16 %v4769
    %v5085 = vunpack.c.h.b16 %v4769
    %v5086 = vunpack.c.l.b16 %v4770
    %v5087 = vunpack.c.h.b16 %v4770
    %v5088 = vunpack.c.l.b16 %v4771
    %v5089 = vunpack.c.h.b16 %v4771
    %v5090 = vunpack.c.l.b16 %v4772
    %v5091 = vunpack.c.h.b16 %v4772
    %v5092 = vunpack.c.l.b16 %v4773
    %v5093 = vunpack.c.h.b16 %v4773
    %v5094 = vunpack.c.l.b16 %v4774
    %v5095 = vunpack.c.h.b16 %v4774
    %v5096 = vunpack.c.l.b16 %v4775
    %v5097 = vunpack.c.h.b16 %v4775
    %v5098 = vunpack.c.l.b16 %v4776
    %v5099 = vunpack.c.h.b16 %v4776
    %v5100 = vunpack.c.l.b16 %v4777
    %v5101 = vunpack.c.h.b16 %v4777
    %v5102 = vunpack.c.l.b16 %v4778
    %v5103 = vunpack.c.h.b16 %v4778
    %v5104 = vunpack.c.l.b16 %v4779
    %v5105 = vunpack.c.h.b16 %v4779
    %v5106 = vunpack.c.l.b16 %v4780
    %v5107 = vunpack.c.h.b16 %v4780
    %v5108 = vunpack.c.l.b16 %v4781
    %v5109 = vunpack.c.h.b16 %v4781
    %v5110 = vunpack.c.l.b16 %v4782
    %v5111 = vunpack.c.h.b16 %v4782
    %v5112 = vunpack.c.l.b16 %v4783
    %v5113 = vunpack.c.h.b16 %v4783
    %v5114 = vunpack.c.l.b16 %v4784
    %v5115 = vunpack.c.h.b16 %v4784
    %v5116 = vunpack.c.l.b16 %v4785
    %v5117 = vunpack.c.h.b16 %v4785
    %v5118 = vunpack.c.l.b16 %v4786
    %v5119 = vunpack.c.h.b16 %v4786
    %v5120 = vunpack.c.l.b16 %v4787
    %v5121 = vunpack.c.h.b16 %v4787
    %v5122 = vunpack.c.l.b16 %v4788
    %v5123 = vunpack.c.h.b16 %v4788
    %v5124 = vunpack.c.l.b16 %v4789
    %v5125 = vunpack.c.h.b16 %v4789
    %v5126 = vunpack.c.l.b16 %v4790
    %v5127 = vunpack.c.h.b16 %v4790
    %v5128 = vunpack.c.l.b16 %v4791
    %v5129 = vunpack.c.h.b16 %v4791
    %v5130 = vunpack.c.l.b16 %v4792
    %v5131 = vunpack.c.h.b16 %v4792
    %v5132 = vunpack.c.l.b16 %v4793
    %v5133 = vunpack.c.h.b16 %v4793
    %v5134 = vunpack.c.l.b16 %v4794
    %v5135 = vunpack.c.h.b16 %v4794
    %v5136 = vunpack.c.l.b16 %v4795
    %v5137 = vunpack.c.h.b16 %v4795
    %v5138 = vunpack.c.l.b16 %v4796
    %v5139 = vunpack.c.h.b16 %v4796
    %v5140 = vunpack.c.l.b16 %v4797
    %v5141 = vunpack.c.h.b16 %v4797
    %v5142 = vunpack.c.l.b16 %v4798
    %v5143 = vunpack.c.h.b16 %v4798
    %v5144 = vunpack.c.l.b16 %v4799
    %v5145 = vunpack.c.h.b16 %v4799
    %v5146 = vunpack.c.l.b16 %v4800
    %v5147 = vunpack.c.h.b16 %v4800
    %v5148 = vunpack.c.l.b16 %v4801
    %v5149 = vunpack.c.h.b16 %v4801
    %v5150 = vunpack.c.l.b16 %v4802
    %v5151 = vunpack.c.h.b16 %v4802
    %v5152 = vunpack.c.l.b16 %v4803
    %v5153 = vunpack.c.h.b16 %v4803
    %v5154 = vunpack.c.l.b16 %v4804
    %v5155 = vunpack.c.h.b16 %v4804
    %v5156 = vunpack.c.l.b16 %v4805
    %v5157 = vunpack.c.h.b16 %v4805
    %v5158 = vunpack.c.l.b16 %v4806
    %v5159 = vunpack.c.h.b16 %v4806
    %v5160 = vunpack.c.l.b16 %v4807
    %v5161 = vunpack.c.h.b16 %v4807
    %v5162 = vunpack.c.l.b16 %v4808
    %v5163 = vunpack.c.h.b16 %v4808
    %v5164 = vunpack.c.l.b16 %v4809
    %v5165 = vunpack.c.h.b16 %v4809
    %v5166 = vunpack.c.l.b16 %v4810
    %v5167 = vunpack.c.h.b16 %v4810
    %v5168 = vunpack.c.l.b16 %v4811
    %v5169 = vunpack.c.h.b16 %v4811
    %v5170 = vunpack.c.l.b16 %v4812
    %v5171 = vunpack.c.h.b16 %v4812
    %v5172 = vunpack.c.l.b16 %v4813
    %v5173 = vunpack.c.h.b16 %v4813
    %v5174 = vunpack.c.l.b16 %v4814
    %v5175 = vunpack.c.h.b16 %v4814
    %v5176 = vunpack.c.l.b16 %v4815
    %v5177 = vunpack.c.h.b16 %v4815
    %v5178 = vunpack.c.l.b16 %v4816
    %v5179 = vunpack.c.h.b16 %v4816
    %v5180 = vunpack.c.l.b16 %v4817
    %v5181 = vunpack.c.h.b16 %v4817
    %v5182 = vunpack.c.l.b16 %v4818
    %v5183 = vunpack.c.h.b16 %v4818
    %v5184 = vunpack.c.l.b16 %v4819
    %v5185 = vunpack.c.h.b16 %v4819
    %v5186 = vunpack.c.l.b16 %v4820
    %v5187 = vunpack.c.h.b16 %v4820
    %v5188 = vunpack.c.l.b16 %v4821
    %v5189 = vunpack.c.h.b16 %v4821
    %v5190 = vunpack.c.l.b16 %v4822
    %v5191 = vunpack.c.h.b16 %v4822
    %v5192 = vunpack.c.l.b16 %v4823
    %v5193 = vunpack.c.h.b16 %v4823
    %v5194 = vunpack.c.l.b16 %v4824
    %v5195 = vunpack.c.h.b16 %v4824
    %v5196 = vunpack.c.l.b16 %v4825
    %v5197 = vunpack.c.h.b16 %v4825
    %v5198 = vunpack.c.l.b16 %v4826
    %v5199 = vunpack.c.h.b16 %v4826
    %v5200 = vunpack.c.l.b16 %v4827
    %v5201 = vunpack.c.h.b16 %v4827
    %v5202 = vunpack.c.l.b16 %v4828
    %v5203 = vunpack.c.h.b16 %v4828
    %v5204 = vunpack.c.l.b16 %v4829
    %v5205 = vunpack.c.h.b16 %v4829
    %v5206 = vunpack.c.l.b16 %v4830
    %v5207 = vunpack.c.h.b16 %v4830
    %v5208 = vunpack.c.l.b16 %v4831
    %v5209 = vunpack.c.h.b16 %v4831
    %v5210 = vunpack.c.l.b16 %v4832
    %v5211 = vunpack.c.h.b16 %v4832
    %v5212 = vunpack.c.l.b16 %v4833
    %v5213 = vunpack.c.h.b16 %v4833
    %v5214 = vunpack.c.l.b16 %v4834
    %v5215 = vunpack.c.h.b16 %v4834
    %v5216 = vunpack.c.l.b16 %v4835
    %v5217 = vunpack.c.h.b16 %v4835
    %v5218 = vunpack.c.l.b16 %v4836
    %v5219 = vunpack.c.h.b16 %v4836
    %v5220 = vunpack.c.l.b16 %v4837
    %v5221 = vunpack.c.h.b16 %v4837
    %v5222 = vpack.c.b16 %v4970, %v4966
    %v5223 = vpack.c.b16 %v4971, %v4967
    %v5224 = vpack.c.b16 %v4972, %v4968
    %v5225 = vpack.c.b16 %v4973, %v4969
    %v5226 = vpack.c.b16 %v4978, %v4974
    %v5227 = vpack.c.b16 %v4979, %v4975
    %v5228 = vpack.c.b16 %v4980, %v4976
    %v5229 = vpack.c.b16 %v4981, %v4977
    %v5230 = vpack.c.b16 %v4986, %v4982
    %v5231 = vpack.c.b16 %v4987, %v4983
    %v5232 = vpack.c.b16 %v4988, %v4984
    %v5233 = vpack.c.b16 %v4989, %v4985
    %v5234 = vpack.c.b16 %v4994, %v4990
    %v5235 = vpack.c.b16 %v4995, %v4991
    %v5236 = vpack.c.b16 %v4996, %v4992
    %v5237 = vpack.c.b16 %v4997, %v4993
    %v5238 = vpack.c.b16 %v5002, %v4998
    %v5239 = vpack.c.b16 %v5003, %v4999
    %v5240 = vpack.c.b16 %v5004, %v5000
    %v5241 = vpack.c.b16 %v5005, %v5001
    %v5242 = vpack.c.b16 %v5010, %v5006
    %v5243 = vpack.c.b16 %v5011, %v5007
    %v5244 = vpack.c.b16 %v5012, %v5008
    %v5245 = vpack.c.b16 %v5013, %v5009
    %v5246 = vpack.c.b16 %v5018, %v5014
    %v5247 = vpack.c.b16 %v5019, %v5015
    %v5248 = vpack.c.b16 %v5020, %v5016
    %v5249 = vpack.c.b16 %v5021, %v5017
    %v5250 = vpack.c.b16 %v5026, %v5022
    %v5251 = vpack.c.b16 %v5027, %v5023
    %v5252 = vpack.c.b16 %v5028, %v5024
    %v5253 = vpack.c.b16 %v5029, %v5025
    %v5254 = vpack.c.b16 %v5034, %v5030
    %v5255 = vpack.c.b16 %v5035, %v5031
    %v5256 = vpack.c.b16 %v5036, %v5032
    %v5257 = vpack.c.b16 %v5037, %v5033
    %v5258 = vpack.c.b16 %v5042, %v5038
    %v5259 = vpack.c.b16 %v5043, %v5039
    %v5260 = vpack.c.b16 %v5044, %v5040
    %v5261 = vpack.c.b16 %v5045, %v5041
    %v5262 = vpack.c.b16 %v5050, %v5046
    %v5263 = vpack.c.b16 %v5051, %v5047
    %v5264 = vpack.c.b16 %v5052, %v5048
    %v5265 = vpack.c.b16 %v5053, %v5049
    %v5266 = vpack.c.b16 %v5058, %v5054
    %v5267 = vpack.c.b16 %v5059, %v5055
    %v5268 = vpack.c.b16 %v5060, %v5056
    %v5269 = vpack.c.b16 %v5061, %v5057
    %v5270 = vpack.c.b16 %v5066, %v5062
    %v5271 = vpack.c.b16 %v5067, %v5063
    %v5272 = vpack.c.b16 %v5068, %v5064
    %v5273 = vpack.c.b16 %v5069, %v5065
    %v5274 = vpack.c.b16 %v5074, %v5070
    %v5275 = vpack.c.b16 %v5075, %v5071
    %v5276 = vpack.c.b16 %v5076, %v5072
    %v5277 = vpack.c.b16 %v5077, %v5073
    %v5278 = vpack.c.b16 %v5082, %v5078
    %v5279 = vpack.c.b16 %v5083, %v5079
    %v5280 = vpack.c.b16 %v5084, %v5080
    %v5281 = vpack.c.b16 %v5085, %v5081
    %v5282 = vpack.c.b16 %v5090, %v5086
    %v5283 = vpack.c.b16 %v5091, %v5087
    %v5284 = vpack.c.b16 %v5092, %v5088
    %v5285 = vpack.c.b16 %v5093, %v5089
    %v5286 = vpack.c.b16 %v5098, %v5094
    %v5287 = vpack.c.b16 %v5099, %v5095
    %v5288 = vpack.c.b16 %v5100, %v5096
    %v5289 = vpack.c.b16 %v5101, %v5097
    %v5290 = vpack.c.b16 %v5106, %v5102
    %v5291 = vpack.c.b16 %v5107, %v5103
    %v5292 = vpack.c.b16 %v5108, %v5104
    %v5293 = vpack.c.b16 %v5109, %v5105
    %v5294 = vpack.c.b16 %v5114, %v5110
    %v5295 = vpack.c.b16 %v5115, %v5111
    %v5296 = vpack.c.b16 %v5116, %v5112
    %v5297 = vpack.c.b16 %v5117, %v5113
    %v5298 = vpack.c.b16 %v5122, %v5118
    %v5299 = vpack.c.b16 %v5123, %v5119
    %v5300 = vpack.c.b16 %v5124, %v5120
    %v5301 = vpack.c.b16 %v5125, %v5121
    %v5302 = vpack.c.b16 %v5130, %v5126
    %v5303 = vpack.c.b16 %v5131, %v5127
    %v5304 = vpack.c.b16 %v5132, %v5128
    %v5305 = vpack.c.b16 %v5133, %v5129
    %v5306 = vpack.c.b16 %v5138, %v5134
    %v5307 = vpack.c.b16 %v5139, %v5135
    %v5308 = vpack.c.b16 %v5140, %v5136
    %v5309 = vpack.c.b16 %v5141, %v5137
    %v5310 = vpack.c.b16 %v5146, %v5142
    %v5311 = vpack.c.b16 %v5147, %v5143
    %v5312 = vpack.c.b16 %v5148, %v5144
    %v5313 = vpack.c.b16 %v5149, %v5145
    %v5314 = vpack.c.b16 %v5154, %v5150
    %v5315 = vpack.c.b16 %v5155, %v5151
    %v5316 = vpack.c.b16 %v5156, %v5152
    %v5317 = vpack.c.b16 %v5157, %v5153
    %v5318 = vpack.c.b16 %v5162, %v5158
    %v5319 = vpack.c.b16 %v5163, %v5159
    %v5320 = vpack.c.b16 %v5164, %v5160
    %v5321 = vpack.c.b16 %v5165, %v5161
    %v5322 = vpack.c.b16 %v5170, %v5166
    %v5323 = vpack.c.b16 %v5171, %v5167
    %v5324 = vpack.c.b16 %v5172, %v5168
    %v5325 = vpack.c.b16 %v5173, %v5169
    %v5326 = vpack.c.b16 %v5178, %v5174
    %v5327 = vpack.c.b16 %v5179, %v5175
    %v5328 = vpack.c.b16 %v5180, %v5176
    %v5329 = vpack.c.b16 %v5181, %v5177
    %v5330 = vpack.c.b16 %v5186, %v5182
    %v5331 = vpack.c.b16 %v5187, %v5183
    %v5332 = vpack.c.b16 %v5188, %v5184
    %v5333 = vpack.c.b16 %v5189, %v5185
    %v5334 = vpack.c.b16 %v5194, %v5190
    %v5335 = vpack.c.b16 %v5195, %v5191
    %v5336 = vpack.c.b16 %v5196, %v5192
    %v5337 = vpack.c.b16 %v5197, %v5193
    %v5338 = vpack.c.b16 %v5202, %v5198
    %v5339 = vpack.c.b16 %v5203, %v5199
    %v5340 = vpack.c.b16 %v5204, %v5200
    %v5341 = vpack.c.b16 %v5205, %v5201
    %v5342 = vpack.c.b16 %v5210, %v5206
    %v5343 = vpack.c.b16 %v5211, %v5207
    %v5344 = vpack.c.b16 %v5212, %v5208
    %v5345 = vpack.c.b16 %v5213, %v5209
    %v5346 = vpack.c.b16 %v5218, %v5214
    %v5347 = vpack.c.b16 %v5219, %v5215
    %v5348 = vpack.c.b16 %v5220, %v5216
    %v5349 = vpack.c.b16 %v5221, %v5217
    %5478 = vmatpush.bf16.msra.mxu0 %v5250
    %5479 = vmatpush.bf16.msra.mxu0 %v5246
    %5480 = vmatpush.bf16.msra.mxu0 %v5242
    %5481 = vmatpush.bf16.msra.mxu0 %v5238
    %5482 = vmatpush.bf16.msra.mxu0 %v5234
    %5483 = vmatpush.bf16.msra.mxu0 %v5230
    %5484 = vmatpush.bf16.msra.mxu0 %v5226
    %5485 = vmatpush.bf16.msra.mxu0 %v5222
    %5486 = vmatmul.bf16.gmra.mxu0 %v4705
    %v5487 = vpop.f32.mrf.mxu0
    %v5488 = vadd.f32 0.0, %v5487
    %v5489 = vpop.f32.mrf.mxu0
    %v5490 = vadd.f32 0.0, %v5489
    %5491 = vdwg.mxu0
    %5492 = vmatpush.bf16.msra.mxu0 %v5282
    %5493 = vmatpush.bf16.msra.mxu0 %v5278
    %5494 = vmatpush.bf16.msra.mxu0 %v5274
    %5495 = vmatpush.bf16.msra.mxu0 %v5270
    %5496 = vmatpush.bf16.msra.mxu0 %v5266
    %5497 = vmatpush.bf16.msra.mxu0 %v5262
    %5498 = vmatpush.bf16.msra.mxu0 %v5258
    %5499 = vmatpush.bf16.msra.mxu0 %v5254
    %5500 = vmatmul.bf16.gmra.mxu0 %v4706
    %v5501 = vpop.f32.mrf.mxu0
    %v5502 = vadd.f32 %v5488, %v5501
    %v5503 = vpop.f32.mrf.mxu0
    %v5504 = vadd.f32 %v5490, %v5503
    %5505 = vdwg.mxu0
    %5506 = vmatpush.bf16.msra.mxu0 %v5314
    %5507 = vmatpush.bf16.msra.mxu0 %v5310
    %5508 = vmatpush.bf16.msra.mxu0 %v5306
    %5509 = vmatpush.bf16.msra.mxu0 %v5302
    %5510 = vmatpush.bf16.msra.mxu0 %v5298
    %5511 = vmatpush.bf16.msra.mxu0 %v5294
    %5512 = vmatpush.bf16.msra.mxu0 %v5290
    %5513 = vmatpush.bf16.msra.mxu0 %v5286
    %5514 = vmatmul.bf16.gmra.mxu0 %v4707
    %v5515 = vpop.f32.mrf.mxu0
    %v5516 = vadd.f32 %v5502, %v5515
    %v5517 = vpop.f32.mrf.mxu0
    %v5518 = vadd.f32 %v5504, %v5517
    %5519 = vdwg.mxu0
    %5520 = vmatpush.bf16.msra.mxu0 %v5346
    %5521 = vmatpush.bf16.msra.mxu0 %v5342
    %5522 = vmatpush.bf16.msra.mxu0 %v5338
    %5523 = vmatpush.bf16.msra.mxu0 %v5334
    %5524 = vmatpush.bf16.msra.mxu0 %v5330
    %5525 = vmatpush.bf16.msra.mxu0 %v5326
    %5526 = vmatpush.bf16.msra.mxu0 %v5322
    %5527 = vmatpush.bf16.msra.mxu0 %v5318
    %5528 = vmatmul.bf16.gmra.mxu0 %v4708
    %v5529 = vpop.f32.mrf.mxu0
    %v5530 = vadd.f32 %v5516, %v5529
    %v5531 = vpop.f32.mrf.mxu0
    %v5532 = vadd.f32 %v5518, %v5531
    %5533 = vdwg.mxu0
    %5534 = vmatpush.bf16.msra.mxu0 %v5251
    %5535 = vmatpush.bf16.msra.mxu0 %v5247
    %5536 = vmatpush.bf16.msra.mxu0 %v5243
    %5537 = vmatpush.bf16.msra.mxu0 %v5239
    %5538 = vmatpush.bf16.msra.mxu0 %v5235
    %5539 = vmatpush.bf16.msra.mxu0 %v5231
    %5540 = vmatpush.bf16.msra.mxu0 %v5227
    %5541 = vmatpush.bf16.msra.mxu0 %v5223
    %5542 = vmatmul.bf16.gmra.mxu0 %v4705
    %v5543 = vpop.f32.mrf.mxu0
    %v5544 = vadd.f32 0.0, %v5543
    %v5545 = vpop.f32.mrf.mxu0
    %v5546 = vadd.f32 0.0, %v5545
    %5547 = vdwg.mxu0
    %5548 = vmatpush.bf16.msra.mxu0 %v5283
    %5549 = vmatpush.bf16.msra.mxu0 %v5279
    %5550 = vmatpush.bf16.msra.mxu0 %v5275
    %5551 = vmatpush.bf16.msra.mxu0 %v5271
    %5552 = vmatpush.bf16.msra.mxu0 %v5267
    %5553 = vmatpush.bf16.msra.mxu0 %v5263
    %5554 = vmatpush.bf16.msra.mxu0 %v5259
    %5555 = vmatpush.bf16.msra.mxu0 %v5255
    %5556 = vmatmul.bf16.gmra.mxu0 %v4706
    %v5557 = vpop.f32.mrf.mxu0
    %v5558 = vadd.f32 %v5544, %v5557
    %v5559 = vpop.f32.mrf.mxu0
    %v5560 = vadd.f32 %v5546, %v5559
    %5561 = vdwg.mxu0
    %5562 = vmatpush.bf16.msra.mxu0 %v5315
    %5563 = vmatpush.bf16.msra.mxu0 %v5311
    %5564 = vmatpush.bf16.msra.mxu0 %v5307
    %5565 = vmatpush.bf16.msra.mxu0 %v5303
    %5566 = vmatpush.bf16.msra.mxu0 %v5299
    %5567 = vmatpush.bf16.msra.mxu0 %v5295
    %5568 = vmatpush.bf16.msra.mxu0 %v5291
    %5569 = vmatpush.bf16.msra.mxu0 %v5287
    %5570 = vmatmul.bf16.gmra.mxu0 %v4707
    %v5571 = vpop.f32.mrf.mxu0
    %v5572 = vadd.f32 %v5558, %v5571
    %v5573 = vpop.f32.mrf.mxu0
    %v5574 = vadd.f32 %v5560, %v5573
    %5575 = vdwg.mxu0
    %5576 = vmatpush.bf16.msra.mxu0 %v5347
    %5577 = vmatpush.bf16.msra.mxu0 %v5343
    %5578 = vmatpush.bf16.msra.mxu0 %v5339
    %5579 = vmatpush.bf16.msra.mxu0 %v5335
    %5580 = vmatpush.bf16.msra.mxu0 %v5331
    %5581 = vmatpush.bf16.msra.mxu0 %v5327
    %5582 = vmatpush.bf16.msra.mxu0 %v5323
    %5583 = vmatpush.bf16.msra.mxu0 %v5319
    %5584 = vmatmul.bf16.gmra.mxu0 %v4708
    %v5585 = vpop.f32.mrf.mxu0
    %v5586 = vadd.f32 %v5572, %v5585
    %v5587 = vpop.f32.mrf.mxu0
    %v5588 = vadd.f32 %v5574, %v5587
    %5589 = vdwg.mxu0
    %5590 = vmatpush.bf16.msra.mxu0 %v5252
    %5591 = vmatpush.bf16.msra.mxu0 %v5248
    %5592 = vmatpush.bf16.msra.mxu0 %v5244
    %5593 = vmatpush.bf16.msra.mxu0 %v5240
    %5594 = vmatpush.bf16.msra.mxu0 %v5236
    %5595 = vmatpush.bf16.msra.mxu0 %v5232
    %5596 = vmatpush.bf16.msra.mxu0 %v5228
    %5597 = vmatpush.bf16.msra.mxu0 %v5224
    %5598 = vmatmul.bf16.gmra.mxu0 %v4705
    %v5599 = vpop.f32.mrf.mxu0
    %v5600 = vadd.f32 0.0, %v5599
    %v5601 = vpop.f32.mrf.mxu0
    %v5602 = vadd.f32 0.0, %v5601
    %5603 = vdwg.mxu0
    %5604 = vmatpush.bf16.msra.mxu0 %v5284
    %5605 = vmatpush.bf16.msra.mxu0 %v5280
    %5606 = vmatpush.bf16.msra.mxu0 %v5276
    %5607 = vmatpush.bf16.msra.mxu0 %v5272
    %5608 = vmatpush.bf16.msra.mxu0 %v5268
    %5609 = vmatpush.bf16.msra.mxu0 %v5264
    %5610 = vmatpush.bf16.msra.mxu0 %v5260
    %5611 = vmatpush.bf16.msra.mxu0 %v5256
    %5612 = vmatmul.bf16.gmra.mxu0 %v4706
    %v5613 = vpop.f32.mrf.mxu0
    %v5614 = vadd.f32 %v5600, %v5613
    %v5615 = vpop.f32.mrf.mxu0
    %v5616 = vadd.f32 %v5602, %v5615
    %5617 = vdwg.mxu0
    %5618 = vmatpush.bf16.msra.mxu0 %v5316
    %5619 = vmatpush.bf16.msra.mxu0 %v5312
    %5620 = vmatpush.bf16.msra.mxu0 %v5308
    %5621 = vmatpush.bf16.msra.mxu0 %v5304
    %5622 = vmatpush.bf16.msra.mxu0 %v5300
    %5623 = vmatpush.bf16.msra.mxu0 %v5296
    %5624 = vmatpush.bf16.msra.mxu0 %v5292
    %5625 = vmatpush.bf16.msra.mxu0 %v5288
    %5626 = vmatmul.bf16.gmra.mxu0 %v4707
    %v5627 = vpop.f32.mrf.mxu0
    %v5628 = vadd.f32 %v5614, %v5627
    %v5629 = vpop.f32.mrf.mxu0
    %v5630 = vadd.f32 %v5616, %v5629
    %5631 = vdwg.mxu0
    %5632 = vmatpush.bf16.msra.mxu0 %v5348
    %5633 = vmatpush.bf16.msra.mxu0 %v5344
    %5634 = vmatpush.bf16.msra.mxu0 %v5340
    %5635 = vmatpush.bf16.msra.mxu0 %v5336
    %5636 = vmatpush.bf16.msra.mxu0 %v5332
    %5637 = vmatpush.bf16.msra.mxu0 %v5328
    %5638 = vmatpush.bf16.msra.mxu0 %v5324
    %5639 = vmatpush.bf16.msra.mxu0 %v5320
    %5640 = vmatmul.bf16.gmra.mxu0 %v4708
    %v5641 = vpop.f32.mrf.mxu0
    %v5642 = vadd.f32 %v5628, %v5641
    %v5643 = vpop.f32.mrf.mxu0
    %v5644 = vadd.f32 %v5630, %v5643
    %5645 = vdwg.mxu0
    %5646 = vmatpush.bf16.msra.mxu0 %v5253
    %5647 = vmatpush.bf16.msra.mxu0 %v5249
    %5648 = vmatpush.bf16.msra.mxu0 %v5245
    %5649 = vmatpush.bf16.msra.mxu0 %v5241
    %5650 = vmatpush.bf16.msra.mxu0 %v5237
    %5651 = vmatpush.bf16.msra.mxu0 %v5233
    %5652 = vmatpush.bf16.msra.mxu0 %v5229
    %5653 = vmatpush.bf16.msra.mxu0 %v5225
    %5654 = vmatmul.bf16.gmra.mxu0 %v4705
    %v5655 = vpop.f32.mrf.mxu0
    %v5656 = vadd.f32 0.0, %v5655
    %v5657 = vpop.f32.mrf.mxu0
    %v5658 = vadd.f32 0.0, %v5657
    %5659 = vdwg.mxu0
    %5660 = vmatpush.bf16.msra.mxu0 %v5285
    %5661 = vmatpush.bf16.msra.mxu0 %v5281
    %5662 = vmatpush.bf16.msra.mxu0 %v5277
    %5663 = vmatpush.bf16.msra.mxu0 %v5273
    %5664 = vmatpush.bf16.msra.mxu0 %v5269
    %5665 = vmatpush.bf16.msra.mxu0 %v5265
    %5666 = vmatpush.bf16.msra.mxu0 %v5261
    %5667 = vmatpush.bf16.msra.mxu0 %v5257
    %5668 = vmatmul.bf16.gmra.mxu0 %v4706
    %v5669 = vpop.f32.mrf.mxu0
    %v5670 = vadd.f32 %v5656, %v5669
    %v5671 = vpop.f32.mrf.mxu0
    %v5672 = vadd.f32 %v5658, %v5671
    %5673 = vdwg.mxu0
    %5674 = vmatpush.bf16.msra.mxu0 %v5317
    %5675 = vmatpush.bf16.msra.mxu0 %v5313
    %5676 = vmatpush.bf16.msra.mxu0 %v5309
    %5677 = vmatpush.bf16.msra.mxu0 %v5305
    %5678 = vmatpush.bf16.msra.mxu0 %v5301
    %5679 = vmatpush.bf16.msra.mxu0 %v5297
    %5680 = vmatpush.bf16.msra.mxu0 %v5293
    %5681 = vmatpush.bf16.msra.mxu0 %v5289
    %5682 = vmatmul.bf16.gmra.mxu0 %v4707
    %v5683 = vpop.f32.mrf.mxu0
    %v5684 = vadd.f32 %v5670, %v5683
    %v5685 = vpop.f32.mrf.mxu0
    %v5686 = vadd.f32 %v5672, %v5685
    %5687 = vdwg.mxu0
    %5688 = vmatpush.bf16.msra.mxu0 %v5349
    %5689 = vmatpush.bf16.msra.mxu0 %v5345
    %5690 = vmatpush.bf16.msra.mxu0 %v5341
    %5691 = vmatpush.bf16.msra.mxu0 %v5337
    %5692 = vmatpush.bf16.msra.mxu0 %v5333
    %5693 = vmatpush.bf16.msra.mxu0 %v5329
    %5694 = vmatpush.bf16.msra.mxu0 %v5325
    %5695 = vmatpush.bf16.msra.mxu0 %v5321
    %5696 = vmatmul.bf16.gmra.mxu0 %v4708
    %v5697 = vpop.f32.mrf.mxu0
    %v5698 = vadd.f32 %v5684, %v5697
    %v5699 = vpop.f32.mrf.mxu0
    %v5700 = vadd.f32 %v5686, %v5699
    %5701 = vdwg.mxu0
    %v5702 = vmax.f32 %v5530, %v5642
    %v5703 = vmax.f32 %v5586, %v5698
    %v5704 = vmax.f32 %v5532, %v5644
    %v5705 = vmax.f32 %v5588, %v5700
    %v5706 = vpack.c.bf16 %v5704, %v5702
    %v5707 = vpack.c.bf16 %v5705, %v5703
    %v5708 = vld [vmem:[#allocation17] sm:$0xf]
    %v5709 = vld [vmem:[#allocation17 + $0x4] sm:$0xf]
    %v5710 = vld [vmem:[#allocation17 + $0x8] sm:$0xf]
    %v5714 = vunpack.c.l.b16 %v5708
    %v5715 = vunpack.c.l.b16 %v5709
    %v5716 = vunpack.c.l.b16 %v5710
    %v5717 = vpack.c.b16 %v5715, %v5714
    %v5718 = vpack.c.b16 %v5716, %v5716
    %vm5719 = vcmask 130048
    %v5721 = vsel %vm5719, %v5717, 0
    %v5724 = vsel %vm5719, %v5718, 0
    %5726 = vmatpush.bf16.msra.mxu0 0
    %5727 = vmatpush.bf16.msra.mxu0 0
    %5728 = vmatpush.bf16.msra.mxu0 0
    %5729 = vmatpush.bf16.msra.mxu0 0
    %5730 = vmatpush.bf16.msra.mxu0 0
    %5731 = vmatpush.bf16.msra.mxu0 0
    %5732 = vmatpush.bf16.msra.mxu0 0
    %5733 = vmatpush.bf16.msra.mxu0 %v5706
    %5734 = vmatmul.bf16.gmra.mxu0 %v5721
    %v5735 = vpop.f32.mrf.mxu0
    %v5736 = vadd.f32 0.0, %v5735
    %v5737 = vpop.f32.mrf.mxu0
    %v5738 = vadd.f32 0.0, %v5737
    %5739 = vmatmul.bf16.gmra.mxu0 %v5724
    %v5740 = vpop.f32.mrf.mxu0
    %v5741 = vadd.f32 0.0, %v5740
    %v5742 = vpop.f32.mrf.mxu0
    %5743 = vdwg.mxu0
    %5744 = vmatpush.bf16.msra.mxu0 0
    %5745 = vmatpush.bf16.msra.mxu0 0
    %5746 = vmatpush.bf16.msra.mxu0 0
    %5747 = vmatpush.bf16.msra.mxu0 0
    %5748 = vmatpush.bf16.msra.mxu0 0
    %5749 = vmatpush.bf16.msra.mxu0 0
    %5750 = vmatpush.bf16.msra.mxu0 0
    %5751 = vmatpush.bf16.msra.mxu0 %v5707
    %5752 = vmatmul.bf16.gmra.mxu0 %v5721
    %v5753 = vpop.f32.mrf.mxu0
    %v5754 = vadd.f32 0.0, %v5753
    %v5755 = vpop.f32.mrf.mxu0
    %v5756 = vadd.f32 0.0, %v5755
    %5757 = vmatmul.bf16.gmra.mxu0 %v5724
    %v5758 = vpop.f32.mrf.mxu0
    %v5759 = vadd.f32 0.0, %v5758
    %v5760 = vpop.f32.mrf.mxu0
    %5761 = vdwg.mxu0
    %v5766 = vrot.slane %v5738, 4
    %v5767 = vrot.slane %v5741, 4
    %v5768 = vsel %vm3028, %v5766, %v5767
    %v5769 = vrot.slane %v5756, 4
    %v5770 = vrot.slane %v5759, 4
    %v5771 = vsel %vm3028, %v5769, %v5770
    %v5776 = vmax.f32 %v5736, %v5768
    %v5777 = vmax.f32 %v5754, %v5771
    %v5778 = vmax.f32 %v5738, %v5767
    %v5779 = vmax.f32 %v5756, %v5770
    %v5780 = vpack.c.bf16 %v5777, %v5776
    %v5781 = vpack.c.bf16 %v5779, %v5778
    %v5784 = vrot.slane %v5780, 3
    %v5785 = vrot.slane %v5781, 3
    %v5788 = vsel %vm3060, %v5780, %v5784
    %v5789 = vsel %vm3064, %v5780, %v5784
    %v5791 = vrot.slane %v5789, 1
    %v5792 = vsel %vm3068, %v5780, %v5784
    %v5794 = vrot.slane %v5792, 2
    %v5795 = vsel %vm3072, %v5780, %v5784
    %v5797 = vrot.slane %v5795, 3
    %v5800 = vsel %vm3060, %v5781, %v5785
    %v5801 = vsel %vm3064, %v5781, %v5785
    %v5803 = vrot.slane %v5801, 1
    %5804 = vst [vmem:[#allocation1] ss:$4 sm:$0xff] %v5788
    %s5806 = scalar_lea.vmem [#allocation1], 1
    %5807 = vst [vmem:[%s5806] ss:$4 sm:$0xff] %v5791
    %s5809 = scalar_lea.vmem [#allocation1], 2
    %5810 = vst [vmem:[%s5809] ss:$4 sm:$0xff] %v5794
    %v5811 = vld [vmem:[#allocation1] sm:$0xff]
    %s5813 = scalar_lea.vmem [#allocation1], 32
    %5814 = vst [vmem:[%s5813] ss:$4 sm:$0xff] %v5797
    %s5815 = scalar_lea.vmem [#allocation1], 33
    %5816 = vst [vmem:[%s5815] ss:$4 sm:$0xff] %v5800
    %s5818 = scalar_lea.vmem [#allocation1], 34
    %5819 = vst [vmem:[%s5818] ss:$4 sm:$0xff] %v5803
    %v5820 = vld [vmem:[#allocation1 + $0x20] sm:$0xff]
    %5823 = vst [vmem:[#allocation3] sm:$0x77] %v5811
    %5824 = vst [vmem:[#allocation3 + $0x8] sm:$0x77] %v5820
    %v5825 = vld [vmem:[#allocation3] sm:$0x33]
    %v5826 = vld [vmem:[#allocation3 + $0x8] sm:$0x33]
    %v5829 = vrot.slane %v5825, 2
    %v5830 = vrot.slane %v5826, 2
    %vm5831 = vcmask 1041408
    %v5834 = vsel %vm5831, %v5825, %v5829
    %v5837 = vsel %vm5831, %v5826, %v5830
    %v5838 = vld [vmem:[#allocation3] sm:$0x77]
    %v5839 = vld [vmem:[#allocation3 + $0x8] sm:$0x77]
    %v5842 = vrot.slane %v5838, 2
    %v5843 = vrot.slane %v5839, 2
    %v5846 = vsel %vm5831, %v5838, %v5842
    %vm5847 = vcmask 1043458
    %v5848 = vsel %vm5847, %v5838, %v5842
    %v5850 = vrot.slane %v5848, 2
    %v5853 = vsel %vm5831, %v5839, %v5843
    %v5854 = vsel %vm5847, %v5839, %v5843
    %v5856 = vrot.slane %v5854, 2
    %vm5857 = vsmask.f32 1280
    %vm5858 = vsmask.f32 3336
    %vm5859 = vmor %vm5857, %vm5858
    %vm5860 = vsmask.f32 5392
    %vm5861 = vmor %vm5859, %vm5860
    %vm5862 = vsmask.f32 7448
    %vm5863 = vmor %vm5861, %vm5862
    %v5864 = vshrl.u32 %v5846, 16
    %v5866 = vrot.slane %v5864, 6
    %v5867 = vshll.u32 %v5846, 16
    %v5869 = vrot.slane %v5867, 7
    %v5870 = vor.u32 %v5866, %v5869
    %v5871 = vrot.slane %v5870, 2
    %v5873 = vshll.u32 %v5850, 16
    %v5875 = vrot.slane %v5873, 7
    %v5876 = vsel %vm5863, %v5871, %v5875
    %v5877 = vshrl.u32 %v5853, 16
    %v5879 = vrot.slane %v5877, 6
    %v5880 = vshll.u32 %v5853, 16
    %v5882 = vrot.slane %v5880, 7
    %v5883 = vor.u32 %v5879, %v5882
    %v5884 = vrot.slane %v5883, 2
    %v5886 = vshll.u32 %v5856, 16
    %v5888 = vrot.slane %v5886, 7
    %v5889 = vsel %vm5863, %v5884, %v5888
    %v5890 = vld [vmem:[#allocation3] sm:$0x66]
    %v5891 = vld [vmem:[#allocation3 + $0x8] sm:$0x66]
    %v5894 = vrot.slane %v5890, 2
    %v5895 = vrot.slane %v5891, 2
    %v5898 = vsel %vm5831, %v5890, %v5894
    %v5900 = vsel %vm5847, %v5890, %v5894
    %v5902 = vrot.slane %v5900, 2
    %v5905 = vsel %vm5831, %v5891, %v5895
    %v5907 = vsel %vm5847, %v5891, %v5895
    %v5909 = vrot.slane %v5907, 2
    %vm5910 = vcmask 1040384
    %vm5911 = vcmask 1042434
    %vm5912 = vmor %vm5910, %vm5911
    %vm5913 = vcmask 1044484
    %vm5914 = vmor %vm5912, %vm5913
    %vm5915 = vcmask 1046534
    %vm5916 = vmor %vm5914, %vm5915
    %v5917 = vrot.slane %v5898, 7
    %v5918 = vrot.slane %v5917, 2
    %v5919 = vrot.slane %v5902, 7
    %v5920 = vsel %vm5916, %v5918, %v5919
    %v5921 = vrot.slane %v5905, 7
    %v5922 = vrot.slane %v5921, 2
    %v5923 = vrot.slane %v5909, 7
    %v5924 = vsel %vm5916, %v5922, %v5923
    %5925 = vst [vmem:[#allocation1] ss:$4 sm:$0xff] %v5834
    %s5926 = scalar_lea.vmem [#allocation1], 1
    %5927 = vst [vmem:[%s5926] ss:$4 sm:$0xff] %v5837
    %v5928 = vld.sshfl [vmem:[#allocation1] sm:$0xff pattern:$0x73625140]
    %v5929 = vld.sshfl [vmem:[#allocation1 + $0x8] sm:$0xff pattern:$0x73625140]
    %5933 = vst [vmem:[#allocation1] ss:$4 sm:$0xff] %v5876
    %s5935 = scalar_lea.vmem [#allocation1], 1
    %5936 = vst [vmem:[%s5935] ss:$4 sm:$0xff] %v5889
    %v5937 = vld.sshfl [vmem:[#allocation1] sm:$0xff pattern:$0x73625140]
    %v5938 = vld.sshfl [vmem:[#allocation1 + $0x8] sm:$0xff pattern:$0x73625140]
    %5942 = vst [vmem:[#allocation1] ss:$4 sm:$0xff] %v5920
    %s5944 = scalar_lea.vmem [#allocation1], 1
    %5945 = vst [vmem:[%s5944] ss:$4 sm:$0xff] %v5924
    %v5946 = vld.sshfl [vmem:[#allocation1] sm:$0xff pattern:$0x73625140]
    %v5947 = vld.sshfl [vmem:[#allocation1 + $0x8] sm:$0xff pattern:$0x73625140]
    %v5950 = vld [vmem:[#allocation11] sm:$0xff]
    %v5951 = vld [vmem:[#allocation11 + $0x8] sm:$0xff]
    %v5952 = vld [vmem:[#allocation11 + $0x10] sm:$0xff]
    %v5953 = vld [vmem:[#allocation11 + $0x18] sm:$0xff]
    %v5954 = vld [vmem:[#allocation11 + $0x20] sm:$0xff]
    %v5955 = vld [vmem:[#allocation11 + $0x28] sm:$0xff]
    %v5956 = vld [vmem:[#allocation11 + $0x30] sm:$0xff]
    %v5957 = vld [vmem:[#allocation11 + $0x38] sm:$0xff]
    %v5958 = vld [vmem:[#allocation11 + $0x40] sm:$0xff]
    %v5959 = vld [vmem:[#allocation11 + $0x48] sm:$0xff]
    %v5960 = vld [vmem:[#allocation11 + $0x50] sm:$0xff]
    %v5961 = vld [vmem:[#allocation11 + $0x58] sm:$0xff]
    %v5962 = vld [vmem:[#allocation11 + $0x60] sm:$0xff]
    %v5963 = vld [vmem:[#allocation11 + $0x68] sm:$0xff]
    %v5964 = vld [vmem:[#allocation11 + $0x70] sm:$0xff]
    %v5965 = vld [vmem:[#allocation11 + $0x78] sm:$0xff]
    %v5966 = vld [vmem:[#allocation11 + $0x80] sm:$0xff]
    %v5967 = vld [vmem:[#allocation11 + $0x88] sm:$0xff]
    %v5968 = vld [vmem:[#allocation11 + $0x90] sm:$0xff]
    %v5969 = vld [vmem:[#allocation11 + $0x98] sm:$0xff]
    %v5970 = vld [vmem:[#allocation11 + $0xa0] sm:$0xff]
    %v5971 = vld [vmem:[#allocation11 + $0xa8] sm:$0xff]
    %v5972 = vld [vmem:[#allocation11 + $0xb0] sm:$0xff]
    %v5973 = vld [vmem:[#allocation11 + $0xb8] sm:$0xff]
    %v5974 = vld [vmem:[#allocation11 + $0xc0] sm:$0xff]
    %v5975 = vld [vmem:[#allocation11 + $0xc8] sm:$0xff]
    %v5976 = vld [vmem:[#allocation11 + $0xd0] sm:$0xff]
    %v5977 = vld [vmem:[#allocation11 + $0xd8] sm:$0xff]
    %v5978 = vld [vmem:[#allocation11 + $0xe0] sm:$0xff]
    %v5979 = vld [vmem:[#allocation11 + $0xe8] sm:$0xff]
    %v5980 = vld [vmem:[#allocation11 + $0xf0] sm:$0xff]
    %v5981 = vld [vmem:[#allocation11 + $0xf8] sm:$0xff]
    %v5982 = vld [vmem:[#allocation11 + $0x100] sm:$0xff]
    %v5983 = vld [vmem:[#allocation11 + $0x108] sm:$0xff]
    %v5984 = vld [vmem:[#allocation11 + $0x110] sm:$0xff]
    %v5985 = vld [vmem:[#allocation11 + $0x118] sm:$0xff]
    %v5986 = vld [vmem:[#allocation11 + $0x120] sm:$0xff]
    %v5987 = vld [vmem:[#allocation11 + $0x128] sm:$0xff]
    %v5988 = vld [vmem:[#allocation11 + $0x130] sm:$0xff]
    %v5989 = vld [vmem:[#allocation11 + $0x138] sm:$0xff]
    %v5990 = vld [vmem:[#allocation11 + $0x140] sm:$0xff]
    %v5991 = vld [vmem:[#allocation11 + $0x148] sm:$0xff]
    %v5992 = vld [vmem:[#allocation11 + $0x150] sm:$0xff]
    %v5993 = vld [vmem:[#allocation11 + $0x158] sm:$0xff]
    %v5994 = vld [vmem:[#allocation11 + $0x160] sm:$0xff]
    %v5995 = vld [vmem:[#allocation11 + $0x168] sm:$0xff]
    %v5996 = vld [vmem:[#allocation11 + $0x170] sm:$0xff]
    %v5997 = vld [vmem:[#allocation11 + $0x178] sm:$0xff]
    %v5998 = vld [vmem:[#allocation11 + $0x180] sm:$0xff]
    %v5999 = vld [vmem:[#allocation11 + $0x188] sm:$0xff]
    %v6000 = vld [vmem:[#allocation11 + $0x190] sm:$0xff]
    %v6001 = vld [vmem:[#allocation11 + $0x198] sm:$0xff]
    %v6002 = vld [vmem:[#allocation11 + $0x1a0] sm:$0xff]
    %v6003 = vld [vmem:[#allocation11 + $0x1a8] sm:$0xff]
    %v6004 = vld [vmem:[#allocation11 + $0x1b0] sm:$0xff]
    %v6005 = vld [vmem:[#allocation11 + $0x1b8] sm:$0xff]
    %v6006 = vld [vmem:[#allocation11 + $0x1c0] sm:$0xff]
    %v6007 = vld [vmem:[#allocation11 + $0x1c8] sm:$0xff]
    %v6008 = vld [vmem:[#allocation11 + $0x1d0] sm:$0xff]
    %v6009 = vld [vmem:[#allocation11 + $0x1d8] sm:$0xff]
    %v6010 = vld [vmem:[#allocation11 + $0x1e0] sm:$0xff]
    %v6011 = vld [vmem:[#allocation11 + $0x1e8] sm:$0xff]
    %v6012 = vld [vmem:[#allocation11 + $0x1f0] sm:$0xff]
    %v6013 = vld [vmem:[#allocation11 + $0x1f8] sm:$0xff]
    %v6014 = vld [vmem:[#allocation11 + $0x200] sm:$0xff]
    %v6015 = vld [vmem:[#allocation11 + $0x208] sm:$0xff]
    %v6016 = vld [vmem:[#allocation11 + $0x210] sm:$0xff]
    %v6017 = vld [vmem:[#allocation11 + $0x218] sm:$0xff]
    %v6018 = vld [vmem:[#allocation11 + $0x220] sm:$0xff]
    %v6019 = vld [vmem:[#allocation11 + $0x228] sm:$0xff]
    %v6020 = vld [vmem:[#allocation11 + $0x230] sm:$0xff]
    %v6021 = vld [vmem:[#allocation11 + $0x238] sm:$0xff]
    %v6022 = vld [vmem:[#allocation11 + $0x240] sm:$0xff]
    %v6023 = vld [vmem:[#allocation11 + $0x248] sm:$0xff]
    %v6024 = vld [vmem:[#allocation11 + $0x250] sm:$0xff]
    %v6025 = vld [vmem:[#allocation11 + $0x258] sm:$0xff]
    %v6026 = vld [vmem:[#allocation11 + $0x260] sm:$0xff]
    %v6027 = vld [vmem:[#allocation11 + $0x268] sm:$0xff]
    %v6028 = vld [vmem:[#allocation11 + $0x270] sm:$0xff]
    %v6029 = vld [vmem:[#allocation11 + $0x278] sm:$0xff]
    %v6030 = vld [vmem:[#allocation11 + $0x280] sm:$0xff]
    %v6031 = vld [vmem:[#allocation11 + $0x288] sm:$0xff]
    %v6032 = vld [vmem:[#allocation11 + $0x290] sm:$0xff]
    %v6033 = vld [vmem:[#allocation11 + $0x298] sm:$0xff]
    %v6034 = vld [vmem:[#allocation11 + $0x2a0] sm:$0xff]
    %v6035 = vld [vmem:[#allocation11 + $0x2a8] sm:$0xff]
    %v6036 = vld [vmem:[#allocation11 + $0x2b0] sm:$0xff]
    %v6037 = vld [vmem:[#allocation11 + $0x2b8] sm:$0xff]
    %v6038 = vld [vmem:[#allocation11 + $0x2c0] sm:$0xff]
    %v6039 = vld [vmem:[#allocation11 + $0x2c8] sm:$0xff]
    %v6040 = vld [vmem:[#allocation11 + $0x2d0] sm:$0xff]
    %v6041 = vld [vmem:[#allocation11 + $0x2d8] sm:$0xff]
    %v6042 = vld [vmem:[#allocation11 + $0x2e0] sm:$0xff]
    %v6043 = vld [vmem:[#allocation11 + $0x2e8] sm:$0xff]
    %v6044 = vld [vmem:[#allocation11 + $0x2f0] sm:$0xff]
    %v6045 = vld [vmem:[#allocation11 + $0x2f8] sm:$0xff]
    %v6046 = vld [vmem:[#allocation11 + $0x300] sm:$0xff]
    %v6047 = vld [vmem:[#allocation11 + $0x308] sm:$0xff]
    %v6048 = vld [vmem:[#allocation11 + $0x310] sm:$0xff]
    %v6049 = vld [vmem:[#allocation11 + $0x318] sm:$0xff]
    %v6050 = vld [vmem:[#allocation11 + $0x320] sm:$0xff]
    %v6051 = vld [vmem:[#allocation11 + $0x328] sm:$0xff]
    %v6052 = vld [vmem:[#allocation11 + $0x330] sm:$0xff]
    %v6053 = vld [vmem:[#allocation11 + $0x338] sm:$0xff]
    %v6054 = vld [vmem:[#allocation11 + $0x340] sm:$0xff]
    %v6055 = vld [vmem:[#allocation11 + $0x348] sm:$0xff]
    %v6056 = vld [vmem:[#allocation11 + $0x350] sm:$0xff]
    %v6057 = vld [vmem:[#allocation11 + $0x358] sm:$0xff]
    %v6058 = vld [vmem:[#allocation11 + $0x360] sm:$0xff]
    %v6059 = vld [vmem:[#allocation11 + $0x368] sm:$0xff]
    %v6060 = vld [vmem:[#allocation11 + $0x370] sm:$0xff]
    %v6061 = vld [vmem:[#allocation11 + $0x378] sm:$0xff]
    %v6062 = vld [vmem:[#allocation11 + $0x380] sm:$0xff]
    %v6063 = vld [vmem:[#allocation11 + $0x388] sm:$0xff]
    %v6064 = vld [vmem:[#allocation11 + $0x390] sm:$0xff]
    %v6065 = vld [vmem:[#allocation11 + $0x398] sm:$0xff]
    %v6066 = vld [vmem:[#allocation11 + $0x3a0] sm:$0xff]
    %v6067 = vld [vmem:[#allocation11 + $0x3a8] sm:$0xff]
    %v6068 = vld [vmem:[#allocation11 + $0x3b0] sm:$0xff]
    %v6069 = vld [vmem:[#allocation11 + $0x3b8] sm:$0xff]
    %v6070 = vld [vmem:[#allocation11 + $0x3c0] sm:$0xff]
    %v6071 = vld [vmem:[#allocation11 + $0x3c8] sm:$0xff]
    %v6072 = vld [vmem:[#allocation11 + $0x3d0] sm:$0xff]
    %v6073 = vld [vmem:[#allocation11 + $0x3d8] sm:$0xff]
    %v6074 = vld [vmem:[#allocation11 + $0x3e0] sm:$0xff]
    %v6075 = vld [vmem:[#allocation11 + $0x3e8] sm:$0xff]
    %v6076 = vld [vmem:[#allocation11 + $0x3f0] sm:$0xff]
    %v6077 = vld [vmem:[#allocation11 + $0x3f8] sm:$0xff]
    %v6078 = vld [vmem:[#allocation11 + $0x400] sm:$0xff]
    %v6079 = vld [vmem:[#allocation11 + $0x408] sm:$0xff]
    %v6080 = vld [vmem:[#allocation11 + $0x410] sm:$0xff]
    %v6081 = vld [vmem:[#allocation11 + $0x418] sm:$0xff]
    %v6082 = vld [vmem:[#allocation11 + $0x420] sm:$0xff]
    %v6083 = vld [vmem:[#allocation11 + $0x428] sm:$0xff]
    %v6084 = vld [vmem:[#allocation11 + $0x430] sm:$0xff]
    %v6085 = vld [vmem:[#allocation11 + $0x438] sm:$0xff]
    %v6086 = vld [vmem:[#allocation11 + $0x440] sm:$0xff]
    %v6087 = vld [vmem:[#allocation11 + $0x448] sm:$0xff]
    %v6088 = vld [vmem:[#allocation11 + $0x450] sm:$0xff]
    %v6089 = vld [vmem:[#allocation11 + $0x458] sm:$0xff]
    %v6090 = vld [vmem:[#allocation11 + $0x460] sm:$0xff]
    %v6091 = vld [vmem:[#allocation11 + $0x468] sm:$0xff]
    %v6092 = vld [vmem:[#allocation11 + $0x470] sm:$0xff]
    %v6093 = vld [vmem:[#allocation11 + $0x478] sm:$0xff]
    %v6094 = vld [vmem:[#allocation11 + $0x480] sm:$0xff]
    %v6095 = vld [vmem:[#allocation11 + $0x488] sm:$0xff]
    %v6096 = vld [vmem:[#allocation11 + $0x490] sm:$0xff]
    %v6097 = vld [vmem:[#allocation11 + $0x498] sm:$0xff]
    %v6098 = vld [vmem:[#allocation11 + $0x4a0] sm:$0xff]
    %v6099 = vld [vmem:[#allocation11 + $0x4a8] sm:$0xff]
    %v6100 = vld [vmem:[#allocation11 + $0x4b0] sm:$0xff]
    %v6101 = vld [vmem:[#allocation11 + $0x4b8] sm:$0xff]
    %v6102 = vld [vmem:[#allocation11 + $0x4c0] sm:$0xff]
    %v6103 = vld [vmem:[#allocation11 + $0x4c8] sm:$0xff]
    %v6104 = vld [vmem:[#allocation11 + $0x4d0] sm:$0xff]
    %v6105 = vld [vmem:[#allocation11 + $0x4d8] sm:$0xff]
    %v6106 = vld [vmem:[#allocation11 + $0x4e0] sm:$0xff]
    %v6107 = vld [vmem:[#allocation11 + $0x4e8] sm:$0xff]
    %v6108 = vld [vmem:[#allocation11 + $0x4f0] sm:$0xff]
    %v6109 = vld [vmem:[#allocation11 + $0x4f8] sm:$0xff]
    %v6110 = vld [vmem:[#allocation11 + $0x500] sm:$0xff]
    %v6111 = vld [vmem:[#allocation11 + $0x508] sm:$0xff]
    %v6112 = vld [vmem:[#allocation11 + $0x510] sm:$0xff]
    %v6113 = vld [vmem:[#allocation11 + $0x518] sm:$0xff]
    %v6114 = vld [vmem:[#allocation11 + $0x520] sm:$0xff]
    %v6115 = vld [vmem:[#allocation11 + $0x528] sm:$0xff]
    %v6116 = vld [vmem:[#allocation11 + $0x530] sm:$0xff]
    %v6117 = vld [vmem:[#allocation11 + $0x538] sm:$0xff]
    %v6118 = vld [vmem:[#allocation11 + $0x540] sm:$0xff]
    %v6119 = vld [vmem:[#allocation11 + $0x548] sm:$0xff]
    %v6120 = vld [vmem:[#allocation11 + $0x550] sm:$0xff]
    %v6121 = vld [vmem:[#allocation11 + $0x558] sm:$0xff]
    %v6122 = vld [vmem:[#allocation11 + $0x560] sm:$0xff]
    %v6123 = vld [vmem:[#allocation11 + $0x568] sm:$0xff]
    %v6124 = vld [vmem:[#allocation11 + $0x570] sm:$0xff]
    %v6125 = vld [vmem:[#allocation11 + $0x578] sm:$0xff]
    %v6126 = vld [vmem:[#allocation11 + $0x580] sm:$0xff]
    %v6127 = vld [vmem:[#allocation11 + $0x588] sm:$0xff]
    %v6128 = vld [vmem:[#allocation11 + $0x590] sm:$0xff]
    %v6129 = vld [vmem:[#allocation11 + $0x598] sm:$0xff]
    %v6130 = vld [vmem:[#allocation11 + $0x5a0] sm:$0xff]
    %v6131 = vld [vmem:[#allocation11 + $0x5a8] sm:$0xff]
    %v6132 = vld [vmem:[#allocation11 + $0x5b0] sm:$0xff]
    %v6133 = vld [vmem:[#allocation11 + $0x5b8] sm:$0xff]
    %v6134 = vld [vmem:[#allocation11 + $0x5c0] sm:$0xff]
    %v6135 = vld [vmem:[#allocation11 + $0x5c8] sm:$0xff]
    %v6136 = vld [vmem:[#allocation11 + $0x5d0] sm:$0xff]
    %v6137 = vld [vmem:[#allocation11 + $0x5d8] sm:$0xff]
    %v6138 = vld [vmem:[#allocation11 + $0x5e0] sm:$0xff]
    %v6139 = vld [vmem:[#allocation11 + $0x5e8] sm:$0xff]
    %v6140 = vld [vmem:[#allocation11 + $0x5f0] sm:$0xff]
    %v6141 = vld [vmem:[#allocation11 + $0x5f8] sm:$0xff]
    %v6142 = vld [vmem:[#allocation12] sm:$0xf]
    %v6144 = vperm.slane %v6142, 0
    %v6145 = vperm.slane %v6142, 1
    %v6146 = vperm.slane %v6142, 2
    %v6147 = vperm.slane %v6142, 3
    %v6344 = vunpack.c.l.b16 %v5950
    %v6345 = vunpack.c.h.b16 %v5950
    %v6346 = vunpack.c.l.b16 %v5951
    %v6347 = vunpack.c.h.b16 %v5951
    %v6348 = vunpack.c.l.b16 %v5952
    %v6349 = vunpack.c.h.b16 %v5952
    %v6350 = vunpack.c.l.b16 %v5953
    %v6351 = vunpack.c.h.b16 %v5953
    %v6352 = vunpack.c.l.b16 %v5954
    %v6353 = vunpack.c.h.b16 %v5954
    %v6354 = vunpack.c.l.b16 %v5955
    %v6355 = vunpack.c.h.b16 %v5955
    %v6356 = vunpack.c.l.b16 %v5956
    %v6357 = vunpack.c.h.b16 %v5956
    %v6358 = vunpack.c.l.b16 %v5957
    %v6359 = vunpack.c.h.b16 %v5957
    %v6360 = vunpack.c.l.b16 %v5958
    %v6361 = vunpack.c.h.b16 %v5958
    %v6362 = vunpack.c.l.b16 %v5959
    %v6363 = vunpack.c.h.b16 %v5959
    %v6364 = vunpack.c.l.b16 %v5960
    %v6365 = vunpack.c.h.b16 %v5960
    %v6366 = vunpack.c.l.b16 %v5961
    %v6367 = vunpack.c.h.b16 %v5961
    %v6368 = vunpack.c.l.b16 %v5962
    %v6369 = vunpack.c.h.b16 %v5962
    %v6370 = vunpack.c.l.b16 %v5963
    %v6371 = vunpack.c.h.b16 %v5963
    %v6372 = vunpack.c.l.b16 %v5964
    %v6373 = vunpack.c.h.b16 %v5964
    %v6374 = vunpack.c.l.b16 %v5965
    %v6375 = vunpack.c.h.b16 %v5965
    %v6376 = vunpack.c.l.b16 %v5966
    %v6377 = vunpack.c.h.b16 %v5966
    %v6378 = vunpack.c.l.b16 %v5967
    %v6379 = vunpack.c.h.b16 %v5967
    %v6380 = vunpack.c.l.b16 %v5968
    %v6381 = vunpack.c.h.b16 %v5968
    %v6382 = vunpack.c.l.b16 %v5969
    %v6383 = vunpack.c.h.b16 %v5969
    %v6384 = vunpack.c.l.b16 %v5970
    %v6385 = vunpack.c.h.b16 %v5970
    %v6386 = vunpack.c.l.b16 %v5971
    %v6387 = vunpack.c.h.b16 %v5971
    %v6388 = vunpack.c.l.b16 %v5972
    %v6389 = vunpack.c.h.b16 %v5972
    %v6390 = vunpack.c.l.b16 %v5973
    %v6391 = vunpack.c.h.b16 %v5973
    %v6392 = vunpack.c.l.b16 %v5974
    %v6393 = vunpack.c.h.b16 %v5974
    %v6394 = vunpack.c.l.b16 %v5975
    %v6395 = vunpack.c.h.b16 %v5975
    %v6396 = vunpack.c.l.b16 %v5976
    %v6397 = vunpack.c.h.b16 %v5976
    %v6398 = vunpack.c.l.b16 %v5977
    %v6399 = vunpack.c.h.b16 %v5977
    %v6400 = vunpack.c.l.b16 %v5978
    %v6401 = vunpack.c.h.b16 %v5978
    %v6402 = vunpack.c.l.b16 %v5979
    %v6403 = vunpack.c.h.b16 %v5979
    %v6404 = vunpack.c.l.b16 %v5980
    %v6405 = vunpack.c.h.b16 %v5980
    %v6406 = vunpack.c.l.b16 %v5981
    %v6407 = vunpack.c.h.b16 %v5981
    %v6408 = vunpack.c.l.b16 %v5982
    %v6409 = vunpack.c.h.b16 %v5982
    %v6410 = vunpack.c.l.b16 %v5983
    %v6411 = vunpack.c.h.b16 %v5983
    %v6412 = vunpack.c.l.b16 %v5984
    %v6413 = vunpack.c.h.b16 %v5984
    %v6414 = vunpack.c.l.b16 %v5985
    %v6415 = vunpack.c.h.b16 %v5985
    %v6416 = vunpack.c.l.b16 %v5986
    %v6417 = vunpack.c.h.b16 %v5986
    %v6418 = vunpack.c.l.b16 %v5987
    %v6419 = vunpack.c.h.b16 %v5987
    %v6420 = vunpack.c.l.b16 %v5988
    %v6421 = vunpack.c.h.b16 %v5988
    %v6422 = vunpack.c.l.b16 %v5989
    %v6423 = vunpack.c.h.b16 %v5989
    %v6424 = vunpack.c.l.b16 %v5990
    %v6425 = vunpack.c.h.b16 %v5990
    %v6426 = vunpack.c.l.b16 %v5991
    %v6427 = vunpack.c.h.b16 %v5991
    %v6428 = vunpack.c.l.b16 %v5992
    %v6429 = vunpack.c.h.b16 %v5992
    %v6430 = vunpack.c.l.b16 %v5993
    %v6431 = vunpack.c.h.b16 %v5993
    %v6432 = vunpack.c.l.b16 %v5994
    %v6433 = vunpack.c.h.b16 %v5994
    %v6434 = vunpack.c.l.b16 %v5995
    %v6435 = vunpack.c.h.b16 %v5995
    %v6436 = vunpack.c.l.b16 %v5996
    %v6437 = vunpack.c.h.b16 %v5996
    %v6438 = vunpack.c.l.b16 %v5997
    %v6439 = vunpack.c.h.b16 %v5997
    %v6440 = vunpack.c.l.b16 %v5998
    %v6441 = vunpack.c.h.b16 %v5998
    %v6442 = vunpack.c.l.b16 %v5999
    %v6443 = vunpack.c.h.b16 %v5999
    %v6444 = vunpack.c.l.b16 %v6000
    %v6445 = vunpack.c.h.b16 %v6000
    %v6446 = vunpack.c.l.b16 %v6001
    %v6447 = vunpack.c.h.b16 %v6001
    %v6448 = vunpack.c.l.b16 %v6002
    %v6449 = vunpack.c.h.b16 %v6002
    %v6450 = vunpack.c.l.b16 %v6003
    %v6451 = vunpack.c.h.b16 %v6003
    %v6452 = vunpack.c.l.b16 %v6004
    %v6453 = vunpack.c.h.b16 %v6004
    %v6454 = vunpack.c.l.b16 %v6005
    %v6455 = vunpack.c.h.b16 %v6005
    %v6456 = vunpack.c.l.b16 %v6006
    %v6457 = vunpack.c.h.b16 %v6006
    %v6458 = vunpack.c.l.b16 %v6007
    %v6459 = vunpack.c.h.b16 %v6007
    %v6460 = vunpack.c.l.b16 %v6008
    %v6461 = vunpack.c.h.b16 %v6008
    %v6462 = vunpack.c.l.b16 %v6009
    %v6463 = vunpack.c.h.b16 %v6009
    %v6464 = vunpack.c.l.b16 %v6010
    %v6465 = vunpack.c.h.b16 %v6010
    %v6466 = vunpack.c.l.b16 %v6011
    %v6467 = vunpack.c.h.b16 %v6011
    %v6468 = vunpack.c.l.b16 %v6012
    %v6469 = vunpack.c.h.b16 %v6012
    %v6470 = vunpack.c.l.b16 %v6013
    %v6471 = vunpack.c.h.b16 %v6013
    %v6472 = vunpack.c.l.b16 %v6014
    %v6473 = vunpack.c.h.b16 %v6014
    %v6474 = vunpack.c.l.b16 %v6015
    %v6475 = vunpack.c.h.b16 %v6015
    %v6476 = vunpack.c.l.b16 %v6016
    %v6477 = vunpack.c.h.b16 %v6016
    %v6478 = vunpack.c.l.b16 %v6017
    %v6479 = vunpack.c.h.b16 %v6017
    %v6480 = vunpack.c.l.b16 %v6018
    %v6481 = vunpack.c.h.b16 %v6018
    %v6482 = vunpack.c.l.b16 %v6019
    %v6483 = vunpack.c.h.b16 %v6019
    %v6484 = vunpack.c.l.b16 %v6020
    %v6485 = vunpack.c.h.b16 %v6020
    %v6486 = vunpack.c.l.b16 %v6021
    %v6487 = vunpack.c.h.b16 %v6021
    %v6488 = vunpack.c.l.b16 %v6022
    %v6489 = vunpack.c.h.b16 %v6022
    %v6490 = vunpack.c.l.b16 %v6023
    %v6491 = vunpack.c.h.b16 %v6023
    %v6492 = vunpack.c.l.b16 %v6024
    %v6493 = vunpack.c.h.b16 %v6024
    %v6494 = vunpack.c.l.b16 %v6025
    %v6495 = vunpack.c.h.b16 %v6025
    %v6496 = vunpack.c.l.b16 %v6026
    %v6497 = vunpack.c.h.b16 %v6026
    %v6498 = vunpack.c.l.b16 %v6027
    %v6499 = vunpack.c.h.b16 %v6027
    %v6500 = vunpack.c.l.b16 %v6028
    %v6501 = vunpack.c.h.b16 %v6028
    %v6502 = vunpack.c.l.b16 %v6029
    %v6503 = vunpack.c.h.b16 %v6029
    %v6504 = vunpack.c.l.b16 %v6030
    %v6505 = vunpack.c.h.b16 %v6030
    %v6506 = vunpack.c.l.b16 %v6031
    %v6507 = vunpack.c.h.b16 %v6031
    %v6508 = vunpack.c.l.b16 %v6032
    %v6509 = vunpack.c.h.b16 %v6032
    %v6510 = vunpack.c.l.b16 %v6033
    %v6511 = vunpack.c.h.b16 %v6033
    %v6512 = vunpack.c.l.b16 %v6034
    %v6513 = vunpack.c.h.b16 %v6034
    %v6514 = vunpack.c.l.b16 %v6035
    %v6515 = vunpack.c.h.b16 %v6035
    %v6516 = vunpack.c.l.b16 %v6036
    %v6517 = vunpack.c.h.b16 %v6036
    %v6518 = vunpack.c.l.b16 %v6037
    %v6519 = vunpack.c.h.b16 %v6037
    %v6520 = vunpack.c.l.b16 %v6038
    %v6521 = vunpack.c.h.b16 %v6038
    %v6522 = vunpack.c.l.b16 %v6039
    %v6523 = vunpack.c.h.b16 %v6039
    %v6524 = vunpack.c.l.b16 %v6040
    %v6525 = vunpack.c.h.b16 %v6040
    %v6526 = vunpack.c.l.b16 %v6041
    %v6527 = vunpack.c.h.b16 %v6041
    %v6528 = vunpack.c.l.b16 %v6042
    %v6529 = vunpack.c.h.b16 %v6042
    %v6530 = vunpack.c.l.b16 %v6043
    %v6531 = vunpack.c.h.b16 %v6043
    %v6532 = vunpack.c.l.b16 %v6044
    %v6533 = vunpack.c.h.b16 %v6044
    %v6534 = vunpack.c.l.b16 %v6045
    %v6535 = vunpack.c.h.b16 %v6045
    %v6536 = vunpack.c.l.b16 %v6046
    %v6537 = vunpack.c.h.b16 %v6046
    %v6538 = vunpack.c.l.b16 %v6047
    %v6539 = vunpack.c.h.b16 %v6047
    %v6540 = vunpack.c.l.b16 %v6048
    %v6541 = vunpack.c.h.b16 %v6048
    %v6542 = vunpack.c.l.b16 %v6049
    %v6543 = vunpack.c.h.b16 %v6049
    %v6544 = vunpack.c.l.b16 %v6050
    %v6545 = vunpack.c.h.b16 %v6050
    %v6546 = vunpack.c.l.b16 %v6051
    %v6547 = vunpack.c.h.b16 %v6051
    %v6548 = vunpack.c.l.b16 %v6052
    %v6549 = vunpack.c.h.b16 %v6052
    %v6550 = vunpack.c.l.b16 %v6053
    %v6551 = vunpack.c.h.b16 %v6053
    %v6552 = vunpack.c.l.b16 %v6054
    %v6553 = vunpack.c.h.b16 %v6054
    %v6554 = vunpack.c.l.b16 %v6055
    %v6555 = vunpack.c.h.b16 %v6055
    %v6556 = vunpack.c.l.b16 %v6056
    %v6557 = vunpack.c.h.b16 %v6056
    %v6558 = vunpack.c.l.b16 %v6057
    %v6559 = vunpack.c.h.b16 %v6057
    %v6560 = vunpack.c.l.b16 %v6058
    %v6561 = vunpack.c.h.b16 %v6058
    %v6562 = vunpack.c.l.b16 %v6059
    %v6563 = vunpack.c.h.b16 %v6059
    %v6564 = vunpack.c.l.b16 %v6060
    %v6565 = vunpack.c.h.b16 %v6060
    %v6566 = vunpack.c.l.b16 %v6061
    %v6567 = vunpack.c.h.b16 %v6061
    %v6568 = vunpack.c.l.b16 %v6062
    %v6569 = vunpack.c.h.b16 %v6062
    %v6570 = vunpack.c.l.b16 %v6063
    %v6571 = vunpack.c.h.b16 %v6063
    %v6572 = vunpack.c.l.b16 %v6064
    %v6573 = vunpack.c.h.b16 %v6064
    %v6574 = vunpack.c.l.b16 %v6065
    %v6575 = vunpack.c.h.b16 %v6065
    %v6576 = vunpack.c.l.b16 %v6066
    %v6577 = vunpack.c.h.b16 %v6066
    %v6578 = vunpack.c.l.b16 %v6067
    %v6579 = vunpack.c.h.b16 %v6067
    %v6580 = vunpack.c.l.b16 %v6068
    %v6581 = vunpack.c.h.b16 %v6068
    %v6582 = vunpack.c.l.b16 %v6069
    %v6583 = vunpack.c.h.b16 %v6069
    %v6584 = vunpack.c.l.b16 %v6070
    %v6585 = vunpack.c.h.b16 %v6070
    %v6586 = vunpack.c.l.b16 %v6071
    %v6587 = vunpack.c.h.b16 %v6071
    %v6588 = vunpack.c.l.b16 %v6072
    %v6589 = vunpack.c.h.b16 %v6072
    %v6590 = vunpack.c.l.b16 %v6073
    %v6591 = vunpack.c.h.b16 %v6073
    %v6592 = vunpack.c.l.b16 %v6074
    %v6593 = vunpack.c.h.b16 %v6074
    %v6594 = vunpack.c.l.b16 %v6075
    %v6595 = vunpack.c.h.b16 %v6075
    %v6596 = vunpack.c.l.b16 %v6076
    %v6597 = vunpack.c.h.b16 %v6076
    %v6598 = vunpack.c.l.b16 %v6077
    %v6599 = vunpack.c.h.b16 %v6077
    %v6600 = vunpack.c.l.b16 %v6078
    %v6601 = vunpack.c.h.b16 %v6078
    %v6602 = vunpack.c.l.b16 %v6079
    %v6603 = vunpack.c.h.b16 %v6079
    %v6604 = vunpack.c.l.b16 %v6080
    %v6605 = vunpack.c.h.b16 %v6080
    %v6606 = vunpack.c.l.b16 %v6081
    %v6607 = vunpack.c.h.b16 %v6081
    %v6608 = vunpack.c.l.b16 %v6082
    %v6609 = vunpack.c.h.b16 %v6082
    %v6610 = vunpack.c.l.b16 %v6083
    %v6611 = vunpack.c.h.b16 %v6083
    %v6612 = vunpack.c.l.b16 %v6084
    %v6613 = vunpack.c.h.b16 %v6084
    %v6614 = vunpack.c.l.b16 %v6085
    %v6615 = vunpack.c.h.b16 %v6085
    %v6616 = vunpack.c.l.b16 %v6086
    %v6617 = vunpack.c.h.b16 %v6086
    %v6618 = vunpack.c.l.b16 %v6087
    %v6619 = vunpack.c.h.b16 %v6087
    %v6620 = vunpack.c.l.b16 %v6088
    %v6621 = vunpack.c.h.b16 %v6088
    %v6622 = vunpack.c.l.b16 %v6089
    %v6623 = vunpack.c.h.b16 %v6089
    %v6624 = vunpack.c.l.b16 %v6090
    %v6625 = vunpack.c.h.b16 %v6090
    %v6626 = vunpack.c.l.b16 %v6091
    %v6627 = vunpack.c.h.b16 %v6091
    %v6628 = vunpack.c.l.b16 %v6092
    %v6629 = vunpack.c.h.b16 %v6092
    %v6630 = vunpack.c.l.b16 %v6093
    %v6631 = vunpack.c.h.b16 %v6093
    %v6632 = vunpack.c.l.b16 %v6094
    %v6633 = vunpack.c.h.b16 %v6094
    %v6634 = vunpack.c.l.b16 %v6095
    %v6635 = vunpack.c.h.b16 %v6095
    %v6636 = vunpack.c.l.b16 %v6096
    %v6637 = vunpack.c.h.b16 %v6096
    %v6638 = vunpack.c.l.b16 %v6097
    %v6639 = vunpack.c.h.b16 %v6097
    %v6640 = vunpack.c.l.b16 %v6098
    %v6641 = vunpack.c.h.b16 %v6098
    %v6642 = vunpack.c.l.b16 %v6099
    %v6643 = vunpack.c.h.b16 %v6099
    %v6644 = vunpack.c.l.b16 %v6100
    %v6645 = vunpack.c.h.b16 %v6100
    %v6646 = vunpack.c.l.b16 %v6101
    %v6647 = vunpack.c.h.b16 %v6101
    %v6648 = vunpack.c.l.b16 %v6102
    %v6649 = vunpack.c.h.b16 %v6102
    %v6650 = vunpack.c.l.b16 %v6103
    %v6651 = vunpack.c.h.b16 %v6103
    %v6652 = vunpack.c.l.b16 %v6104
    %v6653 = vunpack.c.h.b16 %v6104
    %v6654 = vunpack.c.l.b16 %v6105
    %v6655 = vunpack.c.h.b16 %v6105
    %v6656 = vunpack.c.l.b16 %v6106
    %v6657 = vunpack.c.h.b16 %v6106
    %v6658 = vunpack.c.l.b16 %v6107
    %v6659 = vunpack.c.h.b16 %v6107
    %v6660 = vunpack.c.l.b16 %v6108
    %v6661 = vunpack.c.h.b16 %v6108
    %v6662 = vunpack.c.l.b16 %v6109
    %v6663 = vunpack.c.h.b16 %v6109
    %v6664 = vunpack.c.l.b16 %v6110
    %v6665 = vunpack.c.h.b16 %v6110
    %v6666 = vunpack.c.l.b16 %v6111
    %v6667 = vunpack.c.h.b16 %v6111
    %v6668 = vunpack.c.l.b16 %v6112
    %v6669 = vunpack.c.h.b16 %v6112
    %v6670 = vunpack.c.l.b16 %v6113
    %v6671 = vunpack.c.h.b16 %v6113
    %v6672 = vunpack.c.l.b16 %v6114
    %v6673 = vunpack.c.h.b16 %v6114
    %v6674 = vunpack.c.l.b16 %v6115
    %v6675 = vunpack.c.h.b16 %v6115
    %v6676 = vunpack.c.l.b16 %v6116
    %v6677 = vunpack.c.h.b16 %v6116
    %v6678 = vunpack.c.l.b16 %v6117
    %v6679 = vunpack.c.h.b16 %v6117
    %v6680 = vunpack.c.l.b16 %v6118
    %v6681 = vunpack.c.h.b16 %v6118
    %v6682 = vunpack.c.l.b16 %v6119
    %v6683 = vunpack.c.h.b16 %v6119
    %v6684 = vunpack.c.l.b16 %v6120
    %v6685 = vunpack.c.h.b16 %v6120
    %v6686 = vunpack.c.l.b16 %v6121
    %v6687 = vunpack.c.h.b16 %v6121
    %v6688 = vunpack.c.l.b16 %v6122
    %v6689 = vunpack.c.h.b16 %v6122
    %v6690 = vunpack.c.l.b16 %v6123
    %v6691 = vunpack.c.h.b16 %v6123
    %v6692 = vunpack.c.l.b16 %v6124
    %v6693 = vunpack.c.h.b16 %v6124
    %v6694 = vunpack.c.l.b16 %v6125
    %v6695 = vunpack.c.h.b16 %v6125
    %v6696 = vunpack.c.l.b16 %v6126
    %v6697 = vunpack.c.h.b16 %v6126
    %v6698 = vunpack.c.l.b16 %v6127
    %v6699 = vunpack.c.h.b16 %v6127
    %v6700 = vunpack.c.l.b16 %v6128
    %v6701 = vunpack.c.h.b16 %v6128
    %v6702 = vunpack.c.l.b16 %v6129
    %v6703 = vunpack.c.h.b16 %v6129
    %v6704 = vunpack.c.l.b16 %v6130
    %v6705 = vunpack.c.h.b16 %v6130
    %v6706 = vunpack.c.l.b16 %v6131
    %v6707 = vunpack.c.h.b16 %v6131
    %v6708 = vunpack.c.l.b16 %v6132
    %v6709 = vunpack.c.h.b16 %v6132
    %v6710 = vunpack.c.l.b16 %v6133
    %v6711 = vunpack.c.h.b16 %v6133
    %v6712 = vunpack.c.l.b16 %v6134
    %v6713 = vunpack.c.h.b16 %v6134
    %v6714 = vunpack.c.l.b16 %v6135
    %v6715 = vunpack.c.h.b16 %v6135
    %v6716 = vunpack.c.l.b16 %v6136
    %v6717 = vunpack.c.h.b16 %v6136
    %v6718 = vunpack.c.l.b16 %v6137
    %v6719 = vunpack.c.h.b16 %v6137
    %v6720 = vunpack.c.l.b16 %v6138
    %v6721 = vunpack.c.h.b16 %v6138
    %v6722 = vunpack.c.l.b16 %v6139
    %v6723 = vunpack.c.h.b16 %v6139
    %v6724 = vunpack.c.l.b16 %v6140
    %v6725 = vunpack.c.h.b16 %v6140
    %v6726 = vunpack.c.l.b16 %v6141
    %v6727 = vunpack.c.h.b16 %v6141
    %v6728 = vpack.c.b16 %v6348, %v6344
    %v6729 = vpack.c.b16 %v6349, %v6345
    %v6730 = vpack.c.b16 %v6350, %v6346
    %v6731 = vpack.c.b16 %v6351, %v6347
    %v6732 = vpack.c.b16 %v6356, %v6352
    %v6733 = vpack.c.b16 %v6357, %v6353
    %v6734 = vpack.c.b16 %v6358, %v6354
    %v6735 = vpack.c.b16 %v6359, %v6355
    %v6736 = vpack.c.b16 %v6364, %v6360
    %v6737 = vpack.c.b16 %v6365, %v6361
    %v6738 = vpack.c.b16 %v6366, %v6362
    %v6739 = vpack.c.b16 %v6367, %v6363
    %v6740 = vpack.c.b16 %v6372, %v6368
    %v6741 = vpack.c.b16 %v6373, %v6369
    %v6742 = vpack.c.b16 %v6374, %v6370
    %v6743 = vpack.c.b16 %v6375, %v6371
    %v6744 = vpack.c.b16 %v6380, %v6376
    %v6745 = vpack.c.b16 %v6381, %v6377
    %v6746 = vpack.c.b16 %v6382, %v6378
    %v6747 = vpack.c.b16 %v6383, %v6379
    %v6748 = vpack.c.b16 %v6388, %v6384
    %v6749 = vpack.c.b16 %v6389, %v6385
    %v6750 = vpack.c.b16 %v6390, %v6386
    %v6751 = vpack.c.b16 %v6391, %v6387
    %v6752 = vpack.c.b16 %v6396, %v6392
    %v6753 = vpack.c.b16 %v6397, %v6393
    %v6754 = vpack.c.b16 %v6398, %v6394
    %v6755 = vpack.c.b16 %v6399, %v6395
    %v6756 = vpack.c.b16 %v6404, %v6400
    %v6757 = vpack.c.b16 %v6405, %v6401
    %v6758 = vpack.c.b16 %v6406, %v6402
    %v6759 = vpack.c.b16 %v6407, %v6403
    %v6760 = vpack.c.b16 %v6412, %v6408
    %v6761 = vpack.c.b16 %v6413, %v6409
    %v6762 = vpack.c.b16 %v6414, %v6410
    %v6763 = vpack.c.b16 %v6415, %v6411
    %v6764 = vpack.c.b16 %v6420, %v6416
    %v6765 = vpack.c.b16 %v6421, %v6417
    %v6766 = vpack.c.b16 %v6422, %v6418
    %v6767 = vpack.c.b16 %v6423, %v6419
    %v6768 = vpack.c.b16 %v6428, %v6424
    %v6769 = vpack.c.b16 %v6429, %v6425
    %v6770 = vpack.c.b16 %v6430, %v6426
    %v6771 = vpack.c.b16 %v6431, %v6427
    %v6772 = vpack.c.b16 %v6436, %v6432
    %v6773 = vpack.c.b16 %v6437, %v6433
    %v6774 = vpack.c.b16 %v6438, %v6434
    %v6775 = vpack.c.b16 %v6439, %v6435
    %v6776 = vpack.c.b16 %v6444, %v6440
    %v6777 = vpack.c.b16 %v6445, %v6441
    %v6778 = vpack.c.b16 %v6446, %v6442
    %v6779 = vpack.c.b16 %v6447, %v6443
    %v6780 = vpack.c.b16 %v6452, %v6448
    %v6781 = vpack.c.b16 %v6453, %v6449
    %v6782 = vpack.c.b16 %v6454, %v6450
    %v6783 = vpack.c.b16 %v6455, %v6451
    %v6784 = vpack.c.b16 %v6460, %v6456
    %v6785 = vpack.c.b16 %v6461, %v6457
    %v6786 = vpack.c.b16 %v6462, %v6458
    %v6787 = vpack.c.b16 %v6463, %v6459
    %v6788 = vpack.c.b16 %v6468, %v6464
    %v6789 = vpack.c.b16 %v6469, %v6465
    %v6790 = vpack.c.b16 %v6470, %v6466
    %v6791 = vpack.c.b16 %v6471, %v6467
    %v6792 = vpack.c.b16 %v6476, %v6472
    %v6793 = vpack.c.b16 %v6477, %v6473
    %v6794 = vpack.c.b16 %v6478, %v6474
    %v6795 = vpack.c.b16 %v6479, %v6475
    %v6796 = vpack.c.b16 %v6484, %v6480
    %v6797 = vpack.c.b16 %v6485, %v6481
    %v6798 = vpack.c.b16 %v6486, %v6482
    %v6799 = vpack.c.b16 %v6487, %v6483
    %v6800 = vpack.c.b16 %v6492, %v6488
    %v6801 = vpack.c.b16 %v6493, %v6489
    %v6802 = vpack.c.b16 %v6494, %v6490
    %v6803 = vpack.c.b16 %v6495, %v6491
    %v6804 = vpack.c.b16 %v6500, %v6496
    %v6805 = vpack.c.b16 %v6501, %v6497
    %v6806 = vpack.c.b16 %v6502, %v6498
    %v6807 = vpack.c.b16 %v6503, %v6499
    %v6808 = vpack.c.b16 %v6508, %v6504
    %v6809 = vpack.c.b16 %v6509, %v6505
    %v6810 = vpack.c.b16 %v6510, %v6506
    %v6811 = vpack.c.b16 %v6511, %v6507
    %v6812 = vpack.c.b16 %v6516, %v6512
    %v6813 = vpack.c.b16 %v6517, %v6513
    %v6814 = vpack.c.b16 %v6518, %v6514
    %v6815 = vpack.c.b16 %v6519, %v6515
    %v6816 = vpack.c.b16 %v6524, %v6520
    %v6817 = vpack.c.b16 %v6525, %v6521
    %v6818 = vpack.c.b16 %v6526, %v6522
    %v6819 = vpack.c.b16 %v6527, %v6523
    %v6820 = vpack.c.b16 %v6532, %v6528
    %v6821 = vpack.c.b16 %v6533, %v6529
    %v6822 = vpack.c.b16 %v6534, %v6530
    %v6823 = vpack.c.b16 %v6535, %v6531
    %v6824 = vpack.c.b16 %v6540, %v6536
    %v6825 = vpack.c.b16 %v6541, %v6537
    %v6826 = vpack.c.b16 %v6542, %v6538
    %v6827 = vpack.c.b16 %v6543, %v6539
    %v6828 = vpack.c.b16 %v6548, %v6544
    %v6829 = vpack.c.b16 %v6549, %v6545
    %v6830 = vpack.c.b16 %v6550, %v6546
    %v6831 = vpack.c.b16 %v6551, %v6547
    %v6832 = vpack.c.b16 %v6556, %v6552
    %v6833 = vpack.c.b16 %v6557, %v6553
    %v6834 = vpack.c.b16 %v6558, %v6554
    %v6835 = vpack.c.b16 %v6559, %v6555
    %v6836 = vpack.c.b16 %v6564, %v6560
    %v6837 = vpack.c.b16 %v6565, %v6561
    %v6838 = vpack.c.b16 %v6566, %v6562
    %v6839 = vpack.c.b16 %v6567, %v6563
    %v6840 = vpack.c.b16 %v6572, %v6568
    %v6841 = vpack.c.b16 %v6573, %v6569
    %v6842 = vpack.c.b16 %v6574, %v6570
    %v6843 = vpack.c.b16 %v6575, %v6571
    %v6844 = vpack.c.b16 %v6580, %v6576
    %v6845 = vpack.c.b16 %v6581, %v6577
    %v6846 = vpack.c.b16 %v6582, %v6578
    %v6847 = vpack.c.b16 %v6583, %v6579
    %v6848 = vpack.c.b16 %v6588, %v6584
    %v6849 = vpack.c.b16 %v6589, %v6585
    %v6850 = vpack.c.b16 %v6590, %v6586
    %v6851 = vpack.c.b16 %v6591, %v6587
    %v6852 = vpack.c.b16 %v6596, %v6592
    %v6853 = vpack.c.b16 %v6597, %v6593
    %v6854 = vpack.c.b16 %v6598, %v6594
    %v6855 = vpack.c.b16 %v6599, %v6595
    %v6856 = vpack.c.b16 %v6604, %v6600
    %v6857 = vpack.c.b16 %v6605, %v6601
    %v6858 = vpack.c.b16 %v6606, %v6602
    %v6859 = vpack.c.b16 %v6607, %v6603
    %v6860 = vpack.c.b16 %v6612, %v6608
    %v6861 = vpack.c.b16 %v6613, %v6609
    %v6862 = vpack.c.b16 %v6614, %v6610
    %v6863 = vpack.c.b16 %v6615, %v6611
    %v6864 = vpack.c.b16 %v6620, %v6616
    %v6865 = vpack.c.b16 %v6621, %v6617
    %v6866 = vpack.c.b16 %v6622, %v6618
    %v6867 = vpack.c.b16 %v6623, %v6619
    %v6868 = vpack.c.b16 %v6628, %v6624
    %v6869 = vpack.c.b16 %v6629, %v6625
    %v6870 = vpack.c.b16 %v6630, %v6626
    %v6871 = vpack.c.b16 %v6631, %v6627
    %v6872 = vpack.c.b16 %v6636, %v6632
    %v6873 = vpack.c.b16 %v6637, %v6633
    %v6874 = vpack.c.b16 %v6638, %v6634
    %v6875 = vpack.c.b16 %v6639, %v6635
    %v6876 = vpack.c.b16 %v6644, %v6640
    %v6877 = vpack.c.b16 %v6645, %v6641
    %v6878 = vpack.c.b16 %v6646, %v6642
    %v6879 = vpack.c.b16 %v6647, %v6643
    %v6880 = vpack.c.b16 %v6652, %v6648
    %v6881 = vpack.c.b16 %v6653, %v6649
    %v6882 = vpack.c.b16 %v6654, %v6650
    %v6883 = vpack.c.b16 %v6655, %v6651
    %v6884 = vpack.c.b16 %v6660, %v6656
    %v6885 = vpack.c.b16 %v6661, %v6657
    %v6886 = vpack.c.b16 %v6662, %v6658
    %v6887 = vpack.c.b16 %v6663, %v6659
    %v6888 = vpack.c.b16 %v6668, %v6664
    %v6889 = vpack.c.b16 %v6669, %v6665
    %v6890 = vpack.c.b16 %v6670, %v6666
    %v6891 = vpack.c.b16 %v6671, %v6667
    %v6892 = vpack.c.b16 %v6676, %v6672
    %v6893 = vpack.c.b16 %v6677, %v6673
    %v6894 = vpack.c.b16 %v6678, %v6674
    %v6895 = vpack.c.b16 %v6679, %v6675
    %v6896 = vpack.c.b16 %v6684, %v6680
    %v6897 = vpack.c.b16 %v6685, %v6681
    %v6898 = vpack.c.b16 %v6686, %v6682
    %v6899 = vpack.c.b16 %v6687, %v6683
    %v6900 = vpack.c.b16 %v6692, %v6688
    %v6901 = vpack.c.b16 %v6693, %v6689
    %v6902 = vpack.c.b16 %v6694, %v6690
    %v6903 = vpack.c.b16 %v6695, %v6691
    %v6904 = vpack.c.b16 %v6700, %v6696
    %v6905 = vpack.c.b16 %v6701, %v6697
    %v6906 = vpack.c.b16 %v6702, %v6698
    %v6907 = vpack.c.b16 %v6703, %v6699
    %v6908 = vpack.c.b16 %v6708, %v6704
    %v6909 = vpack.c.b16 %v6709, %v6705
    %v6910 = vpack.c.b16 %v6710, %v6706
    %v6911 = vpack.c.b16 %v6711, %v6707
    %v6912 = vpack.c.b16 %v6716, %v6712
    %v6913 = vpack.c.b16 %v6717, %v6713
    %v6914 = vpack.c.b16 %v6718, %v6714
    %v6915 = vpack.c.b16 %v6719, %v6715
    %v6916 = vpack.c.b16 %v6724, %v6720
    %v6917 = vpack.c.b16 %v6725, %v6721
    %v6918 = vpack.c.b16 %v6726, %v6722
    %v6919 = vpack.c.b16 %v6727, %v6723
    %7112 = vmatpush.bf16.msra.mxu0 %v6756
    %7113 = vmatpush.bf16.msra.mxu0 %v6752
    %7114 = vmatpush.bf16.msra.mxu0 %v6748
    %7115 = vmatpush.bf16.msra.mxu0 %v6744
    %7116 = vmatpush.bf16.msra.mxu0 %v6740
    %7117 = vmatpush.bf16.msra.mxu0 %v6736
    %7118 = vmatpush.bf16.msra.mxu0 %v6732
    %7119 = vmatpush.bf16.msra.mxu0 %v6728
    %7120 = vmatmul.bf16.gmra.mxu0 %v5928
    %v7121 = vpop.f32.mrf.mxu0
    %v7122 = vadd.f32 %v6144, %v7121
    %v7123 = vpop.f32.mrf.mxu0
    %7124 = vdwg.mxu0
    %7125 = vmatpush.bf16.msra.mxu0 %v6788
    %7126 = vmatpush.bf16.msra.mxu0 %v6784
    %7127 = vmatpush.bf16.msra.mxu0 %v6780
    %7128 = vmatpush.bf16.msra.mxu0 %v6776
    %7129 = vmatpush.bf16.msra.mxu0 %v6772
    %7130 = vmatpush.bf16.msra.mxu0 %v6768
    %7131 = vmatpush.bf16.msra.mxu0 %v6764
    %7132 = vmatpush.bf16.msra.mxu0 %v6760
    %7133 = vmatmul.bf16.gmra.mxu0 %v5929
    %v7134 = vpop.f32.mrf.mxu0
    %v7135 = vadd.f32 %v7122, %v7134
    %v7136 = vpop.f32.mrf.mxu0
    %7137 = vdwg.mxu0
    %7138 = vmatpush.bf16.msra.mxu0 %v6820
    %7139 = vmatpush.bf16.msra.mxu0 %v6816
    %7140 = vmatpush.bf16.msra.mxu0 %v6812
    %7141 = vmatpush.bf16.msra.mxu0 %v6808
    %7142 = vmatpush.bf16.msra.mxu0 %v6804
    %7143 = vmatpush.bf16.msra.mxu0 %v6800
    %7144 = vmatpush.bf16.msra.mxu0 %v6796
    %7145 = vmatpush.bf16.msra.mxu0 %v6792
    %7146 = vmatmul.bf16.gmra.mxu0 %v5937
    %v7147 = vpop.f32.mrf.mxu0
    %v7148 = vadd.f32 %v7135, %v7147
    %v7149 = vpop.f32.mrf.mxu0
    %7150 = vdwg.mxu0
    %7151 = vmatpush.bf16.msra.mxu0 %v6852
    %7152 = vmatpush.bf16.msra.mxu0 %v6848
    %7153 = vmatpush.bf16.msra.mxu0 %v6844
    %7154 = vmatpush.bf16.msra.mxu0 %v6840
    %7155 = vmatpush.bf16.msra.mxu0 %v6836
    %7156 = vmatpush.bf16.msra.mxu0 %v6832
    %7157 = vmatpush.bf16.msra.mxu0 %v6828
    %7158 = vmatpush.bf16.msra.mxu0 %v6824
    %7159 = vmatmul.bf16.gmra.mxu0 %v5938
    %v7160 = vpop.f32.mrf.mxu0
    %v7161 = vadd.f32 %v7148, %v7160
    %v7162 = vpop.f32.mrf.mxu0
    %7163 = vdwg.mxu0
    %7164 = vmatpush.bf16.msra.mxu0 %v6884
    %7165 = vmatpush.bf16.msra.mxu0 %v6880
    %7166 = vmatpush.bf16.msra.mxu0 %v6876
    %7167 = vmatpush.bf16.msra.mxu0 %v6872
    %7168 = vmatpush.bf16.msra.mxu0 %v6868
    %7169 = vmatpush.bf16.msra.mxu0 %v6864
    %7170 = vmatpush.bf16.msra.mxu0 %v6860
    %7171 = vmatpush.bf16.msra.mxu0 %v6856
    %7172 = vmatmul.bf16.gmra.mxu0 %v5946
    %v7173 = vpop.f32.mrf.mxu0
    %v7174 = vadd.f32 %v7161, %v7173
    %v7175 = vpop.f32.mrf.mxu0
    %7176 = vdwg.mxu0
    %7177 = vmatpush.bf16.msra.mxu0 %v6916
    %7178 = vmatpush.bf16.msra.mxu0 %v6912
    %7179 = vmatpush.bf16.msra.mxu0 %v6908
    %7180 = vmatpush.bf16.msra.mxu0 %v6904
    %7181 = vmatpush.bf16.msra.mxu0 %v6900
    %7182 = vmatpush.bf16.msra.mxu0 %v6896
    %7183 = vmatpush.bf16.msra.mxu0 %v6892
    %7184 = vmatpush.bf16.msra.mxu0 %v6888
    %7185 = vmatmul.bf16.gmra.mxu0 %v5947
    %v7186 = vpop.f32.mrf.mxu0
    %v7187 = vadd.f32 %v7174, %v7186
    %v7188 = vpop.f32.mrf.mxu0
    %7189 = vdwg.mxu0
    %7190 = vmatpush.bf16.msra.mxu0 %v6757
    %7191 = vmatpush.bf16.msra.mxu0 %v6753
    %7192 = vmatpush.bf16.msra.mxu0 %v6749
    %7193 = vmatpush.bf16.msra.mxu0 %v6745
    %7194 = vmatpush.bf16.msra.mxu0 %v6741
    %7195 = vmatpush.bf16.msra.mxu0 %v6737
    %7196 = vmatpush.bf16.msra.mxu0 %v6733
    %7197 = vmatpush.bf16.msra.mxu0 %v6729
    %7198 = vmatmul.bf16.gmra.mxu0 %v5928
    %v7199 = vpop.f32.mrf.mxu0
    %v7200 = vadd.f32 %v6145, %v7199
    %v7201 = vpop.f32.mrf.mxu0
    %7202 = vdwg.mxu0
    %7203 = vmatpush.bf16.msra.mxu0 %v6789
    %7204 = vmatpush.bf16.msra.mxu0 %v6785
    %7205 = vmatpush.bf16.msra.mxu0 %v6781
    %7206 = vmatpush.bf16.msra.mxu0 %v6777
    %7207 = vmatpush.bf16.msra.mxu0 %v6773
    %7208 = vmatpush.bf16.msra.mxu0 %v6769
    %7209 = vmatpush.bf16.msra.mxu0 %v6765
    %7210 = vmatpush.bf16.msra.mxu0 %v6761
    %7211 = vmatmul.bf16.gmra.mxu0 %v5929
    %v7212 = vpop.f32.mrf.mxu0
    %v7213 = vadd.f32 %v7200, %v7212
    %v7214 = vpop.f32.mrf.mxu0
    %7215 = vdwg.mxu0
    %7216 = vmatpush.bf16.msra.mxu0 %v6821
    %7217 = vmatpush.bf16.msra.mxu0 %v6817
    %7218 = vmatpush.bf16.msra.mxu0 %v6813
    %7219 = vmatpush.bf16.msra.mxu0 %v6809
    %7220 = vmatpush.bf16.msra.mxu0 %v6805
    %7221 = vmatpush.bf16.msra.mxu0 %v6801
    %7222 = vmatpush.bf16.msra.mxu0 %v6797
    %7223 = vmatpush.bf16.msra.mxu0 %v6793
    %7224 = vmatmul.bf16.gmra.mxu0 %v5937
    %v7225 = vpop.f32.mrf.mxu0
    %v7226 = vadd.f32 %v7213, %v7225
    %v7227 = vpop.f32.mrf.mxu0
    %7228 = vdwg.mxu0
    %7229 = vmatpush.bf16.msra.mxu0 %v6853
    %7230 = vmatpush.bf16.msra.mxu0 %v6849
    %7231 = vmatpush.bf16.msra.mxu0 %v6845
    %7232 = vmatpush.bf16.msra.mxu0 %v6841
    %7233 = vmatpush.bf16.msra.mxu0 %v6837
    %7234 = vmatpush.bf16.msra.mxu0 %v6833
    %7235 = vmatpush.bf16.msra.mxu0 %v6829
    %7236 = vmatpush.bf16.msra.mxu0 %v6825
    %7237 = vmatmul.bf16.gmra.mxu0 %v5938
    %v7238 = vpop.f32.mrf.mxu0
    %v7239 = vadd.f32 %v7226, %v7238
    %v7240 = vpop.f32.mrf.mxu0
    %7241 = vdwg.mxu0
    %7242 = vmatpush.bf16.msra.mxu0 %v6885
    %7243 = vmatpush.bf16.msra.mxu0 %v6881
    %7244 = vmatpush.bf16.msra.mxu0 %v6877
    %7245 = vmatpush.bf16.msra.mxu0 %v6873
    %7246 = vmatpush.bf16.msra.mxu0 %v6869
    %7247 = vmatpush.bf16.msra.mxu0 %v6865
    %7248 = vmatpush.bf16.msra.mxu0 %v6861
    %7249 = vmatpush.bf16.msra.mxu0 %v6857
    %7250 = vmatmul.bf16.gmra.mxu0 %v5946
    %v7251 = vpop.f32.mrf.mxu0
    %v7252 = vadd.f32 %v7239, %v7251
    %v7253 = vpop.f32.mrf.mxu0
    %7254 = vdwg.mxu0
    %7255 = vmatpush.bf16.msra.mxu0 %v6917
    %7256 = vmatpush.bf16.msra.mxu0 %v6913
    %7257 = vmatpush.bf16.msra.mxu0 %v6909
    %7258 = vmatpush.bf16.msra.mxu0 %v6905
    %7259 = vmatpush.bf16.msra.mxu0 %v6901
    %7260 = vmatpush.bf16.msra.mxu0 %v6897
    %7261 = vmatpush.bf16.msra.mxu0 %v6893
    %7262 = vmatpush.bf16.msra.mxu0 %v6889
    %7263 = vmatmul.bf16.gmra.mxu0 %v5947
    %v7264 = vpop.f32.mrf.mxu0
    %v7265 = vadd.f32 %v7252, %v7264
    %v7266 = vpop.f32.mrf.mxu0
    %7267 = vdwg.mxu0
    %7268 = vmatpush.bf16.msra.mxu0 %v6758
    %7269 = vmatpush.bf16.msra.mxu0 %v6754
    %7270 = vmatpush.bf16.msra.mxu0 %v6750
    %7271 = vmatpush.bf16.msra.mxu0 %v6746
    %7272 = vmatpush.bf16.msra.mxu0 %v6742
    %7273 = vmatpush.bf16.msra.mxu0 %v6738
    %7274 = vmatpush.bf16.msra.mxu0 %v6734
    %7275 = vmatpush.bf16.msra.mxu0 %v6730
    %7276 = vmatmul.bf16.gmra.mxu0 %v5928
    %v7277 = vpop.f32.mrf.mxu0
    %v7278 = vadd.f32 %v6146, %v7277
    %v7279 = vpop.f32.mrf.mxu0
    %7280 = vdwg.mxu0
    %7281 = vmatpush.bf16.msra.mxu0 %v6790
    %7282 = vmatpush.bf16.msra.mxu0 %v6786
    %7283 = vmatpush.bf16.msra.mxu0 %v6782
    %7284 = vmatpush.bf16.msra.mxu0 %v6778
    %7285 = vmatpush.bf16.msra.mxu0 %v6774
    %7286 = vmatpush.bf16.msra.mxu0 %v6770
    %7287 = vmatpush.bf16.msra.mxu0 %v6766
    %7288 = vmatpush.bf16.msra.mxu0 %v6762
    %7289 = vmatmul.bf16.gmra.mxu0 %v5929
    %v7290 = vpop.f32.mrf.mxu0
    %v7291 = vadd.f32 %v7278, %v7290
    %v7292 = vpop.f32.mrf.mxu0
    %7293 = vdwg.mxu0
    %7294 = vmatpush.bf16.msra.mxu0 %v6822
    %7295 = vmatpush.bf16.msra.mxu0 %v6818
    %7296 = vmatpush.bf16.msra.mxu0 %v6814
    %7297 = vmatpush.bf16.msra.mxu0 %v6810
    %7298 = vmatpush.bf16.msra.mxu0 %v6806
    %7299 = vmatpush.bf16.msra.mxu0 %v6802
    %7300 = vmatpush.bf16.msra.mxu0 %v6798
    %7301 = vmatpush.bf16.msra.mxu0 %v6794
    %7302 = vmatmul.bf16.gmra.mxu0 %v5937
    %v7303 = vpop.f32.mrf.mxu0
    %v7304 = vadd.f32 %v7291, %v7303
    %v7305 = vpop.f32.mrf.mxu0
    %7306 = vdwg.mxu0
    %7307 = vmatpush.bf16.msra.mxu0 %v6854
    %7308 = vmatpush.bf16.msra.mxu0 %v6850
    %7309 = vmatpush.bf16.msra.mxu0 %v6846
    %7310 = vmatpush.bf16.msra.mxu0 %v6842
    %7311 = vmatpush.bf16.msra.mxu0 %v6838
    %7312 = vmatpush.bf16.msra.mxu0 %v6834
    %7313 = vmatpush.bf16.msra.mxu0 %v6830
    %7314 = vmatpush.bf16.msra.mxu0 %v6826
    %7315 = vmatmul.bf16.gmra.mxu0 %v5938
    %v7316 = vpop.f32.mrf.mxu0
    %v7317 = vadd.f32 %v7304, %v7316
    %v7318 = vpop.f32.mrf.mxu0
    %7319 = vdwg.mxu0
    %7320 = vmatpush.bf16.msra.mxu0 %v6886
    %7321 = vmatpush.bf16.msra.mxu0 %v6882
    %7322 = vmatpush.bf16.msra.mxu0 %v6878
    %7323 = vmatpush.bf16.msra.mxu0 %v6874
    %7324 = vmatpush.bf16.msra.mxu0 %v6870
    %7325 = vmatpush.bf16.msra.mxu0 %v6866
    %7326 = vmatpush.bf16.msra.mxu0 %v6862
    %7327 = vmatpush.bf16.msra.mxu0 %v6858
    %7328 = vmatmul.bf16.gmra.mxu0 %v5946
    %v7329 = vpop.f32.mrf.mxu0
    %v7330 = vadd.f32 %v7317, %v7329
    %v7331 = vpop.f32.mrf.mxu0
    %7332 = vdwg.mxu0
    %7333 = vmatpush.bf16.msra.mxu0 %v6918
    %7334 = vmatpush.bf16.msra.mxu0 %v6914
    %7335 = vmatpush.bf16.msra.mxu0 %v6910
    %7336 = vmatpush.bf16.msra.mxu0 %v6906
    %7337 = vmatpush.bf16.msra.mxu0 %v6902
    %7338 = vmatpush.bf16.msra.mxu0 %v6898
    %7339 = vmatpush.bf16.msra.mxu0 %v6894
    %7340 = vmatpush.bf16.msra.mxu0 %v6890
    %7341 = vmatmul.bf16.gmra.mxu0 %v5947
    %v7342 = vpop.f32.mrf.mxu0
    %v7343 = vadd.f32 %v7330, %v7342
    %v7344 = vpop.f32.mrf.mxu0
    %7345 = vdwg.mxu0
    %7346 = vmatpush.bf16.msra.mxu0 %v6759
    %7347 = vmatpush.bf16.msra.mxu0 %v6755
    %7348 = vmatpush.bf16.msra.mxu0 %v6751
    %7349 = vmatpush.bf16.msra.mxu0 %v6747
    %7350 = vmatpush.bf16.msra.mxu0 %v6743
    %7351 = vmatpush.bf16.msra.mxu0 %v6739
    %7352 = vmatpush.bf16.msra.mxu0 %v6735
    %7353 = vmatpush.bf16.msra.mxu0 %v6731
    %7354 = vmatmul.bf16.gmra.mxu0 %v5928
    %v7355 = vpop.f32.mrf.mxu0
    %v7356 = vadd.f32 %v6147, %v7355
    %v7357 = vpop.f32.mrf.mxu0
    %7358 = vdwg.mxu0
    %7359 = vmatpush.bf16.msra.mxu0 %v6791
    %7360 = vmatpush.bf16.msra.mxu0 %v6787
    %7361 = vmatpush.bf16.msra.mxu0 %v6783
    %7362 = vmatpush.bf16.msra.mxu0 %v6779
    %7363 = vmatpush.bf16.msra.mxu0 %v6775
    %7364 = vmatpush.bf16.msra.mxu0 %v6771
    %7365 = vmatpush.bf16.msra.mxu0 %v6767
    %7366 = vmatpush.bf16.msra.mxu0 %v6763
    %7367 = vmatmul.bf16.gmra.mxu0 %v5929
    %v7368 = vpop.f32.mrf.mxu0
    %v7369 = vadd.f32 %v7356, %v7368
    %v7370 = vpop.f32.mrf.mxu0
    %7371 = vdwg.mxu0
    %7372 = vmatpush.bf16.msra.mxu0 %v6823
    %7373 = vmatpush.bf16.msra.mxu0 %v6819
    %7374 = vmatpush.bf16.msra.mxu0 %v6815
    %7375 = vmatpush.bf16.msra.mxu0 %v6811
    %7376 = vmatpush.bf16.msra.mxu0 %v6807
    %7377 = vmatpush.bf16.msra.mxu0 %v6803
    %7378 = vmatpush.bf16.msra.mxu0 %v6799
    %7379 = vmatpush.bf16.msra.mxu0 %v6795
    %7380 = vmatmul.bf16.gmra.mxu0 %v5937
    %v7381 = vpop.f32.mrf.mxu0
    %v7382 = vadd.f32 %v7369, %v7381
    %v7383 = vpop.f32.mrf.mxu0
    %7384 = vdwg.mxu0
    %7385 = vmatpush.bf16.msra.mxu0 %v6855
    %7386 = vmatpush.bf16.msra.mxu0 %v6851
    %7387 = vmatpush.bf16.msra.mxu0 %v6847
    %7388 = vmatpush.bf16.msra.mxu0 %v6843
    %7389 = vmatpush.bf16.msra.mxu0 %v6839
    %7390 = vmatpush.bf16.msra.mxu0 %v6835
    %7391 = vmatpush.bf16.msra.mxu0 %v6831
    %7392 = vmatpush.bf16.msra.mxu0 %v6827
    %7393 = vmatmul.bf16.gmra.mxu0 %v5938
    %v7394 = vpop.f32.mrf.mxu0
    %v7395 = vadd.f32 %v7382, %v7394
    %v7396 = vpop.f32.mrf.mxu0
    %7397 = vdwg.mxu0
    %7398 = vmatpush.bf16.msra.mxu0 %v6887
    %7399 = vmatpush.bf16.msra.mxu0 %v6883
    %7400 = vmatpush.bf16.msra.mxu0 %v6879
    %7401 = vmatpush.bf16.msra.mxu0 %v6875
    %7402 = vmatpush.bf16.msra.mxu0 %v6871
    %7403 = vmatpush.bf16.msra.mxu0 %v6867
    %7404 = vmatpush.bf16.msra.mxu0 %v6863
    %7405 = vmatpush.bf16.msra.mxu0 %v6859
    %7406 = vmatmul.bf16.gmra.mxu0 %v5946
    %v7407 = vpop.f32.mrf.mxu0
    %v7408 = vadd.f32 %v7395, %v7407
    %v7409 = vpop.f32.mrf.mxu0
    %7410 = vdwg.mxu0
    %7411 = vmatpush.bf16.msra.mxu0 %v6919
    %7412 = vmatpush.bf16.msra.mxu0 %v6915
    %7413 = vmatpush.bf16.msra.mxu0 %v6911
    %7414 = vmatpush.bf16.msra.mxu0 %v6907
    %7415 = vmatpush.bf16.msra.mxu0 %v6903
    %7416 = vmatpush.bf16.msra.mxu0 %v6899
    %7417 = vmatpush.bf16.msra.mxu0 %v6895
    %7418 = vmatpush.bf16.msra.mxu0 %v6891
    %7419 = vmatmul.bf16.gmra.mxu0 %v5947
    %v7420 = vpop.f32.mrf.mxu0
    %v7421 = vadd.f32 %v7408, %v7420
    %v7422 = vpop.f32.mrf.mxu0
    %7423 = vdwg.mxu0
    %v7424 = vmax.f32 %v7187, 0.0
    %v7425 = vmax.f32 %v7265, 0.0
    %v7426 = vmax.f32 %v7343, 0.0
    %v7427 = vmax.f32 %v7421, 0.0
    %v7428 = vpack.c.bf16 %v7424, %v7424
    %v7429 = vpack.c.bf16 %v7425, %v7425
    %v7430 = vpack.c.bf16 %v7426, %v7426
    %v7431 = vpack.c.bf16 %v7427, %v7427
    %s7432 = scalar_lea.vmem [#allocation14], 2048
    %v7433 = vld [vmem:[%s7432] sm:$0xff]
    %v7434 = vld [vmem:[%s7432 + $0x8] sm:$0xff]
    %v7435 = vld [vmem:[%s7432 + $0x10] sm:$0xff]
    %v7436 = vld [vmem:[%s7432 + $0x18] sm:$0xff]
    %v7437 = vld [vmem:[%s7432 + $0x20] sm:$0xff]
    %v7438 = vld [vmem:[%s7432 + $0x28] sm:$0xff]
    %v7439 = vld [vmem:[%s7432 + $0x30] sm:$0xff]
    %v7440 = vld [vmem:[%s7432 + $0x38] sm:$0xff]
    %v7441 = vld [vmem:[%s7432 + $0x40] sm:$0xff]
    %v7442 = vld [vmem:[%s7432 + $0x48] sm:$0xff]
    %v7443 = vld [vmem:[%s7432 + $0x50] sm:$0xff]
    %v7444 = vld [vmem:[%s7432 + $0x58] sm:$0xff]
    %v7445 = vld [vmem:[%s7432 + $0x60] sm:$0xff]
    %v7446 = vld [vmem:[%s7432 + $0x68] sm:$0xff]
    %v7447 = vld [vmem:[%s7432 + $0x70] sm:$0xff]
    %v7448 = vld [vmem:[%s7432 + $0x78] sm:$0xff]
    %v7449 = vld [vmem:[%s7432 + $0x80] sm:$0xff]
    %v7450 = vld [vmem:[%s7432 + $0x88] sm:$0xff]
    %v7451 = vld [vmem:[%s7432 + $0x90] sm:$0xff]
    %v7452 = vld [vmem:[%s7432 + $0x98] sm:$0xff]
    %v7453 = vld [vmem:[%s7432 + $0xa0] sm:$0xff]
    %v7454 = vld [vmem:[%s7432 + $0xa8] sm:$0xff]
    %v7455 = vld [vmem:[%s7432 + $0xb0] sm:$0xff]
    %v7456 = vld [vmem:[%s7432 + $0xb8] sm:$0xff]
    %v7457 = vld [vmem:[%s7432 + $0xc0] sm:$0xff]
    %v7458 = vld [vmem:[%s7432 + $0xc8] sm:$0xff]
    %v7459 = vld [vmem:[%s7432 + $0xd0] sm:$0xff]
    %v7460 = vld [vmem:[%s7432 + $0xd8] sm:$0xff]
    %v7461 = vld [vmem:[%s7432 + $0xe0] sm:$0xff]
    %v7462 = vld [vmem:[%s7432 + $0xe8] sm:$0xff]
    %v7463 = vld [vmem:[%s7432 + $0xf0] sm:$0xff]
    %v7464 = vld [vmem:[%s7432 + $0xf8] sm:$0xff]
    %v7465 = vld [vmem:[%s7432 + $0x100] sm:$0xff]
    %v7466 = vld [vmem:[%s7432 + $0x108] sm:$0xff]
    %v7467 = vld [vmem:[%s7432 + $0x110] sm:$0xff]
    %v7468 = vld [vmem:[%s7432 + $0x118] sm:$0xff]
    %v7469 = vld [vmem:[%s7432 + $0x120] sm:$0xff]
    %v7470 = vld [vmem:[%s7432 + $0x128] sm:$0xff]
    %v7471 = vld [vmem:[%s7432 + $0x130] sm:$0xff]
    %v7472 = vld [vmem:[%s7432 + $0x138] sm:$0xff]
    %v7473 = vld [vmem:[%s7432 + $0x140] sm:$0xff]
    %v7474 = vld [vmem:[%s7432 + $0x148] sm:$0xff]
    %v7475 = vld [vmem:[%s7432 + $0x150] sm:$0xff]
    %v7476 = vld [vmem:[%s7432 + $0x158] sm:$0xff]
    %v7477 = vld [vmem:[%s7432 + $0x160] sm:$0xff]
    %v7478 = vld [vmem:[%s7432 + $0x168] sm:$0xff]
    %v7479 = vld [vmem:[%s7432 + $0x170] sm:$0xff]
    %v7480 = vld [vmem:[%s7432 + $0x178] sm:$0xff]
    %v7481 = vld [vmem:[%s7432 + $0x180] sm:$0xff]
    %v7482 = vld [vmem:[%s7432 + $0x188] sm:$0xff]
    %v7483 = vld [vmem:[%s7432 + $0x190] sm:$0xff]
    %v7484 = vld [vmem:[%s7432 + $0x198] sm:$0xff]
    %v7485 = vld [vmem:[%s7432 + $0x1a0] sm:$0xff]
    %v7486 = vld [vmem:[%s7432 + $0x1a8] sm:$0xff]
    %v7487 = vld [vmem:[%s7432 + $0x1b0] sm:$0xff]
    %v7488 = vld [vmem:[%s7432 + $0x1b8] sm:$0xff]
    %v7489 = vld [vmem:[%s7432 + $0x1c0] sm:$0xff]
    %v7490 = vld [vmem:[%s7432 + $0x1c8] sm:$0xff]
    %v7491 = vld [vmem:[%s7432 + $0x1d0] sm:$0xff]
    %v7492 = vld [vmem:[%s7432 + $0x1d8] sm:$0xff]
    %v7493 = vld [vmem:[%s7432 + $0x1e0] sm:$0xff]
    %v7494 = vld [vmem:[%s7432 + $0x1e8] sm:$0xff]
    %v7495 = vld [vmem:[%s7432 + $0x1f0] sm:$0xff]
    %v7496 = vld [vmem:[%s7432 + $0x1f8] sm:$0xff]
    %v7497 = vld [vmem:[%s7432 + $0x200] sm:$0xff]
    %v7498 = vld [vmem:[%s7432 + $0x208] sm:$0xff]
    %v7499 = vld [vmem:[%s7432 + $0x210] sm:$0xff]
    %v7500 = vld [vmem:[%s7432 + $0x218] sm:$0xff]
    %v7501 = vld [vmem:[%s7432 + $0x220] sm:$0xff]
    %v7502 = vld [vmem:[%s7432 + $0x228] sm:$0xff]
    %v7503 = vld [vmem:[%s7432 + $0x230] sm:$0xff]
    %v7504 = vld [vmem:[%s7432 + $0x238] sm:$0xff]
    %v7505 = vld [vmem:[%s7432 + $0x240] sm:$0xff]
    %v7506 = vld [vmem:[%s7432 + $0x248] sm:$0xff]
    %v7507 = vld [vmem:[%s7432 + $0x250] sm:$0xff]
    %v7508 = vld [vmem:[%s7432 + $0x258] sm:$0xff]
    %v7509 = vld [vmem:[%s7432 + $0x260] sm:$0xff]
    %v7510 = vld [vmem:[%s7432 + $0x268] sm:$0xff]
    %v7511 = vld [vmem:[%s7432 + $0x270] sm:$0xff]
    %v7512 = vld [vmem:[%s7432 + $0x278] sm:$0xff]
    %v7513 = vld [vmem:[%s7432 + $0x280] sm:$0xff]
    %v7514 = vld [vmem:[%s7432 + $0x288] sm:$0xff]
    %v7515 = vld [vmem:[%s7432 + $0x290] sm:$0xff]
    %v7516 = vld [vmem:[%s7432 + $0x298] sm:$0xff]
    %v7517 = vld [vmem:[%s7432 + $0x2a0] sm:$0xff]
    %v7518 = vld [vmem:[%s7432 + $0x2a8] sm:$0xff]
    %v7519 = vld [vmem:[%s7432 + $0x2b0] sm:$0xff]
    %v7520 = vld [vmem:[%s7432 + $0x2b8] sm:$0xff]
    %v7521 = vld [vmem:[%s7432 + $0x2c0] sm:$0xff]
    %v7522 = vld [vmem:[%s7432 + $0x2c8] sm:$0xff]
    %v7523 = vld [vmem:[%s7432 + $0x2d0] sm:$0xff]
    %v7524 = vld [vmem:[%s7432 + $0x2d8] sm:$0xff]
    %v7525 = vld [vmem:[%s7432 + $0x2e0] sm:$0xff]
    %v7526 = vld [vmem:[%s7432 + $0x2e8] sm:$0xff]
    %v7527 = vld [vmem:[%s7432 + $0x2f0] sm:$0xff]
    %v7528 = vld [vmem:[%s7432 + $0x2f8] sm:$0xff]
    %v7529 = vld [vmem:[%s7432 + $0x300] sm:$0xff]
    %v7530 = vld [vmem:[%s7432 + $0x308] sm:$0xff]
    %v7531 = vld [vmem:[%s7432 + $0x310] sm:$0xff]
    %v7532 = vld [vmem:[%s7432 + $0x318] sm:$0xff]
    %v7533 = vld [vmem:[%s7432 + $0x320] sm:$0xff]
    %v7534 = vld [vmem:[%s7432 + $0x328] sm:$0xff]
    %v7535 = vld [vmem:[%s7432 + $0x330] sm:$0xff]
    %v7536 = vld [vmem:[%s7432 + $0x338] sm:$0xff]
    %v7537 = vld [vmem:[%s7432 + $0x340] sm:$0xff]
    %v7538 = vld [vmem:[%s7432 + $0x348] sm:$0xff]
    %v7539 = vld [vmem:[%s7432 + $0x350] sm:$0xff]
    %v7540 = vld [vmem:[%s7432 + $0x358] sm:$0xff]
    %v7541 = vld [vmem:[%s7432 + $0x360] sm:$0xff]
    %v7542 = vld [vmem:[%s7432 + $0x368] sm:$0xff]
    %v7543 = vld [vmem:[%s7432 + $0x370] sm:$0xff]
    %v7544 = vld [vmem:[%s7432 + $0x378] sm:$0xff]
    %v7545 = vld [vmem:[%s7432 + $0x380] sm:$0xff]
    %v7546 = vld [vmem:[%s7432 + $0x388] sm:$0xff]
    %v7547 = vld [vmem:[%s7432 + $0x390] sm:$0xff]
    %v7548 = vld [vmem:[%s7432 + $0x398] sm:$0xff]
    %v7549 = vld [vmem:[%s7432 + $0x3a0] sm:$0xff]
    %v7550 = vld [vmem:[%s7432 + $0x3a8] sm:$0xff]
    %v7551 = vld [vmem:[%s7432 + $0x3b0] sm:$0xff]
    %v7552 = vld [vmem:[%s7432 + $0x3b8] sm:$0xff]
    %v7553 = vld [vmem:[%s7432 + $0x3c0] sm:$0xff]
    %v7554 = vld [vmem:[%s7432 + $0x3c8] sm:$0xff]
    %v7555 = vld [vmem:[%s7432 + $0x3d0] sm:$0xff]
    %v7556 = vld [vmem:[%s7432 + $0x3d8] sm:$0xff]
    %v7557 = vld [vmem:[%s7432 + $0x3e0] sm:$0xff]
    %v7558 = vld [vmem:[%s7432 + $0x3e8] sm:$0xff]
    %v7559 = vld [vmem:[%s7432 + $0x3f0] sm:$0xff]
    %v7560 = vld [vmem:[%s7432 + $0x3f8] sm:$0xff]
    %v7689 = vunpack.c.l.b16 %v7433
    %v7690 = vunpack.c.h.b16 %v7433
    %v7691 = vunpack.c.l.b16 %v7434
    %v7692 = vunpack.c.h.b16 %v7434
    %v7693 = vunpack.c.l.b16 %v7435
    %v7694 = vunpack.c.h.b16 %v7435
    %v7695 = vunpack.c.l.b16 %v7436
    %v7696 = vunpack.c.h.b16 %v7436
    %v7697 = vunpack.c.l.b16 %v7437
    %v7698 = vunpack.c.h.b16 %v7437
    %v7699 = vunpack.c.l.b16 %v7438
    %v7700 = vunpack.c.h.b16 %v7438
    %v7701 = vunpack.c.l.b16 %v7439
    %v7702 = vunpack.c.h.b16 %v7439
    %v7703 = vunpack.c.l.b16 %v7440
    %v7704 = vunpack.c.h.b16 %v7440
    %v7705 = vunpack.c.l.b16 %v7441
    %v7706 = vunpack.c.h.b16 %v7441
    %v7707 = vunpack.c.l.b16 %v7442
    %v7708 = vunpack.c.h.b16 %v7442
    %v7709 = vunpack.c.l.b16 %v7443
    %v7710 = vunpack.c.h.b16 %v7443
    %v7711 = vunpack.c.l.b16 %v7444
    %v7712 = vunpack.c.h.b16 %v7444
    %v7713 = vunpack.c.l.b16 %v7445
    %v7714 = vunpack.c.h.b16 %v7445
    %v7715 = vunpack.c.l.b16 %v7446
    %v7716 = vunpack.c.h.b16 %v7446
    %v7717 = vunpack.c.l.b16 %v7447
    %v7718 = vunpack.c.h.b16 %v7447
    %v7719 = vunpack.c.l.b16 %v7448
    %v7720 = vunpack.c.h.b16 %v7448
    %v7721 = vunpack.c.l.b16 %v7449
    %v7722 = vunpack.c.h.b16 %v7449
    %v7723 = vunpack.c.l.b16 %v7450
    %v7724 = vunpack.c.h.b16 %v7450
    %v7725 = vunpack.c.l.b16 %v7451
    %v7726 = vunpack.c.h.b16 %v7451
    %v7727 = vunpack.c.l.b16 %v7452
    %v7728 = vunpack.c.h.b16 %v7452
    %v7729 = vunpack.c.l.b16 %v7453
    %v7730 = vunpack.c.h.b16 %v7453
    %v7731 = vunpack.c.l.b16 %v7454
    %v7732 = vunpack.c.h.b16 %v7454
    %v7733 = vunpack.c.l.b16 %v7455
    %v7734 = vunpack.c.h.b16 %v7455
    %v7735 = vunpack.c.l.b16 %v7456
    %v7736 = vunpack.c.h.b16 %v7456
    %v7737 = vunpack.c.l.b16 %v7457
    %v7738 = vunpack.c.h.b16 %v7457
    %v7739 = vunpack.c.l.b16 %v7458
    %v7740 = vunpack.c.h.b16 %v7458
    %v7741 = vunpack.c.l.b16 %v7459
    %v7742 = vunpack.c.h.b16 %v7459
    %v7743 = vunpack.c.l.b16 %v7460
    %v7744 = vunpack.c.h.b16 %v7460
    %v7745 = vunpack.c.l.b16 %v7461
    %v7746 = vunpack.c.h.b16 %v7461
    %v7747 = vunpack.c.l.b16 %v7462
    %v7748 = vunpack.c.h.b16 %v7462
    %v7749 = vunpack.c.l.b16 %v7463
    %v7750 = vunpack.c.h.b16 %v7463
    %v7751 = vunpack.c.l.b16 %v7464
    %v7752 = vunpack.c.h.b16 %v7464
    %v7753 = vunpack.c.l.b16 %v7465
    %v7754 = vunpack.c.h.b16 %v7465
    %v7755 = vunpack.c.l.b16 %v7466
    %v7756 = vunpack.c.h.b16 %v7466
    %v7757 = vunpack.c.l.b16 %v7467
    %v7758 = vunpack.c.h.b16 %v7467
    %v7759 = vunpack.c.l.b16 %v7468
    %v7760 = vunpack.c.h.b16 %v7468
    %v7761 = vunpack.c.l.b16 %v7469
    %v7762 = vunpack.c.h.b16 %v7469
    %v7763 = vunpack.c.l.b16 %v7470
    %v7764 = vunpack.c.h.b16 %v7470
    %v7765 = vunpack.c.l.b16 %v7471
    %v7766 = vunpack.c.h.b16 %v7471
    %v7767 = vunpack.c.l.b16 %v7472
    %v7768 = vunpack.c.h.b16 %v7472
    %v7769 = vunpack.c.l.b16 %v7473
    %v7770 = vunpack.c.h.b16 %v7473
    %v7771 = vunpack.c.l.b16 %v7474
    %v7772 = vunpack.c.h.b16 %v7474
    %v7773 = vunpack.c.l.b16 %v7475
    %v7774 = vunpack.c.h.b16 %v7475
    %v7775 = vunpack.c.l.b16 %v7476
    %v7776 = vunpack.c.h.b16 %v7476
    %v7777 = vunpack.c.l.b16 %v7477
    %v7778 = vunpack.c.h.b16 %v7477
    %v7779 = vunpack.c.l.b16 %v7478
    %v7780 = vunpack.c.h.b16 %v7478
    %v7781 = vunpack.c.l.b16 %v7479
    %v7782 = vunpack.c.h.b16 %v7479
    %v7783 = vunpack.c.l.b16 %v7480
    %v7784 = vunpack.c.h.b16 %v7480
    %v7785 = vunpack.c.l.b16 %v7481
    %v7786 = vunpack.c.h.b16 %v7481
    %v7787 = vunpack.c.l.b16 %v7482
    %v7788 = vunpack.c.h.b16 %v7482
    %v7789 = vunpack.c.l.b16 %v7483
    %v7790 = vunpack.c.h.b16 %v7483
    %v7791 = vunpack.c.l.b16 %v7484
    %v7792 = vunpack.c.h.b16 %v7484
    %v7793 = vunpack.c.l.b16 %v7485
    %v7794 = vunpack.c.h.b16 %v7485
    %v7795 = vunpack.c.l.b16 %v7486
    %v7796 = vunpack.c.h.b16 %v7486
    %v7797 = vunpack.c.l.b16 %v7487
    %v7798 = vunpack.c.h.b16 %v7487
    %v7799 = vunpack.c.l.b16 %v7488
    %v7800 = vunpack.c.h.b16 %v7488
    %v7801 = vunpack.c.l.b16 %v7489
    %v7802 = vunpack.c.h.b16 %v7489
    %v7803 = vunpack.c.l.b16 %v7490
    %v7804 = vunpack.c.h.b16 %v7490
    %v7805 = vunpack.c.l.b16 %v7491
    %v7806 = vunpack.c.h.b16 %v7491
    %v7807 = vunpack.c.l.b16 %v7492
    %v7808 = vunpack.c.h.b16 %v7492
    %v7809 = vunpack.c.l.b16 %v7493
    %v7810 = vunpack.c.h.b16 %v7493
    %v7811 = vunpack.c.l.b16 %v7494
    %v7812 = vunpack.c.h.b16 %v7494
    %v7813 = vunpack.c.l.b16 %v7495
    %v7814 = vunpack.c.h.b16 %v7495
    %v7815 = vunpack.c.l.b16 %v7496
    %v7816 = vunpack.c.h.b16 %v7496
    %v7817 = vunpack.c.l.b16 %v7497
    %v7818 = vunpack.c.h.b16 %v7497
    %v7819 = vunpack.c.l.b16 %v7498
    %v7820 = vunpack.c.h.b16 %v7498
    %v7821 = vunpack.c.l.b16 %v7499
    %v7822 = vunpack.c.h.b16 %v7499
    %v7823 = vunpack.c.l.b16 %v7500
    %v7824 = vunpack.c.h.b16 %v7500
    %v7825 = vunpack.c.l.b16 %v7501
    %v7826 = vunpack.c.h.b16 %v7501
    %v7827 = vunpack.c.l.b16 %v7502
    %v7828 = vunpack.c.h.b16 %v7502
    %v7829 = vunpack.c.l.b16 %v7503
    %v7830 = vunpack.c.h.b16 %v7503
    %v7831 = vunpack.c.l.b16 %v7504
    %v7832 = vunpack.c.h.b16 %v7504
    %v7833 = vunpack.c.l.b16 %v7505
    %v7834 = vunpack.c.h.b16 %v7505
    %v7835 = vunpack.c.l.b16 %v7506
    %v7836 = vunpack.c.h.b16 %v7506
    %v7837 = vunpack.c.l.b16 %v7507
    %v7838 = vunpack.c.h.b16 %v7507
    %v7839 = vunpack.c.l.b16 %v7508
    %v7840 = vunpack.c.h.b16 %v7508
    %v7841 = vunpack.c.l.b16 %v7509
    %v7842 = vunpack.c.h.b16 %v7509
    %v7843 = vunpack.c.l.b16 %v7510
    %v7844 = vunpack.c.h.b16 %v7510
    %v7845 = vunpack.c.l.b16 %v7511
    %v7846 = vunpack.c.h.b16 %v7511
    %v7847 = vunpack.c.l.b16 %v7512
    %v7848 = vunpack.c.h.b16 %v7512
    %v7849 = vunpack.c.l.b16 %v7513
    %v7850 = vunpack.c.h.b16 %v7513
    %v7851 = vunpack.c.l.b16 %v7514
    %v7852 = vunpack.c.h.b16 %v7514
    %v7853 = vunpack.c.l.b16 %v7515
    %v7854 = vunpack.c.h.b16 %v7515
    %v7855 = vunpack.c.l.b16 %v7516
    %v7856 = vunpack.c.h.b16 %v7516
    %v7857 = vunpack.c.l.b16 %v7517
    %v7858 = vunpack.c.h.b16 %v7517
    %v7859 = vunpack.c.l.b16 %v7518
    %v7860 = vunpack.c.h.b16 %v7518
    %v7861 = vunpack.c.l.b16 %v7519
    %v7862 = vunpack.c.h.b16 %v7519
    %v7863 = vunpack.c.l.b16 %v7520
    %v7864 = vunpack.c.h.b16 %v7520
    %v7865 = vunpack.c.l.b16 %v7521
    %v7866 = vunpack.c.h.b16 %v7521
    %v7867 = vunpack.c.l.b16 %v7522
    %v7868 = vunpack.c.h.b16 %v7522
    %v7869 = vunpack.c.l.b16 %v7523
    %v7870 = vunpack.c.h.b16 %v7523
    %v7871 = vunpack.c.l.b16 %v7524
    %v7872 = vunpack.c.h.b16 %v7524
    %v7873 = vunpack.c.l.b16 %v7525
    %v7874 = vunpack.c.h.b16 %v7525
    %v7875 = vunpack.c.l.b16 %v7526
    %v7876 = vunpack.c.h.b16 %v7526
    %v7877 = vunpack.c.l.b16 %v7527
    %v7878 = vunpack.c.h.b16 %v7527
    %v7879 = vunpack.c.l.b16 %v7528
    %v7880 = vunpack.c.h.b16 %v7528
    %v7881 = vunpack.c.l.b16 %v7529
    %v7882 = vunpack.c.h.b16 %v7529
    %v7883 = vunpack.c.l.b16 %v7530
    %v7884 = vunpack.c.h.b16 %v7530
    %v7885 = vunpack.c.l.b16 %v7531
    %v7886 = vunpack.c.h.b16 %v7531
    %v7887 = vunpack.c.l.b16 %v7532
    %v7888 = vunpack.c.h.b16 %v7532
    %v7889 = vunpack.c.l.b16 %v7533
    %v7890 = vunpack.c.h.b16 %v7533
    %v7891 = vunpack.c.l.b16 %v7534
    %v7892 = vunpack.c.h.b16 %v7534
    %v7893 = vunpack.c.l.b16 %v7535
    %v7894 = vunpack.c.h.b16 %v7535
    %v7895 = vunpack.c.l.b16 %v7536
    %v7896 = vunpack.c.h.b16 %v7536
    %v7897 = vunpack.c.l.b16 %v7537
    %v7898 = vunpack.c.h.b16 %v7537
    %v7899 = vunpack.c.l.b16 %v7538
    %v7900 = vunpack.c.h.b16 %v7538
    %v7901 = vunpack.c.l.b16 %v7539
    %v7902 = vunpack.c.h.b16 %v7539
    %v7903 = vunpack.c.l.b16 %v7540
    %v7904 = vunpack.c.h.b16 %v7540
    %v7905 = vunpack.c.l.b16 %v7541
    %v7906 = vunpack.c.h.b16 %v7541
    %v7907 = vunpack.c.l.b16 %v7542
    %v7908 = vunpack.c.h.b16 %v7542
    %v7909 = vunpack.c.l.b16 %v7543
    %v7910 = vunpack.c.h.b16 %v7543
    %v7911 = vunpack.c.l.b16 %v7544
    %v7912 = vunpack.c.h.b16 %v7544
    %v7913 = vunpack.c.l.b16 %v7545
    %v7914 = vunpack.c.h.b16 %v7545
    %v7915 = vunpack.c.l.b16 %v7546
    %v7916 = vunpack.c.h.b16 %v7546
    %v7917 = vunpack.c.l.b16 %v7547
    %v7918 = vunpack.c.h.b16 %v7547
    %v7919 = vunpack.c.l.b16 %v7548
    %v7920 = vunpack.c.h.b16 %v7548
    %v7921 = vunpack.c.l.b16 %v7549
    %v7922 = vunpack.c.h.b16 %v7549
    %v7923 = vunpack.c.l.b16 %v7550
    %v7924 = vunpack.c.h.b16 %v7550
    %v7925 = vunpack.c.l.b16 %v7551
    %v7926 = vunpack.c.h.b16 %v7551
    %v7927 = vunpack.c.l.b16 %v7552
    %v7928 = vunpack.c.h.b16 %v7552
    %v7929 = vunpack.c.l.b16 %v7553
    %v7930 = vunpack.c.h.b16 %v7553
    %v7931 = vunpack.c.l.b16 %v7554
    %v7932 = vunpack.c.h.b16 %v7554
    %v7933 = vunpack.c.l.b16 %v7555
    %v7934 = vunpack.c.h.b16 %v7555
    %v7935 = vunpack.c.l.b16 %v7556
    %v7936 = vunpack.c.h.b16 %v7556
    %v7937 = vunpack.c.l.b16 %v7557
    %v7938 = vunpack.c.h.b16 %v7557
    %v7939 = vunpack.c.l.b16 %v7558
    %v7940 = vunpack.c.h.b16 %v7558
    %v7941 = vunpack.c.l.b16 %v7559
    %v7942 = vunpack.c.h.b16 %v7559
    %v7943 = vunpack.c.l.b16 %v7560
    %v7944 = vunpack.c.h.b16 %v7560
    %v7945 = vpack.c.b16 %v7693, %v7689
    %v7946 = vpack.c.b16 %v7694, %v7690
    %v7947 = vpack.c.b16 %v7695, %v7691
    %v7948 = vpack.c.b16 %v7696, %v7692
    %v7949 = vpack.c.b16 %v7701, %v7697
    %v7950 = vpack.c.b16 %v7702, %v7698
    %v7951 = vpack.c.b16 %v7703, %v7699
    %v7952 = vpack.c.b16 %v7704, %v7700
    %v7953 = vpack.c.b16 %v7709, %v7705
    %v7954 = vpack.c.b16 %v7710, %v7706
    %v7955 = vpack.c.b16 %v7711, %v7707
    %v7956 = vpack.c.b16 %v7712, %v7708
    %v7957 = vpack.c.b16 %v7717, %v7713
    %v7958 = vpack.c.b16 %v7718, %v7714
    %v7959 = vpack.c.b16 %v7719, %v7715
    %v7960 = vpack.c.b16 %v7720, %v7716
    %v7961 = vpack.c.b16 %v7725, %v7721
    %v7962 = vpack.c.b16 %v7726, %v7722
    %v7963 = vpack.c.b16 %v7727, %v7723
    %v7964 = vpack.c.b16 %v7728, %v7724
    %v7965 = vpack.c.b16 %v7733, %v7729
    %v7966 = vpack.c.b16 %v7734, %v7730
    %v7967 = vpack.c.b16 %v7735, %v7731
    %v7968 = vpack.c.b16 %v7736, %v7732
    %v7969 = vpack.c.b16 %v7741, %v7737
    %v7970 = vpack.c.b16 %v7742, %v7738
    %v7971 = vpack.c.b16 %v7743, %v7739
    %v7972 = vpack.c.b16 %v7744, %v7740
    %v7973 = vpack.c.b16 %v7749, %v7745
    %v7974 = vpack.c.b16 %v7750, %v7746
    %v7975 = vpack.c.b16 %v7751, %v7747
    %v7976 = vpack.c.b16 %v7752, %v7748
    %v7977 = vpack.c.b16 %v7757, %v7753
    %v7978 = vpack.c.b16 %v7758, %v7754
    %v7979 = vpack.c.b16 %v7759, %v7755
    %v7980 = vpack.c.b16 %v7760, %v7756
    %v7981 = vpack.c.b16 %v7765, %v7761
    %v7982 = vpack.c.b16 %v7766, %v7762
    %v7983 = vpack.c.b16 %v7767, %v7763
    %v7984 = vpack.c.b16 %v7768, %v7764
    %v7985 = vpack.c.b16 %v7773, %v7769
    %v7986 = vpack.c.b16 %v7774, %v7770
    %v7987 = vpack.c.b16 %v7775, %v7771
    %v7988 = vpack.c.b16 %v7776, %v7772
    %v7989 = vpack.c.b16 %v7781, %v7777
    %v7990 = vpack.c.b16 %v7782, %v7778
    %v7991 = vpack.c.b16 %v7783, %v7779
    %v7992 = vpack.c.b16 %v7784, %v7780
    %v7993 = vpack.c.b16 %v7789, %v7785
    %v7994 = vpack.c.b16 %v7790, %v7786
    %v7995 = vpack.c.b16 %v7791, %v7787
    %v7996 = vpack.c.b16 %v7792, %v7788
    %v7997 = vpack.c.b16 %v7797, %v7793
    %v7998 = vpack.c.b16 %v7798, %v7794
    %v7999 = vpack.c.b16 %v7799, %v7795
    %v8000 = vpack.c.b16 %v7800, %v7796
    %v8001 = vpack.c.b16 %v7805, %v7801
    %v8002 = vpack.c.b16 %v7806, %v7802
    %v8003 = vpack.c.b16 %v7807, %v7803
    %v8004 = vpack.c.b16 %v7808, %v7804
    %v8005 = vpack.c.b16 %v7813, %v7809
    %v8006 = vpack.c.b16 %v7814, %v7810
    %v8007 = vpack.c.b16 %v7815, %v7811
    %v8008 = vpack.c.b16 %v7816, %v7812
    %v8009 = vpack.c.b16 %v7821, %v7817
    %v8010 = vpack.c.b16 %v7822, %v7818
    %v8011 = vpack.c.b16 %v7823, %v7819
    %v8012 = vpack.c.b16 %v7824, %v7820
    %v8013 = vpack.c.b16 %v7829, %v7825
    %v8014 = vpack.c.b16 %v7830, %v7826
    %v8015 = vpack.c.b16 %v7831, %v7827
    %v8016 = vpack.c.b16 %v7832, %v7828
    %v8017 = vpack.c.b16 %v7837, %v7833
    %v8018 = vpack.c.b16 %v7838, %v7834
    %v8019 = vpack.c.b16 %v7839, %v7835
    %v8020 = vpack.c.b16 %v7840, %v7836
    %v8021 = vpack.c.b16 %v7845, %v7841
    %v8022 = vpack.c.b16 %v7846, %v7842
    %v8023 = vpack.c.b16 %v7847, %v7843
    %v8024 = vpack.c.b16 %v7848, %v7844
    %v8025 = vpack.c.b16 %v7853, %v7849
    %v8026 = vpack.c.b16 %v7854, %v7850
    %v8027 = vpack.c.b16 %v7855, %v7851
    %v8028 = vpack.c.b16 %v7856, %v7852
    %v8029 = vpack.c.b16 %v7861, %v7857
    %v8030 = vpack.c.b16 %v7862, %v7858
    %v8031 = vpack.c.b16 %v7863, %v7859
    %v8032 = vpack.c.b16 %v7864, %v7860
    %v8033 = vpack.c.b16 %v7869, %v7865
    %v8034 = vpack.c.b16 %v7870, %v7866
    %v8035 = vpack.c.b16 %v7871, %v7867
    %v8036 = vpack.c.b16 %v7872, %v7868
    %v8037 = vpack.c.b16 %v7877, %v7873
    %v8038 = vpack.c.b16 %v7878, %v7874
    %v8039 = vpack.c.b16 %v7879, %v7875
    %v8040 = vpack.c.b16 %v7880, %v7876
    %v8041 = vpack.c.b16 %v7885, %v7881
    %v8042 = vpack.c.b16 %v7886, %v7882
    %v8043 = vpack.c.b16 %v7887, %v7883
    %v8044 = vpack.c.b16 %v7888, %v7884
    %v8045 = vpack.c.b16 %v7893, %v7889
    %v8046 = vpack.c.b16 %v7894, %v7890
    %v8047 = vpack.c.b16 %v7895, %v7891
    %v8048 = vpack.c.b16 %v7896, %v7892
    %v8049 = vpack.c.b16 %v7901, %v7897
    %v8050 = vpack.c.b16 %v7902, %v7898
    %v8051 = vpack.c.b16 %v7903, %v7899
    %v8052 = vpack.c.b16 %v7904, %v7900
    %v8053 = vpack.c.b16 %v7909, %v7905
    %v8054 = vpack.c.b16 %v7910, %v7906
    %v8055 = vpack.c.b16 %v7911, %v7907
    %v8056 = vpack.c.b16 %v7912, %v7908
    %v8057 = vpack.c.b16 %v7917, %v7913
    %v8058 = vpack.c.b16 %v7918, %v7914
    %v8059 = vpack.c.b16 %v7919, %v7915
    %v8060 = vpack.c.b16 %v7920, %v7916
    %v8061 = vpack.c.b16 %v7925, %v7921
    %v8062 = vpack.c.b16 %v7926, %v7922
    %v8063 = vpack.c.b16 %v7927, %v7923
    %v8064 = vpack.c.b16 %v7928, %v7924
    %v8065 = vpack.c.b16 %v7933, %v7929
    %v8066 = vpack.c.b16 %v7934, %v7930
    %v8067 = vpack.c.b16 %v7935, %v7931
    %v8068 = vpack.c.b16 %v7936, %v7932
    %v8069 = vpack.c.b16 %v7941, %v7937
    %v8070 = vpack.c.b16 %v7942, %v7938
    %v8071 = vpack.c.b16 %v7943, %v7939
    %v8072 = vpack.c.b16 %v7944, %v7940
    %8201 = vmatpush.bf16.msra.mxu0 %v7973
    %8202 = vmatpush.bf16.msra.mxu0 %v7969
    %8203 = vmatpush.bf16.msra.mxu0 %v7965
    %8204 = vmatpush.bf16.msra.mxu0 %v7961
    %8205 = vmatpush.bf16.msra.mxu0 %v7957
    %8206 = vmatpush.bf16.msra.mxu0 %v7953
    %8207 = vmatpush.bf16.msra.mxu0 %v7949
    %8208 = vmatpush.bf16.msra.mxu0 %v7945
    %8209 = vmatmul.bf16.gmra.mxu0 %v7428
    %v8210 = vpop.f32.mrf.mxu0
    %v8211 = vadd.f32 0.0, %v8210
    %v8212 = vpop.f32.mrf.mxu0
    %8213 = vdwg.mxu0
    %8214 = vmatpush.bf16.msra.mxu0 %v8005
    %8215 = vmatpush.bf16.msra.mxu0 %v8001
    %8216 = vmatpush.bf16.msra.mxu0 %v7997
    %8217 = vmatpush.bf16.msra.mxu0 %v7993
    %8218 = vmatpush.bf16.msra.mxu0 %v7989
    %8219 = vmatpush.bf16.msra.mxu0 %v7985
    %8220 = vmatpush.bf16.msra.mxu0 %v7981
    %8221 = vmatpush.bf16.msra.mxu0 %v7977
    %8222 = vmatmul.bf16.gmra.mxu0 %v7429
    %v8223 = vpop.f32.mrf.mxu0
    %v8224 = vadd.f32 %v8211, %v8223
    %v8225 = vpop.f32.mrf.mxu0
    %8226 = vdwg.mxu0
    %8227 = vmatpush.bf16.msra.mxu0 %v8037
    %8228 = vmatpush.bf16.msra.mxu0 %v8033
    %8229 = vmatpush.bf16.msra.mxu0 %v8029
    %8230 = vmatpush.bf16.msra.mxu0 %v8025
    %8231 = vmatpush.bf16.msra.mxu0 %v8021
    %8232 = vmatpush.bf16.msra.mxu0 %v8017
    %8233 = vmatpush.bf16.msra.mxu0 %v8013
    %8234 = vmatpush.bf16.msra.mxu0 %v8009
    %8235 = vmatmul.bf16.gmra.mxu0 %v7430
    %v8236 = vpop.f32.mrf.mxu0
    %v8237 = vadd.f32 %v8224, %v8236
    %v8238 = vpop.f32.mrf.mxu0
    %8239 = vdwg.mxu0
    %8240 = vmatpush.bf16.msra.mxu0 %v8069
    %8241 = vmatpush.bf16.msra.mxu0 %v8065
    %8242 = vmatpush.bf16.msra.mxu0 %v8061
    %8243 = vmatpush.bf16.msra.mxu0 %v8057
    %8244 = vmatpush.bf16.msra.mxu0 %v8053
    %8245 = vmatpush.bf16.msra.mxu0 %v8049
    %8246 = vmatpush.bf16.msra.mxu0 %v8045
    %8247 = vmatpush.bf16.msra.mxu0 %v8041
    %8248 = vmatmul.bf16.gmra.mxu0 %v7431
    %v8249 = vpop.f32.mrf.mxu0
    %v8250 = vadd.f32 %v8237, %v8249
    %v8251 = vpop.f32.mrf.mxu0
    %8252 = vdwg.mxu0
    %8253 = vmatpush.bf16.msra.mxu0 %v7974
    %8254 = vmatpush.bf16.msra.mxu0 %v7970
    %8255 = vmatpush.bf16.msra.mxu0 %v7966
    %8256 = vmatpush.bf16.msra.mxu0 %v7962
    %8257 = vmatpush.bf16.msra.mxu0 %v7958
    %8258 = vmatpush.bf16.msra.mxu0 %v7954
    %8259 = vmatpush.bf16.msra.mxu0 %v7950
    %8260 = vmatpush.bf16.msra.mxu0 %v7946
    %8261 = vmatmul.bf16.gmra.mxu0 %v7428
    %v8262 = vpop.f32.mrf.mxu0
    %v8263 = vadd.f32 0.0, %v8262
    %v8264 = vpop.f32.mrf.mxu0
    %8265 = vdwg.mxu0
    %8266 = vmatpush.bf16.msra.mxu0 %v8006
    %8267 = vmatpush.bf16.msra.mxu0 %v8002
    %8268 = vmatpush.bf16.msra.mxu0 %v7998
    %8269 = vmatpush.bf16.msra.mxu0 %v7994
    %8270 = vmatpush.bf16.msra.mxu0 %v7990
    %8271 = vmatpush.bf16.msra.mxu0 %v7986
    %8272 = vmatpush.bf16.msra.mxu0 %v7982
    %8273 = vmatpush.bf16.msra.mxu0 %v7978
    %8274 = vmatmul.bf16.gmra.mxu0 %v7429
    %v8275 = vpop.f32.mrf.mxu0
    %v8276 = vadd.f32 %v8263, %v8275
    %v8277 = vpop.f32.mrf.mxu0
    %8278 = vdwg.mxu0
    %8279 = vmatpush.bf16.msra.mxu0 %v8038
    %8280 = vmatpush.bf16.msra.mxu0 %v8034
    %8281 = vmatpush.bf16.msra.mxu0 %v8030
    %8282 = vmatpush.bf16.msra.mxu0 %v8026
    %8283 = vmatpush.bf16.msra.mxu0 %v8022
    %8284 = vmatpush.bf16.msra.mxu0 %v8018
    %8285 = vmatpush.bf16.msra.mxu0 %v8014
    %8286 = vmatpush.bf16.msra.mxu0 %v8010
    %8287 = vmatmul.bf16.gmra.mxu0 %v7430
    %v8288 = vpop.f32.mrf.mxu0
    %v8289 = vadd.f32 %v8276, %v8288
    %v8290 = vpop.f32.mrf.mxu0
    %8291 = vdwg.mxu0
    %8292 = vmatpush.bf16.msra.mxu0 %v8070
    %8293 = vmatpush.bf16.msra.mxu0 %v8066
    %8294 = vmatpush.bf16.msra.mxu0 %v8062
    %8295 = vmatpush.bf16.msra.mxu0 %v8058
    %8296 = vmatpush.bf16.msra.mxu0 %v8054
    %8297 = vmatpush.bf16.msra.mxu0 %v8050
    %8298 = vmatpush.bf16.msra.mxu0 %v8046
    %8299 = vmatpush.bf16.msra.mxu0 %v8042
    %8300 = vmatmul.bf16.gmra.mxu0 %v7431
    %v8301 = vpop.f32.mrf.mxu0
    %v8302 = vadd.f32 %v8289, %v8301
    %v8303 = vpop.f32.mrf.mxu0
    %8304 = vdwg.mxu0
    %8305 = vmatpush.bf16.msra.mxu0 %v7975
    %8306 = vmatpush.bf16.msra.mxu0 %v7971
    %8307 = vmatpush.bf16.msra.mxu0 %v7967
    %8308 = vmatpush.bf16.msra.mxu0 %v7963
    %8309 = vmatpush.bf16.msra.mxu0 %v7959
    %8310 = vmatpush.bf16.msra.mxu0 %v7955
    %8311 = vmatpush.bf16.msra.mxu0 %v7951
    %8312 = vmatpush.bf16.msra.mxu0 %v7947
    %8313 = vmatmul.bf16.gmra.mxu0 %v7428
    %v8314 = vpop.f32.mrf.mxu0
    %v8315 = vadd.f32 0.0, %v8314
    %v8316 = vpop.f32.mrf.mxu0
    %8317 = vdwg.mxu0
    %8318 = vmatpush.bf16.msra.mxu0 %v8007
    %8319 = vmatpush.bf16.msra.mxu0 %v8003
    %8320 = vmatpush.bf16.msra.mxu0 %v7999
    %8321 = vmatpush.bf16.msra.mxu0 %v7995
    %8322 = vmatpush.bf16.msra.mxu0 %v7991
    %8323 = vmatpush.bf16.msra.mxu0 %v7987
    %8324 = vmatpush.bf16.msra.mxu0 %v7983
    %8325 = vmatpush.bf16.msra.mxu0 %v7979
    %8326 = vmatmul.bf16.gmra.mxu0 %v7429
    %v8327 = vpop.f32.mrf.mxu0
    %v8328 = vadd.f32 %v8315, %v8327
    %v8329 = vpop.f32.mrf.mxu0
    %8330 = vdwg.mxu0
    %8331 = vmatpush.bf16.msra.mxu0 %v8039
    %8332 = vmatpush.bf16.msra.mxu0 %v8035
    %8333 = vmatpush.bf16.msra.mxu0 %v8031
    %8334 = vmatpush.bf16.msra.mxu0 %v8027
    %8335 = vmatpush.bf16.msra.mxu0 %v8023
    %8336 = vmatpush.bf16.msra.mxu0 %v8019
    %8337 = vmatpush.bf16.msra.mxu0 %v8015
    %8338 = vmatpush.bf16.msra.mxu0 %v8011
    %8339 = vmatmul.bf16.gmra.mxu0 %v7430
    %v8340 = vpop.f32.mrf.mxu0
    %v8341 = vadd.f32 %v8328, %v8340
    %v8342 = vpop.f32.mrf.mxu0
    %8343 = vdwg.mxu0
    %8344 = vmatpush.bf16.msra.mxu0 %v8071
    %8345 = vmatpush.bf16.msra.mxu0 %v8067
    %8346 = vmatpush.bf16.msra.mxu0 %v8063
    %8347 = vmatpush.bf16.msra.mxu0 %v8059
    %8348 = vmatpush.bf16.msra.mxu0 %v8055
    %8349 = vmatpush.bf16.msra.mxu0 %v8051
    %8350 = vmatpush.bf16.msra.mxu0 %v8047
    %8351 = vmatpush.bf16.msra.mxu0 %v8043
    %8352 = vmatmul.bf16.gmra.mxu0 %v7431
    %v8353 = vpop.f32.mrf.mxu0
    %v8354 = vadd.f32 %v8341, %v8353
    %v8355 = vpop.f32.mrf.mxu0
    %8356 = vdwg.mxu0
    %8357 = vmatpush.bf16.msra.mxu0 %v7976
    %8358 = vmatpush.bf16.msra.mxu0 %v7972
    %8359 = vmatpush.bf16.msra.mxu0 %v7968
    %8360 = vmatpush.bf16.msra.mxu0 %v7964
    %8361 = vmatpush.bf16.msra.mxu0 %v7960
    %8362 = vmatpush.bf16.msra.mxu0 %v7956
    %8363 = vmatpush.bf16.msra.mxu0 %v7952
    %8364 = vmatpush.bf16.msra.mxu0 %v7948
    %8365 = vmatmul.bf16.gmra.mxu0 %v7428
    %v8366 = vpop.f32.mrf.mxu0
    %v8367 = vadd.f32 0.0, %v8366
    %v8368 = vpop.f32.mrf.mxu0
    %8369 = vdwg.mxu0
    %8370 = vmatpush.bf16.msra.mxu0 %v8008
    %8371 = vmatpush.bf16.msra.mxu0 %v8004
    %8372 = vmatpush.bf16.msra.mxu0 %v8000
    %8373 = vmatpush.bf16.msra.mxu0 %v7996
    %8374 = vmatpush.bf16.msra.mxu0 %v7992
    %8375 = vmatpush.bf16.msra.mxu0 %v7988
    %8376 = vmatpush.bf16.msra.mxu0 %v7984
    %8377 = vmatpush.bf16.msra.mxu0 %v7980
    %8378 = vmatmul.bf16.gmra.mxu0 %v7429
    %v8379 = vpop.f32.mrf.mxu0
    %v8380 = vadd.f32 %v8367, %v8379
    %v8381 = vpop.f32.mrf.mxu0
    %8382 = vdwg.mxu0
    %8383 = vmatpush.bf16.msra.mxu0 %v8040
    %8384 = vmatpush.bf16.msra.mxu0 %v8036
    %8385 = vmatpush.bf16.msra.mxu0 %v8032
    %8386 = vmatpush.bf16.msra.mxu0 %v8028
    %8387 = vmatpush.bf16.msra.mxu0 %v8024
    %8388 = vmatpush.bf16.msra.mxu0 %v8020
    %8389 = vmatpush.bf16.msra.mxu0 %v8016
    %8390 = vmatpush.bf16.msra.mxu0 %v8012
    %8391 = vmatmul.bf16.gmra.mxu0 %v7430
    %v8392 = vpop.f32.mrf.mxu0
    %v8393 = vadd.f32 %v8380, %v8392
    %v8394 = vpop.f32.mrf.mxu0
    %8395 = vdwg.mxu0
    %8396 = vmatpush.bf16.msra.mxu0 %v8072
    %8397 = vmatpush.bf16.msra.mxu0 %v8068
    %8398 = vmatpush.bf16.msra.mxu0 %v8064
    %8399 = vmatpush.bf16.msra.mxu0 %v8060
    %8400 = vmatpush.bf16.msra.mxu0 %v8056
    %8401 = vmatpush.bf16.msra.mxu0 %v8052
    %8402 = vmatpush.bf16.msra.mxu0 %v8048
    %8403 = vmatpush.bf16.msra.mxu0 %v8044
    %8404 = vmatmul.bf16.gmra.mxu0 %v7431
    %v8405 = vpop.f32.mrf.mxu0
    %v8406 = vadd.f32 %v8393, %v8405
    %v8407 = vpop.f32.mrf.mxu0
    %8408 = vdwg.mxu0
    %v8409 = vmax.f32 %v8250, %v8354
    %v8410 = vmax.f32 %v8302, %v8406
    %v8411 = vpack.c.bf16 %v8409, %v8409
    %v8412 = vpack.c.bf16 %v8410, %v8410
    %v8413 = vld [vmem:[#allocation18] sm:$0xf]
    %vm8414 = vcmask 64512
    %v8416 = vsel %vm8414, %v8413, 0
    %v8419 = vsel %vm3028, %v8411, 0
    %v8422 = vsel %vm3028, %v8412, 0
    %8424 = vmatpush.bf16.msra.mxu0 0
    %8425 = vmatpush.bf16.msra.mxu0 0
    %8426 = vmatpush.bf16.msra.mxu0 0
    %8427 = vmatpush.bf16.msra.mxu0 0
    %8428 = vmatpush.bf16.msra.mxu0 0
    %8429 = vmatpush.bf16.msra.mxu0 0
    %8430 = vmatpush.bf16.msra.mxu0 0
    %8431 = vmatpush.bf16.msra.mxu0 %v8419
    %8432 = vmatmul.bf16.gmra.mxu0 %v8416
    %v8433 = vpop.f32.mrf.mxu0
    %v8434 = vadd.f32 0.0, %v8433
    %v8435 = vpop.f32.mrf.mxu0
    %8436 = vdwg.mxu0
    %8437 = vmatpush.bf16.msra.mxu0 0
    %8438 = vmatpush.bf16.msra.mxu0 0
    %8439 = vmatpush.bf16.msra.mxu0 0
    %8440 = vmatpush.bf16.msra.mxu0 0
    %8441 = vmatpush.bf16.msra.mxu0 0
    %8442 = vmatpush.bf16.msra.mxu0 0
    %8443 = vmatpush.bf16.msra.mxu0 0
    %8444 = vmatpush.bf16.msra.mxu0 %v8422
    %8445 = vmatmul.bf16.gmra.mxu0 %v8416
    %v8446 = vpop.f32.mrf.mxu0
    %v8447 = vadd.f32 0.0, %v8446
    %v8448 = vpop.f32.mrf.mxu0
    %8449 = vdwg.mxu0
    %v8452 = vrot.slane %v8434, 4
    %v8453 = vrot.slane %v8447, 4
    %v8456 = vmax.f32 %v8434, %v8452
    %v8457 = vmax.f32 %v8447, %v8453
    %v8458 = vpack.c.bf16 %v8457, %v8456
    %v8460 = vunpack.c.l.b16 %v8458
    %v8461 = vunpack.c.h.b16 %v8458
    %v8462 = vpack.c.b16 %v8460, %v8460
    %v8463 = vpack.c.b16 %v8461, %v8461
    %v8466 = vrot.slane %v8462, 1
    %v8467 = vrot.slane %v8463, 1
    %v8470 = vld [vmem:[#allocation20] sm:$0xf]
    %v8471 = vld [vmem:[#allocation20 + $0x4] sm:$0xf]
    %v8472 = vld [vmem:[#allocation20 + $0x8] sm:$0xf]
    %v8473 = vld [vmem:[#allocation20 + $0xc] sm:$0xf]
    %v8474 = vld [vmem:[#allocation20 + $0x10] sm:$0xf]
    %v8475 = vld [vmem:[#allocation20 + $0x14] sm:$0xf]
    %v8476 = vld [vmem:[#allocation20 + $0x18] sm:$0xf]
    %v8477 = vld [vmem:[#allocation20 + $0x1c] sm:$0xf]
    %v8478 = vld [vmem:[#allocation20 + $0x20] sm:$0xf]
    %v8479 = vld [vmem:[#allocation20 + $0x24] sm:$0xf]
    %v8480 = vld [vmem:[#allocation20 + $0x28] sm:$0xf]
    %v8481 = vld [vmem:[#allocation20 + $0x2c] sm:$0xf]
    %v8482 = vld [vmem:[#allocation20 + $0x30] sm:$0xf]
    %v8483 = vld [vmem:[#allocation20 + $0x34] sm:$0xf]
    %v8484 = vld [vmem:[#allocation20 + $0x38] sm:$0xf]
    %v8485 = vld [vmem:[#allocation20 + $0x3c] sm:$0xf]
    %v8486 = vld [vmem:[#allocation20 + $0x40] sm:$0xf]
    %v8487 = vld [vmem:[#allocation20 + $0x44] sm:$0xf]
    %v8488 = vld [vmem:[#allocation20 + $0x48] sm:$0xf]
    %v8489 = vld [vmem:[#allocation20 + $0x4c] sm:$0xf]
    %v8490 = vld [vmem:[#allocation20 + $0x50] sm:$0xf]
    %v8491 = vld [vmem:[#allocation20 + $0x54] sm:$0xf]
    %v8492 = vld [vmem:[#allocation20 + $0x58] sm:$0xf]
    %v8493 = vld [vmem:[#allocation20 + $0x5c] sm:$0xf]
    %v8494 = vld [vmem:[#allocation20 + $0x60] sm:$0xf]
    %v8495 = vld [vmem:[#allocation20 + $0x64] sm:$0xf]
    %v8496 = vld [vmem:[#allocation20 + $0x68] sm:$0xf]
    %v8497 = vld [vmem:[#allocation20 + $0x6c] sm:$0xf]
    %v8498 = vld [vmem:[#allocation20 + $0x70] sm:$0xf]
    %v8499 = vld [vmem:[#allocation20 + $0x74] sm:$0xf]
    %v8500 = vld [vmem:[#allocation20 + $0x78] sm:$0xf]
    %v8501 = vld [vmem:[#allocation20 + $0x7c] sm:$0xf]
    %v8502 = vld [vmem:[#allocation20 + $0x80] sm:$0xf]
    %v8503 = vld [vmem:[#allocation20 + $0x84] sm:$0xf]
    %v8504 = vld [vmem:[#allocation20 + $0x88] sm:$0xf]
    %v8505 = vld [vmem:[#allocation20 + $0x8c] sm:$0xf]
    %v8506 = vld [vmem:[#allocation20 + $0x90] sm:$0xf]
    %v8507 = vld [vmem:[#allocation20 + $0x94] sm:$0xf]
    %v8508 = vld [vmem:[#allocation20 + $0x98] sm:$0xf]
    %v8509 = vld [vmem:[#allocation20 + $0x9c] sm:$0xf]
    %v8510 = vld [vmem:[#allocation20 + $0xa0] sm:$0xf]
    %v8511 = vld [vmem:[#allocation20 + $0xa4] sm:$0xf]
    %v8512 = vld [vmem:[#allocation20 + $0xa8] sm:$0xf]
    %v8513 = vld [vmem:[#allocation20 + $0xac] sm:$0xf]
    %v8514 = vld [vmem:[#allocation20 + $0xb0] sm:$0xf]
    %v8515 = vld [vmem:[#allocation20 + $0xb4] sm:$0xf]
    %v8516 = vld [vmem:[#allocation20 + $0xb8] sm:$0xf]
    %v8517 = vld [vmem:[#allocation20 + $0xbc] sm:$0xf]
    %v8518 = vld [vmem:[#allocation20 + $0xc0] sm:$0xf]
    %v8519 = vld [vmem:[#allocation20 + $0xc4] sm:$0xf]
    %v8520 = vld [vmem:[#allocation20 + $0xc8] sm:$0xf]
    %v8521 = vld [vmem:[#allocation20 + $0xcc] sm:$0xf]
    %v8522 = vld [vmem:[#allocation20 + $0xd0] sm:$0xf]
    %v8523 = vld [vmem:[#allocation20 + $0xd4] sm:$0xf]
    %v8524 = vld [vmem:[#allocation20 + $0xd8] sm:$0xf]
    %v8525 = vld [vmem:[#allocation20 + $0xdc] sm:$0xf]
    %v8526 = vld [vmem:[#allocation20 + $0xe0] sm:$0xf]
    %v8527 = vld [vmem:[#allocation20 + $0xe4] sm:$0xf]
    %v8528 = vld [vmem:[#allocation20 + $0xe8] sm:$0xf]
    %v8529 = vld [vmem:[#allocation20 + $0xec] sm:$0xf]
    %v8530 = vld [vmem:[#allocation20 + $0xf0] sm:$0xf]
    %v8531 = vld [vmem:[#allocation20 + $0xf4] sm:$0xf]
    %v8532 = vld [vmem:[#allocation20 + $0xf8] sm:$0xf]
    %v8533 = vld [vmem:[#allocation20 + $0xfc] sm:$0xf]
    %v8534 = vld [vmem:[#allocation21] sm:$0x1]
    %v8536 = vperm.slane %v8534, 0
    %v8602 = vunpack.c.l.b16 %v8470
    %v8603 = vunpack.c.l.b16 %v8471
    %v8604 = vunpack.c.l.b16 %v8472
    %v8605 = vunpack.c.l.b16 %v8473
    %v8606 = vunpack.c.l.b16 %v8474
    %v8607 = vunpack.c.l.b16 %v8475
    %v8608 = vunpack.c.l.b16 %v8476
    %v8609 = vunpack.c.l.b16 %v8477
    %v8610 = vunpack.c.l.b16 %v8478
    %v8611 = vunpack.c.l.b16 %v8479
    %v8612 = vunpack.c.l.b16 %v8480
    %v8613 = vunpack.c.l.b16 %v8481
    %v8614 = vunpack.c.l.b16 %v8482
    %v8615 = vunpack.c.l.b16 %v8483
    %v8616 = vunpack.c.l.b16 %v8484
    %v8617 = vunpack.c.l.b16 %v8485
    %v8618 = vunpack.c.l.b16 %v8486
    %v8619 = vunpack.c.l.b16 %v8487
    %v8620 = vunpack.c.l.b16 %v8488
    %v8621 = vunpack.c.l.b16 %v8489
    %v8622 = vunpack.c.l.b16 %v8490
    %v8623 = vunpack.c.l.b16 %v8491
    %v8624 = vunpack.c.l.b16 %v8492
    %v8625 = vunpack.c.l.b16 %v8493
    %v8626 = vunpack.c.l.b16 %v8494
    %v8627 = vunpack.c.l.b16 %v8495
    %v8628 = vunpack.c.l.b16 %v8496
    %v8629 = vunpack.c.l.b16 %v8497
    %v8630 = vunpack.c.l.b16 %v8498
    %v8631 = vunpack.c.l.b16 %v8499
    %v8632 = vunpack.c.l.b16 %v8500
    %v8633 = vunpack.c.l.b16 %v8501
    %v8634 = vunpack.c.l.b16 %v8502
    %v8635 = vunpack.c.l.b16 %v8503
    %v8636 = vunpack.c.l.b16 %v8504
    %v8637 = vunpack.c.l.b16 %v8505
    %v8638 = vunpack.c.l.b16 %v8506
    %v8639 = vunpack.c.l.b16 %v8507
    %v8640 = vunpack.c.l.b16 %v8508
    %v8641 = vunpack.c.l.b16 %v8509
    %v8642 = vunpack.c.l.b16 %v8510
    %v8643 = vunpack.c.l.b16 %v8511
    %v8644 = vunpack.c.l.b16 %v8512
    %v8645 = vunpack.c.l.b16 %v8513
    %v8646 = vunpack.c.l.b16 %v8514
    %v8647 = vunpack.c.l.b16 %v8515
    %v8648 = vunpack.c.l.b16 %v8516
    %v8649 = vunpack.c.l.b16 %v8517
    %v8650 = vunpack.c.l.b16 %v8518
    %v8651 = vunpack.c.l.b16 %v8519
    %v8652 = vunpack.c.l.b16 %v8520
    %v8653 = vunpack.c.l.b16 %v8521
    %v8654 = vunpack.c.l.b16 %v8522
    %v8655 = vunpack.c.l.b16 %v8523
    %v8656 = vunpack.c.l.b16 %v8524
    %v8657 = vunpack.c.l.b16 %v8525
    %v8658 = vunpack.c.l.b16 %v8526
    %v8659 = vunpack.c.l.b16 %v8527
    %v8660 = vunpack.c.l.b16 %v8528
    %v8661 = vunpack.c.l.b16 %v8529
    %v8662 = vunpack.c.l.b16 %v8530
    %v8663 = vunpack.c.l.b16 %v8531
    %v8664 = vunpack.c.l.b16 %v8532
    %v8665 = vunpack.c.l.b16 %v8533
    %v8666 = vpack.c.b16 %v8603, %v8602
    %v8667 = vpack.c.b16 %v8605, %v8604
    %v8668 = vpack.c.b16 %v8607, %v8606
    %v8669 = vpack.c.b16 %v8609, %v8608
    %v8670 = vpack.c.b16 %v8611, %v8610
    %v8671 = vpack.c.b16 %v8613, %v8612
    %v8672 = vpack.c.b16 %v8615, %v8614
    %v8673 = vpack.c.b16 %v8617, %v8616
    %v8674 = vpack.c.b16 %v8619, %v8618
    %v8675 = vpack.c.b16 %v8621, %v8620
    %v8676 = vpack.c.b16 %v8623, %v8622
    %v8677 = vpack.c.b16 %v8625, %v8624
    %v8678 = vpack.c.b16 %v8627, %v8626
    %v8679 = vpack.c.b16 %v8629, %v8628
    %v8680 = vpack.c.b16 %v8631, %v8630
    %v8681 = vpack.c.b16 %v8633, %v8632
    %v8682 = vpack.c.b16 %v8635, %v8634
    %v8683 = vpack.c.b16 %v8637, %v8636
    %v8684 = vpack.c.b16 %v8639, %v8638
    %v8685 = vpack.c.b16 %v8641, %v8640
    %v8686 = vpack.c.b16 %v8643, %v8642
    %v8687 = vpack.c.b16 %v8645, %v8644
    %v8688 = vpack.c.b16 %v8647, %v8646
    %v8689 = vpack.c.b16 %v8649, %v8648
    %v8690 = vpack.c.b16 %v8651, %v8650
    %v8691 = vpack.c.b16 %v8653, %v8652
    %v8692 = vpack.c.b16 %v8655, %v8654
    %v8693 = vpack.c.b16 %v8657, %v8656
    %v8694 = vpack.c.b16 %v8659, %v8658
    %v8695 = vpack.c.b16 %v8661, %v8660
    %v8696 = vpack.c.b16 %v8663, %v8662
    %v8697 = vpack.c.b16 %v8665, %v8664
    %8730 = vmatpush.bf16.msra.mxu0 %v8673
    %8731 = vmatpush.bf16.msra.mxu0 %v8672
    %8732 = vmatpush.bf16.msra.mxu0 %v8671
    %8733 = vmatpush.bf16.msra.mxu0 %v8670
    %8734 = vmatpush.bf16.msra.mxu0 %v8669
    %8735 = vmatpush.bf16.msra.mxu0 %v8668
    %8736 = vmatpush.bf16.msra.mxu0 %v8667
    %8737 = vmatpush.bf16.msra.mxu0 %v8666
    %8738 = vmatmul.bf16.gmra.mxu0 %v8462
    %v8739 = vpop.f32.mrf.mxu0
    %v8740 = vadd.f32 %v8536, %v8739
    %v8741 = vpop.f32.mrf.mxu0
    %8742 = vdwg.mxu0
    %8743 = vmatpush.bf16.msra.mxu0 %v8681
    %8744 = vmatpush.bf16.msra.mxu0 %v8680
    %8745 = vmatpush.bf16.msra.mxu0 %v8679
    %8746 = vmatpush.bf16.msra.mxu0 %v8678
    %8747 = vmatpush.bf16.msra.mxu0 %v8677
    %8748 = vmatpush.bf16.msra.mxu0 %v8676
    %8749 = vmatpush.bf16.msra.mxu0 %v8675
    %8750 = vmatpush.bf16.msra.mxu0 %v8674
    %8751 = vmatmul.bf16.gmra.mxu0 %v8463
    %v8752 = vpop.f32.mrf.mxu0
    %v8753 = vadd.f32 %v8740, %v8752
    %v8754 = vpop.f32.mrf.mxu0
    %8755 = vdwg.mxu0
    %8756 = vmatpush.bf16.msra.mxu0 %v8689
    %8757 = vmatpush.bf16.msra.mxu0 %v8688
    %8758 = vmatpush.bf16.msra.mxu0 %v8687
    %8759 = vmatpush.bf16.msra.mxu0 %v8686
    %8760 = vmatpush.bf16.msra.mxu0 %v8685
    %8761 = vmatpush.bf16.msra.mxu0 %v8684
    %8762 = vmatpush.bf16.msra.mxu0 %v8683
    %8763 = vmatpush.bf16.msra.mxu0 %v8682
    %8764 = vmatmul.bf16.gmra.mxu0 %v8466
    %v8765 = vpop.f32.mrf.mxu0
    %v8766 = vadd.f32 %v8753, %v8765
    %v8767 = vpop.f32.mrf.mxu0
    %8768 = vdwg.mxu0
    %8769 = vmatpush.bf16.msra.mxu0 %v8697
    %8770 = vmatpush.bf16.msra.mxu0 %v8696
    %8771 = vmatpush.bf16.msra.mxu0 %v8695
    %8772 = vmatpush.bf16.msra.mxu0 %v8694
    %8773 = vmatpush.bf16.msra.mxu0 %v8693
    %8774 = vmatpush.bf16.msra.mxu0 %v8692
    %8775 = vmatpush.bf16.msra.mxu0 %v8691
    %8776 = vmatpush.bf16.msra.mxu0 %v8690
    %8777 = vmatmul.bf16.gmra.mxu0 %v8467
    %v8778 = vpop.f32.mrf.mxu0
    %v8779 = vadd.f32 %v8766, %v8778
    %v8780 = vpop.f32.mrf.mxu0
    %8781 = vdwg.mxu0
    %v8782 = vmax.f32 %v8779, 0.0
    %v8783 = vpack.c.bf16 %v8782, %v8782
    %v8784 = vld [vmem:[#allocation23] sm:$0xf]
    %v8785 = vld [vmem:[#allocation23 + $0x4] sm:$0xf]
    %v8786 = vld [vmem:[#allocation23 + $0x8] sm:$0xf]
    %v8787 = vld [vmem:[#allocation23 + $0xc] sm:$0xf]
    %v8788 = vld [vmem:[#allocation23 + $0x10] sm:$0xf]
    %v8789 = vld [vmem:[#allocation23 + $0x14] sm:$0xf]
    %v8790 = vld [vmem:[#allocation23 + $0x18] sm:$0xf]
    %v8791 = vld [vmem:[#allocation23 + $0x1c] sm:$0xf]
    %v8792 = vld [vmem:[#allocation23 + $0x20] sm:$0xf]
    %v8793 = vld [vmem:[#allocation23 + $0x24] sm:$0xf]
    %v8794 = vld [vmem:[#allocation23 + $0x28] sm:$0xf]
    %v8795 = vld [vmem:[#allocation23 + $0x2c] sm:$0xf]
    %v8796 = vld [vmem:[#allocation23 + $0x30] sm:$0xf]
    %v8797 = vld [vmem:[#allocation23 + $0x34] sm:$0xf]
    %v8798 = vld [vmem:[#allocation23 + $0x38] sm:$0xf]
    %v8799 = vld [vmem:[#allocation23 + $0x3c] sm:$0xf]
    %v8800 = vld [vmem:[#allocation24] sm:$0x1]
    %v8802 = vperm.slane %v8800, 0
    %v8820 = vunpack.c.l.b16 %v8784
    %v8821 = vunpack.c.l.b16 %v8785
    %v8822 = vunpack.c.l.b16 %v8786
    %v8823 = vunpack.c.l.b16 %v8787
    %v8824 = vunpack.c.l.b16 %v8788
    %v8825 = vunpack.c.l.b16 %v8789
    %v8826 = vunpack.c.l.b16 %v8790
    %v8827 = vunpack.c.l.b16 %v8791
    %v8828 = vunpack.c.l.b16 %v8792
    %v8829 = vunpack.c.l.b16 %v8793
    %v8830 = vunpack.c.l.b16 %v8794
    %v8831 = vunpack.c.l.b16 %v8795
    %v8832 = vunpack.c.l.b16 %v8796
    %v8833 = vunpack.c.l.b16 %v8797
    %v8834 = vunpack.c.l.b16 %v8798
    %v8835 = vunpack.c.l.b16 %v8799
    %v8836 = vpack.c.b16 %v8821, %v8820
    %v8837 = vpack.c.b16 %v8823, %v8822
    %v8838 = vpack.c.b16 %v8825, %v8824
    %v8839 = vpack.c.b16 %v8827, %v8826
    %v8840 = vpack.c.b16 %v8829, %v8828
    %v8841 = vpack.c.b16 %v8831, %v8830
    %v8842 = vpack.c.b16 %v8833, %v8832
    %v8843 = vpack.c.b16 %v8835, %v8834
    %8852 = vmatpush.bf16.msra.mxu0 %v8843
    %8853 = vmatpush.bf16.msra.mxu0 %v8842
    %8854 = vmatpush.bf16.msra.mxu0 %v8841
    %8855 = vmatpush.bf16.msra.mxu0 %v8840
    %8856 = vmatpush.bf16.msra.mxu0 %v8839
    %8857 = vmatpush.bf16.msra.mxu0 %v8838
    %8858 = vmatpush.bf16.msra.mxu0 %v8837
    %8859 = vmatpush.bf16.msra.mxu0 %v8836
    %8860 = vmatmul.bf16.gmra.mxu0 %v8783
    %v8861 = vpop.f32.mrf.mxu0
    %v8862 = vadd.f32 %v8802, %v8861
    %v8863 = vpop.f32.mrf.mxu0
    %8864 = vdwg.mxu0
    %v8865 = vmax.f32 %v8862, 0.0
    %v8866 = vpack.c.bf16 %v8865, %v8865
    %v8867 = vld [vmem:[#allocation26] sm:$0xf]
    %v8868 = vld [vmem:[#allocation26 + $0x4] sm:$0xf]
    %v8869 = vld [vmem:[#allocation26 + $0x8] sm:$0xf]
    %v8870 = vld [vmem:[#allocation26 + $0xc] sm:$0xf]
    %v8871 = vld [vmem:[#allocation26 + $0x10] sm:$0xf]
    %v8872 = vld [vmem:[#allocation26 + $0x14] sm:$0xf]
    %v8873 = vld [vmem:[#allocation26 + $0x18] sm:$0xf]
    %v8874 = vld [vmem:[#allocation26 + $0x1c] sm:$0xf]
    %v8875 = vld [vmem:[#allocation26 + $0x20] sm:$0xf]
    %v8876 = vld [vmem:[#allocation26 + $0x24] sm:$0xf]
    %v8877 = vld [vmem:[#allocation26 + $0x28] sm:$0xf]
    %v8878 = vld [vmem:[#allocation26 + $0x2c] sm:$0xf]
    %v8879 = vld [vmem:[#allocation26 + $0x30] sm:$0xf]
    %v8880 = vld [vmem:[#allocation26 + $0x34] sm:$0xf]
    %v8881 = vld [vmem:[#allocation26 + $0x38] sm:$0xf]
    %v8882 = vld [vmem:[#allocation26 + $0x3c] sm:$0xf]
    %v8883 = vld [vmem:[#allocation27] sm:$0x1]
    %v8885 = vperm.slane %v8883, 0
    %v8903 = vunpack.c.l.b16 %v8867
    %v8904 = vunpack.c.l.b16 %v8868
    %v8905 = vunpack.c.l.b16 %v8869
    %v8906 = vunpack.c.l.b16 %v8870
    %v8907 = vunpack.c.l.b16 %v8871
    %v8908 = vunpack.c.l.b16 %v8872
    %v8909 = vunpack.c.l.b16 %v8873
    %v8910 = vunpack.c.l.b16 %v8874
    %v8911 = vunpack.c.l.b16 %v8875
    %v8912 = vunpack.c.l.b16 %v8876
    %v8913 = vunpack.c.l.b16 %v8877
    %v8914 = vunpack.c.l.b16 %v8878
    %v8915 = vunpack.c.l.b16 %v8879
    %v8916 = vunpack.c.l.b16 %v8880
    %v8917 = vunpack.c.l.b16 %v8881
    %v8918 = vunpack.c.l.b16 %v8882
    %v8919 = vpack.c.b16 %v8904, %v8903
    %v8920 = vpack.c.b16 %v8906, %v8905
    %v8921 = vpack.c.b16 %v8908, %v8907
    %v8922 = vpack.c.b16 %v8910, %v8909
    %v8923 = vpack.c.b16 %v8912, %v8911
    %v8924 = vpack.c.b16 %v8914, %v8913
    %v8925 = vpack.c.b16 %v8916, %v8915
    %v8926 = vpack.c.b16 %v8918, %v8917
    %8935 = vmatpush.bf16.msra.mxu0 %v8926
    %8936 = vmatpush.bf16.msra.mxu0 %v8925
    %8937 = vmatpush.bf16.msra.mxu0 %v8924
    %8938 = vmatpush.bf16.msra.mxu0 %v8923
    %8939 = vmatpush.bf16.msra.mxu0 %v8922
    %8940 = vmatpush.bf16.msra.mxu0 %v8921
    %8941 = vmatpush.bf16.msra.mxu0 %v8920
    %8942 = vmatpush.bf16.msra.mxu0 %v8919
    %8943 = vmatmul.bf16.gmra.mxu0 %v8866
    %v8944 = vpop.f32.mrf.mxu0
    %v8945 = vadd.f32 %v8885, %v8944
    %v8946 = vpop.f32.mrf.mxu0
    %8947 = vdwg.mxu0
    %8948 = vst [vmem:[%s17] sm:$0x3] %v8945
    // Predicated region
    $region134: #{shoe_cnn_forward.1} parent=1 // pred_check
      _
    $region135: #{shoe_cnn_forward.1} parent=1 // pred_check_branch
      %8950 = sbr.rel (0) target = $region137
    $region136: #{shoe_cnn_forward.1} parent=1 // pred_region
      _
    $region137: #{shoe_cnn_forward.1} parent=1 // pred_fallthru
      _
    // Predicated region
    $region138: #{shoe_cnn_forward.1} parent=1 // pred_check
      _
    $region139: #{shoe_cnn_forward.1} parent=1 // pred_check_branch
      %8952 = sbr.rel (0) target = $region141
    $region140: #{shoe_cnn_forward.1} parent=1 // pred_region
      _
    $region141: #{shoe_cnn_forward.1} parent=1 // pred_fallthru
      _
    %8953 = vsyncpa [#allocation5], 1
    %8954 = vsyncpa [#allocation7], 1
    %8955 = vsyncpa [#allocation10], 1
    %8956 = vsyncpa [#allocation13], 1
    %8957 = vsyncpa [#allocation16], 1
    %8958 = vsyncpa [#allocation19], 1
    %8959 = vsyncpa [#allocation22], 1
    %8960 = vsyncpa [#allocation25], 1
    %8961 = vsyncpa [#allocation28], 1

</llo_original>
